<compile_context>
chip_gen: v5e
topology: v5e:2x2
jax: 0.10.0
libtpu: 0.0.40
codegen_flags: <defaults>
</compile_context>

<pallas_src>
import functools

import jax
import jax.numpy as jnp
from jax.experimental import pallas as pl
from jax.experimental.pallas import tpu as pltpu

_LANE = 128
_VMEM_LIMIT = 48 * 1024 * 1024   # <= ~48 MiB: headroom on v7x (64 MiB/TC)
_FUSED_A_MAX_NODES = 2048        # A bf16 <= 8 MiB -> resident-A single-pass path


# ---------------------------------------------------------------------------
# helpers
# ---------------------------------------------------------------------------
def _round_up(n, m):
    return ((n + m - 1) // m) * m


def _pad2d(a, rows, cols):
    return jnp.pad(a, ((0, rows - a.shape[0]), (0, cols - a.shape[1])))


def build_normalized_adjacency(edge_index, num_nodes, dtype=jnp.float32):
    """Dense symmetric-normalized adjacency D^-1/2 (A + I) D^-1/2.

    Duplicate edges collapse to weight 1 (matches the internal reference)."""
    row, col = edge_index[0], edge_index[1]
    a = jnp.zeros((num_nodes, num_nodes), dtype=dtype)
    a = a.at[row, col].set(1.0)
    a = a + jnp.eye(num_nodes, dtype=dtype)      # self-loops
    deg = jnp.sum(a, axis=1)
    dinv_sqrt = jnp.where(deg > 0, 1.0 / jnp.sqrt(deg), 0.0)
    return a * dinv_sqrt[:, None] * dinv_sqrt[None, :]


# ---------------------------------------------------------------------------
# Kernel A: one fused GCN layer  o = [relu](A @ (X @ W) + b)
#   grid = (row tiles i, K tiles k); A streamed (tm, tk); X, W, b resident.
# ---------------------------------------------------------------------------
def _gcn_layer_kernel(a_ref, x_ref, w_ref, b_ref, o_ref, *acc, tk, apply_relu):
    # f32 accumulator: scratch buffer for bf16 output, or the resident output
    # block itself for f32 output (its block index is (i, 0) for every k).
    acc_ref = acc[0] if acc else o_ref
    k = pl.program_id(1)

    @pl.when(k == 0)
    def _():
        acc_ref[...] = jnp.zeros_like(acc_ref)

    # On-the-fly feature transform for this K chunk (MXU slack is free here).
    koff = pl.multiple_of(k * tk, tk)
    xw = jnp.dot(
        x_ref[pl.ds(koff, tk), :], w_ref[...],
        preferred_element_type=jnp.float32,
    ).astype(jnp.bfloat16)
    acc_ref[...] += jnp.dot(a_ref[...], xw, preferred_element_type=jnp.float32)

    @pl.when(k == pl.num_programs(1) - 1)
    def _():
        h = acc_ref[...] + b_ref[...]            # f32 epilogue (v5e-safe)
        if apply_relu:
            h = jnp.maximum(h, 0.0)
        o_ref[...] = h.astype(o_ref.dtype)


def gcn_layer(a, x, w, b, *, apply_relu, out_dtype, tm=512, tk=512):
    """a: (n_pad, n_pad) bf16, x: (n_pad, f_in) bf16, w: (f_in, f_out) bf16,
    b: (1, f_out) f32 -> (n_pad, f_out) out_dtype."""
    n_pad = a.shape[0]
    f_in = x.shape[1]
    f_out = w.shape[1]
    assert n_pad % tm == 0 and n_pad % tk == 0
    grid = (n_pad // tm, n_pad // tk)

    out_is_f32 = jnp.dtype(out_dtype) == jnp.float32
    scratch_shapes = [] if out_is_f32 else [pltpu.VMEM((tm, f_out), jnp.float32)]
    kernel = functools.partial(_gcn_layer_kernel, tk=tk, apply_relu=apply_relu)

    flops = 2 * n_pad * n_pad * f_out + 2 * (n_pad // tm) * n_pad * f_in * f_out
    bytes_accessed = (
        n_pad * n_pad * 2                  # A: dominant stream (bf16), read once
        + n_pad * f_in * 2                 # X: resident, fetched once
        + f_in * f_out * 2 + f_out * 4     # W, b
        + n_pad * f_out * jnp.dtype(out_dtype).itemsize
    )
    return pl.pallas_call(
        kernel,
        out_shape=jax.ShapeDtypeStruct((n_pad, f_out), out_dtype),
        grid_spec=pltpu.PrefetchScalarGridSpec(
            num_scalar_prefetch=0,
            grid=grid,
            in_specs=[
                pl.BlockSpec((tm, tk), lambda i, k: (i, k)),       # A streamed
                pl.BlockSpec((n_pad, f_in), lambda i, k: (0, 0)),  # X resident
                pl.BlockSpec((f_in, f_out), lambda i, k: (0, 0)),  # W resident
                pl.BlockSpec((1, f_out), lambda i, k: (0, 0)),     # b resident
            ],
            out_specs=pl.BlockSpec((tm, f_out), lambda i, k: (i, 0)),
            scratch_shapes=scratch_shapes,
        ),
        compiler_params=pltpu.CompilerParams(
            dimension_semantics=("parallel", "arbitrary"),
            vmem_limit_bytes=_VMEM_LIMIT,
        ),
        cost_estimate=pl.CostEstimate(
            flops=flops, transcendentals=0, bytes_accessed=bytes_accessed
        ),
    )(a, x, w, b)


# ---------------------------------------------------------------------------
# Kernel B (small graphs): both layers in one call, A resident in VMEM.
# ---------------------------------------------------------------------------
def _gcn_fused_kernel(a_ref, x_ref, w1_ref, b1_ref, w2_ref, b2_ref, o_ref):
    # NOTE: padded rows of h hold relu(b1) (possibly nonzero), but padded
    # *columns* of A_norm are zero, so they cannot contaminate real rows.
    xw1 = jnp.dot(
        x_ref[...], w1_ref[...], preferred_element_type=jnp.float32
    ).astype(jnp.bfloat16)
    h = jnp.dot(a_ref[...], xw1, preferred_element_type=jnp.float32) + b1_ref[...]
    h = jnp.maximum(h, 0.0).astype(jnp.bfloat16)
    xw2 = jnp.dot(
        h, w2_ref[...], preferred_element_type=jnp.float32
    ).astype(jnp.bfloat16)
    o_ref[...] = (
        jnp.dot(a_ref[...], xw2, preferred_element_type=jnp.float32) + b2_ref[...]
    )


def _gcn_fused_call(a, x, w1, b1, w2, b2):
    n_pad, f_in = x.shape
    hid = w1.shape[1]
    cls = w2.shape[1]

    flops = 2 * n_pad * (f_in * hid + n_pad * hid + hid * cls + n_pad * cls)
    bytes_accessed = (
        n_pad * n_pad * 2 + n_pad * f_in * 2
        + f_in * hid * 2 + hid * cls * 2 + (hid + cls) * 4
        + n_pad * cls * 4
    )

    def full_spec(shape):
        return pl.BlockSpec(shape, lambda i: (0, 0))

    return pl.pallas_call(
        _gcn_fused_kernel,
        out_shape=jax.ShapeDtypeStruct((n_pad, cls), jnp.float32),
        grid_spec=pltpu.PrefetchScalarGridSpec(
            num_scalar_prefetch=0,
            grid=(1,),
            in_specs=[
                full_spec((n_pad, n_pad)),   # A resident (read from HBM once)
                full_spec((n_pad, f_in)),
                full_spec((f_in, hid)),
                full_spec((1, hid)),
                full_spec((hid, cls)),
                full_spec((1, cls)),
            ],
            out_specs=full_spec((n_pad, cls)),
        ),
        compiler_params=pltpu.CompilerParams(
            dimension_semantics=("arbitrary",),
            vmem_limit_bytes=_VMEM_LIMIT,
        ),
        cost_estimate=pl.CostEstimate(
            flops=flops, transcendentals=0, bytes_accessed=bytes_accessed
        ),
    )(a, x, w1, b1, w2, b2)


# ---------------------------------------------------------------------------
# Glue: padding + forward passes
# ---------------------------------------------------------------------------
def _prepare_padded(x, edge_index, params, n_pad_multiple):
    n, f_in = x.shape
    hidden = params["w1"].shape[1]
    n_classes = params["w2"].shape[1]
    n_pad = _round_up(n, n_pad_multiple)
    f_in_pad = _round_up(f_in, _LANE)
    hid_pad = _round_up(hidden, _LANE)
    cls_pad = _round_up(n_classes, _LANE)

    a = build_normalized_adjacency(edge_index, n, dtype=jnp.float32)
    a_pad = _pad2d(a, n_pad, n_pad).astype(jnp.bfloat16)
    x_pad = _pad2d(x, n_pad, f_in_pad).astype(jnp.bfloat16)
    w1 = _pad2d(params["w1"], f_in_pad, hid_pad).astype(jnp.bfloat16)
    b1 = jnp.pad(params["b1"], (0, hid_pad - hidden)).reshape(1, hid_pad)
    b1 = b1.astype(jnp.float32)
    w2 = _pad2d(params["w2"], hid_pad, cls_pad).astype(jnp.bfloat16)
    b2 = jnp.pad(params["b2"], (0, cls_pad - n_classes)).reshape(1, cls_pad)
    b2 = b2.astype(jnp.float32)
    return a_pad, x_pad, w1, b1, w2, b2


def gcn_forward_fused(x, edge_index, params):
    """Small-graph path: both layers in one pallas_call, A resident in VMEM."""
    n = x.shape[0]
    n_classes = params["w2"].shape[1]
    a, xp, w1, b1, w2, b2 = _prepare_padded(x, edge_index, params, 256)
    out = _gcn_fused_call(a, xp, w1, b1, w2, b2)
    return out[:n, :n_classes]


def gcn_forward_tiled(x, edge_index, params, *, tm=512, tk=512):
    """General path: one fused layer kernel per GCNConv, A streamed per layer."""
    assert tm == tk, "node padding uses a single tile size (avoids tk>tm blowup)"
    n = x.shape[0]
    n_classes = params["w2"].shape[1]
    a, xp, w1, b1, w2, b2 = _prepare_padded(x, edge_index, params, tm)
    # Layer 1: h = ReLU(A (X W1) + b1) -> bf16 for the next MXU pass.
    h = gcn_layer(a, xp, w1, b1, apply_relu=True, out_dtype=jnp.bfloat16,
                  tm=tm, tk=tk)
    # Layer 2: out = A (h W2) + b2 -> f32 logits (accumulated in resident output).
    out = gcn_layer(a, h, w2, b2, apply_relu=False, out_dtype=jnp.float32,
                    tm=tm, tk=tk)
    return out[:n, :n_classes]


def gcn_forward(x, edge_index, params):
    if _round_up(x.shape[0], 256) <= _FUSED_A_MAX_NODES:
        return gcn_forward_fused(x, edge_index, params)
    return gcn_forward_tiled(x, edge_index, params)


# Pure-JAX reference mirroring the same bf16-input / f32-accumulate dataflow.
def gcn_reference(x, edge_index, params):
    n = x.shape[0]
    a = build_normalized_adjacency(edge_index, n, dtype=jnp.float32)
    a = a.astype(jnp.bfloat16)
    xb = x.astype(jnp.bfloat16)
    w1 = params["w1"].astype(jnp.bfloat16)
    w2 = params["w2"].astype(jnp.bfloat16)

    xw1 = jnp.dot(xb, w1, preferred_element_type=jnp.float32).astype(jnp.bfloat16)
    h = jnp.dot(a, xw1, preferred_element_type=jnp.float32) + params["b1"]
    h = jnp.maximum(h, 0.0).astype(jnp.bfloat16)
    xw2 = jnp.dot(h, w2, preferred_element_type=jnp.float32).astype(jnp.bfloat16)
    return jnp.dot(a, xw2, preferred_element_type=jnp.float32) + params["b2"]


if __name__ == "__main__":
    # Small synthetic graph consistent with the module:
    # N=1000 nodes, 50 features, hidden=16, 4 classes.
    NUM_NODES = 1000
    NUM_EDGES = 4096
    NUM_FEATURES = 50
    HIDDEN = 16
    NUM_CLASSES = 4

    key = jax.random.PRNGKey(0)
    kx, ke, kw1, kw2 = jax.random.split(key, 4)

    x = jax.random.normal(kx, (NUM_NODES, NUM_FEATURES), dtype=jnp.float32)
    edge_index = jax.random.randint(
        ke, (2, NUM_EDGES), minval=0, maxval=NUM_NODES, dtype=jnp.int32
    )

    def glorot(k, shape):
        limit = jnp.sqrt(6.0 / (shape[0] + shape[1]))
        return jax.random.uniform(
            k, shape, minval=-limit, maxval=limit, dtype=jnp.float32
        )

    params = {
        "w1": glorot(kw1, (NUM_FEATURES, HIDDEN)),
        "b1": jnp.zeros((HIDDEN,), dtype=jnp.float32),
        "w2": glorot(kw2, (HIDDEN, NUM_CLASSES)),
        "b2": jnp.zeros((NUM_CLASSES,), dtype=jnp.float32),
    }

    ref = jax.block_until_ready(gcn_reference(x, edge_index, params))

    # Primary path: small graph -> fused single kernel, A read from HBM once.
    out = jax.block_until_ready(jax.jit(gcn_forward)(x, edge_index, params))
    assert out.shape == (NUM_NODES, NUM_CLASSES)
    assert jnp.allclose(out, ref, atol=5e-2, rtol=5e-2)

    # Also exercise the general tiled path (used when A is too big for VMEM).
    out_tiled = jax.block_until_ready(
        jax.jit(gcn_forward_tiled)(x, edge_index, params)
    )
    assert out_tiled.shape == (NUM_NODES, NUM_CLASSES)
    assert jnp.allclose(out_tiled, ref, atol=5e-2, rtol=5e-2)

    print("KERNEL_OK")
</pallas_src>

<mosaic_0001>
module attributes {stable_mosaic.version = 11 : i64} {
  func.func @_gcn_fused_kernel(%arg0: i32, %arg1: memref<1024x1024xbf16, #tpu.memory_space<vmem>>, %arg2: memref<1024x128xbf16, #tpu.memory_space<vmem>>, %arg3: memref<128x128xbf16, #tpu.memory_space<vmem>>, %arg4: memref<1x128xf32, #tpu.memory_space<vmem>>, %arg5: memref<128x128xbf16, #tpu.memory_space<vmem>>, %arg6: memref<1x128xf32, #tpu.memory_space<vmem>>, %arg7: memref<1024x128xf32, #tpu.memory_space<vmem>>) attributes {dimension_semantics = [#tpu.dimension_semantics<arbitrary>], iteration_bounds = array<i64: 1>, scalar_prefetch = 0 : i64, scratch_operands = 0 : i64, tpu.core_type = #tpu.core_type<tc>, window_params = [{pipeline_mode = #tpu.pipeline_mode<synchronous>, transform_indices = @transform_0, window_bounds = array<i64: 1024, 1024>}, {pipeline_mode = #tpu.pipeline_mode<synchronous>, transform_indices = @transform_1, window_bounds = array<i64: 1024, 128>}, {pipeline_mode = #tpu.pipeline_mode<synchronous>, transform_indices = @transform_2, window_bounds = array<i64: 128, 128>}, {pipeline_mode = #tpu.pipeline_mode<synchronous>, transform_indices = @transform_3, window_bounds = array<i64: 1, 128>}, {pipeline_mode = #tpu.pipeline_mode<synchronous>, transform_indices = @transform_4, window_bounds = array<i64: 128, 128>}, {pipeline_mode = #tpu.pipeline_mode<synchronous>, transform_indices = @transform_5, window_bounds = array<i64: 1, 128>}, {pipeline_mode = #tpu.pipeline_mode<synchronous>, transform_indices = @transform_6, window_bounds = array<i64: 1024, 128>}]} {
    %c0 = arith.constant 0 : index
    %c0_0 = arith.constant 0 : index
    %0 = vector.load %arg2[%c0, %c0_0] : memref<1024x128xbf16, #tpu.memory_space<vmem>>, vector<1024x128xbf16>
    %c0_1 = arith.constant 0 : index
    %c0_2 = arith.constant 0 : index
    %1 = vector.load %arg3[%c0_1, %c0_2] : memref<128x128xbf16, #tpu.memory_space<vmem>>, vector<128x128xbf16>
    %cst = arith.constant dense<0.000000e+00> : vector<1024x128xf32>
    %2 = tpu.matmul %0, %1, %cst {dimension_numbers = #tpu.dot_dimension_numbers<[1], [0], [0], [1], [0, 0, 1, 1], [], []>} : vector<1024x128xbf16>, vector<128x128xbf16>, vector<1024x128xf32> -> vector<1024x128xf32>
    %3 = arith.truncf %2 : vector<1024x128xf32> to vector<1024x128xbf16>
    %c0_3 = arith.constant 0 : index
    %c0_4 = arith.constant 0 : index
    %4 = vector.load %arg1[%c0_3, %c0_4] : memref<1024x1024xbf16, #tpu.memory_space<vmem>>, vector<1024x1024xbf16>
    %cst_5 = arith.constant dense<0.000000e+00> : vector<1024x128xf32>
    %5 = tpu.matmul %4, %3, %cst_5 {dimension_numbers = #tpu.dot_dimension_numbers<[1], [0], [0], [1], [0, 0, 1, 1], [], []>} : vector<1024x1024xbf16>, vector<1024x128xbf16>, vector<1024x128xf32> -> vector<1024x128xf32>
    %c0_6 = arith.constant 0 : index
    %c0_7 = arith.constant 0 : index
    %6 = vector.load %arg4[%c0_6, %c0_7] : memref<1x128xf32, #tpu.memory_space<vmem>>, vector<1x128xf32>
    %7 = vector.broadcast %6 : vector<1x128xf32> to vector<1024x128xf32>
    %8 = arith.addf %5, %7 : vector<1024x128xf32>
    %cst_8 = arith.constant 0.000000e+00 : f32
    %9 = vector.broadcast %cst_8 : f32 to vector<1024x128xf32>
    %10 = arith.maximumf %8, %9 : vector<1024x128xf32>
    %11 = arith.truncf %10 : vector<1024x128xf32> to vector<1024x128xbf16>
    %c0_9 = arith.constant 0 : index
    %c0_10 = arith.constant 0 : index
    %12 = vector.load %arg5[%c0_9, %c0_10] : memref<128x128xbf16, #tpu.memory_space<vmem>>, vector<128x128xbf16>
    %cst_11 = arith.constant dense<0.000000e+00> : vector<1024x128xf32>
    %13 = tpu.matmul %11, %12, %cst_11 {dimension_numbers = #tpu.dot_dimension_numbers<[1], [0], [0], [1], [0, 0, 1, 1], [], []>} : vector<1024x128xbf16>, vector<128x128xbf16>, vector<1024x128xf32> -> vector<1024x128xf32>
    %14 = arith.truncf %13 : vector<1024x128xf32> to vector<1024x128xbf16>
    %c0_12 = arith.constant 0 : index
    %c0_13 = arith.constant 0 : index
    %15 = vector.load %arg1[%c0_12, %c0_13] : memref<1024x1024xbf16, #tpu.memory_space<vmem>>, vector<1024x1024xbf16>
    %cst_14 = arith.constant dense<0.000000e+00> : vector<1024x128xf32>
    %16 = tpu.matmul %15, %14, %cst_14 {dimension_numbers = #tpu.dot_dimension_numbers<[1], [0], [0], [1], [0, 0, 1, 1], [], []>} : vector<1024x1024xbf16>, vector<1024x128xbf16>, vector<1024x128xf32> -> vector<1024x128xf32>
    %c0_15 = arith.constant 0 : index
    %c0_16 = arith.constant 0 : index
    %17 = vector.load %arg6[%c0_15, %c0_16] : memref<1x128xf32, #tpu.memory_space<vmem>>, vector<1x128xf32>
    %18 = vector.broadcast %17 : vector<1x128xf32> to vector<1024x128xf32>
    %19 = arith.addf %16, %18 : vector<1024x128xf32>
    %c0_17 = arith.constant 0 : index
    %c0_18 = arith.constant 0 : index
    %20 = vector.load %arg7[%c0_17, %c0_18] : memref<1024x128xf32, #tpu.memory_space<vmem>>, vector<1024x128xf32>
    tpu.vector_store %arg7[%c0_17, %c0_18], %19 {strides = array<i32>} : memref<1024x128xf32, #tpu.memory_space<vmem>>, vector<1024x128xf32>,
    return
  }
  func.func @transform_0(%arg0: i32) -> (i32, i32) {
    %c0_i32 = arith.constant 0 : i32
    %c0_i32_0 = arith.constant 0 : i32
    %c0_i32_1 = arith.constant 0 : i32
    return %c0_i32, %c0_i32_0 : i32, i32
  }
  func.func @transform_1(%arg0: i32) -> (i32, i32) {
    %c0_i32 = arith.constant 0 : i32
    %c0_i32_0 = arith.constant 0 : i32
    %c0_i32_1 = arith.constant 0 : i32
    return %c0_i32, %c0_i32_0 : i32, i32
  }
  func.func @transform_2(%arg0: i32) -> (i32, i32) {
    %c0_i32 = arith.constant 0 : i32
    %c0_i32_0 = arith.constant 0 : i32
    %c0_i32_1 = arith.constant 0 : i32
    return %c0_i32, %c0_i32_0 : i32, i32
  }
  func.func @transform_3(%arg0: i32) -> (i32, i32) {
    %c0_i32 = arith.constant 0 : i32
    %c0_i32_0 = arith.constant 0 : i32
    %c0_i32_1 = arith.constant 0 : i32
    return %c0_i32, %c0_i32_0 : i32, i32
  }
  func.func @transform_4(%arg0: i32) -> (i32, i32) {
    %c0_i32 = arith.constant 0 : i32
    %c0_i32_0 = arith.constant 0 : i32
    %c0_i32_1 = arith.constant 0 : i32
    return %c0_i32, %c0_i32_0 : i32, i32
  }
  func.func @transform_5(%arg0: i32) -> (i32, i32) {
    %c0_i32 = arith.constant 0 : i32
    %c0_i32_0 = arith.constant 0 : i32
    %c0_i32_1 = arith.constant 0 : i32
    return %c0_i32, %c0_i32_0 : i32, i32
  }
  func.func @transform_6(%arg0: i32) -> (i32, i32) {
    %c0_i32 = arith.constant 0 : i32
    %c0_i32_0 = arith.constant 0 : i32
    %c0_i32_1 = arith.constant 0 : i32
    return %c0_i32, %c0_i32_0 : i32, i32
  }
}

</mosaic_0001>

<llo_original>
// kernel: gcn_forward.1
$region0: #{gcn_forward.1}
  #allocation0 [shape = 'u32[]', space=smem, size = 0x4, offset = 0x4, fixed_abs, tag = 'smem constant byte address 0x4 - core index']
  #allocation1 [shape = 'u32[72,128]{1,0:T(1,128)}', space=vmem, size = 0x9000, scoped, tag = 'internal scratch']
  %s0 = inlined_call_operand.vmem [shape: bf16[1024,1024], index: 0, kind: input, shape index: {}]
  %s1 = inlined_call_operand.vmem [shape: bf16[1024,128], index: 1, kind: input, shape index: {}]
  %s2 = inlined_call_operand.vmem [shape: bf16[128,128], index: 2, kind: input, shape index: {}]
  %s3 = inlined_call_operand.vmem [shape: f32[1,128], index: 3, kind: input, shape index: {}]
  %s4 = inlined_call_operand.vmem [shape: bf16[128,128], index: 4, kind: input, shape index: {}]
  %s5 = inlined_call_operand.vmem [shape: f32[1,128], index: 5, kind: input, shape index: {}]
  %s6 = inlined_call_operand.vmem [shape: f32[1024,128], index: 6, kind: output, shape index: {}]
  %s7 = sld [smem:[#allocation0]]
  $region34: #{gcn_forward.1} parent=0
    _
  %s9 = ssub.s32 1, %s7
  %s10 = scalar_select 0, %s9, %s7
  // Predicated region
  $region2: #{gcn_forward.1} parent=0 // pred_check
    _
  $region3: #{gcn_forward.1} parent=0 // pred_check_branch
    %12 = sbr.rel (0) target = $region5
  $region4: #{gcn_forward.1} parent=0 // pred_region
    _
  $region5: #{gcn_forward.1} parent=0 // pred_fallthru
    _
  // Predicated region
  $region6: #{gcn_forward.1} parent=0 // pred_check
    _
  $region7: #{gcn_forward.1} parent=0 // pred_check_branch
    %14 = sbr.rel (0) target = $region9
  $region8: #{gcn_forward.1} parent=0 // pred_region
    _
  $region9: #{gcn_forward.1} parent=0 // pred_fallthru
    _
  // Predicated region
  $region10: #{gcn_forward.1} parent=0 // pred_check
    _
  $region11: #{gcn_forward.1} parent=0 // pred_check_branch
    %16 = sbr.rel (0) target = $region13
  $region12: #{gcn_forward.1} parent=0 // pred_region
    _
  $region13: #{gcn_forward.1} parent=0 // pred_fallthru
    _
  // Predicated region
  $region14: #{gcn_forward.1} parent=0 // pred_check
    _
  $region15: #{gcn_forward.1} parent=0 // pred_check_branch
    %18 = sbr.rel (0) target = $region17
  $region16: #{gcn_forward.1} parent=0 // pred_region
    _
  $region17: #{gcn_forward.1} parent=0 // pred_fallthru
    _
  // Predicated region
  $region18: #{gcn_forward.1} parent=0 // pred_check
    _
  $region19: #{gcn_forward.1} parent=0 // pred_check_branch
    %20 = sbr.rel (0) target = $region21
  $region20: #{gcn_forward.1} parent=0 // pred_region
    _
  $region21: #{gcn_forward.1} parent=0 // pred_fallthru
    _
  // Predicated region
  $region22: #{gcn_forward.1} parent=0 // pred_check
    _
  $region23: #{gcn_forward.1} parent=0 // pred_check_branch
    %22 = sbr.rel (0) target = $region25
  $region24: #{gcn_forward.1} parent=0 // pred_region
    _
  $region25: #{gcn_forward.1} parent=0 // pred_fallthru
    _
  %v23 = vld [vmem:[%s1] sm:$0xf]
  %v24 = vld [vmem:[%s1 + $0x4] sm:$0xf]
  %v25 = vld [vmem:[%s1 + $0x8] sm:$0xf]
  %v26 = vld [vmem:[%s1 + $0xc] sm:$0xf]
  %v27 = vld [vmem:[%s1 + $0x10] sm:$0xf]
  %v28 = vld [vmem:[%s1 + $0x14] sm:$0xf]
  %v29 = vld [vmem:[%s1 + $0x18] sm:$0xf]
  %v30 = vld [vmem:[%s1 + $0x1c] sm:$0xf]
  %v31 = vld [vmem:[%s1 + $0x20] sm:$0xf]
  %v32 = vld [vmem:[%s1 + $0x24] sm:$0xf]
  %v33 = vld [vmem:[%s1 + $0x28] sm:$0xf]
  %v34 = vld [vmem:[%s1 + $0x2c] sm:$0xf]
  %v35 = vld [vmem:[%s1 + $0x30] sm:$0xf]
  %v36 = vld [vmem:[%s1 + $0x34] sm:$0xf]
  %v37 = vld [vmem:[%s1 + $0x38] sm:$0xf]
  %v38 = vld [vmem:[%s1 + $0x3c] sm:$0xf]
  %v39 = vld [vmem:[%s1 + $0x40] sm:$0xf]
  %v40 = vld [vmem:[%s1 + $0x44] sm:$0xf]
  %v41 = vld [vmem:[%s1 + $0x48] sm:$0xf]
  %v42 = vld [vmem:[%s1 + $0x4c] sm:$0xf]
  %v43 = vld [vmem:[%s1 + $0x50] sm:$0xf]
  %v44 = vld [vmem:[%s1 + $0x54] sm:$0xf]
  %v45 = vld [vmem:[%s1 + $0x58] sm:$0xf]
  %v46 = vld [vmem:[%s1 + $0x5c] sm:$0xf]
  %v47 = vld [vmem:[%s1 + $0x60] sm:$0xf]
  %v48 = vld [vmem:[%s1 + $0x64] sm:$0xf]
  %v49 = vld [vmem:[%s1 + $0x68] sm:$0xf]
  %v50 = vld [vmem:[%s1 + $0x6c] sm:$0xf]
  %v51 = vld [vmem:[%s1 + $0x70] sm:$0xf]
  %v52 = vld [vmem:[%s1 + $0x74] sm:$0xf]
  %v53 = vld [vmem:[%s1 + $0x78] sm:$0xf]
  %v54 = vld [vmem:[%s1 + $0x7c] sm:$0xf]
  %v55 = vld [vmem:[%s1 + $0x80] sm:$0xf]
  %v56 = vld [vmem:[%s1 + $0x84] sm:$0xf]
  %v57 = vld [vmem:[%s1 + $0x88] sm:$0xf]
  %v58 = vld [vmem:[%s1 + $0x8c] sm:$0xf]
  %v59 = vld [vmem:[%s1 + $0x90] sm:$0xf]
  %v60 = vld [vmem:[%s1 + $0x94] sm:$0xf]
  %v61 = vld [vmem:[%s1 + $0x98] sm:$0xf]
  %v62 = vld [vmem:[%s1 + $0x9c] sm:$0xf]
  %v63 = vld [vmem:[%s1 + $0xa0] sm:$0xf]
  %v64 = vld [vmem:[%s1 + $0xa4] sm:$0xf]
  %v65 = vld [vmem:[%s1 + $0xa8] sm:$0xf]
  %v66 = vld [vmem:[%s1 + $0xac] sm:$0xf]
  %v67 = vld [vmem:[%s1 + $0xb0] sm:$0xf]
  %v68 = vld [vmem:[%s1 + $0xb4] sm:$0xf]
  %v69 = vld [vmem:[%s1 + $0xb8] sm:$0xf]
  %v70 = vld [vmem:[%s1 + $0xbc] sm:$0xf]
  %v71 = vld [vmem:[%s1 + $0xc0] sm:$0xf]
  %v72 = vld [vmem:[%s1 + $0xc4] sm:$0xf]
  %v73 = vld [vmem:[%s1 + $0xc8] sm:$0xf]
  %v74 = vld [vmem:[%s1 + $0xcc] sm:$0xf]
  %v75 = vld [vmem:[%s1 + $0xd0] sm:$0xf]
  %v76 = vld [vmem:[%s1 + $0xd4] sm:$0xf]
  %v77 = vld [vmem:[%s1 + $0xd8] sm:$0xf]
  %v78 = vld [vmem:[%s1 + $0xdc] sm:$0xf]
  %v79 = vld [vmem:[%s1 + $0xe0] sm:$0xf]
  %v80 = vld [vmem:[%s1 + $0xe4] sm:$0xf]
  %v81 = vld [vmem:[%s1 + $0xe8] sm:$0xf]
  %v82 = vld [vmem:[%s1 + $0xec] sm:$0xf]
  %v83 = vld [vmem:[%s1 + $0xf0] sm:$0xf]
  %v84 = vld [vmem:[%s1 + $0xf4] sm:$0xf]
  %v85 = vld [vmem:[%s1 + $0xf8] sm:$0xf]
  %v86 = vld [vmem:[%s1 + $0xfc] sm:$0xf]
  %v87 = vld [vmem:[%s1 + $0x100] sm:$0xf]
  %v88 = vld [vmem:[%s1 + $0x104] sm:$0xf]
  %v89 = vld [vmem:[%s1 + $0x108] sm:$0xf]
  %v90 = vld [vmem:[%s1 + $0x10c] sm:$0xf]
  %v91 = vld [vmem:[%s1 + $0x110] sm:$0xf]
  %v92 = vld [vmem:[%s1 + $0x114] sm:$0xf]
  %v93 = vld [vmem:[%s1 + $0x118] sm:$0xf]
  %v94 = vld [vmem:[%s1 + $0x11c] sm:$0xf]
  %v95 = vld [vmem:[%s1 + $0x120] sm:$0xf]
  %v96 = vld [vmem:[%s1 + $0x124] sm:$0xf]
  %v97 = vld [vmem:[%s1 + $0x128] sm:$0xf]
  %v98 = vld [vmem:[%s1 + $0x12c] sm:$0xf]
  %v99 = vld [vmem:[%s1 + $0x130] sm:$0xf]
  %v100 = vld [vmem:[%s1 + $0x134] sm:$0xf]
  %v101 = vld [vmem:[%s1 + $0x138] sm:$0xf]
  %v102 = vld [vmem:[%s1 + $0x13c] sm:$0xf]
  %v103 = vld [vmem:[%s1 + $0x140] sm:$0xf]
  %v104 = vld [vmem:[%s1 + $0x144] sm:$0xf]
  %v105 = vld [vmem:[%s1 + $0x148] sm:$0xf]
  %v106 = vld [vmem:[%s1 + $0x14c] sm:$0xf]
  %v107 = vld [vmem:[%s1 + $0x150] sm:$0xf]
  %v108 = vld [vmem:[%s1 + $0x154] sm:$0xf]
  %v109 = vld [vmem:[%s1 + $0x158] sm:$0xf]
  %v110 = vld [vmem:[%s1 + $0x15c] sm:$0xf]
  %v111 = vld [vmem:[%s1 + $0x160] sm:$0xf]
  %v112 = vld [vmem:[%s1 + $0x164] sm:$0xf]
  %v113 = vld [vmem:[%s1 + $0x168] sm:$0xf]
  %v114 = vld [vmem:[%s1 + $0x16c] sm:$0xf]
  %v115 = vld [vmem:[%s1 + $0x170] sm:$0xf]
  %v116 = vld [vmem:[%s1 + $0x174] sm:$0xf]
  %v117 = vld [vmem:[%s1 + $0x178] sm:$0xf]
  %v118 = vld [vmem:[%s1 + $0x17c] sm:$0xf]
  %v119 = vld [vmem:[%s1 + $0x180] sm:$0xf]
  %v120 = vld [vmem:[%s1 + $0x184] sm:$0xf]
  %v121 = vld [vmem:[%s1 + $0x188] sm:$0xf]
  %v122 = vld [vmem:[%s1 + $0x18c] sm:$0xf]
  %v123 = vld [vmem:[%s1 + $0x190] sm:$0xf]
  %v124 = vld [vmem:[%s1 + $0x194] sm:$0xf]
  %v125 = vld [vmem:[%s1 + $0x198] sm:$0xf]
  %v126 = vld [vmem:[%s1 + $0x19c] sm:$0xf]
  %v127 = vld [vmem:[%s1 + $0x1a0] sm:$0xf]
  %v128 = vld [vmem:[%s1 + $0x1a4] sm:$0xf]
  %v129 = vld [vmem:[%s1 + $0x1a8] sm:$0xf]
  %v130 = vld [vmem:[%s1 + $0x1ac] sm:$0xf]
  %v131 = vld [vmem:[%s1 + $0x1b0] sm:$0xf]
  %v132 = vld [vmem:[%s1 + $0x1b4] sm:$0xf]
  %v133 = vld [vmem:[%s1 + $0x1b8] sm:$0xf]
  %v134 = vld [vmem:[%s1 + $0x1bc] sm:$0xf]
  %v135 = vld [vmem:[%s1 + $0x1c0] sm:$0xf]
  %v136 = vld [vmem:[%s1 + $0x1c4] sm:$0xf]
  %v137 = vld [vmem:[%s1 + $0x1c8] sm:$0xf]
  %v138 = vld [vmem:[%s1 + $0x1cc] sm:$0xf]
  %v139 = vld [vmem:[%s1 + $0x1d0] sm:$0xf]
  %v140 = vld [vmem:[%s1 + $0x1d4] sm:$0xf]
  %v141 = vld [vmem:[%s1 + $0x1d8] sm:$0xf]
  %v142 = vld [vmem:[%s1 + $0x1dc] sm:$0xf]
  %v143 = vld [vmem:[%s1 + $0x1e0] sm:$0xf]
  %v144 = vld [vmem:[%s1 + $0x1e4] sm:$0xf]
  %v145 = vld [vmem:[%s1 + $0x1e8] sm:$0xf]
  %v146 = vld [vmem:[%s1 + $0x1ec] sm:$0xf]
  %v147 = vld [vmem:[%s1 + $0x1f0] sm:$0xf]
  %v148 = vld [vmem:[%s1 + $0x1f4] sm:$0xf]
  %v149 = vld [vmem:[%s1 + $0x1f8] sm:$0xf]
  %v150 = vld [vmem:[%s1 + $0x1fc] sm:$0xf]
  %v151 = vld [vmem:[%s2] sm:$0xf]
  %v152 = vld [vmem:[%s2 + $0x4] sm:$0xf]
  %v153 = vld [vmem:[%s2 + $0x8] sm:$0xf]
  %v154 = vld [vmem:[%s2 + $0xc] sm:$0xf]
  %v155 = vld [vmem:[%s2 + $0x10] sm:$0xf]
  %v156 = vld [vmem:[%s2 + $0x14] sm:$0xf]
  %v157 = vld [vmem:[%s2 + $0x18] sm:$0xf]
  %v158 = vld [vmem:[%s2 + $0x1c] sm:$0xf]
  %v159 = vld [vmem:[%s2 + $0x20] sm:$0xf]
  %v160 = vld [vmem:[%s2 + $0x24] sm:$0xf]
  %v161 = vld [vmem:[%s2 + $0x28] sm:$0xf]
  %v162 = vld [vmem:[%s2 + $0x2c] sm:$0xf]
  %v163 = vld [vmem:[%s2 + $0x30] sm:$0xf]
  %v164 = vld [vmem:[%s2 + $0x34] sm:$0xf]
  %v165 = vld [vmem:[%s2 + $0x38] sm:$0xf]
  %v166 = vld [vmem:[%s2 + $0x3c] sm:$0xf]
  %v295 = vunpack.c.l.b16 %v23
  %v296 = vunpack.c.l.b16 %v24
  %v297 = vunpack.c.l.b16 %v25
  %v298 = vunpack.c.l.b16 %v26
  %v299 = vunpack.c.l.b16 %v27
  %v300 = vunpack.c.l.b16 %v28
  %v301 = vunpack.c.l.b16 %v29
  %v302 = vunpack.c.l.b16 %v30
  %v303 = vunpack.c.l.b16 %v31
  %v304 = vunpack.c.l.b16 %v32
  %v305 = vunpack.c.l.b16 %v33
  %v306 = vunpack.c.l.b16 %v34
  %v307 = vunpack.c.l.b16 %v35
  %v308 = vunpack.c.l.b16 %v36
  %v309 = vunpack.c.l.b16 %v37
  %v310 = vunpack.c.l.b16 %v38
  %v311 = vunpack.c.l.b16 %v39
  %v312 = vunpack.c.l.b16 %v40
  %v313 = vunpack.c.l.b16 %v41
  %v314 = vunpack.c.l.b16 %v42
  %v315 = vunpack.c.l.b16 %v43
  %v316 = vunpack.c.l.b16 %v44
  %v317 = vunpack.c.l.b16 %v45
  %v318 = vunpack.c.l.b16 %v46
  %v319 = vunpack.c.l.b16 %v47
  %v320 = vunpack.c.l.b16 %v48
  %v321 = vunpack.c.l.b16 %v49
  %v322 = vunpack.c.l.b16 %v50
  %v323 = vunpack.c.l.b16 %v51
  %v324 = vunpack.c.l.b16 %v52
  %v325 = vunpack.c.l.b16 %v53
  %v326 = vunpack.c.l.b16 %v54
  %v327 = vunpack.c.l.b16 %v55
  %v328 = vunpack.c.l.b16 %v56
  %v329 = vunpack.c.l.b16 %v57
  %v330 = vunpack.c.l.b16 %v58
  %v331 = vunpack.c.l.b16 %v59
  %v332 = vunpack.c.l.b16 %v60
  %v333 = vunpack.c.l.b16 %v61
  %v334 = vunpack.c.l.b16 %v62
  %v335 = vunpack.c.l.b16 %v63
  %v336 = vunpack.c.l.b16 %v64
  %v337 = vunpack.c.l.b16 %v65
  %v338 = vunpack.c.l.b16 %v66
  %v339 = vunpack.c.l.b16 %v67
  %v340 = vunpack.c.l.b16 %v68
  %v341 = vunpack.c.l.b16 %v69
  %v342 = vunpack.c.l.b16 %v70
  %v343 = vunpack.c.l.b16 %v71
  %v344 = vunpack.c.l.b16 %v72
  %v345 = vunpack.c.l.b16 %v73
  %v346 = vunpack.c.l.b16 %v74
  %v347 = vunpack.c.l.b16 %v75
  %v348 = vunpack.c.l.b16 %v76
  %v349 = vunpack.c.l.b16 %v77
  %v350 = vunpack.c.l.b16 %v78
  %v351 = vunpack.c.l.b16 %v79
  %v352 = vunpack.c.l.b16 %v80
  %v353 = vunpack.c.l.b16 %v81
  %v354 = vunpack.c.l.b16 %v82
  %v355 = vunpack.c.l.b16 %v83
  %v356 = vunpack.c.l.b16 %v84
  %v357 = vunpack.c.l.b16 %v85
  %v358 = vunpack.c.l.b16 %v86
  %v359 = vunpack.c.l.b16 %v87
  %v360 = vunpack.c.l.b16 %v88
  %v361 = vunpack.c.l.b16 %v89
  %v362 = vunpack.c.l.b16 %v90
  %v363 = vunpack.c.l.b16 %v91
  %v364 = vunpack.c.l.b16 %v92
  %v365 = vunpack.c.l.b16 %v93
  %v366 = vunpack.c.l.b16 %v94
  %v367 = vunpack.c.l.b16 %v95
  %v368 = vunpack.c.l.b16 %v96
  %v369 = vunpack.c.l.b16 %v97
  %v370 = vunpack.c.l.b16 %v98
  %v371 = vunpack.c.l.b16 %v99
  %v372 = vunpack.c.l.b16 %v100
  %v373 = vunpack.c.l.b16 %v101
  %v374 = vunpack.c.l.b16 %v102
  %v375 = vunpack.c.l.b16 %v103
  %v376 = vunpack.c.l.b16 %v104
  %v377 = vunpack.c.l.b16 %v105
  %v378 = vunpack.c.l.b16 %v106
  %v379 = vunpack.c.l.b16 %v107
  %v380 = vunpack.c.l.b16 %v108
  %v381 = vunpack.c.l.b16 %v109
  %v382 = vunpack.c.l.b16 %v110
  %v383 = vunpack.c.l.b16 %v111
  %v384 = vunpack.c.l.b16 %v112
  %v385 = vunpack.c.l.b16 %v113
  %v386 = vunpack.c.l.b16 %v114
  %v387 = vunpack.c.l.b16 %v115
  %v388 = vunpack.c.l.b16 %v116
  %v389 = vunpack.c.l.b16 %v117
  %v390 = vunpack.c.l.b16 %v118
  %v391 = vunpack.c.l.b16 %v119
  %v392 = vunpack.c.l.b16 %v120
  %v393 = vunpack.c.l.b16 %v121
  %v394 = vunpack.c.l.b16 %v122
  %v395 = vunpack.c.l.b16 %v123
  %v396 = vunpack.c.l.b16 %v124
  %v397 = vunpack.c.l.b16 %v125
  %v398 = vunpack.c.l.b16 %v126
  %v399 = vunpack.c.l.b16 %v127
  %v400 = vunpack.c.l.b16 %v128
  %v401 = vunpack.c.l.b16 %v129
  %v402 = vunpack.c.l.b16 %v130
  %v403 = vunpack.c.l.b16 %v131
  %v404 = vunpack.c.l.b16 %v132
  %v405 = vunpack.c.l.b16 %v133
  %v406 = vunpack.c.l.b16 %v134
  %v407 = vunpack.c.l.b16 %v135
  %v408 = vunpack.c.l.b16 %v136
  %v409 = vunpack.c.l.b16 %v137
  %v410 = vunpack.c.l.b16 %v138
  %v411 = vunpack.c.l.b16 %v139
  %v412 = vunpack.c.l.b16 %v140
  %v413 = vunpack.c.l.b16 %v141
  %v414 = vunpack.c.l.b16 %v142
  %v415 = vunpack.c.l.b16 %v143
  %v416 = vunpack.c.l.b16 %v144
  %v417 = vunpack.c.l.b16 %v145
  %v418 = vunpack.c.l.b16 %v146
  %v419 = vunpack.c.l.b16 %v147
  %v420 = vunpack.c.l.b16 %v148
  %v421 = vunpack.c.l.b16 %v149
  %v422 = vunpack.c.l.b16 %v150
  %v423 = vpack.c.b16 %v296, %v295
  %v424 = vpack.c.b16 %v298, %v297
  %v425 = vpack.c.b16 %v300, %v299
  %v426 = vpack.c.b16 %v302, %v301
  %v427 = vpack.c.b16 %v304, %v303
  %v428 = vpack.c.b16 %v306, %v305
  %v429 = vpack.c.b16 %v308, %v307
  %v430 = vpack.c.b16 %v310, %v309
  %v431 = vpack.c.b16 %v312, %v311
  %v432 = vpack.c.b16 %v314, %v313
  %v433 = vpack.c.b16 %v316, %v315
  %v434 = vpack.c.b16 %v318, %v317
  %v435 = vpack.c.b16 %v320, %v319
  %v436 = vpack.c.b16 %v322, %v321
  %v437 = vpack.c.b16 %v324, %v323
  %v438 = vpack.c.b16 %v326, %v325
  %v439 = vpack.c.b16 %v328, %v327
  %v440 = vpack.c.b16 %v330, %v329
  %v441 = vpack.c.b16 %v332, %v331
  %v442 = vpack.c.b16 %v334, %v333
  %v443 = vpack.c.b16 %v336, %v335
  %v444 = vpack.c.b16 %v338, %v337
  %v445 = vpack.c.b16 %v340, %v339
  %v446 = vpack.c.b16 %v342, %v341
  %v447 = vpack.c.b16 %v344, %v343
  %v448 = vpack.c.b16 %v346, %v345
  %v449 = vpack.c.b16 %v348, %v347
  %v450 = vpack.c.b16 %v350, %v349
  %v451 = vpack.c.b16 %v352, %v351
  %v452 = vpack.c.b16 %v354, %v353
  %v453 = vpack.c.b16 %v356, %v355
  %v454 = vpack.c.b16 %v358, %v357
  %v455 = vpack.c.b16 %v360, %v359
  %v456 = vpack.c.b16 %v362, %v361
  %v457 = vpack.c.b16 %v364, %v363
  %v458 = vpack.c.b16 %v366, %v365
  %v459 = vpack.c.b16 %v368, %v367
  %v460 = vpack.c.b16 %v370, %v369
  %v461 = vpack.c.b16 %v372, %v371
  %v462 = vpack.c.b16 %v374, %v373
  %v463 = vpack.c.b16 %v376, %v375
  %v464 = vpack.c.b16 %v378, %v377
  %v465 = vpack.c.b16 %v380, %v379
  %v466 = vpack.c.b16 %v382, %v381
  %v467 = vpack.c.b16 %v384, %v383
  %v468 = vpack.c.b16 %v386, %v385
  %v469 = vpack.c.b16 %v388, %v387
  %v470 = vpack.c.b16 %v390, %v389
  %v471 = vpack.c.b16 %v392, %v391
  %v472 = vpack.c.b16 %v394, %v393
  %v473 = vpack.c.b16 %v396, %v395
  %v474 = vpack.c.b16 %v398, %v397
  %v475 = vpack.c.b16 %v400, %v399
  %v476 = vpack.c.b16 %v402, %v401
  %v477 = vpack.c.b16 %v404, %v403
  %v478 = vpack.c.b16 %v406, %v405
  %v479 = vpack.c.b16 %v408, %v407
  %v480 = vpack.c.b16 %v410, %v409
  %v481 = vpack.c.b16 %v412, %v411
  %v482 = vpack.c.b16 %v414, %v413
  %v483 = vpack.c.b16 %v416, %v415
  %v484 = vpack.c.b16 %v418, %v417
  %v485 = vpack.c.b16 %v420, %v419
  %v486 = vpack.c.b16 %v422, %v421
  %v567 = vunpack.c.l.b16 %v151
  %v568 = vunpack.c.l.b16 %v152
  %v569 = vunpack.c.l.b16 %v153
  %v570 = vunpack.c.l.b16 %v154
  %v571 = vunpack.c.l.b16 %v155
  %v572 = vunpack.c.l.b16 %v156
  %v573 = vunpack.c.l.b16 %v157
  %v574 = vunpack.c.l.b16 %v158
  %v575 = vunpack.c.l.b16 %v159
  %v576 = vunpack.c.l.b16 %v160
  %v577 = vunpack.c.l.b16 %v161
  %v578 = vunpack.c.l.b16 %v162
  %v579 = vunpack.c.l.b16 %v163
  %v580 = vunpack.c.l.b16 %v164
  %v581 = vunpack.c.l.b16 %v165
  %v582 = vunpack.c.l.b16 %v166
  %v583 = vpack.c.b16 %v568, %v567
  %v584 = vpack.c.b16 %v570, %v569
  %v585 = vpack.c.b16 %v572, %v571
  %v586 = vpack.c.b16 %v574, %v573
  %v587 = vpack.c.b16 %v576, %v575
  %v588 = vpack.c.b16 %v578, %v577
  %v589 = vpack.c.b16 %v580, %v579
  %v590 = vpack.c.b16 %v582, %v581
  %599 = vmatpush.bf16.msra.mxu0 %v590
  %600 = vmatpush.bf16.msra.mxu0 %v589
  %601 = vmatpush.bf16.msra.mxu0 %v588
  %602 = vmatpush.bf16.msra.mxu0 %v587
  %603 = vmatpush.bf16.msra.mxu0 %v586
  %604 = vmatpush.bf16.msra.mxu0 %v585
  %605 = vmatpush.bf16.msra.mxu0 %v584
  %606 = vmatpush.bf16.msra.mxu0 %v583
  %607 = vmatmul.bf16.gmra.mxu0 %v423
  %v608 = vpop.f32.mrf.mxu0
  %v609 = vadd.f32 0.0, %v608
  %v610 = vpop.f32.mrf.mxu0
  %v611 = vadd.f32 0.0, %v610
  %612 = vmatmul.bf16.gmra.mxu0 %v424
  %v613 = vpop.f32.mrf.mxu0
  %v614 = vadd.f32 0.0, %v613
  %v615 = vpop.f32.mrf.mxu0
  %v616 = vadd.f32 0.0, %v615
  %617 = vmatmul.bf16.gmra.mxu0 %v425
  %v618 = vpop.f32.mrf.mxu0
  %v619 = vadd.f32 0.0, %v618
  %v620 = vpop.f32.mrf.mxu0
  %v621 = vadd.f32 0.0, %v620
  %622 = vmatmul.bf16.gmra.mxu0 %v426
  %v623 = vpop.f32.mrf.mxu0
  %v624 = vadd.f32 0.0, %v623
  %v625 = vpop.f32.mrf.mxu0
  %v626 = vadd.f32 0.0, %v625
  %627 = vmatmul.bf16.gmra.mxu0 %v427
  %v628 = vpop.f32.mrf.mxu0
  %v629 = vadd.f32 0.0, %v628
  %v630 = vpop.f32.mrf.mxu0
  %v631 = vadd.f32 0.0, %v630
  %632 = vmatmul.bf16.gmra.mxu0 %v428
  %v633 = vpop.f32.mrf.mxu0
  %v634 = vadd.f32 0.0, %v633
  %v635 = vpop.f32.mrf.mxu0
  %v636 = vadd.f32 0.0, %v635
  %637 = vmatmul.bf16.gmra.mxu0 %v429
  %v638 = vpop.f32.mrf.mxu0
  %v639 = vadd.f32 0.0, %v638
  %v640 = vpop.f32.mrf.mxu0
  %v641 = vadd.f32 0.0, %v640
  %642 = vmatmul.bf16.gmra.mxu0 %v430
  %v643 = vpop.f32.mrf.mxu0
  %v644 = vadd.f32 0.0, %v643
  %v645 = vpop.f32.mrf.mxu0
  %v646 = vadd.f32 0.0, %v645
  %647 = vmatmul.bf16.gmra.mxu0 %v431
  %v648 = vpop.f32.mrf.mxu0
  %v649 = vadd.f32 0.0, %v648
  %v650 = vpop.f32.mrf.mxu0
  %v651 = vadd.f32 0.0, %v650
  %652 = vmatmul.bf16.gmra.mxu0 %v432
  %v653 = vpop.f32.mrf.mxu0
  %v654 = vadd.f32 0.0, %v653
  %v655 = vpop.f32.mrf.mxu0
  %v656 = vadd.f32 0.0, %v655
  %657 = vmatmul.bf16.gmra.mxu0 %v433
  %v658 = vpop.f32.mrf.mxu0
  %v659 = vadd.f32 0.0, %v658
  %v660 = vpop.f32.mrf.mxu0
  %v661 = vadd.f32 0.0, %v660
  %662 = vmatmul.bf16.gmra.mxu0 %v434
  %v663 = vpop.f32.mrf.mxu0
  %v664 = vadd.f32 0.0, %v663
  %v665 = vpop.f32.mrf.mxu0
  %v666 = vadd.f32 0.0, %v665
  %667 = vmatmul.bf16.gmra.mxu0 %v435
  %v668 = vpop.f32.mrf.mxu0
  %v669 = vadd.f32 0.0, %v668
  %v670 = vpop.f32.mrf.mxu0
  %v671 = vadd.f32 0.0, %v670
  %672 = vmatmul.bf16.gmra.mxu0 %v436
  %v673 = vpop.f32.mrf.mxu0
  %v674 = vadd.f32 0.0, %v673
  %v675 = vpop.f32.mrf.mxu0
  %v676 = vadd.f32 0.0, %v675
  %677 = vmatmul.bf16.gmra.mxu0 %v437
  %v678 = vpop.f32.mrf.mxu0
  %v679 = vadd.f32 0.0, %v678
  %v680 = vpop.f32.mrf.mxu0
  %v681 = vadd.f32 0.0, %v680
  %682 = vmatmul.bf16.gmra.mxu0 %v438
  %v683 = vpop.f32.mrf.mxu0
  %v684 = vadd.f32 0.0, %v683
  %v685 = vpop.f32.mrf.mxu0
  %v686 = vadd.f32 0.0, %v685
  %687 = vmatmul.bf16.gmra.mxu0 %v439
  %v688 = vpop.f32.mrf.mxu0
  %v689 = vadd.f32 0.0, %v688
  %v690 = vpop.f32.mrf.mxu0
  %v691 = vadd.f32 0.0, %v690
  %692 = vmatmul.bf16.gmra.mxu0 %v440
  %v693 = vpop.f32.mrf.mxu0
  %v694 = vadd.f32 0.0, %v693
  %v695 = vpop.f32.mrf.mxu0
  %v696 = vadd.f32 0.0, %v695
  %697 = vmatmul.bf16.gmra.mxu0 %v441
  %v698 = vpop.f32.mrf.mxu0
  %v699 = vadd.f32 0.0, %v698
  %v700 = vpop.f32.mrf.mxu0
  %v701 = vadd.f32 0.0, %v700
  %702 = vmatmul.bf16.gmra.mxu0 %v442
  %v703 = vpop.f32.mrf.mxu0
  %v704 = vadd.f32 0.0, %v703
  %v705 = vpop.f32.mrf.mxu0
  %v706 = vadd.f32 0.0, %v705
  %707 = vmatmul.bf16.gmra.mxu0 %v443
  %v708 = vpop.f32.mrf.mxu0
  %v709 = vadd.f32 0.0, %v708
  %v710 = vpop.f32.mrf.mxu0
  %v711 = vadd.f32 0.0, %v710
  %712 = vmatmul.bf16.gmra.mxu0 %v444
  %v713 = vpop.f32.mrf.mxu0
  %v714 = vadd.f32 0.0, %v713
  %v715 = vpop.f32.mrf.mxu0
  %v716 = vadd.f32 0.0, %v715
  %717 = vmatmul.bf16.gmra.mxu0 %v445
  %v718 = vpop.f32.mrf.mxu0
  %v719 = vadd.f32 0.0, %v718
  %v720 = vpop.f32.mrf.mxu0
  %v721 = vadd.f32 0.0, %v720
  %722 = vmatmul.bf16.gmra.mxu0 %v446
  %v723 = vpop.f32.mrf.mxu0
  %v724 = vadd.f32 0.0, %v723
  %v725 = vpop.f32.mrf.mxu0
  %v726 = vadd.f32 0.0, %v725
  %727 = vmatmul.bf16.gmra.mxu0 %v447
  %v728 = vpop.f32.mrf.mxu0
  %v729 = vadd.f32 0.0, %v728
  %v730 = vpop.f32.mrf.mxu0
  %v731 = vadd.f32 0.0, %v730
  %732 = vmatmul.bf16.gmra.mxu0 %v448
  %v733 = vpop.f32.mrf.mxu0
  %v734 = vadd.f32 0.0, %v733
  %v735 = vpop.f32.mrf.mxu0
  %v736 = vadd.f32 0.0, %v735
  %737 = vmatmul.bf16.gmra.mxu0 %v449
  %v738 = vpop.f32.mrf.mxu0
  %v739 = vadd.f32 0.0, %v738
  %v740 = vpop.f32.mrf.mxu0
  %v741 = vadd.f32 0.0, %v740
  %742 = vmatmul.bf16.gmra.mxu0 %v450
  %v743 = vpop.f32.mrf.mxu0
  %v744 = vadd.f32 0.0, %v743
  %v745 = vpop.f32.mrf.mxu0
  %v746 = vadd.f32 0.0, %v745
  %747 = vmatmul.bf16.gmra.mxu0 %v451
  %v748 = vpop.f32.mrf.mxu0
  %v749 = vadd.f32 0.0, %v748
  %v750 = vpop.f32.mrf.mxu0
  %v751 = vadd.f32 0.0, %v750
  %752 = vmatmul.bf16.gmra.mxu0 %v452
  %v753 = vpop.f32.mrf.mxu0
  %v754 = vadd.f32 0.0, %v753
  %v755 = vpop.f32.mrf.mxu0
  %v756 = vadd.f32 0.0, %v755
  %757 = vmatmul.bf16.gmra.mxu0 %v453
  %v758 = vpop.f32.mrf.mxu0
  %v759 = vadd.f32 0.0, %v758
  %v760 = vpop.f32.mrf.mxu0
  %v761 = vadd.f32 0.0, %v760
  %762 = vmatmul.bf16.gmra.mxu0 %v454
  %v763 = vpop.f32.mrf.mxu0
  %v764 = vadd.f32 0.0, %v763
  %v765 = vpop.f32.mrf.mxu0
  %v766 = vadd.f32 0.0, %v765
  %767 = vmatmul.bf16.gmra.mxu0 %v455
  %v768 = vpop.f32.mrf.mxu0
  %v769 = vadd.f32 0.0, %v768
  %v770 = vpop.f32.mrf.mxu0
  %v771 = vadd.f32 0.0, %v770
  %772 = vmatmul.bf16.gmra.mxu0 %v456
  %v773 = vpop.f32.mrf.mxu0
  %v774 = vadd.f32 0.0, %v773
  %v775 = vpop.f32.mrf.mxu0
  %v776 = vadd.f32 0.0, %v775
  %777 = vmatmul.bf16.gmra.mxu0 %v457
  %v778 = vpop.f32.mrf.mxu0
  %v779 = vadd.f32 0.0, %v778
  %v780 = vpop.f32.mrf.mxu0
  %v781 = vadd.f32 0.0, %v780
  %782 = vmatmul.bf16.gmra.mxu0 %v458
  %v783 = vpop.f32.mrf.mxu0
  %v784 = vadd.f32 0.0, %v783
  %v785 = vpop.f32.mrf.mxu0
  %v786 = vadd.f32 0.0, %v785
  %787 = vmatmul.bf16.gmra.mxu0 %v459
  %v788 = vpop.f32.mrf.mxu0
  %v789 = vadd.f32 0.0, %v788
  %v790 = vpop.f32.mrf.mxu0
  %v791 = vadd.f32 0.0, %v790
  %792 = vmatmul.bf16.gmra.mxu0 %v460
  %v793 = vpop.f32.mrf.mxu0
  %v794 = vadd.f32 0.0, %v793
  %v795 = vpop.f32.mrf.mxu0
  %v796 = vadd.f32 0.0, %v795
  %797 = vmatmul.bf16.gmra.mxu0 %v461
  %v798 = vpop.f32.mrf.mxu0
  %v799 = vadd.f32 0.0, %v798
  %v800 = vpop.f32.mrf.mxu0
  %v801 = vadd.f32 0.0, %v800
  %802 = vmatmul.bf16.gmra.mxu0 %v462
  %v803 = vpop.f32.mrf.mxu0
  %v804 = vadd.f32 0.0, %v803
  %v805 = vpop.f32.mrf.mxu0
  %v806 = vadd.f32 0.0, %v805
  %807 = vmatmul.bf16.gmra.mxu0 %v463
  %v808 = vpop.f32.mrf.mxu0
  %v809 = vadd.f32 0.0, %v808
  %v810 = vpop.f32.mrf.mxu0
  %v811 = vadd.f32 0.0, %v810
  %812 = vmatmul.bf16.gmra.mxu0 %v464
  %v813 = vpop.f32.mrf.mxu0
  %v814 = vadd.f32 0.0, %v813
  %v815 = vpop.f32.mrf.mxu0
  %v816 = vadd.f32 0.0, %v815
  %817 = vmatmul.bf16.gmra.mxu0 %v465
  %v818 = vpop.f32.mrf.mxu0
  %v819 = vadd.f32 0.0, %v818
  %v820 = vpop.f32.mrf.mxu0
  %v821 = vadd.f32 0.0, %v820
  %822 = vmatmul.bf16.gmra.mxu0 %v466
  %v823 = vpop.f32.mrf.mxu0
  %v824 = vadd.f32 0.0, %v823
  %v825 = vpop.f32.mrf.mxu0
  %v826 = vadd.f32 0.0, %v825
  %827 = vmatmul.bf16.gmra.mxu0 %v467
  %v828 = vpop.f32.mrf.mxu0
  %v829 = vadd.f32 0.0, %v828
  %v830 = vpop.f32.mrf.mxu0
  %v831 = vadd.f32 0.0, %v830
  %832 = vmatmul.bf16.gmra.mxu0 %v468
  %v833 = vpop.f32.mrf.mxu0
  %v834 = vadd.f32 0.0, %v833
  %v835 = vpop.f32.mrf.mxu0
  %v836 = vadd.f32 0.0, %v835
  %837 = vmatmul.bf16.gmra.mxu0 %v469
  %v838 = vpop.f32.mrf.mxu0
  %v839 = vadd.f32 0.0, %v838
  %v840 = vpop.f32.mrf.mxu0
  %v841 = vadd.f32 0.0, %v840
  %842 = vmatmul.bf16.gmra.mxu0 %v470
  %v843 = vpop.f32.mrf.mxu0
  %v844 = vadd.f32 0.0, %v843
  %v845 = vpop.f32.mrf.mxu0
  %v846 = vadd.f32 0.0, %v845
  %847 = vmatmul.bf16.gmra.mxu0 %v471
  %v848 = vpop.f32.mrf.mxu0
  %v849 = vadd.f32 0.0, %v848
  %v850 = vpop.f32.mrf.mxu0
  %v851 = vadd.f32 0.0, %v850
  %852 = vmatmul.bf16.gmra.mxu0 %v472
  %v853 = vpop.f32.mrf.mxu0
  %v854 = vadd.f32 0.0, %v853
  %v855 = vpop.f32.mrf.mxu0
  %v856 = vadd.f32 0.0, %v855
  %857 = vmatmul.bf16.gmra.mxu0 %v473
  %v858 = vpop.f32.mrf.mxu0
  %v859 = vadd.f32 0.0, %v858
  %v860 = vpop.f32.mrf.mxu0
  %v861 = vadd.f32 0.0, %v860
  %862 = vmatmul.bf16.gmra.mxu0 %v474
  %v863 = vpop.f32.mrf.mxu0
  %v864 = vadd.f32 0.0, %v863
  %v865 = vpop.f32.mrf.mxu0
  %v866 = vadd.f32 0.0, %v865
  %867 = vmatmul.bf16.gmra.mxu0 %v475
  %v868 = vpop.f32.mrf.mxu0
  %v869 = vadd.f32 0.0, %v868
  %v870 = vpop.f32.mrf.mxu0
  %v871 = vadd.f32 0.0, %v870
  %872 = vmatmul.bf16.gmra.mxu0 %v476
  %v873 = vpop.f32.mrf.mxu0
  %v874 = vadd.f32 0.0, %v873
  %v875 = vpop.f32.mrf.mxu0
  %v876 = vadd.f32 0.0, %v875
  %877 = vmatmul.bf16.gmra.mxu0 %v477
  %v878 = vpop.f32.mrf.mxu0
  %v879 = vadd.f32 0.0, %v878
  %v880 = vpop.f32.mrf.mxu0
  %v881 = vadd.f32 0.0, %v880
  %882 = vmatmul.bf16.gmra.mxu0 %v478
  %v883 = vpop.f32.mrf.mxu0
  %v884 = vadd.f32 0.0, %v883
  %v885 = vpop.f32.mrf.mxu0
  %v886 = vadd.f32 0.0, %v885
  %887 = vmatmul.bf16.gmra.mxu0 %v479
  %v888 = vpop.f32.mrf.mxu0
  %v889 = vadd.f32 0.0, %v888
  %v890 = vpop.f32.mrf.mxu0
  %v891 = vadd.f32 0.0, %v890
  %892 = vmatmul.bf16.gmra.mxu0 %v480
  %v893 = vpop.f32.mrf.mxu0
  %v894 = vadd.f32 0.0, %v893
  %v895 = vpop.f32.mrf.mxu0
  %v896 = vadd.f32 0.0, %v895
  %897 = vmatmul.bf16.gmra.mxu0 %v481
  %v898 = vpop.f32.mrf.mxu0
  %v899 = vadd.f32 0.0, %v898
  %v900 = vpop.f32.mrf.mxu0
  %v901 = vadd.f32 0.0, %v900
  %902 = vmatmul.bf16.gmra.mxu0 %v482
  %v903 = vpop.f32.mrf.mxu0
  %v904 = vadd.f32 0.0, %v903
  %v905 = vpop.f32.mrf.mxu0
  %v906 = vadd.f32 0.0, %v905
  %907 = vmatmul.bf16.gmra.mxu0 %v483
  %v908 = vpop.f32.mrf.mxu0
  %v909 = vadd.f32 0.0, %v908
  %v910 = vpop.f32.mrf.mxu0
  %v911 = vadd.f32 0.0, %v910
  %912 = vmatmul.bf16.gmra.mxu0 %v484
  %v913 = vpop.f32.mrf.mxu0
  %v914 = vadd.f32 0.0, %v913
  %v915 = vpop.f32.mrf.mxu0
  %v916 = vadd.f32 0.0, %v915
  %917 = vmatmul.bf16.gmra.mxu0 %v485
  %v918 = vpop.f32.mrf.mxu0
  %v919 = vadd.f32 0.0, %v918
  %v920 = vpop.f32.mrf.mxu0
  %v921 = vadd.f32 0.0, %v920
  %922 = vmatmul.bf16.gmra.mxu0 %v486
  %v923 = vpop.f32.mrf.mxu0
  %v924 = vadd.f32 0.0, %v923
  %v925 = vpop.f32.mrf.mxu0
  %v926 = vadd.f32 0.0, %v925
  %927 = vdwg.mxu0
  %v928 = vpack.c.bf16 %v611, %v609
  %v929 = vpack.c.bf16 %v616, %v614
  %v930 = vpack.c.bf16 %v621, %v619
  %v931 = vpack.c.bf16 %v626, %v624
  %v932 = vpack.c.bf16 %v631, %v629
  %v933 = vpack.c.bf16 %v636, %v634
  %v934 = vpack.c.bf16 %v641, %v639
  %v935 = vpack.c.bf16 %v646, %v644
  %v936 = vpack.c.bf16 %v651, %v649
  %v937 = vpack.c.bf16 %v656, %v654
  %v938 = vpack.c.bf16 %v661, %v659
  %v939 = vpack.c.bf16 %v666, %v664
  %v940 = vpack.c.bf16 %v671, %v669
  %v941 = vpack.c.bf16 %v676, %v674
  %v942 = vpack.c.bf16 %v681, %v679
  %v943 = vpack.c.bf16 %v686, %v684
  %v944 = vpack.c.bf16 %v691, %v689
  %v945 = vpack.c.bf16 %v696, %v694
  %v946 = vpack.c.bf16 %v701, %v699
  %v947 = vpack.c.bf16 %v706, %v704
  %v948 = vpack.c.bf16 %v711, %v709
  %v949 = vpack.c.bf16 %v716, %v714
  %v950 = vpack.c.bf16 %v721, %v719
  %v951 = vpack.c.bf16 %v726, %v724
  %v952 = vpack.c.bf16 %v731, %v729
  %v953 = vpack.c.bf16 %v736, %v734
  %v954 = vpack.c.bf16 %v741, %v739
  %v955 = vpack.c.bf16 %v746, %v744
  %v956 = vpack.c.bf16 %v751, %v749
  %v957 = vpack.c.bf16 %v756, %v754
  %v958 = vpack.c.bf16 %v761, %v759
  %v959 = vpack.c.bf16 %v766, %v764
  %v960 = vpack.c.bf16 %v771, %v769
  %v961 = vpack.c.bf16 %v776, %v774
  %v962 = vpack.c.bf16 %v781, %v779
  %v963 = vpack.c.bf16 %v786, %v784
  %v964 = vpack.c.bf16 %v791, %v789
  %v965 = vpack.c.bf16 %v796, %v794
  %v966 = vpack.c.bf16 %v801, %v799
  %v967 = vpack.c.bf16 %v806, %v804
  %v968 = vpack.c.bf16 %v811, %v809
  %v969 = vpack.c.bf16 %v816, %v814
  %v970 = vpack.c.bf16 %v821, %v819
  %v971 = vpack.c.bf16 %v826, %v824
  %v972 = vpack.c.bf16 %v831, %v829
  %v973 = vpack.c.bf16 %v836, %v834
  %v974 = vpack.c.bf16 %v841, %v839
  %v975 = vpack.c.bf16 %v846, %v844
  %v976 = vpack.c.bf16 %v851, %v849
  %v977 = vpack.c.bf16 %v856, %v854
  %v978 = vpack.c.bf16 %v861, %v859
  %v979 = vpack.c.bf16 %v866, %v864
  %v980 = vpack.c.bf16 %v871, %v869
  %v981 = vpack.c.bf16 %v876, %v874
  %v982 = vpack.c.bf16 %v881, %v879
  %v983 = vpack.c.bf16 %v886, %v884
  %v984 = vpack.c.bf16 %v891, %v889
  %v985 = vpack.c.bf16 %v896, %v894
  %v986 = vpack.c.bf16 %v901, %v899
  %v987 = vpack.c.bf16 %v906, %v904
  %v988 = vpack.c.bf16 %v911, %v909
  %v989 = vpack.c.bf16 %v916, %v914
  %v990 = vpack.c.bf16 %v921, %v919
  %v991 = vpack.c.bf16 %v926, %v924
  %v992 = vld [vmem:[%s0] sm:$0xff]
  %v993 = vld [vmem:[%s0 + $0x8] sm:$0xff]
  %v994 = vld [vmem:[%s0 + $0x10] sm:$0xff]
  %v995 = vld [vmem:[%s0 + $0x18] sm:$0xff]
  %v996 = vld [vmem:[%s0 + $0x20] sm:$0xff]
  %v997 = vld [vmem:[%s0 + $0x28] sm:$0xff]
  %v998 = vld [vmem:[%s0 + $0x30] sm:$0xff]
  %v999 = vld [vmem:[%s0 + $0x38] sm:$0xff]
  %v1000 = vld [vmem:[%s0 + $0x40] sm:$0xff]
  %v1001 = vld [vmem:[%s0 + $0x48] sm:$0xff]
  %v1002 = vld [vmem:[%s0 + $0x50] sm:$0xff]
  %v1003 = vld [vmem:[%s0 + $0x58] sm:$0xff]
  %v1004 = vld [vmem:[%s0 + $0x60] sm:$0xff]
  %v1005 = vld [vmem:[%s0 + $0x68] sm:$0xff]
  %v1006 = vld [vmem:[%s0 + $0x70] sm:$0xff]
  %v1007 = vld [vmem:[%s0 + $0x78] sm:$0xff]
  %v1008 = vld [vmem:[%s0 + $0x80] sm:$0xff]
  %v1009 = vld [vmem:[%s0 + $0x88] sm:$0xff]
  %v1010 = vld [vmem:[%s0 + $0x90] sm:$0xff]
  %v1011 = vld [vmem:[%s0 + $0x98] sm:$0xff]
  %v1012 = vld [vmem:[%s0 + $0xa0] sm:$0xff]
  %v1013 = vld [vmem:[%s0 + $0xa8] sm:$0xff]
  %v1014 = vld [vmem:[%s0 + $0xb0] sm:$0xff]
  %v1015 = vld [vmem:[%s0 + $0xb8] sm:$0xff]
  %v1016 = vld [vmem:[%s0 + $0xc0] sm:$0xff]
  %v1017 = vld [vmem:[%s0 + $0xc8] sm:$0xff]
  %v1018 = vld [vmem:[%s0 + $0xd0] sm:$0xff]
  %v1019 = vld [vmem:[%s0 + $0xd8] sm:$0xff]
  %v1020 = vld [vmem:[%s0 + $0xe0] sm:$0xff]
  %v1021 = vld [vmem:[%s0 + $0xe8] sm:$0xff]
  %v1022 = vld [vmem:[%s0 + $0xf0] sm:$0xff]
  %v1023 = vld [vmem:[%s0 + $0xf8] sm:$0xff]
  %v1024 = vld [vmem:[%s0 + $0x100] sm:$0xff]
  %v1025 = vld [vmem:[%s0 + $0x108] sm:$0xff]
  %v1026 = vld [vmem:[%s0 + $0x110] sm:$0xff]
  %v1027 = vld [vmem:[%s0 + $0x118] sm:$0xff]
  %v1028 = vld [vmem:[%s0 + $0x120] sm:$0xff]
  %v1029 = vld [vmem:[%s0 + $0x128] sm:$0xff]
  %v1030 = vld [vmem:[%s0 + $0x130] sm:$0xff]
  %v1031 = vld [vmem:[%s0 + $0x138] sm:$0xff]
  %v1032 = vld [vmem:[%s0 + $0x140] sm:$0xff]
  %v1033 = vld [vmem:[%s0 + $0x148] sm:$0xff]
  %v1034 = vld [vmem:[%s0 + $0x150] sm:$0xff]
  %v1035 = vld [vmem:[%s0 + $0x158] sm:$0xff]
  %v1036 = vld [vmem:[%s0 + $0x160] sm:$0xff]
  %v1037 = vld [vmem:[%s0 + $0x168] sm:$0xff]
  %v1038 = vld [vmem:[%s0 + $0x170] sm:$0xff]
  %v1039 = vld [vmem:[%s0 + $0x178] sm:$0xff]
  %v1040 = vld [vmem:[%s0 + $0x180] sm:$0xff]
  %v1041 = vld [vmem:[%s0 + $0x188] sm:$0xff]
  %v1042 = vld [vmem:[%s0 + $0x190] sm:$0xff]
  %v1043 = vld [vmem:[%s0 + $0x198] sm:$0xff]
  %v1044 = vld [vmem:[%s0 + $0x1a0] sm:$0xff]
  %v1045 = vld [vmem:[%s0 + $0x1a8] sm:$0xff]
  %v1046 = vld [vmem:[%s0 + $0x1b0] sm:$0xff]
  %v1047 = vld [vmem:[%s0 + $0x1b8] sm:$0xff]
  %v1048 = vld [vmem:[%s0 + $0x1c0] sm:$0xff]
  %v1049 = vld [vmem:[%s0 + $0x1c8] sm:$0xff]
  %v1050 = vld [vmem:[%s0 + $0x1d0] sm:$0xff]
  %v1051 = vld [vmem:[%s0 + $0x1d8] sm:$0xff]
  %v1052 = vld [vmem:[%s0 + $0x1e0] sm:$0xff]
  %v1053 = vld [vmem:[%s0 + $0x1e8] sm:$0xff]
  %v1054 = vld [vmem:[%s0 + $0x1f0] sm:$0xff]
  %v1055 = vld [vmem:[%s0 + $0x1f8] sm:$0xff]
  %v1056 = vld [vmem:[%s0 + $0x200] sm:$0xff]
  %v1057 = vld [vmem:[%s0 + $0x208] sm:$0xff]
  %v1058 = vld [vmem:[%s0 + $0x210] sm:$0xff]
  %v1059 = vld [vmem:[%s0 + $0x218] sm:$0xff]
  %v1060 = vld [vmem:[%s0 + $0x220] sm:$0xff]
  %v1061 = vld [vmem:[%s0 + $0x228] sm:$0xff]
  %v1062 = vld [vmem:[%s0 + $0x230] sm:$0xff]
  %v1063 = vld [vmem:[%s0 + $0x238] sm:$0xff]
  %v1064 = vld [vmem:[%s0 + $0x240] sm:$0xff]
  %v1065 = vld [vmem:[%s0 + $0x248] sm:$0xff]
  %v1066 = vld [vmem:[%s0 + $0x250] sm:$0xff]
  %v1067 = vld [vmem:[%s0 + $0x258] sm:$0xff]
  %v1068 = vld [vmem:[%s0 + $0x260] sm:$0xff]
  %v1069 = vld [vmem:[%s0 + $0x268] sm:$0xff]
  %v1070 = vld [vmem:[%s0 + $0x270] sm:$0xff]
  %v1071 = vld [vmem:[%s0 + $0x278] sm:$0xff]
  %v1072 = vld [vmem:[%s0 + $0x280] sm:$0xff]
  %v1073 = vld [vmem:[%s0 + $0x288] sm:$0xff]
  %v1074 = vld [vmem:[%s0 + $0x290] sm:$0xff]
  %v1075 = vld [vmem:[%s0 + $0x298] sm:$0xff]
  %v1076 = vld [vmem:[%s0 + $0x2a0] sm:$0xff]
  %v1077 = vld [vmem:[%s0 + $0x2a8] sm:$0xff]
  %v1078 = vld [vmem:[%s0 + $0x2b0] sm:$0xff]
  %v1079 = vld [vmem:[%s0 + $0x2b8] sm:$0xff]
  %v1080 = vld [vmem:[%s0 + $0x2c0] sm:$0xff]
  %v1081 = vld [vmem:[%s0 + $0x2c8] sm:$0xff]
  %v1082 = vld [vmem:[%s0 + $0x2d0] sm:$0xff]
  %v1083 = vld [vmem:[%s0 + $0x2d8] sm:$0xff]
  %v1084 = vld [vmem:[%s0 + $0x2e0] sm:$0xff]
  %v1085 = vld [vmem:[%s0 + $0x2e8] sm:$0xff]
  %v1086 = vld [vmem:[%s0 + $0x2f0] sm:$0xff]
  %v1087 = vld [vmem:[%s0 + $0x2f8] sm:$0xff]
  %v1088 = vld [vmem:[%s0 + $0x300] sm:$0xff]
  %v1089 = vld [vmem:[%s0 + $0x308] sm:$0xff]
  %v1090 = vld [vmem:[%s0 + $0x310] sm:$0xff]
  %v1091 = vld [vmem:[%s0 + $0x318] sm:$0xff]
  %v1092 = vld [vmem:[%s0 + $0x320] sm:$0xff]
  %v1093 = vld [vmem:[%s0 + $0x328] sm:$0xff]
  %v1094 = vld [vmem:[%s0 + $0x330] sm:$0xff]
  %v1095 = vld [vmem:[%s0 + $0x338] sm:$0xff]
  %v1096 = vld [vmem:[%s0 + $0x340] sm:$0xff]
  %v1097 = vld [vmem:[%s0 + $0x348] sm:$0xff]
  %v1098 = vld [vmem:[%s0 + $0x350] sm:$0xff]
  %v1099 = vld [vmem:[%s0 + $0x358] sm:$0xff]
  %v1100 = vld [vmem:[%s0 + $0x360] sm:$0xff]
  %v1101 = vld [vmem:[%s0 + $0x368] sm:$0xff]
  %v1102 = vld [vmem:[%s0 + $0x370] sm:$0xff]
  %v1103 = vld [vmem:[%s0 + $0x378] sm:$0xff]
  %v1104 = vld [vmem:[%s0 + $0x380] sm:$0xff]
  %v1105 = vld [vmem:[%s0 + $0x388] sm:$0xff]
  %v1106 = vld [vmem:[%s0 + $0x390] sm:$0xff]
  %v1107 = vld [vmem:[%s0 + $0x398] sm:$0xff]
  %v1108 = vld [vmem:[%s0 + $0x3a0] sm:$0xff]
  %v1109 = vld [vmem:[%s0 + $0x3a8] sm:$0xff]
  %v1110 = vld [vmem:[%s0 + $0x3b0] sm:$0xff]
  %v1111 = vld [vmem:[%s0 + $0x3b8] sm:$0xff]
  %v1112 = vld [vmem:[%s0 + $0x3c0] sm:$0xff]
  %v1113 = vld [vmem:[%s0 + $0x3c8] sm:$0xff]
  %v1114 = vld [vmem:[%s0 + $0x3d0] sm:$0xff]
  %v1115 = vld [vmem:[%s0 + $0x3d8] sm:$0xff]
  %v1116 = vld [vmem:[%s0 + $0x3e0] sm:$0xff]
  %v1117 = vld [vmem:[%s0 + $0x3e8] sm:$0xff]
  %v1118 = vld [vmem:[%s0 + $0x3f0] sm:$0xff]
  %v1119 = vld [vmem:[%s0 + $0x3f8] sm:$0xff]
  %v1120 = vld [vmem:[%s0 + $0x400] sm:$0xff]
  %v1121 = vld [vmem:[%s0 + $0x408] sm:$0xff]
  %v1122 = vld [vmem:[%s0 + $0x410] sm:$0xff]
  %v1123 = vld [vmem:[%s0 + $0x418] sm:$0xff]
  %v1124 = vld [vmem:[%s0 + $0x420] sm:$0xff]
  %v1125 = vld [vmem:[%s0 + $0x428] sm:$0xff]
  %v1126 = vld [vmem:[%s0 + $0x430] sm:$0xff]
  %v1127 = vld [vmem:[%s0 + $0x438] sm:$0xff]
  %v1128 = vld [vmem:[%s0 + $0x440] sm:$0xff]
  %v1129 = vld [vmem:[%s0 + $0x448] sm:$0xff]
  %v1130 = vld [vmem:[%s0 + $0x450] sm:$0xff]
  %v1131 = vld [vmem:[%s0 + $0x458] sm:$0xff]
  %v1132 = vld [vmem:[%s0 + $0x460] sm:$0xff]
  %v1133 = vld [vmem:[%s0 + $0x468] sm:$0xff]
  %v1134 = vld [vmem:[%s0 + $0x470] sm:$0xff]
  %v1135 = vld [vmem:[%s0 + $0x478] sm:$0xff]
  %v1136 = vld [vmem:[%s0 + $0x480] sm:$0xff]
  %v1137 = vld [vmem:[%s0 + $0x488] sm:$0xff]
  %v1138 = vld [vmem:[%s0 + $0x490] sm:$0xff]
  %v1139 = vld [vmem:[%s0 + $0x498] sm:$0xff]
  %v1140 = vld [vmem:[%s0 + $0x4a0] sm:$0xff]
  %v1141 = vld [vmem:[%s0 + $0x4a8] sm:$0xff]
  %v1142 = vld [vmem:[%s0 + $0x4b0] sm:$0xff]
  %v1143 = vld [vmem:[%s0 + $0x4b8] sm:$0xff]
  %v1144 = vld [vmem:[%s0 + $0x4c0] sm:$0xff]
  %v1145 = vld [vmem:[%s0 + $0x4c8] sm:$0xff]
  %v1146 = vld [vmem:[%s0 + $0x4d0] sm:$0xff]
  %v1147 = vld [vmem:[%s0 + $0x4d8] sm:$0xff]
  %v1148 = vld [vmem:[%s0 + $0x4e0] sm:$0xff]
  %v1149 = vld [vmem:[%s0 + $0x4e8] sm:$0xff]
  %v1150 = vld [vmem:[%s0 + $0x4f0] sm:$0xff]
  %v1151 = vld [vmem:[%s0 + $0x4f8] sm:$0xff]
  %v1152 = vld [vmem:[%s0 + $0x500] sm:$0xff]
  %v1153 = vld [vmem:[%s0 + $0x508] sm:$0xff]
  %v1154 = vld [vmem:[%s0 + $0x510] sm:$0xff]
  %v1155 = vld [vmem:[%s0 + $0x518] sm:$0xff]
  %v1156 = vld [vmem:[%s0 + $0x520] sm:$0xff]
  %v1157 = vld [vmem:[%s0 + $0x528] sm:$0xff]
  %v1158 = vld [vmem:[%s0 + $0x530] sm:$0xff]
  %v1159 = vld [vmem:[%s0 + $0x538] sm:$0xff]
  %v1160 = vld [vmem:[%s0 + $0x540] sm:$0xff]
  %v1161 = vld [vmem:[%s0 + $0x548] sm:$0xff]
  %v1162 = vld [vmem:[%s0 + $0x550] sm:$0xff]
  %v1163 = vld [vmem:[%s0 + $0x558] sm:$0xff]
  %v1164 = vld [vmem:[%s0 + $0x560] sm:$0xff]
  %v1165 = vld [vmem:[%s0 + $0x568] sm:$0xff]
  %v1166 = vld [vmem:[%s0 + $0x570] sm:$0xff]
  %v1167 = vld [vmem:[%s0 + $0x578] sm:$0xff]
  %v1168 = vld [vmem:[%s0 + $0x580] sm:$0xff]
  %v1169 = vld [vmem:[%s0 + $0x588] sm:$0xff]
  %v1170 = vld [vmem:[%s0 + $0x590] sm:$0xff]
  %v1171 = vld [vmem:[%s0 + $0x598] sm:$0xff]
  %v1172 = vld [vmem:[%s0 + $0x5a0] sm:$0xff]
  %v1173 = vld [vmem:[%s0 + $0x5a8] sm:$0xff]
  %v1174 = vld [vmem:[%s0 + $0x5b0] sm:$0xff]
  %v1175 = vld [vmem:[%s0 + $0x5b8] sm:$0xff]
  %v1176 = vld [vmem:[%s0 + $0x5c0] sm:$0xff]
  %v1177 = vld [vmem:[%s0 + $0x5c8] sm:$0xff]
  %v1178 = vld [vmem:[%s0 + $0x5d0] sm:$0xff]
  %v1179 = vld [vmem:[%s0 + $0x5d8] sm:$0xff]
  %v1180 = vld [vmem:[%s0 + $0x5e0] sm:$0xff]
  %v1181 = vld [vmem:[%s0 + $0x5e8] sm:$0xff]
  %v1182 = vld [vmem:[%s0 + $0x5f0] sm:$0xff]
  %v1183 = vld [vmem:[%s0 + $0x5f8] sm:$0xff]
  %v1184 = vld [vmem:[%s0 + $0x600] sm:$0xff]
  %v1185 = vld [vmem:[%s0 + $0x608] sm:$0xff]
  %v1186 = vld [vmem:[%s0 + $0x610] sm:$0xff]
  %v1187 = vld [vmem:[%s0 + $0x618] sm:$0xff]
  %v1188 = vld [vmem:[%s0 + $0x620] sm:$0xff]
  %v1189 = vld [vmem:[%s0 + $0x628] sm:$0xff]
  %v1190 = vld [vmem:[%s0 + $0x630] sm:$0xff]
  %v1191 = vld [vmem:[%s0 + $0x638] sm:$0xff]
  %v1192 = vld [vmem:[%s0 + $0x640] sm:$0xff]
  %v1193 = vld [vmem:[%s0 + $0x648] sm:$0xff]
  %v1194 = vld [vmem:[%s0 + $0x650] sm:$0xff]
  %v1195 = vld [vmem:[%s0 + $0x658] sm:$0xff]
  %v1196 = vld [vmem:[%s0 + $0x660] sm:$0xff]
  %v1197 = vld [vmem:[%s0 + $0x668] sm:$0xff]
  %v1198 = vld [vmem:[%s0 + $0x670] sm:$0xff]
  %v1199 = vld [vmem:[%s0 + $0x678] sm:$0xff]
  %v1200 = vld [vmem:[%s0 + $0x680] sm:$0xff]
  %v1201 = vld [vmem:[%s0 + $0x688] sm:$0xff]
  %v1202 = vld [vmem:[%s0 + $0x690] sm:$0xff]
  %v1203 = vld [vmem:[%s0 + $0x698] sm:$0xff]
  %v1204 = vld [vmem:[%s0 + $0x6a0] sm:$0xff]
  %v1205 = vld [vmem:[%s0 + $0x6a8] sm:$0xff]
  %v1206 = vld [vmem:[%s0 + $0x6b0] sm:$0xff]
  %v1207 = vld [vmem:[%s0 + $0x6b8] sm:$0xff]
  %v1208 = vld [vmem:[%s0 + $0x6c0] sm:$0xff]
  %v1209 = vld [vmem:[%s0 + $0x6c8] sm:$0xff]
  %v1210 = vld [vmem:[%s0 + $0x6d0] sm:$0xff]
  %v1211 = vld [vmem:[%s0 + $0x6d8] sm:$0xff]
  %v1212 = vld [vmem:[%s0 + $0x6e0] sm:$0xff]
  %v1213 = vld [vmem:[%s0 + $0x6e8] sm:$0xff]
  %v1214 = vld [vmem:[%s0 + $0x6f0] sm:$0xff]
  %v1215 = vld [vmem:[%s0 + $0x6f8] sm:$0xff]
  %v1216 = vld [vmem:[%s0 + $0x700] sm:$0xff]
  %v1217 = vld [vmem:[%s0 + $0x708] sm:$0xff]
  %v1218 = vld [vmem:[%s0 + $0x710] sm:$0xff]
  %v1219 = vld [vmem:[%s0 + $0x718] sm:$0xff]
  %v1220 = vld [vmem:[%s0 + $0x720] sm:$0xff]
  %v1221 = vld [vmem:[%s0 + $0x728] sm:$0xff]
  %v1222 = vld [vmem:[%s0 + $0x730] sm:$0xff]
  %v1223 = vld [vmem:[%s0 + $0x738] sm:$0xff]
  %v1224 = vld [vmem:[%s0 + $0x740] sm:$0xff]
  %v1225 = vld [vmem:[%s0 + $0x748] sm:$0xff]
  %v1226 = vld [vmem:[%s0 + $0x750] sm:$0xff]
  %v1227 = vld [vmem:[%s0 + $0x758] sm:$0xff]
  %v1228 = vld [vmem:[%s0 + $0x760] sm:$0xff]
  %v1229 = vld [vmem:[%s0 + $0x768] sm:$0xff]
  %v1230 = vld [vmem:[%s0 + $0x770] sm:$0xff]
  %v1231 = vld [vmem:[%s0 + $0x778] sm:$0xff]
  %v1232 = vld [vmem:[%s0 + $0x780] sm:$0xff]
  %v1233 = vld [vmem:[%s0 + $0x788] sm:$0xff]
  %v1234 = vld [vmem:[%s0 + $0x790] sm:$0xff]
  %v1235 = vld [vmem:[%s0 + $0x798] sm:$0xff]
  %v1236 = vld [vmem:[%s0 + $0x7a0] sm:$0xff]
  %v1237 = vld [vmem:[%s0 + $0x7a8] sm:$0xff]
  %v1238 = vld [vmem:[%s0 + $0x7b0] sm:$0xff]
  %v1239 = vld [vmem:[%s0 + $0x7b8] sm:$0xff]
  %v1240 = vld [vmem:[%s0 + $0x7c0] sm:$0xff]
  %v1241 = vld [vmem:[%s0 + $0x7c8] sm:$0xff]
  %v1242 = vld [vmem:[%s0 + $0x7d0] sm:$0xff]
  %v1243 = vld [vmem:[%s0 + $0x7d8] sm:$0xff]
  %v1244 = vld [vmem:[%s0 + $0x7e0] sm:$0xff]
  %v1245 = vld [vmem:[%s0 + $0x7e8] sm:$0xff]
  %v1246 = vld [vmem:[%s0 + $0x7f0] sm:$0xff]
  %v1247 = vld [vmem:[%s0 + $0x7f8] sm:$0xff]
  %v1248 = vld [vmem:[%s0 + $0x800] sm:$0xff]
  %v1249 = vld [vmem:[%s0 + $0x808] sm:$0xff]
  %v1250 = vld [vmem:[%s0 + $0x810] sm:$0xff]
  %v1251 = vld [vmem:[%s0 + $0x818] sm:$0xff]
  %v1252 = vld [vmem:[%s0 + $0x820] sm:$0xff]
  %v1253 = vld [vmem:[%s0 + $0x828] sm:$0xff]
  %v1254 = vld [vmem:[%s0 + $0x830] sm:$0xff]
  %v1255 = vld [vmem:[%s0 + $0x838] sm:$0xff]
  %v1256 = vld [vmem:[%s0 + $0x840] sm:$0xff]
  %v1257 = vld [vmem:[%s0 + $0x848] sm:$0xff]
  %v1258 = vld [vmem:[%s0 + $0x850] sm:$0xff]
  %v1259 = vld [vmem:[%s0 + $0x858] sm:$0xff]
  %v1260 = vld [vmem:[%s0 + $0x860] sm:$0xff]
  %v1261 = vld [vmem:[%s0 + $0x868] sm:$0xff]
  %v1262 = vld [vmem:[%s0 + $0x870] sm:$0xff]
  %v1263 = vld [vmem:[%s0 + $0x878] sm:$0xff]
  %v1264 = vld [vmem:[%s0 + $0x880] sm:$0xff]
  %v1265 = vld [vmem:[%s0 + $0x888] sm:$0xff]
  %v1266 = vld [vmem:[%s0 + $0x890] sm:$0xff]
  %v1267 = vld [vmem:[%s0 + $0x898] sm:$0xff]
  %v1268 = vld [vmem:[%s0 + $0x8a0] sm:$0xff]
  %v1269 = vld [vmem:[%s0 + $0x8a8] sm:$0xff]
  %v1270 = vld [vmem:[%s0 + $0x8b0] sm:$0xff]
  %v1271 = vld [vmem:[%s0 + $0x8b8] sm:$0xff]
  %v1272 = vld [vmem:[%s0 + $0x8c0] sm:$0xff]
  %v1273 = vld [vmem:[%s0 + $0x8c8] sm:$0xff]
  %v1274 = vld [vmem:[%s0 + $0x8d0] sm:$0xff]
  %v1275 = vld [vmem:[%s0 + $0x8d8] sm:$0xff]
  %v1276 = vld [vmem:[%s0 + $0x8e0] sm:$0xff]
  %v1277 = vld [vmem:[%s0 + $0x8e8] sm:$0xff]
  %v1278 = vld [vmem:[%s0 + $0x8f0] sm:$0xff]
  %v1279 = vld [vmem:[%s0 + $0x8f8] sm:$0xff]
  %v1280 = vld [vmem:[%s0 + $0x900] sm:$0xff]
  %v1281 = vld [vmem:[%s0 + $0x908] sm:$0xff]
  %v1282 = vld [vmem:[%s0 + $0x910] sm:$0xff]
  %v1283 = vld [vmem:[%s0 + $0x918] sm:$0xff]
  %v1284 = vld [vmem:[%s0 + $0x920] sm:$0xff]
  %v1285 = vld [vmem:[%s0 + $0x928] sm:$0xff]
  %v1286 = vld [vmem:[%s0 + $0x930] sm:$0xff]
  %v1287 = vld [vmem:[%s0 + $0x938] sm:$0xff]
  %v1288 = vld [vmem:[%s0 + $0x940] sm:$0xff]
  %v1289 = vld [vmem:[%s0 + $0x948] sm:$0xff]
  %v1290 = vld [vmem:[%s0 + $0x950] sm:$0xff]
  %v1291 = vld [vmem:[%s0 + $0x958] sm:$0xff]
  %v1292 = vld [vmem:[%s0 + $0x960] sm:$0xff]
  %v1293 = vld [vmem:[%s0 + $0x968] sm:$0xff]
  %v1294 = vld [vmem:[%s0 + $0x970] sm:$0xff]
  %v1295 = vld [vmem:[%s0 + $0x978] sm:$0xff]
  %v1296 = vld [vmem:[%s0 + $0x980] sm:$0xff]
  %v1297 = vld [vmem:[%s0 + $0x988] sm:$0xff]
  %v1298 = vld [vmem:[%s0 + $0x990] sm:$0xff]
  %v1299 = vld [vmem:[%s0 + $0x998] sm:$0xff]
  %v1300 = vld [vmem:[%s0 + $0x9a0] sm:$0xff]
  %v1301 = vld [vmem:[%s0 + $0x9a8] sm:$0xff]
  %v1302 = vld [vmem:[%s0 + $0x9b0] sm:$0xff]
  %v1303 = vld [vmem:[%s0 + $0x9b8] sm:$0xff]
  %v1304 = vld [vmem:[%s0 + $0x9c0] sm:$0xff]
  %v1305 = vld [vmem:[%s0 + $0x9c8] sm:$0xff]
  %v1306 = vld [vmem:[%s0 + $0x9d0] sm:$0xff]
  %v1307 = vld [vmem:[%s0 + $0x9d8] sm:$0xff]
  %v1308 = vld [vmem:[%s0 + $0x9e0] sm:$0xff]
  %v1309 = vld [vmem:[%s0 + $0x9e8] sm:$0xff]
  %v1310 = vld [vmem:[%s0 + $0x9f0] sm:$0xff]
  %v1311 = vld [vmem:[%s0 + $0x9f8] sm:$0xff]
  %v1312 = vld [vmem:[%s0 + $0xa00] sm:$0xff]
  %v1313 = vld [vmem:[%s0 + $0xa08] sm:$0xff]
  %v1314 = vld [vmem:[%s0 + $0xa10] sm:$0xff]
  %v1315 = vld [vmem:[%s0 + $0xa18] sm:$0xff]
  %v1316 = vld [vmem:[%s0 + $0xa20] sm:$0xff]
  %v1317 = vld [vmem:[%s0 + $0xa28] sm:$0xff]
  %v1318 = vld [vmem:[%s0 + $0xa30] sm:$0xff]
  %v1319 = vld [vmem:[%s0 + $0xa38] sm:$0xff]
  %v1320 = vld [vmem:[%s0 + $0xa40] sm:$0xff]
  %v1321 = vld [vmem:[%s0 + $0xa48] sm:$0xff]
  %v1322 = vld [vmem:[%s0 + $0xa50] sm:$0xff]
  %v1323 = vld [vmem:[%s0 + $0xa58] sm:$0xff]
  %v1324 = vld [vmem:[%s0 + $0xa60] sm:$0xff]
  %v1325 = vld [vmem:[%s0 + $0xa68] sm:$0xff]
  %v1326 = vld [vmem:[%s0 + $0xa70] sm:$0xff]
  %v1327 = vld [vmem:[%s0 + $0xa78] sm:$0xff]
  %v1328 = vld [vmem:[%s0 + $0xa80] sm:$0xff]
  %v1329 = vld [vmem:[%s0 + $0xa88] sm:$0xff]
  %v1330 = vld [vmem:[%s0 + $0xa90] sm:$0xff]
  %v1331 = vld [vmem:[%s0 + $0xa98] sm:$0xff]
  %v1332 = vld [vmem:[%s0 + $0xaa0] sm:$0xff]
  %v1333 = vld [vmem:[%s0 + $0xaa8] sm:$0xff]
  %v1334 = vld [vmem:[%s0 + $0xab0] sm:$0xff]
  %v1335 = vld [vmem:[%s0 + $0xab8] sm:$0xff]
  %v1336 = vld [vmem:[%s0 + $0xac0] sm:$0xff]
  %v1337 = vld [vmem:[%s0 + $0xac8] sm:$0xff]
  %v1338 = vld [vmem:[%s0 + $0xad0] sm:$0xff]
  %v1339 = vld [vmem:[%s0 + $0xad8] sm:$0xff]
  %v1340 = vld [vmem:[%s0 + $0xae0] sm:$0xff]
  %v1341 = vld [vmem:[%s0 + $0xae8] sm:$0xff]
  %v1342 = vld [vmem:[%s0 + $0xaf0] sm:$0xff]
  %v1343 = vld [vmem:[%s0 + $0xaf8] sm:$0xff]
  %v1344 = vld [vmem:[%s0 + $0xb00] sm:$0xff]
  %v1345 = vld [vmem:[%s0 + $0xb08] sm:$0xff]
  %v1346 = vld [vmem:[%s0 + $0xb10] sm:$0xff]
  %v1347 = vld [vmem:[%s0 + $0xb18] sm:$0xff]
  %v1348 = vld [vmem:[%s0 + $0xb20] sm:$0xff]
  %v1349 = vld [vmem:[%s0 + $0xb28] sm:$0xff]
  %v1350 = vld [vmem:[%s0 + $0xb30] sm:$0xff]
  %v1351 = vld [vmem:[%s0 + $0xb38] sm:$0xff]
  %v1352 = vld [vmem:[%s0 + $0xb40] sm:$0xff]
  %v1353 = vld [vmem:[%s0 + $0xb48] sm:$0xff]
  %v1354 = vld [vmem:[%s0 + $0xb50] sm:$0xff]
  %v1355 = vld [vmem:[%s0 + $0xb58] sm:$0xff]
  %v1356 = vld [vmem:[%s0 + $0xb60] sm:$0xff]
  %v1357 = vld [vmem:[%s0 + $0xb68] sm:$0xff]
  %v1358 = vld [vmem:[%s0 + $0xb70] sm:$0xff]
  %v1359 = vld [vmem:[%s0 + $0xb78] sm:$0xff]
  %v1360 = vld [vmem:[%s0 + $0xb80] sm:$0xff]
  %v1361 = vld [vmem:[%s0 + $0xb88] sm:$0xff]
  %v1362 = vld [vmem:[%s0 + $0xb90] sm:$0xff]
  %v1363 = vld [vmem:[%s0 + $0xb98] sm:$0xff]
  %v1364 = vld [vmem:[%s0 + $0xba0] sm:$0xff]
  %v1365 = vld [vmem:[%s0 + $0xba8] sm:$0xff]
  %v1366 = vld [vmem:[%s0 + $0xbb0] sm:$0xff]
  %v1367 = vld [vmem:[%s0 + $0xbb8] sm:$0xff]
  %v1368 = vld [vmem:[%s0 + $0xbc0] sm:$0xff]
  %v1369 = vld [vmem:[%s0 + $0xbc8] sm:$0xff]
  %v1370 = vld [vmem:[%s0 + $0xbd0] sm:$0xff]
  %v1371 = vld [vmem:[%s0 + $0xbd8] sm:$0xff]
  %v1372 = vld [vmem:[%s0 + $0xbe0] sm:$0xff]
  %v1373 = vld [vmem:[%s0 + $0xbe8] sm:$0xff]
  %v1374 = vld [vmem:[%s0 + $0xbf0] sm:$0xff]
  %v1375 = vld [vmem:[%s0 + $0xbf8] sm:$0xff]
  %v1376 = vld [vmem:[%s0 + $0xc00] sm:$0xff]
  %v1377 = vld [vmem:[%s0 + $0xc08] sm:$0xff]
  %v1378 = vld [vmem:[%s0 + $0xc10] sm:$0xff]
  %v1379 = vld [vmem:[%s0 + $0xc18] sm:$0xff]
  %v1380 = vld [vmem:[%s0 + $0xc20] sm:$0xff]
  %v1381 = vld [vmem:[%s0 + $0xc28] sm:$0xff]
  %v1382 = vld [vmem:[%s0 + $0xc30] sm:$0xff]
  %v1383 = vld [vmem:[%s0 + $0xc38] sm:$0xff]
  %v1384 = vld [vmem:[%s0 + $0xc40] sm:$0xff]
  %v1385 = vld [vmem:[%s0 + $0xc48] sm:$0xff]
  %v1386 = vld [vmem:[%s0 + $0xc50] sm:$0xff]
  %v1387 = vld [vmem:[%s0 + $0xc58] sm:$0xff]
  %v1388 = vld [vmem:[%s0 + $0xc60] sm:$0xff]
  %v1389 = vld [vmem:[%s0 + $0xc68] sm:$0xff]
  %v1390 = vld [vmem:[%s0 + $0xc70] sm:$0xff]
  %v1391 = vld [vmem:[%s0 + $0xc78] sm:$0xff]
  %v1392 = vld [vmem:[%s0 + $0xc80] sm:$0xff]
  %v1393 = vld [vmem:[%s0 + $0xc88] sm:$0xff]
  %v1394 = vld [vmem:[%s0 + $0xc90] sm:$0xff]
  %v1395 = vld [vmem:[%s0 + $0xc98] sm:$0xff]
  %v1396 = vld [vmem:[%s0 + $0xca0] sm:$0xff]
  %v1397 = vld [vmem:[%s0 + $0xca8] sm:$0xff]
  %v1398 = vld [vmem:[%s0 + $0xcb0] sm:$0xff]
  %v1399 = vld [vmem:[%s0 + $0xcb8] sm:$0xff]
  %v1400 = vld [vmem:[%s0 + $0xcc0] sm:$0xff]
  %v1401 = vld [vmem:[%s0 + $0xcc8] sm:$0xff]
  %v1402 = vld [vmem:[%s0 + $0xcd0] sm:$0xff]
  %v1403 = vld [vmem:[%s0 + $0xcd8] sm:$0xff]
  %v1404 = vld [vmem:[%s0 + $0xce0] sm:$0xff]
  %v1405 = vld [vmem:[%s0 + $0xce8] sm:$0xff]
  %v1406 = vld [vmem:[%s0 + $0xcf0] sm:$0xff]
  %v1407 = vld [vmem:[%s0 + $0xcf8] sm:$0xff]
  %v1408 = vld [vmem:[%s0 + $0xd00] sm:$0xff]
  %v1409 = vld [vmem:[%s0 + $0xd08] sm:$0xff]
  %v1410 = vld [vmem:[%s0 + $0xd10] sm:$0xff]
  %v1411 = vld [vmem:[%s0 + $0xd18] sm:$0xff]
  %v1412 = vld [vmem:[%s0 + $0xd20] sm:$0xff]
  %v1413 = vld [vmem:[%s0 + $0xd28] sm:$0xff]
  %v1414 = vld [vmem:[%s0 + $0xd30] sm:$0xff]
  %v1415 = vld [vmem:[%s0 + $0xd38] sm:$0xff]
  %v1416 = vld [vmem:[%s0 + $0xd40] sm:$0xff]
  %v1417 = vld [vmem:[%s0 + $0xd48] sm:$0xff]
  %v1418 = vld [vmem:[%s0 + $0xd50] sm:$0xff]
  %v1419 = vld [vmem:[%s0 + $0xd58] sm:$0xff]
  %v1420 = vld [vmem:[%s0 + $0xd60] sm:$0xff]
  %v1421 = vld [vmem:[%s0 + $0xd68] sm:$0xff]
  %v1422 = vld [vmem:[%s0 + $0xd70] sm:$0xff]
  %v1423 = vld [vmem:[%s0 + $0xd78] sm:$0xff]
  %v1424 = vld [vmem:[%s0 + $0xd80] sm:$0xff]
  %v1425 = vld [vmem:[%s0 + $0xd88] sm:$0xff]
  %v1426 = vld [vmem:[%s0 + $0xd90] sm:$0xff]
  %v1427 = vld [vmem:[%s0 + $0xd98] sm:$0xff]
  %v1428 = vld [vmem:[%s0 + $0xda0] sm:$0xff]
  %v1429 = vld [vmem:[%s0 + $0xda8] sm:$0xff]
  %v1430 = vld [vmem:[%s0 + $0xdb0] sm:$0xff]
  %v1431 = vld [vmem:[%s0 + $0xdb8] sm:$0xff]
  %v1432 = vld [vmem:[%s0 + $0xdc0] sm:$0xff]
  %v1433 = vld [vmem:[%s0 + $0xdc8] sm:$0xff]
  %v1434 = vld [vmem:[%s0 + $0xdd0] sm:$0xff]
  %v1435 = vld [vmem:[%s0 + $0xdd8] sm:$0xff]
  %v1436 = vld [vmem:[%s0 + $0xde0] sm:$0xff]
  %v1437 = vld [vmem:[%s0 + $0xde8] sm:$0xff]
  %v1438 = vld [vmem:[%s0 + $0xdf0] sm:$0xff]
  %v1439 = vld [vmem:[%s0 + $0xdf8] sm:$0xff]
  %v1440 = vld [vmem:[%s0 + $0xe00] sm:$0xff]
  %v1441 = vld [vmem:[%s0 + $0xe08] sm:$0xff]
  %v1442 = vld [vmem:[%s0 + $0xe10] sm:$0xff]
  %v1443 = vld [vmem:[%s0 + $0xe18] sm:$0xff]
  %v1444 = vld [vmem:[%s0 + $0xe20] sm:$0xff]
  %v1445 = vld [vmem:[%s0 + $0xe28] sm:$0xff]
  %v1446 = vld [vmem:[%s0 + $0xe30] sm:$0xff]
  %v1447 = vld [vmem:[%s0 + $0xe38] sm:$0xff]
  %v1448 = vld [vmem:[%s0 + $0xe40] sm:$0xff]
  %v1449 = vld [vmem:[%s0 + $0xe48] sm:$0xff]
  %v1450 = vld [vmem:[%s0 + $0xe50] sm:$0xff]
  %v1451 = vld [vmem:[%s0 + $0xe58] sm:$0xff]
  %v1452 = vld [vmem:[%s0 + $0xe60] sm:$0xff]
  %v1453 = vld [vmem:[%s0 + $0xe68] sm:$0xff]
  %v1454 = vld [vmem:[%s0 + $0xe70] sm:$0xff]
  %v1455 = vld [vmem:[%s0 + $0xe78] sm:$0xff]
  %v1456 = vld [vmem:[%s0 + $0xe80] sm:$0xff]
  %v1457 = vld [vmem:[%s0 + $0xe88] sm:$0xff]
  %v1458 = vld [vmem:[%s0 + $0xe90] sm:$0xff]
  %v1459 = vld [vmem:[%s0 + $0xe98] sm:$0xff]
  %v1460 = vld [vmem:[%s0 + $0xea0] sm:$0xff]
  %v1461 = vld [vmem:[%s0 + $0xea8] sm:$0xff]
  %v1462 = vld [vmem:[%s0 + $0xeb0] sm:$0xff]
  %v1463 = vld [vmem:[%s0 + $0xeb8] sm:$0xff]
  %v1464 = vld [vmem:[%s0 + $0xec0] sm:$0xff]
  %v1465 = vld [vmem:[%s0 + $0xec8] sm:$0xff]
  %v1466 = vld [vmem:[%s0 + $0xed0] sm:$0xff]
  %v1467 = vld [vmem:[%s0 + $0xed8] sm:$0xff]
  %v1468 = vld [vmem:[%s0 + $0xee0] sm:$0xff]
  %v1469 = vld [vmem:[%s0 + $0xee8] sm:$0xff]
  %v1470 = vld [vmem:[%s0 + $0xef0] sm:$0xff]
  %v1471 = vld [vmem:[%s0 + $0xef8] sm:$0xff]
  %v1472 = vld [vmem:[%s0 + $0xf00] sm:$0xff]
  %v1473 = vld [vmem:[%s0 + $0xf08] sm:$0xff]
  %v1474 = vld [vmem:[%s0 + $0xf10] sm:$0xff]
  %v1475 = vld [vmem:[%s0 + $0xf18] sm:$0xff]
  %v1476 = vld [vmem:[%s0 + $0xf20] sm:$0xff]
  %v1477 = vld [vmem:[%s0 + $0xf28] sm:$0xff]
  %v1478 = vld [vmem:[%s0 + $0xf30] sm:$0xff]
  %v1479 = vld [vmem:[%s0 + $0xf38] sm:$0xff]
  %v1480 = vld [vmem:[%s0 + $0xf40] sm:$0xff]
  %v1481 = vld [vmem:[%s0 + $0xf48] sm:$0xff]
  %v1482 = vld [vmem:[%s0 + $0xf50] sm:$0xff]
  %v1483 = vld [vmem:[%s0 + $0xf58] sm:$0xff]
  %v1484 = vld [vmem:[%s0 + $0xf60] sm:$0xff]
  %v1485 = vld [vmem:[%s0 + $0xf68] sm:$0xff]
  %v1486 = vld [vmem:[%s0 + $0xf70] sm:$0xff]
  %v1487 = vld [vmem:[%s0 + $0xf78] sm:$0xff]
  %v1488 = vld [vmem:[%s0 + $0xf80] sm:$0xff]
  %v1489 = vld [vmem:[%s0 + $0xf88] sm:$0xff]
  %v1490 = vld [vmem:[%s0 + $0xf90] sm:$0xff]
  %v1491 = vld [vmem:[%s0 + $0xf98] sm:$0xff]
  %v1492 = vld [vmem:[%s0 + $0xfa0] sm:$0xff]
  %v1493 = vld [vmem:[%s0 + $0xfa8] sm:$0xff]
  %v1494 = vld [vmem:[%s0 + $0xfb0] sm:$0xff]
  %v1495 = vld [vmem:[%s0 + $0xfb8] sm:$0xff]
  %v1496 = vld [vmem:[%s0 + $0xfc0] sm:$0xff]
  %v1497 = vld [vmem:[%s0 + $0xfc8] sm:$0xff]
  %v1498 = vld [vmem:[%s0 + $0xfd0] sm:$0xff]
  %v1499 = vld [vmem:[%s0 + $0xfd8] sm:$0xff]
  %v1500 = vld [vmem:[%s0 + $0xfe0] sm:$0xff]
  %v1501 = vld [vmem:[%s0 + $0xfe8] sm:$0xff]
  %v1502 = vld [vmem:[%s0 + $0xff0] sm:$0xff]
  %v1503 = vld [vmem:[%s0 + $0xff8] sm:$0xff]
  %v1504 = vld [vmem:[%s3] sm:$0x1]
  %v1506 = vperm.slane %v1504, 0
  %v2020 = vunpack.c.l.b16 %v992
  %v2021 = vunpack.c.h.b16 %v992
  %v2022 = vunpack.c.l.b16 %v993
  %v2023 = vunpack.c.h.b16 %v993
  %v2024 = vunpack.c.l.b16 %v994
  %v2025 = vunpack.c.h.b16 %v994
  %v2026 = vunpack.c.l.b16 %v995
  %v2027 = vunpack.c.h.b16 %v995
  %v2028 = vunpack.c.l.b16 %v996
  %v2029 = vunpack.c.h.b16 %v996
  %v2030 = vunpack.c.l.b16 %v997
  %v2031 = vunpack.c.h.b16 %v997
  %v2032 = vunpack.c.l.b16 %v998
  %v2033 = vunpack.c.h.b16 %v998
  %v2034 = vunpack.c.l.b16 %v999
  %v2035 = vunpack.c.h.b16 %v999
  %v2036 = vunpack.c.l.b16 %v1000
  %v2037 = vunpack.c.h.b16 %v1000
  %v2038 = vunpack.c.l.b16 %v1001
  %v2039 = vunpack.c.h.b16 %v1001
  %v2040 = vunpack.c.l.b16 %v1002
  %v2041 = vunpack.c.h.b16 %v1002
  %v2042 = vunpack.c.l.b16 %v1003
  %v2043 = vunpack.c.h.b16 %v1003
  %v2044 = vunpack.c.l.b16 %v1004
  %v2045 = vunpack.c.h.b16 %v1004
  %v2046 = vunpack.c.l.b16 %v1005
  %v2047 = vunpack.c.h.b16 %v1005
  %v2048 = vunpack.c.l.b16 %v1006
  %v2049 = vunpack.c.h.b16 %v1006
  %v2050 = vunpack.c.l.b16 %v1007
  %v2051 = vunpack.c.h.b16 %v1007
  %v2052 = vunpack.c.l.b16 %v1008
  %v2053 = vunpack.c.h.b16 %v1008
  %v2054 = vunpack.c.l.b16 %v1009
  %v2055 = vunpack.c.h.b16 %v1009
  %v2056 = vunpack.c.l.b16 %v1010
  %v2057 = vunpack.c.h.b16 %v1010
  %v2058 = vunpack.c.l.b16 %v1011
  %v2059 = vunpack.c.h.b16 %v1011
  %v2060 = vunpack.c.l.b16 %v1012
  %v2061 = vunpack.c.h.b16 %v1012
  %v2062 = vunpack.c.l.b16 %v1013
  %v2063 = vunpack.c.h.b16 %v1013
  %v2064 = vunpack.c.l.b16 %v1014
  %v2065 = vunpack.c.h.b16 %v1014
  %v2066 = vunpack.c.l.b16 %v1015
  %v2067 = vunpack.c.h.b16 %v1015
  %v2068 = vunpack.c.l.b16 %v1016
  %v2069 = vunpack.c.h.b16 %v1016
  %v2070 = vunpack.c.l.b16 %v1017
  %v2071 = vunpack.c.h.b16 %v1017
  %v2072 = vunpack.c.l.b16 %v1018
  %v2073 = vunpack.c.h.b16 %v1018
  %v2074 = vunpack.c.l.b16 %v1019
  %v2075 = vunpack.c.h.b16 %v1019
  %v2076 = vunpack.c.l.b16 %v1020
  %v2077 = vunpack.c.h.b16 %v1020
  %v2078 = vunpack.c.l.b16 %v1021
  %v2079 = vunpack.c.h.b16 %v1021
  %v2080 = vunpack.c.l.b16 %v1022
  %v2081 = vunpack.c.h.b16 %v1022
  %v2082 = vunpack.c.l.b16 %v1023
  %v2083 = vunpack.c.h.b16 %v1023
  %v2084 = vunpack.c.l.b16 %v1024
  %v2085 = vunpack.c.h.b16 %v1024
  %v2086 = vunpack.c.l.b16 %v1025
  %v2087 = vunpack.c.h.b16 %v1025
  %v2088 = vunpack.c.l.b16 %v1026
  %v2089 = vunpack.c.h.b16 %v1026
  %v2090 = vunpack.c.l.b16 %v1027
  %v2091 = vunpack.c.h.b16 %v1027
  %v2092 = vunpack.c.l.b16 %v1028
  %v2093 = vunpack.c.h.b16 %v1028
  %v2094 = vunpack.c.l.b16 %v1029
  %v2095 = vunpack.c.h.b16 %v1029
  %v2096 = vunpack.c.l.b16 %v1030
  %v2097 = vunpack.c.h.b16 %v1030
  %v2098 = vunpack.c.l.b16 %v1031
  %v2099 = vunpack.c.h.b16 %v1031
  %v2100 = vunpack.c.l.b16 %v1032
  %v2101 = vunpack.c.h.b16 %v1032
  %v2102 = vunpack.c.l.b16 %v1033
  %v2103 = vunpack.c.h.b16 %v1033
  %v2104 = vunpack.c.l.b16 %v1034
  %v2105 = vunpack.c.h.b16 %v1034
  %v2106 = vunpack.c.l.b16 %v1035
  %v2107 = vunpack.c.h.b16 %v1035
  %v2108 = vunpack.c.l.b16 %v1036
  %v2109 = vunpack.c.h.b16 %v1036
  %v2110 = vunpack.c.l.b16 %v1037
  %v2111 = vunpack.c.h.b16 %v1037
  %v2112 = vunpack.c.l.b16 %v1038
  %v2113 = vunpack.c.h.b16 %v1038
  %v2114 = vunpack.c.l.b16 %v1039
  %v2115 = vunpack.c.h.b16 %v1039
  %v2116 = vunpack.c.l.b16 %v1040
  %v2117 = vunpack.c.h.b16 %v1040
  %v2118 = vunpack.c.l.b16 %v1041
  %v2119 = vunpack.c.h.b16 %v1041
  %v2120 = vunpack.c.l.b16 %v1042
  %v2121 = vunpack.c.h.b16 %v1042
  %v2122 = vunpack.c.l.b16 %v1043
  %v2123 = vunpack.c.h.b16 %v1043
  %v2124 = vunpack.c.l.b16 %v1044
  %v2125 = vunpack.c.h.b16 %v1044
  %v2126 = vunpack.c.l.b16 %v1045
  %v2127 = vunpack.c.h.b16 %v1045
  %v2128 = vunpack.c.l.b16 %v1046
  %v2129 = vunpack.c.h.b16 %v1046
  %v2130 = vunpack.c.l.b16 %v1047
  %v2131 = vunpack.c.h.b16 %v1047
  %v2132 = vunpack.c.l.b16 %v1048
  %v2133 = vunpack.c.h.b16 %v1048
  %v2134 = vunpack.c.l.b16 %v1049
  %v2135 = vunpack.c.h.b16 %v1049
  %v2136 = vunpack.c.l.b16 %v1050
  %v2137 = vunpack.c.h.b16 %v1050
  %v2138 = vunpack.c.l.b16 %v1051
  %v2139 = vunpack.c.h.b16 %v1051
  %v2140 = vunpack.c.l.b16 %v1052
  %v2141 = vunpack.c.h.b16 %v1052
  %v2142 = vunpack.c.l.b16 %v1053
  %v2143 = vunpack.c.h.b16 %v1053
  %v2144 = vunpack.c.l.b16 %v1054
  %v2145 = vunpack.c.h.b16 %v1054
  %v2146 = vunpack.c.l.b16 %v1055
  %v2147 = vunpack.c.h.b16 %v1055
  %v2148 = vunpack.c.l.b16 %v1056
  %v2149 = vunpack.c.h.b16 %v1056
  %v2150 = vunpack.c.l.b16 %v1057
  %v2151 = vunpack.c.h.b16 %v1057
  %v2152 = vunpack.c.l.b16 %v1058
  %v2153 = vunpack.c.h.b16 %v1058
  %v2154 = vunpack.c.l.b16 %v1059
  %v2155 = vunpack.c.h.b16 %v1059
  %v2156 = vunpack.c.l.b16 %v1060
  %v2157 = vunpack.c.h.b16 %v1060
  %v2158 = vunpack.c.l.b16 %v1061
  %v2159 = vunpack.c.h.b16 %v1061
  %v2160 = vunpack.c.l.b16 %v1062
  %v2161 = vunpack.c.h.b16 %v1062
  %v2162 = vunpack.c.l.b16 %v1063
  %v2163 = vunpack.c.h.b16 %v1063
  %v2164 = vunpack.c.l.b16 %v1064
  %v2165 = vunpack.c.h.b16 %v1064
  %v2166 = vunpack.c.l.b16 %v1065
  %v2167 = vunpack.c.h.b16 %v1065
  %v2168 = vunpack.c.l.b16 %v1066
  %v2169 = vunpack.c.h.b16 %v1066
  %v2170 = vunpack.c.l.b16 %v1067
  %v2171 = vunpack.c.h.b16 %v1067
  %v2172 = vunpack.c.l.b16 %v1068
  %v2173 = vunpack.c.h.b16 %v1068
  %v2174 = vunpack.c.l.b16 %v1069
  %v2175 = vunpack.c.h.b16 %v1069
  %v2176 = vunpack.c.l.b16 %v1070
  %v2177 = vunpack.c.h.b16 %v1070
  %v2178 = vunpack.c.l.b16 %v1071
  %v2179 = vunpack.c.h.b16 %v1071
  %v2180 = vunpack.c.l.b16 %v1072
  %v2181 = vunpack.c.h.b16 %v1072
  %v2182 = vunpack.c.l.b16 %v1073
  %v2183 = vunpack.c.h.b16 %v1073
  %v2184 = vunpack.c.l.b16 %v1074
  %v2185 = vunpack.c.h.b16 %v1074
  %v2186 = vunpack.c.l.b16 %v1075
  %v2187 = vunpack.c.h.b16 %v1075
  %v2188 = vunpack.c.l.b16 %v1076
  %v2189 = vunpack.c.h.b16 %v1076
  %v2190 = vunpack.c.l.b16 %v1077
  %v2191 = vunpack.c.h.b16 %v1077
  %v2192 = vunpack.c.l.b16 %v1078
  %v2193 = vunpack.c.h.b16 %v1078
  %v2194 = vunpack.c.l.b16 %v1079
  %v2195 = vunpack.c.h.b16 %v1079
  %v2196 = vunpack.c.l.b16 %v1080
  %v2197 = vunpack.c.h.b16 %v1080
  %v2198 = vunpack.c.l.b16 %v1081
  %v2199 = vunpack.c.h.b16 %v1081
  %v2200 = vunpack.c.l.b16 %v1082
  %v2201 = vunpack.c.h.b16 %v1082
  %v2202 = vunpack.c.l.b16 %v1083
  %v2203 = vunpack.c.h.b16 %v1083
  %v2204 = vunpack.c.l.b16 %v1084
  %v2205 = vunpack.c.h.b16 %v1084
  %v2206 = vunpack.c.l.b16 %v1085
  %v2207 = vunpack.c.h.b16 %v1085
  %v2208 = vunpack.c.l.b16 %v1086
  %v2209 = vunpack.c.h.b16 %v1086
  %v2210 = vunpack.c.l.b16 %v1087
  %v2211 = vunpack.c.h.b16 %v1087
  %v2212 = vunpack.c.l.b16 %v1088
  %v2213 = vunpack.c.h.b16 %v1088
  %v2214 = vunpack.c.l.b16 %v1089
  %v2215 = vunpack.c.h.b16 %v1089
  %v2216 = vunpack.c.l.b16 %v1090
  %v2217 = vunpack.c.h.b16 %v1090
  %v2218 = vunpack.c.l.b16 %v1091
  %v2219 = vunpack.c.h.b16 %v1091
  %v2220 = vunpack.c.l.b16 %v1092
  %v2221 = vunpack.c.h.b16 %v1092
  %v2222 = vunpack.c.l.b16 %v1093
  %v2223 = vunpack.c.h.b16 %v1093
  %v2224 = vunpack.c.l.b16 %v1094
  %v2225 = vunpack.c.h.b16 %v1094
  %v2226 = vunpack.c.l.b16 %v1095
  %v2227 = vunpack.c.h.b16 %v1095
  %v2228 = vunpack.c.l.b16 %v1096
  %v2229 = vunpack.c.h.b16 %v1096
  %v2230 = vunpack.c.l.b16 %v1097
  %v2231 = vunpack.c.h.b16 %v1097
  %v2232 = vunpack.c.l.b16 %v1098
  %v2233 = vunpack.c.h.b16 %v1098
  %v2234 = vunpack.c.l.b16 %v1099
  %v2235 = vunpack.c.h.b16 %v1099
  %v2236 = vunpack.c.l.b16 %v1100
  %v2237 = vunpack.c.h.b16 %v1100
  %v2238 = vunpack.c.l.b16 %v1101
  %v2239 = vunpack.c.h.b16 %v1101
  %v2240 = vunpack.c.l.b16 %v1102
  %v2241 = vunpack.c.h.b16 %v1102
  %v2242 = vunpack.c.l.b16 %v1103
  %v2243 = vunpack.c.h.b16 %v1103
  %v2244 = vunpack.c.l.b16 %v1104
  %v2245 = vunpack.c.h.b16 %v1104
  %v2246 = vunpack.c.l.b16 %v1105
  %v2247 = vunpack.c.h.b16 %v1105
  %v2248 = vunpack.c.l.b16 %v1106
  %v2249 = vunpack.c.h.b16 %v1106
  %v2250 = vunpack.c.l.b16 %v1107
  %v2251 = vunpack.c.h.b16 %v1107
  %v2252 = vunpack.c.l.b16 %v1108
  %v2253 = vunpack.c.h.b16 %v1108
  %v2254 = vunpack.c.l.b16 %v1109
  %v2255 = vunpack.c.h.b16 %v1109
  %v2256 = vunpack.c.l.b16 %v1110
  %v2257 = vunpack.c.h.b16 %v1110
  %v2258 = vunpack.c.l.b16 %v1111
  %v2259 = vunpack.c.h.b16 %v1111
  %v2260 = vunpack.c.l.b16 %v1112
  %v2261 = vunpack.c.h.b16 %v1112
  %v2262 = vunpack.c.l.b16 %v1113
  %v2263 = vunpack.c.h.b16 %v1113
  %v2264 = vunpack.c.l.b16 %v1114
  %v2265 = vunpack.c.h.b16 %v1114
  %v2266 = vunpack.c.l.b16 %v1115
  %v2267 = vunpack.c.h.b16 %v1115
  %v2268 = vunpack.c.l.b16 %v1116
  %v2269 = vunpack.c.h.b16 %v1116
  %v2270 = vunpack.c.l.b16 %v1117
  %v2271 = vunpack.c.h.b16 %v1117
  %v2272 = vunpack.c.l.b16 %v1118
  %v2273 = vunpack.c.h.b16 %v1118
  %v2274 = vunpack.c.l.b16 %v1119
  %v2275 = vunpack.c.h.b16 %v1119
  %v2276 = vunpack.c.l.b16 %v1120
  %v2277 = vunpack.c.h.b16 %v1120
  %v2278 = vunpack.c.l.b16 %v1121
  %v2279 = vunpack.c.h.b16 %v1121
  %v2280 = vunpack.c.l.b16 %v1122
  %v2281 = vunpack.c.h.b16 %v1122
  %v2282 = vunpack.c.l.b16 %v1123
  %v2283 = vunpack.c.h.b16 %v1123
  %v2284 = vunpack.c.l.b16 %v1124
  %v2285 = vunpack.c.h.b16 %v1124
  %v2286 = vunpack.c.l.b16 %v1125
  %v2287 = vunpack.c.h.b16 %v1125
  %v2288 = vunpack.c.l.b16 %v1126
  %v2289 = vunpack.c.h.b16 %v1126
  %v2290 = vunpack.c.l.b16 %v1127
  %v2291 = vunpack.c.h.b16 %v1127
  %v2292 = vunpack.c.l.b16 %v1128
  %v2293 = vunpack.c.h.b16 %v1128
  %v2294 = vunpack.c.l.b16 %v1129
  %v2295 = vunpack.c.h.b16 %v1129
  %v2296 = vunpack.c.l.b16 %v1130
  %v2297 = vunpack.c.h.b16 %v1130
  %v2298 = vunpack.c.l.b16 %v1131
  %v2299 = vunpack.c.h.b16 %v1131
  %v2300 = vunpack.c.l.b16 %v1132
  %v2301 = vunpack.c.h.b16 %v1132
  %v2302 = vunpack.c.l.b16 %v1133
  %v2303 = vunpack.c.h.b16 %v1133
  %v2304 = vunpack.c.l.b16 %v1134
  %v2305 = vunpack.c.h.b16 %v1134
  %v2306 = vunpack.c.l.b16 %v1135
  %v2307 = vunpack.c.h.b16 %v1135
  %v2308 = vunpack.c.l.b16 %v1136
  %v2309 = vunpack.c.h.b16 %v1136
  %v2310 = vunpack.c.l.b16 %v1137
  %v2311 = vunpack.c.h.b16 %v1137
  %v2312 = vunpack.c.l.b16 %v1138
  %v2313 = vunpack.c.h.b16 %v1138
  %v2314 = vunpack.c.l.b16 %v1139
  %v2315 = vunpack.c.h.b16 %v1139
  %v2316 = vunpack.c.l.b16 %v1140
  %v2317 = vunpack.c.h.b16 %v1140
  %v2318 = vunpack.c.l.b16 %v1141
  %v2319 = vunpack.c.h.b16 %v1141
  %v2320 = vunpack.c.l.b16 %v1142
  %v2321 = vunpack.c.h.b16 %v1142
  %v2322 = vunpack.c.l.b16 %v1143
  %v2323 = vunpack.c.h.b16 %v1143
  %v2324 = vunpack.c.l.b16 %v1144
  %v2325 = vunpack.c.h.b16 %v1144
  %v2326 = vunpack.c.l.b16 %v1145
  %v2327 = vunpack.c.h.b16 %v1145
  %v2328 = vunpack.c.l.b16 %v1146
  %v2329 = vunpack.c.h.b16 %v1146
  %v2330 = vunpack.c.l.b16 %v1147
  %v2331 = vunpack.c.h.b16 %v1147
  %v2332 = vunpack.c.l.b16 %v1148
  %v2333 = vunpack.c.h.b16 %v1148
  %v2334 = vunpack.c.l.b16 %v1149
  %v2335 = vunpack.c.h.b16 %v1149
  %v2336 = vunpack.c.l.b16 %v1150
  %v2337 = vunpack.c.h.b16 %v1150
  %v2338 = vunpack.c.l.b16 %v1151
  %v2339 = vunpack.c.h.b16 %v1151
  %v2340 = vunpack.c.l.b16 %v1152
  %v2341 = vunpack.c.h.b16 %v1152
  %v2342 = vunpack.c.l.b16 %v1153
  %v2343 = vunpack.c.h.b16 %v1153
  %v2344 = vunpack.c.l.b16 %v1154
  %v2345 = vunpack.c.h.b16 %v1154
  %v2346 = vunpack.c.l.b16 %v1155
  %v2347 = vunpack.c.h.b16 %v1155
  %v2348 = vunpack.c.l.b16 %v1156
  %v2349 = vunpack.c.h.b16 %v1156
  %v2350 = vunpack.c.l.b16 %v1157
  %v2351 = vunpack.c.h.b16 %v1157
  %v2352 = vunpack.c.l.b16 %v1158
  %v2353 = vunpack.c.h.b16 %v1158
  %v2354 = vunpack.c.l.b16 %v1159
  %v2355 = vunpack.c.h.b16 %v1159
  %v2356 = vunpack.c.l.b16 %v1160
  %v2357 = vunpack.c.h.b16 %v1160
  %v2358 = vunpack.c.l.b16 %v1161
  %v2359 = vunpack.c.h.b16 %v1161
  %v2360 = vunpack.c.l.b16 %v1162
  %v2361 = vunpack.c.h.b16 %v1162
  %v2362 = vunpack.c.l.b16 %v1163
  %v2363 = vunpack.c.h.b16 %v1163
  %v2364 = vunpack.c.l.b16 %v1164
  %v2365 = vunpack.c.h.b16 %v1164
  %v2366 = vunpack.c.l.b16 %v1165
  %v2367 = vunpack.c.h.b16 %v1165
  %v2368 = vunpack.c.l.b16 %v1166
  %v2369 = vunpack.c.h.b16 %v1166
  %v2370 = vunpack.c.l.b16 %v1167
  %v2371 = vunpack.c.h.b16 %v1167
  %v2372 = vunpack.c.l.b16 %v1168
  %v2373 = vunpack.c.h.b16 %v1168
  %v2374 = vunpack.c.l.b16 %v1169
  %v2375 = vunpack.c.h.b16 %v1169
  %v2376 = vunpack.c.l.b16 %v1170
  %v2377 = vunpack.c.h.b16 %v1170
  %v2378 = vunpack.c.l.b16 %v1171
  %v2379 = vunpack.c.h.b16 %v1171
  %v2380 = vunpack.c.l.b16 %v1172
  %v2381 = vunpack.c.h.b16 %v1172
  %v2382 = vunpack.c.l.b16 %v1173
  %v2383 = vunpack.c.h.b16 %v1173
  %v2384 = vunpack.c.l.b16 %v1174
  %v2385 = vunpack.c.h.b16 %v1174
  %v2386 = vunpack.c.l.b16 %v1175
  %v2387 = vunpack.c.h.b16 %v1175
  %v2388 = vunpack.c.l.b16 %v1176
  %v2389 = vunpack.c.h.b16 %v1176
  %v2390 = vunpack.c.l.b16 %v1177
  %v2391 = vunpack.c.h.b16 %v1177
  %v2392 = vunpack.c.l.b16 %v1178
  %v2393 = vunpack.c.h.b16 %v1178
  %v2394 = vunpack.c.l.b16 %v1179
  %v2395 = vunpack.c.h.b16 %v1179
  %v2396 = vunpack.c.l.b16 %v1180
  %v2397 = vunpack.c.h.b16 %v1180
  %v2398 = vunpack.c.l.b16 %v1181
  %v2399 = vunpack.c.h.b16 %v1181
  %v2400 = vunpack.c.l.b16 %v1182
  %v2401 = vunpack.c.h.b16 %v1182
  %v2402 = vunpack.c.l.b16 %v1183
  %v2403 = vunpack.c.h.b16 %v1183
  %v2404 = vunpack.c.l.b16 %v1184
  %v2405 = vunpack.c.h.b16 %v1184
  %v2406 = vunpack.c.l.b16 %v1185
  %v2407 = vunpack.c.h.b16 %v1185
  %v2408 = vunpack.c.l.b16 %v1186
  %v2409 = vunpack.c.h.b16 %v1186
  %v2410 = vunpack.c.l.b16 %v1187
  %v2411 = vunpack.c.h.b16 %v1187
  %v2412 = vunpack.c.l.b16 %v1188
  %v2413 = vunpack.c.h.b16 %v1188
  %v2414 = vunpack.c.l.b16 %v1189
  %v2415 = vunpack.c.h.b16 %v1189
  %v2416 = vunpack.c.l.b16 %v1190
  %v2417 = vunpack.c.h.b16 %v1190
  %v2418 = vunpack.c.l.b16 %v1191
  %v2419 = vunpack.c.h.b16 %v1191
  %v2420 = vunpack.c.l.b16 %v1192
  %v2421 = vunpack.c.h.b16 %v1192
  %v2422 = vunpack.c.l.b16 %v1193
  %v2423 = vunpack.c.h.b16 %v1193
  %v2424 = vunpack.c.l.b16 %v1194
  %v2425 = vunpack.c.h.b16 %v1194
  %v2426 = vunpack.c.l.b16 %v1195
  %v2427 = vunpack.c.h.b16 %v1195
  %v2428 = vunpack.c.l.b16 %v1196
  %v2429 = vunpack.c.h.b16 %v1196
  %v2430 = vunpack.c.l.b16 %v1197
  %v2431 = vunpack.c.h.b16 %v1197
  %v2432 = vunpack.c.l.b16 %v1198
  %v2433 = vunpack.c.h.b16 %v1198
  %v2434 = vunpack.c.l.b16 %v1199
  %v2435 = vunpack.c.h.b16 %v1199
  %v2436 = vunpack.c.l.b16 %v1200
  %v2437 = vunpack.c.h.b16 %v1200
  %v2438 = vunpack.c.l.b16 %v1201
  %v2439 = vunpack.c.h.b16 %v1201
  %v2440 = vunpack.c.l.b16 %v1202
  %v2441 = vunpack.c.h.b16 %v1202
  %v2442 = vunpack.c.l.b16 %v1203
  %v2443 = vunpack.c.h.b16 %v1203
  %v2444 = vunpack.c.l.b16 %v1204
  %v2445 = vunpack.c.h.b16 %v1204
  %v2446 = vunpack.c.l.b16 %v1205
  %v2447 = vunpack.c.h.b16 %v1205
  %v2448 = vunpack.c.l.b16 %v1206
  %v2449 = vunpack.c.h.b16 %v1206
  %v2450 = vunpack.c.l.b16 %v1207
  %v2451 = vunpack.c.h.b16 %v1207
  %v2452 = vunpack.c.l.b16 %v1208
  %v2453 = vunpack.c.h.b16 %v1208
  %v2454 = vunpack.c.l.b16 %v1209
  %v2455 = vunpack.c.h.b16 %v1209
  %v2456 = vunpack.c.l.b16 %v1210
  %v2457 = vunpack.c.h.b16 %v1210
  %v2458 = vunpack.c.l.b16 %v1211
  %v2459 = vunpack.c.h.b16 %v1211
  %v2460 = vunpack.c.l.b16 %v1212
  %v2461 = vunpack.c.h.b16 %v1212
  %v2462 = vunpack.c.l.b16 %v1213
  %v2463 = vunpack.c.h.b16 %v1213
  %v2464 = vunpack.c.l.b16 %v1214
  %v2465 = vunpack.c.h.b16 %v1214
  %v2466 = vunpack.c.l.b16 %v1215
  %v2467 = vunpack.c.h.b16 %v1215
  %v2468 = vunpack.c.l.b16 %v1216
  %v2469 = vunpack.c.h.b16 %v1216
  %v2470 = vunpack.c.l.b16 %v1217
  %v2471 = vunpack.c.h.b16 %v1217
  %v2472 = vunpack.c.l.b16 %v1218
  %v2473 = vunpack.c.h.b16 %v1218
  %v2474 = vunpack.c.l.b16 %v1219
  %v2475 = vunpack.c.h.b16 %v1219
  %v2476 = vunpack.c.l.b16 %v1220
  %v2477 = vunpack.c.h.b16 %v1220
  %v2478 = vunpack.c.l.b16 %v1221
  %v2479 = vunpack.c.h.b16 %v1221
  %v2480 = vunpack.c.l.b16 %v1222
  %v2481 = vunpack.c.h.b16 %v1222
  %v2482 = vunpack.c.l.b16 %v1223
  %v2483 = vunpack.c.h.b16 %v1223
  %v2484 = vunpack.c.l.b16 %v1224
  %v2485 = vunpack.c.h.b16 %v1224
  %v2486 = vunpack.c.l.b16 %v1225
  %v2487 = vunpack.c.h.b16 %v1225
  %v2488 = vunpack.c.l.b16 %v1226
  %v2489 = vunpack.c.h.b16 %v1226
  %v2490 = vunpack.c.l.b16 %v1227
  %v2491 = vunpack.c.h.b16 %v1227
  %v2492 = vunpack.c.l.b16 %v1228
  %v2493 = vunpack.c.h.b16 %v1228
  %v2494 = vunpack.c.l.b16 %v1229
  %v2495 = vunpack.c.h.b16 %v1229
  %v2496 = vunpack.c.l.b16 %v1230
  %v2497 = vunpack.c.h.b16 %v1230
  %v2498 = vunpack.c.l.b16 %v1231
  %v2499 = vunpack.c.h.b16 %v1231
  %v2500 = vunpack.c.l.b16 %v1232
  %v2501 = vunpack.c.h.b16 %v1232
  %v2502 = vunpack.c.l.b16 %v1233
  %v2503 = vunpack.c.h.b16 %v1233
  %v2504 = vunpack.c.l.b16 %v1234
  %v2505 = vunpack.c.h.b16 %v1234
  %v2506 = vunpack.c.l.b16 %v1235
  %v2507 = vunpack.c.h.b16 %v1235
  %v2508 = vunpack.c.l.b16 %v1236
  %v2509 = vunpack.c.h.b16 %v1236
  %v2510 = vunpack.c.l.b16 %v1237
  %v2511 = vunpack.c.h.b16 %v1237
  %v2512 = vunpack.c.l.b16 %v1238
  %v2513 = vunpack.c.h.b16 %v1238
  %v2514 = vunpack.c.l.b16 %v1239
  %v2515 = vunpack.c.h.b16 %v1239
  %v2516 = vunpack.c.l.b16 %v1240
  %v2517 = vunpack.c.h.b16 %v1240
  %v2518 = vunpack.c.l.b16 %v1241
  %v2519 = vunpack.c.h.b16 %v1241
  %v2520 = vunpack.c.l.b16 %v1242
  %v2521 = vunpack.c.h.b16 %v1242
  %v2522 = vunpack.c.l.b16 %v1243
  %v2523 = vunpack.c.h.b16 %v1243
  %v2524 = vunpack.c.l.b16 %v1244
  %v2525 = vunpack.c.h.b16 %v1244
  %v2526 = vunpack.c.l.b16 %v1245
  %v2527 = vunpack.c.h.b16 %v1245
  %v2528 = vunpack.c.l.b16 %v1246
  %v2529 = vunpack.c.h.b16 %v1246
  %v2530 = vunpack.c.l.b16 %v1247
  %v2531 = vunpack.c.h.b16 %v1247
  %v2532 = vunpack.c.l.b16 %v1248
  %v2533 = vunpack.c.h.b16 %v1248
  %v2534 = vunpack.c.l.b16 %v1249
  %v2535 = vunpack.c.h.b16 %v1249
  %v2536 = vunpack.c.l.b16 %v1250
  %v2537 = vunpack.c.h.b16 %v1250
  %v2538 = vunpack.c.l.b16 %v1251
  %v2539 = vunpack.c.h.b16 %v1251
  %v2540 = vunpack.c.l.b16 %v1252
  %v2541 = vunpack.c.h.b16 %v1252
  %v2542 = vunpack.c.l.b16 %v1253
  %v2543 = vunpack.c.h.b16 %v1253
  %v2544 = vunpack.c.l.b16 %v1254
  %v2545 = vunpack.c.h.b16 %v1254
  %v2546 = vunpack.c.l.b16 %v1255
  %v2547 = vunpack.c.h.b16 %v1255
  %v2548 = vunpack.c.l.b16 %v1256
  %v2549 = vunpack.c.h.b16 %v1256
  %v2550 = vunpack.c.l.b16 %v1257
  %v2551 = vunpack.c.h.b16 %v1257
  %v2552 = vunpack.c.l.b16 %v1258
  %v2553 = vunpack.c.h.b16 %v1258
  %v2554 = vunpack.c.l.b16 %v1259
  %v2555 = vunpack.c.h.b16 %v1259
  %v2556 = vunpack.c.l.b16 %v1260
  %v2557 = vunpack.c.h.b16 %v1260
  %v2558 = vunpack.c.l.b16 %v1261
  %v2559 = vunpack.c.h.b16 %v1261
  %v2560 = vunpack.c.l.b16 %v1262
  %v2561 = vunpack.c.h.b16 %v1262
  %v2562 = vunpack.c.l.b16 %v1263
  %v2563 = vunpack.c.h.b16 %v1263
  %v2564 = vunpack.c.l.b16 %v1264
  %v2565 = vunpack.c.h.b16 %v1264
  %v2566 = vunpack.c.l.b16 %v1265
  %v2567 = vunpack.c.h.b16 %v1265
  %v2568 = vunpack.c.l.b16 %v1266
  %v2569 = vunpack.c.h.b16 %v1266
  %v2570 = vunpack.c.l.b16 %v1267
  %v2571 = vunpack.c.h.b16 %v1267
  %v2572 = vunpack.c.l.b16 %v1268
  %v2573 = vunpack.c.h.b16 %v1268
  %v2574 = vunpack.c.l.b16 %v1269
  %v2575 = vunpack.c.h.b16 %v1269
  %v2576 = vunpack.c.l.b16 %v1270
  %v2577 = vunpack.c.h.b16 %v1270
  %v2578 = vunpack.c.l.b16 %v1271
  %v2579 = vunpack.c.h.b16 %v1271
  %v2580 = vunpack.c.l.b16 %v1272
  %v2581 = vunpack.c.h.b16 %v1272
  %v2582 = vunpack.c.l.b16 %v1273
  %v2583 = vunpack.c.h.b16 %v1273
  %v2584 = vunpack.c.l.b16 %v1274
  %v2585 = vunpack.c.h.b16 %v1274
  %v2586 = vunpack.c.l.b16 %v1275
  %v2587 = vunpack.c.h.b16 %v1275
  %v2588 = vunpack.c.l.b16 %v1276
  %v2589 = vunpack.c.h.b16 %v1276
  %v2590 = vunpack.c.l.b16 %v1277
  %v2591 = vunpack.c.h.b16 %v1277
  %v2592 = vunpack.c.l.b16 %v1278
  %v2593 = vunpack.c.h.b16 %v1278
  %v2594 = vunpack.c.l.b16 %v1279
  %v2595 = vunpack.c.h.b16 %v1279
  %v2596 = vunpack.c.l.b16 %v1280
  %v2597 = vunpack.c.h.b16 %v1280
  %v2598 = vunpack.c.l.b16 %v1281
  %v2599 = vunpack.c.h.b16 %v1281
  %v2600 = vunpack.c.l.b16 %v1282
  %v2601 = vunpack.c.h.b16 %v1282
  %v2602 = vunpack.c.l.b16 %v1283
  %v2603 = vunpack.c.h.b16 %v1283
  %v2604 = vunpack.c.l.b16 %v1284
  %v2605 = vunpack.c.h.b16 %v1284
  %v2606 = vunpack.c.l.b16 %v1285
  %v2607 = vunpack.c.h.b16 %v1285
  %v2608 = vunpack.c.l.b16 %v1286
  %v2609 = vunpack.c.h.b16 %v1286
  %v2610 = vunpack.c.l.b16 %v1287
  %v2611 = vunpack.c.h.b16 %v1287
  %v2612 = vunpack.c.l.b16 %v1288
  %v2613 = vunpack.c.h.b16 %v1288
  %v2614 = vunpack.c.l.b16 %v1289
  %v2615 = vunpack.c.h.b16 %v1289
  %v2616 = vunpack.c.l.b16 %v1290
  %v2617 = vunpack.c.h.b16 %v1290
  %v2618 = vunpack.c.l.b16 %v1291
  %v2619 = vunpack.c.h.b16 %v1291
  %v2620 = vunpack.c.l.b16 %v1292
  %v2621 = vunpack.c.h.b16 %v1292
  %v2622 = vunpack.c.l.b16 %v1293
  %v2623 = vunpack.c.h.b16 %v1293
  %v2624 = vunpack.c.l.b16 %v1294
  %v2625 = vunpack.c.h.b16 %v1294
  %v2626 = vunpack.c.l.b16 %v1295
  %v2627 = vunpack.c.h.b16 %v1295
  %v2628 = vunpack.c.l.b16 %v1296
  %v2629 = vunpack.c.h.b16 %v1296
  %v2630 = vunpack.c.l.b16 %v1297
  %v2631 = vunpack.c.h.b16 %v1297
  %v2632 = vunpack.c.l.b16 %v1298
  %v2633 = vunpack.c.h.b16 %v1298
  %v2634 = vunpack.c.l.b16 %v1299
  %v2635 = vunpack.c.h.b16 %v1299
  %v2636 = vunpack.c.l.b16 %v1300
  %v2637 = vunpack.c.h.b16 %v1300
  %v2638 = vunpack.c.l.b16 %v1301
  %v2639 = vunpack.c.h.b16 %v1301
  %v2640 = vunpack.c.l.b16 %v1302
  %v2641 = vunpack.c.h.b16 %v1302
  %v2642 = vunpack.c.l.b16 %v1303
  %v2643 = vunpack.c.h.b16 %v1303
  %v2644 = vunpack.c.l.b16 %v1304
  %v2645 = vunpack.c.h.b16 %v1304
  %v2646 = vunpack.c.l.b16 %v1305
  %v2647 = vunpack.c.h.b16 %v1305
  %v2648 = vunpack.c.l.b16 %v1306
  %v2649 = vunpack.c.h.b16 %v1306
  %v2650 = vunpack.c.l.b16 %v1307
  %v2651 = vunpack.c.h.b16 %v1307
  %v2652 = vunpack.c.l.b16 %v1308
  %v2653 = vunpack.c.h.b16 %v1308
  %v2654 = vunpack.c.l.b16 %v1309
  %v2655 = vunpack.c.h.b16 %v1309
  %v2656 = vunpack.c.l.b16 %v1310
  %v2657 = vunpack.c.h.b16 %v1310
  %v2658 = vunpack.c.l.b16 %v1311
  %v2659 = vunpack.c.h.b16 %v1311
  %v2660 = vunpack.c.l.b16 %v1312
  %v2661 = vunpack.c.h.b16 %v1312
  %v2662 = vunpack.c.l.b16 %v1313
  %v2663 = vunpack.c.h.b16 %v1313
  %v2664 = vunpack.c.l.b16 %v1314
  %v2665 = vunpack.c.h.b16 %v1314
  %v2666 = vunpack.c.l.b16 %v1315
  %v2667 = vunpack.c.h.b16 %v1315
  %v2668 = vunpack.c.l.b16 %v1316
  %v2669 = vunpack.c.h.b16 %v1316
  %v2670 = vunpack.c.l.b16 %v1317
  %v2671 = vunpack.c.h.b16 %v1317
  %v2672 = vunpack.c.l.b16 %v1318
  %v2673 = vunpack.c.h.b16 %v1318
  %v2674 = vunpack.c.l.b16 %v1319
  %v2675 = vunpack.c.h.b16 %v1319
  %v2676 = vunpack.c.l.b16 %v1320
  %v2677 = vunpack.c.h.b16 %v1320
  %v2678 = vunpack.c.l.b16 %v1321
  %v2679 = vunpack.c.h.b16 %v1321
  %v2680 = vunpack.c.l.b16 %v1322
  %v2681 = vunpack.c.h.b16 %v1322
  %v2682 = vunpack.c.l.b16 %v1323
  %v2683 = vunpack.c.h.b16 %v1323
  %v2684 = vunpack.c.l.b16 %v1324
  %v2685 = vunpack.c.h.b16 %v1324
  %v2686 = vunpack.c.l.b16 %v1325
  %v2687 = vunpack.c.h.b16 %v1325
  %v2688 = vunpack.c.l.b16 %v1326
  %v2689 = vunpack.c.h.b16 %v1326
  %v2690 = vunpack.c.l.b16 %v1327
  %v2691 = vunpack.c.h.b16 %v1327
  %v2692 = vunpack.c.l.b16 %v1328
  %v2693 = vunpack.c.h.b16 %v1328
  %v2694 = vunpack.c.l.b16 %v1329
  %v2695 = vunpack.c.h.b16 %v1329
  %v2696 = vunpack.c.l.b16 %v1330
  %v2697 = vunpack.c.h.b16 %v1330
  %v2698 = vunpack.c.l.b16 %v1331
  %v2699 = vunpack.c.h.b16 %v1331
  %v2700 = vunpack.c.l.b16 %v1332
  %v2701 = vunpack.c.h.b16 %v1332
  %v2702 = vunpack.c.l.b16 %v1333
  %v2703 = vunpack.c.h.b16 %v1333
  %v2704 = vunpack.c.l.b16 %v1334
  %v2705 = vunpack.c.h.b16 %v1334
  %v2706 = vunpack.c.l.b16 %v1335
  %v2707 = vunpack.c.h.b16 %v1335
  %v2708 = vunpack.c.l.b16 %v1336
  %v2709 = vunpack.c.h.b16 %v1336
  %v2710 = vunpack.c.l.b16 %v1337
  %v2711 = vunpack.c.h.b16 %v1337
  %v2712 = vunpack.c.l.b16 %v1338
  %v2713 = vunpack.c.h.b16 %v1338
  %v2714 = vunpack.c.l.b16 %v1339
  %v2715 = vunpack.c.h.b16 %v1339
  %v2716 = vunpack.c.l.b16 %v1340
  %v2717 = vunpack.c.h.b16 %v1340
  %v2718 = vunpack.c.l.b16 %v1341
  %v2719 = vunpack.c.h.b16 %v1341
  %v2720 = vunpack.c.l.b16 %v1342
  %v2721 = vunpack.c.h.b16 %v1342
  %v2722 = vunpack.c.l.b16 %v1343
  %v2723 = vunpack.c.h.b16 %v1343
  %v2724 = vunpack.c.l.b16 %v1344
  %v2725 = vunpack.c.h.b16 %v1344
  %v2726 = vunpack.c.l.b16 %v1345
  %v2727 = vunpack.c.h.b16 %v1345
  %v2728 = vunpack.c.l.b16 %v1346
  %v2729 = vunpack.c.h.b16 %v1346
  %v2730 = vunpack.c.l.b16 %v1347
  %v2731 = vunpack.c.h.b16 %v1347
  %v2732 = vunpack.c.l.b16 %v1348
  %v2733 = vunpack.c.h.b16 %v1348
  %v2734 = vunpack.c.l.b16 %v1349
  %v2735 = vunpack.c.h.b16 %v1349
  %v2736 = vunpack.c.l.b16 %v1350
  %v2737 = vunpack.c.h.b16 %v1350
  %v2738 = vunpack.c.l.b16 %v1351
  %v2739 = vunpack.c.h.b16 %v1351
  %v2740 = vunpack.c.l.b16 %v1352
  %v2741 = vunpack.c.h.b16 %v1352
  %v2742 = vunpack.c.l.b16 %v1353
  %v2743 = vunpack.c.h.b16 %v1353
  %v2744 = vunpack.c.l.b16 %v1354
  %v2745 = vunpack.c.h.b16 %v1354
  %v2746 = vunpack.c.l.b16 %v1355
  %v2747 = vunpack.c.h.b16 %v1355
  %v2748 = vunpack.c.l.b16 %v1356
  %v2749 = vunpack.c.h.b16 %v1356
  %v2750 = vunpack.c.l.b16 %v1357
  %v2751 = vunpack.c.h.b16 %v1357
  %v2752 = vunpack.c.l.b16 %v1358
  %v2753 = vunpack.c.h.b16 %v1358
  %v2754 = vunpack.c.l.b16 %v1359
  %v2755 = vunpack.c.h.b16 %v1359
  %v2756 = vunpack.c.l.b16 %v1360
  %v2757 = vunpack.c.h.b16 %v1360
  %v2758 = vunpack.c.l.b16 %v1361
  %v2759 = vunpack.c.h.b16 %v1361
  %v2760 = vunpack.c.l.b16 %v1362
  %v2761 = vunpack.c.h.b16 %v1362
  %v2762 = vunpack.c.l.b16 %v1363
  %v2763 = vunpack.c.h.b16 %v1363
  %v2764 = vunpack.c.l.b16 %v1364
  %v2765 = vunpack.c.h.b16 %v1364
  %v2766 = vunpack.c.l.b16 %v1365
  %v2767 = vunpack.c.h.b16 %v1365
  %v2768 = vunpack.c.l.b16 %v1366
  %v2769 = vunpack.c.h.b16 %v1366
  %v2770 = vunpack.c.l.b16 %v1367
  %v2771 = vunpack.c.h.b16 %v1367
  %v2772 = vunpack.c.l.b16 %v1368
  %v2773 = vunpack.c.h.b16 %v1368
  %v2774 = vunpack.c.l.b16 %v1369
  %v2775 = vunpack.c.h.b16 %v1369
  %v2776 = vunpack.c.l.b16 %v1370
  %v2777 = vunpack.c.h.b16 %v1370
  %v2778 = vunpack.c.l.b16 %v1371
  %v2779 = vunpack.c.h.b16 %v1371
  %v2780 = vunpack.c.l.b16 %v1372
  %v2781 = vunpack.c.h.b16 %v1372
  %v2782 = vunpack.c.l.b16 %v1373
  %v2783 = vunpack.c.h.b16 %v1373
  %v2784 = vunpack.c.l.b16 %v1374
  %v2785 = vunpack.c.h.b16 %v1374
  %v2786 = vunpack.c.l.b16 %v1375
  %v2787 = vunpack.c.h.b16 %v1375
  %v2788 = vunpack.c.l.b16 %v1376
  %v2789 = vunpack.c.h.b16 %v1376
  %v2790 = vunpack.c.l.b16 %v1377
  %v2791 = vunpack.c.h.b16 %v1377
  %v2792 = vunpack.c.l.b16 %v1378
  %v2793 = vunpack.c.h.b16 %v1378
  %v2794 = vunpack.c.l.b16 %v1379
  %v2795 = vunpack.c.h.b16 %v1379
  %v2796 = vunpack.c.l.b16 %v1380
  %v2797 = vunpack.c.h.b16 %v1380
  %v2798 = vunpack.c.l.b16 %v1381
  %v2799 = vunpack.c.h.b16 %v1381
  %v2800 = vunpack.c.l.b16 %v1382
  %v2801 = vunpack.c.h.b16 %v1382
  %v2802 = vunpack.c.l.b16 %v1383
  %v2803 = vunpack.c.h.b16 %v1383
  %v2804 = vunpack.c.l.b16 %v1384
  %v2805 = vunpack.c.h.b16 %v1384
  %v2806 = vunpack.c.l.b16 %v1385
  %v2807 = vunpack.c.h.b16 %v1385
  %v2808 = vunpack.c.l.b16 %v1386
  %v2809 = vunpack.c.h.b16 %v1386
  %v2810 = vunpack.c.l.b16 %v1387
  %v2811 = vunpack.c.h.b16 %v1387
  %v2812 = vunpack.c.l.b16 %v1388
  %v2813 = vunpack.c.h.b16 %v1388
  %v2814 = vunpack.c.l.b16 %v1389
  %v2815 = vunpack.c.h.b16 %v1389
  %v2816 = vunpack.c.l.b16 %v1390
  %v2817 = vunpack.c.h.b16 %v1390
  %v2818 = vunpack.c.l.b16 %v1391
  %v2819 = vunpack.c.h.b16 %v1391
  %v2820 = vunpack.c.l.b16 %v1392
  %v2821 = vunpack.c.h.b16 %v1392
  %v2822 = vunpack.c.l.b16 %v1393
  %v2823 = vunpack.c.h.b16 %v1393
  %v2824 = vunpack.c.l.b16 %v1394
  %v2825 = vunpack.c.h.b16 %v1394
  %v2826 = vunpack.c.l.b16 %v1395
  %v2827 = vunpack.c.h.b16 %v1395
  %v2828 = vunpack.c.l.b16 %v1396
  %v2829 = vunpack.c.h.b16 %v1396
  %v2830 = vunpack.c.l.b16 %v1397
  %v2831 = vunpack.c.h.b16 %v1397
  %v2832 = vunpack.c.l.b16 %v1398
  %v2833 = vunpack.c.h.b16 %v1398
  %v2834 = vunpack.c.l.b16 %v1399
  %v2835 = vunpack.c.h.b16 %v1399
  %v2836 = vunpack.c.l.b16 %v1400
  %v2837 = vunpack.c.h.b16 %v1400
  %v2838 = vunpack.c.l.b16 %v1401
  %v2839 = vunpack.c.h.b16 %v1401
  %v2840 = vunpack.c.l.b16 %v1402
  %v2841 = vunpack.c.h.b16 %v1402
  %v2842 = vunpack.c.l.b16 %v1403
  %v2843 = vunpack.c.h.b16 %v1403
  %v2844 = vunpack.c.l.b16 %v1404
  %v2845 = vunpack.c.h.b16 %v1404
  %v2846 = vunpack.c.l.b16 %v1405
  %v2847 = vunpack.c.h.b16 %v1405
  %v2848 = vunpack.c.l.b16 %v1406
  %v2849 = vunpack.c.h.b16 %v1406
  %v2850 = vunpack.c.l.b16 %v1407
  %v2851 = vunpack.c.h.b16 %v1407
  %v2852 = vunpack.c.l.b16 %v1408
  %v2853 = vunpack.c.h.b16 %v1408
  %v2854 = vunpack.c.l.b16 %v1409
  %v2855 = vunpack.c.h.b16 %v1409
  %v2856 = vunpack.c.l.b16 %v1410
  %v2857 = vunpack.c.h.b16 %v1410
  %v2858 = vunpack.c.l.b16 %v1411
  %v2859 = vunpack.c.h.b16 %v1411
  %v2860 = vunpack.c.l.b16 %v1412
  %v2861 = vunpack.c.h.b16 %v1412
  %v2862 = vunpack.c.l.b16 %v1413
  %v2863 = vunpack.c.h.b16 %v1413
  %v2864 = vunpack.c.l.b16 %v1414
  %v2865 = vunpack.c.h.b16 %v1414
  %v2866 = vunpack.c.l.b16 %v1415
  %v2867 = vunpack.c.h.b16 %v1415
  %v2868 = vunpack.c.l.b16 %v1416
  %v2869 = vunpack.c.h.b16 %v1416
  %v2870 = vunpack.c.l.b16 %v1417
  %v2871 = vunpack.c.h.b16 %v1417
  %v2872 = vunpack.c.l.b16 %v1418
  %v2873 = vunpack.c.h.b16 %v1418
  %v2874 = vunpack.c.l.b16 %v1419
  %v2875 = vunpack.c.h.b16 %v1419
  %v2876 = vunpack.c.l.b16 %v1420
  %v2877 = vunpack.c.h.b16 %v1420
  %v2878 = vunpack.c.l.b16 %v1421
  %v2879 = vunpack.c.h.b16 %v1421
  %v2880 = vunpack.c.l.b16 %v1422
  %v2881 = vunpack.c.h.b16 %v1422
  %v2882 = vunpack.c.l.b16 %v1423
  %v2883 = vunpack.c.h.b16 %v1423
  %v2884 = vunpack.c.l.b16 %v1424
  %v2885 = vunpack.c.h.b16 %v1424
  %v2886 = vunpack.c.l.b16 %v1425
  %v2887 = vunpack.c.h.b16 %v1425
  %v2888 = vunpack.c.l.b16 %v1426
  %v2889 = vunpack.c.h.b16 %v1426
  %v2890 = vunpack.c.l.b16 %v1427
  %v2891 = vunpack.c.h.b16 %v1427
  %v2892 = vunpack.c.l.b16 %v1428
  %v2893 = vunpack.c.h.b16 %v1428
  %v2894 = vunpack.c.l.b16 %v1429
  %v2895 = vunpack.c.h.b16 %v1429
  %v2896 = vunpack.c.l.b16 %v1430
  %v2897 = vunpack.c.h.b16 %v1430
  %v2898 = vunpack.c.l.b16 %v1431
  %v2899 = vunpack.c.h.b16 %v1431
  %v2900 = vunpack.c.l.b16 %v1432
  %v2901 = vunpack.c.h.b16 %v1432
  %v2902 = vunpack.c.l.b16 %v1433
  %v2903 = vunpack.c.h.b16 %v1433
  %v2904 = vunpack.c.l.b16 %v1434
  %v2905 = vunpack.c.h.b16 %v1434
  %v2906 = vunpack.c.l.b16 %v1435
  %v2907 = vunpack.c.h.b16 %v1435
  %v2908 = vunpack.c.l.b16 %v1436
  %v2909 = vunpack.c.h.b16 %v1436
  %v2910 = vunpack.c.l.b16 %v1437
  %v2911 = vunpack.c.h.b16 %v1437
  %v2912 = vunpack.c.l.b16 %v1438
  %v2913 = vunpack.c.h.b16 %v1438
  %v2914 = vunpack.c.l.b16 %v1439
  %v2915 = vunpack.c.h.b16 %v1439
  %v2916 = vunpack.c.l.b16 %v1440
  %v2917 = vunpack.c.h.b16 %v1440
  %v2918 = vunpack.c.l.b16 %v1441
  %v2919 = vunpack.c.h.b16 %v1441
  %v2920 = vunpack.c.l.b16 %v1442
  %v2921 = vunpack.c.h.b16 %v1442
  %v2922 = vunpack.c.l.b16 %v1443
  %v2923 = vunpack.c.h.b16 %v1443
  %v2924 = vunpack.c.l.b16 %v1444
  %v2925 = vunpack.c.h.b16 %v1444
  %v2926 = vunpack.c.l.b16 %v1445
  %v2927 = vunpack.c.h.b16 %v1445
  %v2928 = vunpack.c.l.b16 %v1446
  %v2929 = vunpack.c.h.b16 %v1446
  %v2930 = vunpack.c.l.b16 %v1447
  %v2931 = vunpack.c.h.b16 %v1447
  %v2932 = vunpack.c.l.b16 %v1448
  %v2933 = vunpack.c.h.b16 %v1448
  %v2934 = vunpack.c.l.b16 %v1449
  %v2935 = vunpack.c.h.b16 %v1449
  %v2936 = vunpack.c.l.b16 %v1450
  %v2937 = vunpack.c.h.b16 %v1450
  %v2938 = vunpack.c.l.b16 %v1451
  %v2939 = vunpack.c.h.b16 %v1451
  %v2940 = vunpack.c.l.b16 %v1452
  %v2941 = vunpack.c.h.b16 %v1452
  %v2942 = vunpack.c.l.b16 %v1453
  %v2943 = vunpack.c.h.b16 %v1453
  %v2944 = vunpack.c.l.b16 %v1454
  %v2945 = vunpack.c.h.b16 %v1454
  %v2946 = vunpack.c.l.b16 %v1455
  %v2947 = vunpack.c.h.b16 %v1455
  %v2948 = vunpack.c.l.b16 %v1456
  %v2949 = vunpack.c.h.b16 %v1456
  %v2950 = vunpack.c.l.b16 %v1457
  %v2951 = vunpack.c.h.b16 %v1457
  %v2952 = vunpack.c.l.b16 %v1458
  %v2953 = vunpack.c.h.b16 %v1458
  %v2954 = vunpack.c.l.b16 %v1459
  %v2955 = vunpack.c.h.b16 %v1459
  %v2956 = vunpack.c.l.b16 %v1460
  %v2957 = vunpack.c.h.b16 %v1460
  %v2958 = vunpack.c.l.b16 %v1461
  %v2959 = vunpack.c.h.b16 %v1461
  %v2960 = vunpack.c.l.b16 %v1462
  %v2961 = vunpack.c.h.b16 %v1462
  %v2962 = vunpack.c.l.b16 %v1463
  %v2963 = vunpack.c.h.b16 %v1463
  %v2964 = vunpack.c.l.b16 %v1464
  %v2965 = vunpack.c.h.b16 %v1464
  %v2966 = vunpack.c.l.b16 %v1465
  %v2967 = vunpack.c.h.b16 %v1465
  %v2968 = vunpack.c.l.b16 %v1466
  %v2969 = vunpack.c.h.b16 %v1466
  %v2970 = vunpack.c.l.b16 %v1467
  %v2971 = vunpack.c.h.b16 %v1467
  %v2972 = vunpack.c.l.b16 %v1468
  %v2973 = vunpack.c.h.b16 %v1468
  %v2974 = vunpack.c.l.b16 %v1469
  %v2975 = vunpack.c.h.b16 %v1469
  %v2976 = vunpack.c.l.b16 %v1470
  %v2977 = vunpack.c.h.b16 %v1470
  %v2978 = vunpack.c.l.b16 %v1471
  %v2979 = vunpack.c.h.b16 %v1471
  %v2980 = vunpack.c.l.b16 %v1472
  %v2981 = vunpack.c.h.b16 %v1472
  %v2982 = vunpack.c.l.b16 %v1473
  %v2983 = vunpack.c.h.b16 %v1473
  %v2984 = vunpack.c.l.b16 %v1474
  %v2985 = vunpack.c.h.b16 %v1474
  %v2986 = vunpack.c.l.b16 %v1475
  %v2987 = vunpack.c.h.b16 %v1475
  %v2988 = vunpack.c.l.b16 %v1476
  %v2989 = vunpack.c.h.b16 %v1476
  %v2990 = vunpack.c.l.b16 %v1477
  %v2991 = vunpack.c.h.b16 %v1477
  %v2992 = vunpack.c.l.b16 %v1478
  %v2993 = vunpack.c.h.b16 %v1478
  %v2994 = vunpack.c.l.b16 %v1479
  %v2995 = vunpack.c.h.b16 %v1479
  %v2996 = vunpack.c.l.b16 %v1480
  %v2997 = vunpack.c.h.b16 %v1480
  %v2998 = vunpack.c.l.b16 %v1481
  %v2999 = vunpack.c.h.b16 %v1481
  %v3000 = vunpack.c.l.b16 %v1482
  %v3001 = vunpack.c.h.b16 %v1482
  %v3002 = vunpack.c.l.b16 %v1483
  %v3003 = vunpack.c.h.b16 %v1483
  %v3004 = vunpack.c.l.b16 %v1484
  %v3005 = vunpack.c.h.b16 %v1484
  %v3006 = vunpack.c.l.b16 %v1485
  %v3007 = vunpack.c.h.b16 %v1485
  %v3008 = vunpack.c.l.b16 %v1486
  %v3009 = vunpack.c.h.b16 %v1486
  %v3010 = vunpack.c.l.b16 %v1487
  %v3011 = vunpack.c.h.b16 %v1487
  %v3012 = vunpack.c.l.b16 %v1488
  %v3013 = vunpack.c.h.b16 %v1488
  %v3014 = vunpack.c.l.b16 %v1489
  %v3015 = vunpack.c.h.b16 %v1489
  %v3016 = vunpack.c.l.b16 %v1490
  %v3017 = vunpack.c.h.b16 %v1490
  %v3018 = vunpack.c.l.b16 %v1491
  %v3019 = vunpack.c.h.b16 %v1491
  %v3020 = vunpack.c.l.b16 %v1492
  %v3021 = vunpack.c.h.b16 %v1492
  %v3022 = vunpack.c.l.b16 %v1493
  %v3023 = vunpack.c.h.b16 %v1493
  %v3024 = vunpack.c.l.b16 %v1494
  %v3025 = vunpack.c.h.b16 %v1494
  %v3026 = vunpack.c.l.b16 %v1495
  %v3027 = vunpack.c.h.b16 %v1495
  %v3028 = vunpack.c.l.b16 %v1496
  %v3029 = vunpack.c.h.b16 %v1496
  %v3030 = vunpack.c.l.b16 %v1497
  %v3031 = vunpack.c.h.b16 %v1497
  %v3032 = vunpack.c.l.b16 %v1498
  %v3033 = vunpack.c.h.b16 %v1498
  %v3034 = vunpack.c.l.b16 %v1499
  %v3035 = vunpack.c.h.b16 %v1499
  %v3036 = vunpack.c.l.b16 %v1500
  %v3037 = vunpack.c.h.b16 %v1500
  %v3038 = vunpack.c.l.b16 %v1501
  %v3039 = vunpack.c.h.b16 %v1501
  %v3040 = vunpack.c.l.b16 %v1502
  %v3041 = vunpack.c.h.b16 %v1502
  %v3042 = vunpack.c.l.b16 %v1503
  %v3043 = vunpack.c.h.b16 %v1503
  %v3044 = vpack.c.b16 %v2028, %v2020
  %v3045 = vpack.c.b16 %v2029, %v2021
  %v3046 = vpack.c.b16 %v2030, %v2022
  %v3047 = vpack.c.b16 %v2031, %v2023
  %v3048 = vpack.c.b16 %v2032, %v2024
  %v3049 = vpack.c.b16 %v2033, %v2025
  %v3050 = vpack.c.b16 %v2034, %v2026
  %v3051 = vpack.c.b16 %v2035, %v2027
  %v3052 = vpack.c.b16 %v2044, %v2036
  %v3053 = vpack.c.b16 %v2045, %v2037
  %v3054 = vpack.c.b16 %v2046, %v2038
  %v3055 = vpack.c.b16 %v2047, %v2039
  %v3056 = vpack.c.b16 %v2048, %v2040
  %v3057 = vpack.c.b16 %v2049, %v2041
  %v3058 = vpack.c.b16 %v2050, %v2042
  %v3059 = vpack.c.b16 %v2051, %v2043
  %v3060 = vpack.c.b16 %v2060, %v2052
  %v3061 = vpack.c.b16 %v2061, %v2053
  %v3062 = vpack.c.b16 %v2062, %v2054
  %v3063 = vpack.c.b16 %v2063, %v2055
  %v3064 = vpack.c.b16 %v2064, %v2056
  %v3065 = vpack.c.b16 %v2065, %v2057
  %v3066 = vpack.c.b16 %v2066, %v2058
  %v3067 = vpack.c.b16 %v2067, %v2059
  %v3068 = vpack.c.b16 %v2076, %v2068
  %v3069 = vpack.c.b16 %v2077, %v2069
  %v3070 = vpack.c.b16 %v2078, %v2070
  %v3071 = vpack.c.b16 %v2079, %v2071
  %v3072 = vpack.c.b16 %v2080, %v2072
  %v3073 = vpack.c.b16 %v2081, %v2073
  %v3074 = vpack.c.b16 %v2082, %v2074
  %v3075 = vpack.c.b16 %v2083, %v2075
  %v3076 = vpack.c.b16 %v2092, %v2084
  %v3077 = vpack.c.b16 %v2093, %v2085
  %v3078 = vpack.c.b16 %v2094, %v2086
  %v3079 = vpack.c.b16 %v2095, %v2087
  %v3080 = vpack.c.b16 %v2096, %v2088
  %v3081 = vpack.c.b16 %v2097, %v2089
  %v3082 = vpack.c.b16 %v2098, %v2090
  %v3083 = vpack.c.b16 %v2099, %v2091
  %v3084 = vpack.c.b16 %v2108, %v2100
  %v3085 = vpack.c.b16 %v2109, %v2101
  %v3086 = vpack.c.b16 %v2110, %v2102
  %v3087 = vpack.c.b16 %v2111, %v2103
  %v3088 = vpack.c.b16 %v2112, %v2104
  %v3089 = vpack.c.b16 %v2113, %v2105
  %v3090 = vpack.c.b16 %v2114, %v2106
  %v3091 = vpack.c.b16 %v2115, %v2107
  %v3092 = vpack.c.b16 %v2124, %v2116
  %v3093 = vpack.c.b16 %v2125, %v2117
  %v3094 = vpack.c.b16 %v2126, %v2118
  %v3095 = vpack.c.b16 %v2127, %v2119
  %v3096 = vpack.c.b16 %v2128, %v2120
  %v3097 = vpack.c.b16 %v2129, %v2121
  %v3098 = vpack.c.b16 %v2130, %v2122
  %v3099 = vpack.c.b16 %v2131, %v2123
  %v3100 = vpack.c.b16 %v2140, %v2132
  %v3101 = vpack.c.b16 %v2141, %v2133
  %v3102 = vpack.c.b16 %v2142, %v2134
  %v3103 = vpack.c.b16 %v2143, %v2135
  %v3104 = vpack.c.b16 %v2144, %v2136
  %v3105 = vpack.c.b16 %v2145, %v2137
  %v3106 = vpack.c.b16 %v2146, %v2138
  %v3107 = vpack.c.b16 %v2147, %v2139
  %v3108 = vpack.c.b16 %v2156, %v2148
  %v3109 = vpack.c.b16 %v2157, %v2149
  %v3110 = vpack.c.b16 %v2158, %v2150
  %v3111 = vpack.c.b16 %v2159, %v2151
  %v3112 = vpack.c.b16 %v2160, %v2152
  %v3113 = vpack.c.b16 %v2161, %v2153
  %v3114 = vpack.c.b16 %v2162, %v2154
  %v3115 = vpack.c.b16 %v2163, %v2155
  %v3116 = vpack.c.b16 %v2172, %v2164
  %v3117 = vpack.c.b16 %v2173, %v2165
  %v3118 = vpack.c.b16 %v2174, %v2166
  %v3119 = vpack.c.b16 %v2175, %v2167
  %v3120 = vpack.c.b16 %v2176, %v2168
  %v3121 = vpack.c.b16 %v2177, %v2169
  %v3122 = vpack.c.b16 %v2178, %v2170
  %v3123 = vpack.c.b16 %v2179, %v2171
  %v3124 = vpack.c.b16 %v2188, %v2180
  %v3125 = vpack.c.b16 %v2189, %v2181
  %v3126 = vpack.c.b16 %v2190, %v2182
  %v3127 = vpack.c.b16 %v2191, %v2183
  %v3128 = vpack.c.b16 %v2192, %v2184
  %v3129 = vpack.c.b16 %v2193, %v2185
  %v3130 = vpack.c.b16 %v2194, %v2186
  %v3131 = vpack.c.b16 %v2195, %v2187
  %v3132 = vpack.c.b16 %v2204, %v2196
  %v3133 = vpack.c.b16 %v2205, %v2197
  %v3134 = vpack.c.b16 %v2206, %v2198
  %v3135 = vpack.c.b16 %v2207, %v2199
  %v3136 = vpack.c.b16 %v2208, %v2200
  %v3137 = vpack.c.b16 %v2209, %v2201
  %v3138 = vpack.c.b16 %v2210, %v2202
  %v3139 = vpack.c.b16 %v2211, %v2203
  %v3140 = vpack.c.b16 %v2220, %v2212
  %v3141 = vpack.c.b16 %v2221, %v2213
  %v3142 = vpack.c.b16 %v2222, %v2214
  %v3143 = vpack.c.b16 %v2223, %v2215
  %v3144 = vpack.c.b16 %v2224, %v2216
  %v3145 = vpack.c.b16 %v2225, %v2217
  %v3146 = vpack.c.b16 %v2226, %v2218
  %v3147 = vpack.c.b16 %v2227, %v2219
  %v3148 = vpack.c.b16 %v2236, %v2228
  %v3149 = vpack.c.b16 %v2237, %v2229
  %v3150 = vpack.c.b16 %v2238, %v2230
  %v3151 = vpack.c.b16 %v2239, %v2231
  %v3152 = vpack.c.b16 %v2240, %v2232
  %v3153 = vpack.c.b16 %v2241, %v2233
  %v3154 = vpack.c.b16 %v2242, %v2234
  %v3155 = vpack.c.b16 %v2243, %v2235
  %v3156 = vpack.c.b16 %v2252, %v2244
  %v3157 = vpack.c.b16 %v2253, %v2245
  %v3158 = vpack.c.b16 %v2254, %v2246
  %v3159 = vpack.c.b16 %v2255, %v2247
  %v3160 = vpack.c.b16 %v2256, %v2248
  %v3161 = vpack.c.b16 %v2257, %v2249
  %v3162 = vpack.c.b16 %v2258, %v2250
  %v3163 = vpack.c.b16 %v2259, %v2251
  %v3164 = vpack.c.b16 %v2268, %v2260
  %v3165 = vpack.c.b16 %v2269, %v2261
  %v3166 = vpack.c.b16 %v2270, %v2262
  %v3167 = vpack.c.b16 %v2271, %v2263
  %v3168 = vpack.c.b16 %v2272, %v2264
  %v3169 = vpack.c.b16 %v2273, %v2265
  %v3170 = vpack.c.b16 %v2274, %v2266
  %v3171 = vpack.c.b16 %v2275, %v2267
  %v3172 = vpack.c.b16 %v2284, %v2276
  %v3173 = vpack.c.b16 %v2285, %v2277
  %v3174 = vpack.c.b16 %v2286, %v2278
  %v3175 = vpack.c.b16 %v2287, %v2279
  %v3176 = vpack.c.b16 %v2288, %v2280
  %v3177 = vpack.c.b16 %v2289, %v2281
  %v3178 = vpack.c.b16 %v2290, %v2282
  %v3179 = vpack.c.b16 %v2291, %v2283
  %v3180 = vpack.c.b16 %v2300, %v2292
  %v3181 = vpack.c.b16 %v2301, %v2293
  %v3182 = vpack.c.b16 %v2302, %v2294
  %v3183 = vpack.c.b16 %v2303, %v2295
  %v3184 = vpack.c.b16 %v2304, %v2296
  %v3185 = vpack.c.b16 %v2305, %v2297
  %v3186 = vpack.c.b16 %v2306, %v2298
  %v3187 = vpack.c.b16 %v2307, %v2299
  %v3188 = vpack.c.b16 %v2316, %v2308
  %v3189 = vpack.c.b16 %v2317, %v2309
  %v3190 = vpack.c.b16 %v2318, %v2310
  %v3191 = vpack.c.b16 %v2319, %v2311
  %v3192 = vpack.c.b16 %v2320, %v2312
  %v3193 = vpack.c.b16 %v2321, %v2313
  %v3194 = vpack.c.b16 %v2322, %v2314
  %v3195 = vpack.c.b16 %v2323, %v2315
  %v3196 = vpack.c.b16 %v2332, %v2324
  %v3197 = vpack.c.b16 %v2333, %v2325
  %v3198 = vpack.c.b16 %v2334, %v2326
  %v3199 = vpack.c.b16 %v2335, %v2327
  %v3200 = vpack.c.b16 %v2336, %v2328
  %v3201 = vpack.c.b16 %v2337, %v2329
  %v3202 = vpack.c.b16 %v2338, %v2330
  %v3203 = vpack.c.b16 %v2339, %v2331
  %v3204 = vpack.c.b16 %v2348, %v2340
  %v3205 = vpack.c.b16 %v2349, %v2341
  %v3206 = vpack.c.b16 %v2350, %v2342
  %v3207 = vpack.c.b16 %v2351, %v2343
  %v3208 = vpack.c.b16 %v2352, %v2344
  %v3209 = vpack.c.b16 %v2353, %v2345
  %v3210 = vpack.c.b16 %v2354, %v2346
  %v3211 = vpack.c.b16 %v2355, %v2347
  %v3212 = vpack.c.b16 %v2364, %v2356
  %v3213 = vpack.c.b16 %v2365, %v2357
  %v3214 = vpack.c.b16 %v2366, %v2358
  %v3215 = vpack.c.b16 %v2367, %v2359
  %v3216 = vpack.c.b16 %v2368, %v2360
  %v3217 = vpack.c.b16 %v2369, %v2361
  %v3218 = vpack.c.b16 %v2370, %v2362
  %v3219 = vpack.c.b16 %v2371, %v2363
  %v3220 = vpack.c.b16 %v2380, %v2372
  %v3221 = vpack.c.b16 %v2381, %v2373
  %v3222 = vpack.c.b16 %v2382, %v2374
  %v3223 = vpack.c.b16 %v2383, %v2375
  %v3224 = vpack.c.b16 %v2384, %v2376
  %v3225 = vpack.c.b16 %v2385, %v2377
  %v3226 = vpack.c.b16 %v2386, %v2378
  %v3227 = vpack.c.b16 %v2387, %v2379
  %v3228 = vpack.c.b16 %v2396, %v2388
  %v3229 = vpack.c.b16 %v2397, %v2389
  %v3230 = vpack.c.b16 %v2398, %v2390
  %v3231 = vpack.c.b16 %v2399, %v2391
  %v3232 = vpack.c.b16 %v2400, %v2392
  %v3233 = vpack.c.b16 %v2401, %v2393
  %v3234 = vpack.c.b16 %v2402, %v2394
  %v3235 = vpack.c.b16 %v2403, %v2395
  %v3236 = vpack.c.b16 %v2412, %v2404
  %v3237 = vpack.c.b16 %v2413, %v2405
  %v3238 = vpack.c.b16 %v2414, %v2406
  %v3239 = vpack.c.b16 %v2415, %v2407
  %v3240 = vpack.c.b16 %v2416, %v2408
  %v3241 = vpack.c.b16 %v2417, %v2409
  %v3242 = vpack.c.b16 %v2418, %v2410
  %v3243 = vpack.c.b16 %v2419, %v2411
  %v3244 = vpack.c.b16 %v2428, %v2420
  %v3245 = vpack.c.b16 %v2429, %v2421
  %v3246 = vpack.c.b16 %v2430, %v2422
  %v3247 = vpack.c.b16 %v2431, %v2423
  %v3248 = vpack.c.b16 %v2432, %v2424
  %v3249 = vpack.c.b16 %v2433, %v2425
  %v3250 = vpack.c.b16 %v2434, %v2426
  %v3251 = vpack.c.b16 %v2435, %v2427
  %v3252 = vpack.c.b16 %v2444, %v2436
  %v3253 = vpack.c.b16 %v2445, %v2437
  %v3254 = vpack.c.b16 %v2446, %v2438
  %v3255 = vpack.c.b16 %v2447, %v2439
  %v3256 = vpack.c.b16 %v2448, %v2440
  %v3257 = vpack.c.b16 %v2449, %v2441
  %v3258 = vpack.c.b16 %v2450, %v2442
  %v3259 = vpack.c.b16 %v2451, %v2443
  %v3260 = vpack.c.b16 %v2460, %v2452
  %v3261 = vpack.c.b16 %v2461, %v2453
  %v3262 = vpack.c.b16 %v2462, %v2454
  %v3263 = vpack.c.b16 %v2463, %v2455
  %v3264 = vpack.c.b16 %v2464, %v2456
  %v3265 = vpack.c.b16 %v2465, %v2457
  %v3266 = vpack.c.b16 %v2466, %v2458
  %v3267 = vpack.c.b16 %v2467, %v2459
  %v3268 = vpack.c.b16 %v2476, %v2468
  %v3269 = vpack.c.b16 %v2477, %v2469
  %v3270 = vpack.c.b16 %v2478, %v2470
  %v3271 = vpack.c.b16 %v2479, %v2471
  %v3272 = vpack.c.b16 %v2480, %v2472
  %v3273 = vpack.c.b16 %v2481, %v2473
  %v3274 = vpack.c.b16 %v2482, %v2474
  %v3275 = vpack.c.b16 %v2483, %v2475
  %v3276 = vpack.c.b16 %v2492, %v2484
  %v3277 = vpack.c.b16 %v2493, %v2485
  %v3278 = vpack.c.b16 %v2494, %v2486
  %v3279 = vpack.c.b16 %v2495, %v2487
  %v3280 = vpack.c.b16 %v2496, %v2488
  %v3281 = vpack.c.b16 %v2497, %v2489
  %v3282 = vpack.c.b16 %v2498, %v2490
  %v3283 = vpack.c.b16 %v2499, %v2491
  %v3284 = vpack.c.b16 %v2508, %v2500
  %v3285 = vpack.c.b16 %v2509, %v2501
  %v3286 = vpack.c.b16 %v2510, %v2502
  %v3287 = vpack.c.b16 %v2511, %v2503
  %v3288 = vpack.c.b16 %v2512, %v2504
  %v3289 = vpack.c.b16 %v2513, %v2505
  %v3290 = vpack.c.b16 %v2514, %v2506
  %v3291 = vpack.c.b16 %v2515, %v2507
  %v3292 = vpack.c.b16 %v2524, %v2516
  %v3293 = vpack.c.b16 %v2525, %v2517
  %v3294 = vpack.c.b16 %v2526, %v2518
  %v3295 = vpack.c.b16 %v2527, %v2519
  %v3296 = vpack.c.b16 %v2528, %v2520
  %v3297 = vpack.c.b16 %v2529, %v2521
  %v3298 = vpack.c.b16 %v2530, %v2522
  %v3299 = vpack.c.b16 %v2531, %v2523
  %v3300 = vpack.c.b16 %v2540, %v2532
  %v3301 = vpack.c.b16 %v2541, %v2533
  %v3302 = vpack.c.b16 %v2542, %v2534
  %v3303 = vpack.c.b16 %v2543, %v2535
  %v3304 = vpack.c.b16 %v2544, %v2536
  %v3305 = vpack.c.b16 %v2545, %v2537
  %v3306 = vpack.c.b16 %v2546, %v2538
  %v3307 = vpack.c.b16 %v2547, %v2539
  %v3308 = vpack.c.b16 %v2556, %v2548
  %v3309 = vpack.c.b16 %v2557, %v2549
  %v3310 = vpack.c.b16 %v2558, %v2550
  %v3311 = vpack.c.b16 %v2559, %v2551
  %v3312 = vpack.c.b16 %v2560, %v2552
  %v3313 = vpack.c.b16 %v2561, %v2553
  %v3314 = vpack.c.b16 %v2562, %v2554
  %v3315 = vpack.c.b16 %v2563, %v2555
  %v3316 = vpack.c.b16 %v2572, %v2564
  %v3317 = vpack.c.b16 %v2573, %v2565
  %v3318 = vpack.c.b16 %v2574, %v2566
  %v3319 = vpack.c.b16 %v2575, %v2567
  %v3320 = vpack.c.b16 %v2576, %v2568
  %v3321 = vpack.c.b16 %v2577, %v2569
  %v3322 = vpack.c.b16 %v2578, %v2570
  %v3323 = vpack.c.b16 %v2579, %v2571
  %v3324 = vpack.c.b16 %v2588, %v2580
  %v3325 = vpack.c.b16 %v2589, %v2581
  %v3326 = vpack.c.b16 %v2590, %v2582
  %v3327 = vpack.c.b16 %v2591, %v2583
  %v3328 = vpack.c.b16 %v2592, %v2584
  %v3329 = vpack.c.b16 %v2593, %v2585
  %v3330 = vpack.c.b16 %v2594, %v2586
  %v3331 = vpack.c.b16 %v2595, %v2587
  %v3332 = vpack.c.b16 %v2604, %v2596
  %v3333 = vpack.c.b16 %v2605, %v2597
  %v3334 = vpack.c.b16 %v2606, %v2598
  %v3335 = vpack.c.b16 %v2607, %v2599
  %v3336 = vpack.c.b16 %v2608, %v2600
  %v3337 = vpack.c.b16 %v2609, %v2601
  %v3338 = vpack.c.b16 %v2610, %v2602
  %v3339 = vpack.c.b16 %v2611, %v2603
  %v3340 = vpack.c.b16 %v2620, %v2612
  %v3341 = vpack.c.b16 %v2621, %v2613
  %v3342 = vpack.c.b16 %v2622, %v2614
  %v3343 = vpack.c.b16 %v2623, %v2615
  %v3344 = vpack.c.b16 %v2624, %v2616
  %v3345 = vpack.c.b16 %v2625, %v2617
  %v3346 = vpack.c.b16 %v2626, %v2618
  %v3347 = vpack.c.b16 %v2627, %v2619
  %v3348 = vpack.c.b16 %v2636, %v2628
  %v3349 = vpack.c.b16 %v2637, %v2629
  %v3350 = vpack.c.b16 %v2638, %v2630
  %v3351 = vpack.c.b16 %v2639, %v2631
  %v3352 = vpack.c.b16 %v2640, %v2632
  %v3353 = vpack.c.b16 %v2641, %v2633
  %v3354 = vpack.c.b16 %v2642, %v2634
  %v3355 = vpack.c.b16 %v2643, %v2635
  %v3356 = vpack.c.b16 %v2652, %v2644
  %v3357 = vpack.c.b16 %v2653, %v2645
  %v3358 = vpack.c.b16 %v2654, %v2646
  %v3359 = vpack.c.b16 %v2655, %v2647
  %v3360 = vpack.c.b16 %v2656, %v2648
  %v3361 = vpack.c.b16 %v2657, %v2649
  %v3362 = vpack.c.b16 %v2658, %v2650
  %v3363 = vpack.c.b16 %v2659, %v2651
  %v3364 = vpack.c.b16 %v2668, %v2660
  %v3365 = vpack.c.b16 %v2669, %v2661
  %v3366 = vpack.c.b16 %v2670, %v2662
  %v3367 = vpack.c.b16 %v2671, %v2663
  %v3368 = vpack.c.b16 %v2672, %v2664
  %v3369 = vpack.c.b16 %v2673, %v2665
  %v3370 = vpack.c.b16 %v2674, %v2666
  %v3371 = vpack.c.b16 %v2675, %v2667
  %v3372 = vpack.c.b16 %v2684, %v2676
  %v3373 = vpack.c.b16 %v2685, %v2677
  %v3374 = vpack.c.b16 %v2686, %v2678
  %v3375 = vpack.c.b16 %v2687, %v2679
  %v3376 = vpack.c.b16 %v2688, %v2680
  %v3377 = vpack.c.b16 %v2689, %v2681
  %v3378 = vpack.c.b16 %v2690, %v2682
  %v3379 = vpack.c.b16 %v2691, %v2683
  %v3380 = vpack.c.b16 %v2700, %v2692
  %v3381 = vpack.c.b16 %v2701, %v2693
  %v3382 = vpack.c.b16 %v2702, %v2694
  %v3383 = vpack.c.b16 %v2703, %v2695
  %v3384 = vpack.c.b16 %v2704, %v2696
  %v3385 = vpack.c.b16 %v2705, %v2697
  %v3386 = vpack.c.b16 %v2706, %v2698
  %v3387 = vpack.c.b16 %v2707, %v2699
  %v3388 = vpack.c.b16 %v2716, %v2708
  %v3389 = vpack.c.b16 %v2717, %v2709
  %v3390 = vpack.c.b16 %v2718, %v2710
  %v3391 = vpack.c.b16 %v2719, %v2711
  %v3392 = vpack.c.b16 %v2720, %v2712
  %v3393 = vpack.c.b16 %v2721, %v2713
  %v3394 = vpack.c.b16 %v2722, %v2714
  %v3395 = vpack.c.b16 %v2723, %v2715
  %v3396 = vpack.c.b16 %v2732, %v2724
  %v3397 = vpack.c.b16 %v2733, %v2725
  %v3398 = vpack.c.b16 %v2734, %v2726
  %v3399 = vpack.c.b16 %v2735, %v2727
  %v3400 = vpack.c.b16 %v2736, %v2728
  %v3401 = vpack.c.b16 %v2737, %v2729
  %v3402 = vpack.c.b16 %v2738, %v2730
  %v3403 = vpack.c.b16 %v2739, %v2731
  %v3404 = vpack.c.b16 %v2748, %v2740
  %v3405 = vpack.c.b16 %v2749, %v2741
  %v3406 = vpack.c.b16 %v2750, %v2742
  %v3407 = vpack.c.b16 %v2751, %v2743
  %v3408 = vpack.c.b16 %v2752, %v2744
  %v3409 = vpack.c.b16 %v2753, %v2745
  %v3410 = vpack.c.b16 %v2754, %v2746
  %v3411 = vpack.c.b16 %v2755, %v2747
  %v3412 = vpack.c.b16 %v2764, %v2756
  %v3413 = vpack.c.b16 %v2765, %v2757
  %v3414 = vpack.c.b16 %v2766, %v2758
  %v3415 = vpack.c.b16 %v2767, %v2759
  %v3416 = vpack.c.b16 %v2768, %v2760
  %v3417 = vpack.c.b16 %v2769, %v2761
  %v3418 = vpack.c.b16 %v2770, %v2762
  %v3419 = vpack.c.b16 %v2771, %v2763
  %v3420 = vpack.c.b16 %v2780, %v2772
  %v3421 = vpack.c.b16 %v2781, %v2773
  %v3422 = vpack.c.b16 %v2782, %v2774
  %v3423 = vpack.c.b16 %v2783, %v2775
  %v3424 = vpack.c.b16 %v2784, %v2776
  %v3425 = vpack.c.b16 %v2785, %v2777
  %v3426 = vpack.c.b16 %v2786, %v2778
  %v3427 = vpack.c.b16 %v2787, %v2779
  %v3428 = vpack.c.b16 %v2796, %v2788
  %v3429 = vpack.c.b16 %v2797, %v2789
  %v3430 = vpack.c.b16 %v2798, %v2790
  %v3431 = vpack.c.b16 %v2799, %v2791
  %v3432 = vpack.c.b16 %v2800, %v2792
  %v3433 = vpack.c.b16 %v2801, %v2793
  %v3434 = vpack.c.b16 %v2802, %v2794
  %v3435 = vpack.c.b16 %v2803, %v2795
  %v3436 = vpack.c.b16 %v2812, %v2804
  %v3437 = vpack.c.b16 %v2813, %v2805
  %v3438 = vpack.c.b16 %v2814, %v2806
  %v3439 = vpack.c.b16 %v2815, %v2807
  %v3440 = vpack.c.b16 %v2816, %v2808
  %v3441 = vpack.c.b16 %v2817, %v2809
  %v3442 = vpack.c.b16 %v2818, %v2810
  %v3443 = vpack.c.b16 %v2819, %v2811
  %v3444 = vpack.c.b16 %v2828, %v2820
  %v3445 = vpack.c.b16 %v2829, %v2821
  %v3446 = vpack.c.b16 %v2830, %v2822
  %v3447 = vpack.c.b16 %v2831, %v2823
  %v3448 = vpack.c.b16 %v2832, %v2824
  %v3449 = vpack.c.b16 %v2833, %v2825
  %v3450 = vpack.c.b16 %v2834, %v2826
  %v3451 = vpack.c.b16 %v2835, %v2827
  %v3452 = vpack.c.b16 %v2844, %v2836
  %v3453 = vpack.c.b16 %v2845, %v2837
  %v3454 = vpack.c.b16 %v2846, %v2838
  %v3455 = vpack.c.b16 %v2847, %v2839
  %v3456 = vpack.c.b16 %v2848, %v2840
  %v3457 = vpack.c.b16 %v2849, %v2841
  %v3458 = vpack.c.b16 %v2850, %v2842
  %v3459 = vpack.c.b16 %v2851, %v2843
  %v3460 = vpack.c.b16 %v2860, %v2852
  %v3461 = vpack.c.b16 %v2861, %v2853
  %v3462 = vpack.c.b16 %v2862, %v2854
  %v3463 = vpack.c.b16 %v2863, %v2855
  %v3464 = vpack.c.b16 %v2864, %v2856
  %v3465 = vpack.c.b16 %v2865, %v2857
  %v3466 = vpack.c.b16 %v2866, %v2858
  %v3467 = vpack.c.b16 %v2867, %v2859
  %v3468 = vpack.c.b16 %v2876, %v2868
  %v3469 = vpack.c.b16 %v2877, %v2869
  %v3470 = vpack.c.b16 %v2878, %v2870
  %v3471 = vpack.c.b16 %v2879, %v2871
  %v3472 = vpack.c.b16 %v2880, %v2872
  %v3473 = vpack.c.b16 %v2881, %v2873
  %v3474 = vpack.c.b16 %v2882, %v2874
  %v3475 = vpack.c.b16 %v2883, %v2875
  %v3476 = vpack.c.b16 %v2892, %v2884
  %v3477 = vpack.c.b16 %v2893, %v2885
  %v3478 = vpack.c.b16 %v2894, %v2886
  %v3479 = vpack.c.b16 %v2895, %v2887
  %v3480 = vpack.c.b16 %v2896, %v2888
  %v3481 = vpack.c.b16 %v2897, %v2889
  %v3482 = vpack.c.b16 %v2898, %v2890
  %v3483 = vpack.c.b16 %v2899, %v2891
  %v3484 = vpack.c.b16 %v2908, %v2900
  %v3485 = vpack.c.b16 %v2909, %v2901
  %v3486 = vpack.c.b16 %v2910, %v2902
  %v3487 = vpack.c.b16 %v2911, %v2903
  %v3488 = vpack.c.b16 %v2912, %v2904
  %v3489 = vpack.c.b16 %v2913, %v2905
  %v3490 = vpack.c.b16 %v2914, %v2906
  %v3491 = vpack.c.b16 %v2915, %v2907
  %v3492 = vpack.c.b16 %v2924, %v2916
  %v3493 = vpack.c.b16 %v2925, %v2917
  %v3494 = vpack.c.b16 %v2926, %v2918
  %v3495 = vpack.c.b16 %v2927, %v2919
  %v3496 = vpack.c.b16 %v2928, %v2920
  %v3497 = vpack.c.b16 %v2929, %v2921
  %v3498 = vpack.c.b16 %v2930, %v2922
  %v3499 = vpack.c.b16 %v2931, %v2923
  %v3500 = vpack.c.b16 %v2940, %v2932
  %v3501 = vpack.c.b16 %v2941, %v2933
  %v3502 = vpack.c.b16 %v2942, %v2934
  %v3503 = vpack.c.b16 %v2943, %v2935
  %v3504 = vpack.c.b16 %v2944, %v2936
  %v3505 = vpack.c.b16 %v2945, %v2937
  %v3506 = vpack.c.b16 %v2946, %v2938
  %v3507 = vpack.c.b16 %v2947, %v2939
  %v3508 = vpack.c.b16 %v2956, %v2948
  %v3509 = vpack.c.b16 %v2957, %v2949
  %v3510 = vpack.c.b16 %v2958, %v2950
  %v3511 = vpack.c.b16 %v2959, %v2951
  %v3512 = vpack.c.b16 %v2960, %v2952
  %v3513 = vpack.c.b16 %v2961, %v2953
  %v3514 = vpack.c.b16 %v2962, %v2954
  %v3515 = vpack.c.b16 %v2963, %v2955
  %v3516 = vpack.c.b16 %v2972, %v2964
  %v3517 = vpack.c.b16 %v2973, %v2965
  %v3518 = vpack.c.b16 %v2974, %v2966
  %v3519 = vpack.c.b16 %v2975, %v2967
  %v3520 = vpack.c.b16 %v2976, %v2968
  %v3521 = vpack.c.b16 %v2977, %v2969
  %v3522 = vpack.c.b16 %v2978, %v2970
  %v3523 = vpack.c.b16 %v2979, %v2971
  %v3524 = vpack.c.b16 %v2988, %v2980
  %v3525 = vpack.c.b16 %v2989, %v2981
  %v3526 = vpack.c.b16 %v2990, %v2982
  %v3527 = vpack.c.b16 %v2991, %v2983
  %v3528 = vpack.c.b16 %v2992, %v2984
  %v3529 = vpack.c.b16 %v2993, %v2985
  %v3530 = vpack.c.b16 %v2994, %v2986
  %v3531 = vpack.c.b16 %v2995, %v2987
  %v3532 = vpack.c.b16 %v3004, %v2996
  %v3533 = vpack.c.b16 %v3005, %v2997
  %v3534 = vpack.c.b16 %v3006, %v2998
  %v3535 = vpack.c.b16 %v3007, %v2999
  %v3536 = vpack.c.b16 %v3008, %v3000
  %v3537 = vpack.c.b16 %v3009, %v3001
  %v3538 = vpack.c.b16 %v3010, %v3002
  %v3539 = vpack.c.b16 %v3011, %v3003
  %v3540 = vpack.c.b16 %v3020, %v3012
  %v3541 = vpack.c.b16 %v3021, %v3013
  %v3542 = vpack.c.b16 %v3022, %v3014
  %v3543 = vpack.c.b16 %v3023, %v3015
  %v3544 = vpack.c.b16 %v3024, %v3016
  %v3545 = vpack.c.b16 %v3025, %v3017
  %v3546 = vpack.c.b16 %v3026, %v3018
  %v3547 = vpack.c.b16 %v3027, %v3019
  %v3548 = vpack.c.b16 %v3036, %v3028
  %v3549 = vpack.c.b16 %v3037, %v3029
  %v3550 = vpack.c.b16 %v3038, %v3030
  %v3551 = vpack.c.b16 %v3039, %v3031
  %v3552 = vpack.c.b16 %v3040, %v3032
  %v3553 = vpack.c.b16 %v3041, %v3033
  %v3554 = vpack.c.b16 %v3042, %v3034
  %v3555 = vpack.c.b16 %v3043, %v3035
  %4068 = vmatpush.bf16.msra.mxu0 %v935
  %4069 = vmatpush.bf16.msra.mxu0 %v934
  %4070 = vmatpush.bf16.msra.mxu0 %v933
  %4071 = vmatpush.bf16.msra.mxu0 %v932
  %4072 = vmatpush.bf16.msra.mxu0 %v931
  %4073 = vmatpush.bf16.msra.mxu0 %v930
  %4074 = vmatpush.bf16.msra.mxu0 %v929
  %4075 = vmatpush.bf16.msra.mxu0 %v928
  %4076 = vmatmul.bf16.gmra.mxu0 %v3044
  %v4077 = vpop.f32.mrf.mxu0
  %v4078 = vadd.f32 %v1506, %v4077
  %v4079 = vpop.f32.mrf.mxu0
  %v4080 = vadd.f32 %v1506, %v4079
  %4081 = vmatmul.bf16.gmra.mxu0 %v3052
  %v4082 = vpop.f32.mrf.mxu0
  %v4083 = vadd.f32 %v1506, %v4082
  %v4084 = vpop.f32.mrf.mxu0
  %v4085 = vadd.f32 %v1506, %v4084
  %4086 = vmatmul.bf16.gmra.mxu0 %v3060
  %v4087 = vpop.f32.mrf.mxu0
  %v4088 = vadd.f32 %v1506, %v4087
  %v4089 = vpop.f32.mrf.mxu0
  %v4090 = vadd.f32 %v1506, %v4089
  %4091 = vmatmul.bf16.gmra.mxu0 %v3068
  %v4092 = vpop.f32.mrf.mxu0
  %v4093 = vadd.f32 %v1506, %v4092
  %v4094 = vpop.f32.mrf.mxu0
  %v4095 = vadd.f32 %v1506, %v4094
  %4096 = vmatmul.bf16.gmra.mxu0 %v3076
  %v4097 = vpop.f32.mrf.mxu0
  %v4098 = vadd.f32 %v1506, %v4097
  %v4099 = vpop.f32.mrf.mxu0
  %v4100 = vadd.f32 %v1506, %v4099
  %4101 = vmatmul.bf16.gmra.mxu0 %v3084
  %v4102 = vpop.f32.mrf.mxu0
  %v4103 = vadd.f32 %v1506, %v4102
  %v4104 = vpop.f32.mrf.mxu0
  %v4105 = vadd.f32 %v1506, %v4104
  %4106 = vmatmul.bf16.gmra.mxu0 %v3092
  %v4107 = vpop.f32.mrf.mxu0
  %v4108 = vadd.f32 %v1506, %v4107
  %v4109 = vpop.f32.mrf.mxu0
  %v4110 = vadd.f32 %v1506, %v4109
  %4111 = vmatmul.bf16.gmra.mxu0 %v3100
  %v4112 = vpop.f32.mrf.mxu0
  %v4113 = vadd.f32 %v1506, %v4112
  %v4114 = vpop.f32.mrf.mxu0
  %v4115 = vadd.f32 %v1506, %v4114
  %4116 = vmatmul.bf16.gmra.mxu0 %v3108
  %v4117 = vpop.f32.mrf.mxu0
  %v4118 = vadd.f32 %v1506, %v4117
  %v4119 = vpop.f32.mrf.mxu0
  %v4120 = vadd.f32 %v1506, %v4119
  %4121 = vmatmul.bf16.gmra.mxu0 %v3116
  %v4122 = vpop.f32.mrf.mxu0
  %v4123 = vadd.f32 %v1506, %v4122
  %v4124 = vpop.f32.mrf.mxu0
  %v4125 = vadd.f32 %v1506, %v4124
  %4126 = vmatmul.bf16.gmra.mxu0 %v3124
  %v4127 = vpop.f32.mrf.mxu0
  %v4128 = vadd.f32 %v1506, %v4127
  %v4129 = vpop.f32.mrf.mxu0
  %v4130 = vadd.f32 %v1506, %v4129
  %4131 = vmatmul.bf16.gmra.mxu0 %v3132
  %v4132 = vpop.f32.mrf.mxu0
  %v4133 = vadd.f32 %v1506, %v4132
  %v4134 = vpop.f32.mrf.mxu0
  %v4135 = vadd.f32 %v1506, %v4134
  %4136 = vmatmul.bf16.gmra.mxu0 %v3140
  %v4137 = vpop.f32.mrf.mxu0
  %v4138 = vadd.f32 %v1506, %v4137
  %v4139 = vpop.f32.mrf.mxu0
  %v4140 = vadd.f32 %v1506, %v4139
  %4141 = vmatmul.bf16.gmra.mxu0 %v3148
  %v4142 = vpop.f32.mrf.mxu0
  %v4143 = vadd.f32 %v1506, %v4142
  %v4144 = vpop.f32.mrf.mxu0
  %v4145 = vadd.f32 %v1506, %v4144
  %4146 = vmatmul.bf16.gmra.mxu0 %v3156
  %v4147 = vpop.f32.mrf.mxu0
  %v4148 = vadd.f32 %v1506, %v4147
  %v4149 = vpop.f32.mrf.mxu0
  %v4150 = vadd.f32 %v1506, %v4149
  %4151 = vmatmul.bf16.gmra.mxu0 %v3164
  %v4152 = vpop.f32.mrf.mxu0
  %v4153 = vadd.f32 %v1506, %v4152
  %v4154 = vpop.f32.mrf.mxu0
  %v4155 = vadd.f32 %v1506, %v4154
  %4156 = vmatmul.bf16.gmra.mxu0 %v3172
  %v4157 = vpop.f32.mrf.mxu0
  %v4158 = vadd.f32 %v1506, %v4157
  %v4159 = vpop.f32.mrf.mxu0
  %v4160 = vadd.f32 %v1506, %v4159
  %4161 = vmatmul.bf16.gmra.mxu0 %v3180
  %v4162 = vpop.f32.mrf.mxu0
  %v4163 = vadd.f32 %v1506, %v4162
  %v4164 = vpop.f32.mrf.mxu0
  %v4165 = vadd.f32 %v1506, %v4164
  %4166 = vmatmul.bf16.gmra.mxu0 %v3188
  %v4167 = vpop.f32.mrf.mxu0
  %v4168 = vadd.f32 %v1506, %v4167
  %v4169 = vpop.f32.mrf.mxu0
  %v4170 = vadd.f32 %v1506, %v4169
  %4171 = vmatmul.bf16.gmra.mxu0 %v3196
  %v4172 = vpop.f32.mrf.mxu0
  %v4173 = vadd.f32 %v1506, %v4172
  %v4174 = vpop.f32.mrf.mxu0
  %v4175 = vadd.f32 %v1506, %v4174
  %4176 = vmatmul.bf16.gmra.mxu0 %v3204
  %v4177 = vpop.f32.mrf.mxu0
  %v4178 = vadd.f32 %v1506, %v4177
  %v4179 = vpop.f32.mrf.mxu0
  %v4180 = vadd.f32 %v1506, %v4179
  %4181 = vmatmul.bf16.gmra.mxu0 %v3212
  %v4182 = vpop.f32.mrf.mxu0
  %v4183 = vadd.f32 %v1506, %v4182
  %v4184 = vpop.f32.mrf.mxu0
  %v4185 = vadd.f32 %v1506, %v4184
  %4186 = vmatmul.bf16.gmra.mxu0 %v3220
  %v4187 = vpop.f32.mrf.mxu0
  %v4188 = vadd.f32 %v1506, %v4187
  %v4189 = vpop.f32.mrf.mxu0
  %v4190 = vadd.f32 %v1506, %v4189
  %4191 = vmatmul.bf16.gmra.mxu0 %v3228
  %v4192 = vpop.f32.mrf.mxu0
  %v4193 = vadd.f32 %v1506, %v4192
  %v4194 = vpop.f32.mrf.mxu0
  %v4195 = vadd.f32 %v1506, %v4194
  %4196 = vmatmul.bf16.gmra.mxu0 %v3236
  %v4197 = vpop.f32.mrf.mxu0
  %v4198 = vadd.f32 %v1506, %v4197
  %v4199 = vpop.f32.mrf.mxu0
  %v4200 = vadd.f32 %v1506, %v4199
  %4201 = vmatmul.bf16.gmra.mxu0 %v3244
  %v4202 = vpop.f32.mrf.mxu0
  %v4203 = vadd.f32 %v1506, %v4202
  %v4204 = vpop.f32.mrf.mxu0
  %v4205 = vadd.f32 %v1506, %v4204
  %4206 = vmatmul.bf16.gmra.mxu0 %v3252
  %v4207 = vpop.f32.mrf.mxu0
  %v4208 = vadd.f32 %v1506, %v4207
  %v4209 = vpop.f32.mrf.mxu0
  %v4210 = vadd.f32 %v1506, %v4209
  %4211 = vmatmul.bf16.gmra.mxu0 %v3260
  %v4212 = vpop.f32.mrf.mxu0
  %v4213 = vadd.f32 %v1506, %v4212
  %v4214 = vpop.f32.mrf.mxu0
  %v4215 = vadd.f32 %v1506, %v4214
  %4216 = vmatmul.bf16.gmra.mxu0 %v3268
  %v4217 = vpop.f32.mrf.mxu0
  %v4218 = vadd.f32 %v1506, %v4217
  %v4219 = vpop.f32.mrf.mxu0
  %v4220 = vadd.f32 %v1506, %v4219
  %4221 = vmatmul.bf16.gmra.mxu0 %v3276
  %v4222 = vpop.f32.mrf.mxu0
  %v4223 = vadd.f32 %v1506, %v4222
  %v4224 = vpop.f32.mrf.mxu0
  %v4225 = vadd.f32 %v1506, %v4224
  %4226 = vmatmul.bf16.gmra.mxu0 %v3284
  %v4227 = vpop.f32.mrf.mxu0
  %v4228 = vadd.f32 %v1506, %v4227
  %v4229 = vpop.f32.mrf.mxu0
  %v4230 = vadd.f32 %v1506, %v4229
  %4231 = vmatmul.bf16.gmra.mxu0 %v3292
  %v4232 = vpop.f32.mrf.mxu0
  %v4233 = vadd.f32 %v1506, %v4232
  %v4234 = vpop.f32.mrf.mxu0
  %v4235 = vadd.f32 %v1506, %v4234
  %4236 = vmatmul.bf16.gmra.mxu0 %v3300
  %v4237 = vpop.f32.mrf.mxu0
  %v4238 = vadd.f32 %v1506, %v4237
  %v4239 = vpop.f32.mrf.mxu0
  %v4240 = vadd.f32 %v1506, %v4239
  %4241 = vmatmul.bf16.gmra.mxu0 %v3308
  %v4242 = vpop.f32.mrf.mxu0
  %v4243 = vadd.f32 %v1506, %v4242
  %v4244 = vpop.f32.mrf.mxu0
  %v4245 = vadd.f32 %v1506, %v4244
  %4246 = vmatmul.bf16.gmra.mxu0 %v3316
  %v4247 = vpop.f32.mrf.mxu0
  %v4248 = vadd.f32 %v1506, %v4247
  %v4249 = vpop.f32.mrf.mxu0
  %v4250 = vadd.f32 %v1506, %v4249
  %4251 = vmatmul.bf16.gmra.mxu0 %v3324
  %v4252 = vpop.f32.mrf.mxu0
  %v4253 = vadd.f32 %v1506, %v4252
  %v4254 = vpop.f32.mrf.mxu0
  %v4255 = vadd.f32 %v1506, %v4254
  %4256 = vmatmul.bf16.gmra.mxu0 %v3332
  %v4257 = vpop.f32.mrf.mxu0
  %v4258 = vadd.f32 %v1506, %v4257
  %v4259 = vpop.f32.mrf.mxu0
  %v4260 = vadd.f32 %v1506, %v4259
  %4261 = vmatmul.bf16.gmra.mxu0 %v3340
  %v4262 = vpop.f32.mrf.mxu0
  %v4263 = vadd.f32 %v1506, %v4262
  %v4264 = vpop.f32.mrf.mxu0
  %v4265 = vadd.f32 %v1506, %v4264
  %4266 = vmatmul.bf16.gmra.mxu0 %v3348
  %v4267 = vpop.f32.mrf.mxu0
  %v4268 = vadd.f32 %v1506, %v4267
  %v4269 = vpop.f32.mrf.mxu0
  %v4270 = vadd.f32 %v1506, %v4269
  %4271 = vmatmul.bf16.gmra.mxu0 %v3356
  %v4272 = vpop.f32.mrf.mxu0
  %v4273 = vadd.f32 %v1506, %v4272
  %v4274 = vpop.f32.mrf.mxu0
  %v4275 = vadd.f32 %v1506, %v4274
  %4276 = vmatmul.bf16.gmra.mxu0 %v3364
  %v4277 = vpop.f32.mrf.mxu0
  %v4278 = vadd.f32 %v1506, %v4277
  %v4279 = vpop.f32.mrf.mxu0
  %v4280 = vadd.f32 %v1506, %v4279
  %4281 = vmatmul.bf16.gmra.mxu0 %v3372
  %v4282 = vpop.f32.mrf.mxu0
  %v4283 = vadd.f32 %v1506, %v4282
  %v4284 = vpop.f32.mrf.mxu0
  %v4285 = vadd.f32 %v1506, %v4284
  %4286 = vmatmul.bf16.gmra.mxu0 %v3380
  %v4287 = vpop.f32.mrf.mxu0
  %v4288 = vadd.f32 %v1506, %v4287
  %v4289 = vpop.f32.mrf.mxu0
  %v4290 = vadd.f32 %v1506, %v4289
  %4291 = vmatmul.bf16.gmra.mxu0 %v3388
  %v4292 = vpop.f32.mrf.mxu0
  %v4293 = vadd.f32 %v1506, %v4292
  %v4294 = vpop.f32.mrf.mxu0
  %v4295 = vadd.f32 %v1506, %v4294
  %4296 = vmatmul.bf16.gmra.mxu0 %v3396
  %v4297 = vpop.f32.mrf.mxu0
  %v4298 = vadd.f32 %v1506, %v4297
  %v4299 = vpop.f32.mrf.mxu0
  %v4300 = vadd.f32 %v1506, %v4299
  %4301 = vmatmul.bf16.gmra.mxu0 %v3404
  %v4302 = vpop.f32.mrf.mxu0
  %v4303 = vadd.f32 %v1506, %v4302
  %v4304 = vpop.f32.mrf.mxu0
  %v4305 = vadd.f32 %v1506, %v4304
  %4306 = vmatmul.bf16.gmra.mxu0 %v3412
  %v4307 = vpop.f32.mrf.mxu0
  %v4308 = vadd.f32 %v1506, %v4307
  %v4309 = vpop.f32.mrf.mxu0
  %v4310 = vadd.f32 %v1506, %v4309
  %4311 = vmatmul.bf16.gmra.mxu0 %v3420
  %v4312 = vpop.f32.mrf.mxu0
  %v4313 = vadd.f32 %v1506, %v4312
  %v4314 = vpop.f32.mrf.mxu0
  %v4315 = vadd.f32 %v1506, %v4314
  %4316 = vmatmul.bf16.gmra.mxu0 %v3428
  %v4317 = vpop.f32.mrf.mxu0
  %v4318 = vadd.f32 %v1506, %v4317
  %v4319 = vpop.f32.mrf.mxu0
  %v4320 = vadd.f32 %v1506, %v4319
  %4321 = vmatmul.bf16.gmra.mxu0 %v3436
  %v4322 = vpop.f32.mrf.mxu0
  %v4323 = vadd.f32 %v1506, %v4322
  %v4324 = vpop.f32.mrf.mxu0
  %v4325 = vadd.f32 %v1506, %v4324
  %4326 = vmatmul.bf16.gmra.mxu0 %v3444
  %v4327 = vpop.f32.mrf.mxu0
  %v4328 = vadd.f32 %v1506, %v4327
  %v4329 = vpop.f32.mrf.mxu0
  %v4330 = vadd.f32 %v1506, %v4329
  %4331 = vmatmul.bf16.gmra.mxu0 %v3452
  %v4332 = vpop.f32.mrf.mxu0
  %v4333 = vadd.f32 %v1506, %v4332
  %v4334 = vpop.f32.mrf.mxu0
  %v4335 = vadd.f32 %v1506, %v4334
  %4336 = vmatmul.bf16.gmra.mxu0 %v3460
  %v4337 = vpop.f32.mrf.mxu0
  %v4338 = vadd.f32 %v1506, %v4337
  %v4339 = vpop.f32.mrf.mxu0
  %v4340 = vadd.f32 %v1506, %v4339
  %4341 = vmatmul.bf16.gmra.mxu0 %v3468
  %v4342 = vpop.f32.mrf.mxu0
  %v4343 = vadd.f32 %v1506, %v4342
  %v4344 = vpop.f32.mrf.mxu0
  %v4345 = vadd.f32 %v1506, %v4344
  %4346 = vmatmul.bf16.gmra.mxu0 %v3476
  %v4347 = vpop.f32.mrf.mxu0
  %v4348 = vadd.f32 %v1506, %v4347
  %v4349 = vpop.f32.mrf.mxu0
  %v4350 = vadd.f32 %v1506, %v4349
  %4351 = vmatmul.bf16.gmra.mxu0 %v3484
  %v4352 = vpop.f32.mrf.mxu0
  %v4353 = vadd.f32 %v1506, %v4352
  %v4354 = vpop.f32.mrf.mxu0
  %v4355 = vadd.f32 %v1506, %v4354
  %4356 = vmatmul.bf16.gmra.mxu0 %v3492
  %v4357 = vpop.f32.mrf.mxu0
  %v4358 = vadd.f32 %v1506, %v4357
  %v4359 = vpop.f32.mrf.mxu0
  %v4360 = vadd.f32 %v1506, %v4359
  %4361 = vmatmul.bf16.gmra.mxu0 %v3500
  %v4362 = vpop.f32.mrf.mxu0
  %v4363 = vadd.f32 %v1506, %v4362
  %v4364 = vpop.f32.mrf.mxu0
  %v4365 = vadd.f32 %v1506, %v4364
  %4366 = vmatmul.bf16.gmra.mxu0 %v3508
  %v4367 = vpop.f32.mrf.mxu0
  %v4368 = vadd.f32 %v1506, %v4367
  %v4369 = vpop.f32.mrf.mxu0
  %v4370 = vadd.f32 %v1506, %v4369
  %4371 = vmatmul.bf16.gmra.mxu0 %v3516
  %v4372 = vpop.f32.mrf.mxu0
  %v4373 = vadd.f32 %v1506, %v4372
  %v4374 = vpop.f32.mrf.mxu0
  %v4375 = vadd.f32 %v1506, %v4374
  %4376 = vmatmul.bf16.gmra.mxu0 %v3524
  %v4377 = vpop.f32.mrf.mxu0
  %v4378 = vadd.f32 %v1506, %v4377
  %v4379 = vpop.f32.mrf.mxu0
  %v4380 = vadd.f32 %v1506, %v4379
  %4381 = vmatmul.bf16.gmra.mxu0 %v3532
  %v4382 = vpop.f32.mrf.mxu0
  %v4383 = vadd.f32 %v1506, %v4382
  %v4384 = vpop.f32.mrf.mxu0
  %v4385 = vadd.f32 %v1506, %v4384
  %4386 = vmatmul.bf16.gmra.mxu0 %v3540
  %v4387 = vpop.f32.mrf.mxu0
  %v4388 = vadd.f32 %v1506, %v4387
  %v4389 = vpop.f32.mrf.mxu0
  %v4390 = vadd.f32 %v1506, %v4389
  %4391 = vmatmul.bf16.gmra.mxu0 %v3548
  %v4392 = vpop.f32.mrf.mxu0
  %v4393 = vadd.f32 %v1506, %v4392
  %v4394 = vpop.f32.mrf.mxu0
  %v4395 = vadd.f32 %v1506, %v4394
  %4396 = vdwg.mxu0
  %4397 = vmatpush.bf16.msra.mxu0 %v943
  %4398 = vmatpush.bf16.msra.mxu0 %v942
  %4399 = vmatpush.bf16.msra.mxu0 %v941
  %4400 = vmatpush.bf16.msra.mxu0 %v940
  %4401 = vmatpush.bf16.msra.mxu0 %v939
  %4402 = vmatpush.bf16.msra.mxu0 %v938
  %4403 = vmatpush.bf16.msra.mxu0 %v937
  %4404 = vmatpush.bf16.msra.mxu0 %v936
  %4405 = vmatmul.bf16.gmra.mxu0 %v3045
  %v4406 = vpop.f32.mrf.mxu0
  %v4407 = vadd.f32 %v4078, %v4406
  %v4408 = vpop.f32.mrf.mxu0
  %v4409 = vadd.f32 %v4080, %v4408
  %4410 = vmatmul.bf16.gmra.mxu0 %v3053
  %v4411 = vpop.f32.mrf.mxu0
  %v4412 = vadd.f32 %v4083, %v4411
  %v4413 = vpop.f32.mrf.mxu0
  %v4414 = vadd.f32 %v4085, %v4413
  %4415 = vmatmul.bf16.gmra.mxu0 %v3061
  %v4416 = vpop.f32.mrf.mxu0
  %v4417 = vadd.f32 %v4088, %v4416
  %v4418 = vpop.f32.mrf.mxu0
  %v4419 = vadd.f32 %v4090, %v4418
  %4420 = vmatmul.bf16.gmra.mxu0 %v3069
  %v4421 = vpop.f32.mrf.mxu0
  %v4422 = vadd.f32 %v4093, %v4421
  %v4423 = vpop.f32.mrf.mxu0
  %v4424 = vadd.f32 %v4095, %v4423
  %4425 = vmatmul.bf16.gmra.mxu0 %v3077
  %v4426 = vpop.f32.mrf.mxu0
  %v4427 = vadd.f32 %v4098, %v4426
  %v4428 = vpop.f32.mrf.mxu0
  %v4429 = vadd.f32 %v4100, %v4428
  %4430 = vmatmul.bf16.gmra.mxu0 %v3085
  %v4431 = vpop.f32.mrf.mxu0
  %v4432 = vadd.f32 %v4103, %v4431
  %v4433 = vpop.f32.mrf.mxu0
  %v4434 = vadd.f32 %v4105, %v4433
  %4435 = vmatmul.bf16.gmra.mxu0 %v3093
  %v4436 = vpop.f32.mrf.mxu0
  %v4437 = vadd.f32 %v4108, %v4436
  %v4438 = vpop.f32.mrf.mxu0
  %v4439 = vadd.f32 %v4110, %v4438
  %4440 = vmatmul.bf16.gmra.mxu0 %v3101
  %v4441 = vpop.f32.mrf.mxu0
  %v4442 = vadd.f32 %v4113, %v4441
  %v4443 = vpop.f32.mrf.mxu0
  %v4444 = vadd.f32 %v4115, %v4443
  %4445 = vmatmul.bf16.gmra.mxu0 %v3109
  %v4446 = vpop.f32.mrf.mxu0
  %v4447 = vadd.f32 %v4118, %v4446
  %v4448 = vpop.f32.mrf.mxu0
  %v4449 = vadd.f32 %v4120, %v4448
  %4450 = vmatmul.bf16.gmra.mxu0 %v3117
  %v4451 = vpop.f32.mrf.mxu0
  %v4452 = vadd.f32 %v4123, %v4451
  %v4453 = vpop.f32.mrf.mxu0
  %v4454 = vadd.f32 %v4125, %v4453
  %4455 = vmatmul.bf16.gmra.mxu0 %v3125
  %v4456 = vpop.f32.mrf.mxu0
  %v4457 = vadd.f32 %v4128, %v4456
  %v4458 = vpop.f32.mrf.mxu0
  %v4459 = vadd.f32 %v4130, %v4458
  %4460 = vmatmul.bf16.gmra.mxu0 %v3133
  %v4461 = vpop.f32.mrf.mxu0
  %v4462 = vadd.f32 %v4133, %v4461
  %v4463 = vpop.f32.mrf.mxu0
  %v4464 = vadd.f32 %v4135, %v4463
  %4465 = vmatmul.bf16.gmra.mxu0 %v3141
  %v4466 = vpop.f32.mrf.mxu0
  %v4467 = vadd.f32 %v4138, %v4466
  %v4468 = vpop.f32.mrf.mxu0
  %v4469 = vadd.f32 %v4140, %v4468
  %4470 = vmatmul.bf16.gmra.mxu0 %v3149
  %v4471 = vpop.f32.mrf.mxu0
  %v4472 = vadd.f32 %v4143, %v4471
  %v4473 = vpop.f32.mrf.mxu0
  %v4474 = vadd.f32 %v4145, %v4473
  %4475 = vmatmul.bf16.gmra.mxu0 %v3157
  %v4476 = vpop.f32.mrf.mxu0
  %v4477 = vadd.f32 %v4148, %v4476
  %v4478 = vpop.f32.mrf.mxu0
  %v4479 = vadd.f32 %v4150, %v4478
  %4480 = vmatmul.bf16.gmra.mxu0 %v3165
  %v4481 = vpop.f32.mrf.mxu0
  %v4482 = vadd.f32 %v4153, %v4481
  %v4483 = vpop.f32.mrf.mxu0
  %v4484 = vadd.f32 %v4155, %v4483
  %4485 = vmatmul.bf16.gmra.mxu0 %v3173
  %v4486 = vpop.f32.mrf.mxu0
  %v4487 = vadd.f32 %v4158, %v4486
  %v4488 = vpop.f32.mrf.mxu0
  %v4489 = vadd.f32 %v4160, %v4488
  %4490 = vmatmul.bf16.gmra.mxu0 %v3181
  %v4491 = vpop.f32.mrf.mxu0
  %v4492 = vadd.f32 %v4163, %v4491
  %v4493 = vpop.f32.mrf.mxu0
  %v4494 = vadd.f32 %v4165, %v4493
  %4495 = vmatmul.bf16.gmra.mxu0 %v3189
  %v4496 = vpop.f32.mrf.mxu0
  %v4497 = vadd.f32 %v4168, %v4496
  %v4498 = vpop.f32.mrf.mxu0
  %v4499 = vadd.f32 %v4170, %v4498
  %4500 = vmatmul.bf16.gmra.mxu0 %v3197
  %v4501 = vpop.f32.mrf.mxu0
  %v4502 = vadd.f32 %v4173, %v4501
  %v4503 = vpop.f32.mrf.mxu0
  %v4504 = vadd.f32 %v4175, %v4503
  %4505 = vmatmul.bf16.gmra.mxu0 %v3205
  %v4506 = vpop.f32.mrf.mxu0
  %v4507 = vadd.f32 %v4178, %v4506
  %v4508 = vpop.f32.mrf.mxu0
  %v4509 = vadd.f32 %v4180, %v4508
  %4510 = vmatmul.bf16.gmra.mxu0 %v3213
  %v4511 = vpop.f32.mrf.mxu0
  %v4512 = vadd.f32 %v4183, %v4511
  %v4513 = vpop.f32.mrf.mxu0
  %v4514 = vadd.f32 %v4185, %v4513
  %4515 = vmatmul.bf16.gmra.mxu0 %v3221
  %v4516 = vpop.f32.mrf.mxu0
  %v4517 = vadd.f32 %v4188, %v4516
  %v4518 = vpop.f32.mrf.mxu0
  %v4519 = vadd.f32 %v4190, %v4518
  %4520 = vmatmul.bf16.gmra.mxu0 %v3229
  %v4521 = vpop.f32.mrf.mxu0
  %v4522 = vadd.f32 %v4193, %v4521
  %v4523 = vpop.f32.mrf.mxu0
  %v4524 = vadd.f32 %v4195, %v4523
  %4525 = vmatmul.bf16.gmra.mxu0 %v3237
  %v4526 = vpop.f32.mrf.mxu0
  %v4527 = vadd.f32 %v4198, %v4526
  %v4528 = vpop.f32.mrf.mxu0
  %v4529 = vadd.f32 %v4200, %v4528
  %4530 = vmatmul.bf16.gmra.mxu0 %v3245
  %v4531 = vpop.f32.mrf.mxu0
  %v4532 = vadd.f32 %v4203, %v4531
  %v4533 = vpop.f32.mrf.mxu0
  %v4534 = vadd.f32 %v4205, %v4533
  %4535 = vmatmul.bf16.gmra.mxu0 %v3253
  %v4536 = vpop.f32.mrf.mxu0
  %v4537 = vadd.f32 %v4208, %v4536
  %v4538 = vpop.f32.mrf.mxu0
  %v4539 = vadd.f32 %v4210, %v4538
  %4540 = vmatmul.bf16.gmra.mxu0 %v3261
  %v4541 = vpop.f32.mrf.mxu0
  %v4542 = vadd.f32 %v4213, %v4541
  %v4543 = vpop.f32.mrf.mxu0
  %v4544 = vadd.f32 %v4215, %v4543
  %4545 = vmatmul.bf16.gmra.mxu0 %v3269
  %v4546 = vpop.f32.mrf.mxu0
  %v4547 = vadd.f32 %v4218, %v4546
  %v4548 = vpop.f32.mrf.mxu0
  %v4549 = vadd.f32 %v4220, %v4548
  %4550 = vmatmul.bf16.gmra.mxu0 %v3277
  %v4551 = vpop.f32.mrf.mxu0
  %v4552 = vadd.f32 %v4223, %v4551
  %v4553 = vpop.f32.mrf.mxu0
  %v4554 = vadd.f32 %v4225, %v4553
  %4555 = vmatmul.bf16.gmra.mxu0 %v3285
  %v4556 = vpop.f32.mrf.mxu0
  %v4557 = vadd.f32 %v4228, %v4556
  %v4558 = vpop.f32.mrf.mxu0
  %v4559 = vadd.f32 %v4230, %v4558
  %4560 = vmatmul.bf16.gmra.mxu0 %v3293
  %v4561 = vpop.f32.mrf.mxu0
  %v4562 = vadd.f32 %v4233, %v4561
  %v4563 = vpop.f32.mrf.mxu0
  %v4564 = vadd.f32 %v4235, %v4563
  %4565 = vmatmul.bf16.gmra.mxu0 %v3301
  %v4566 = vpop.f32.mrf.mxu0
  %v4567 = vadd.f32 %v4238, %v4566
  %v4568 = vpop.f32.mrf.mxu0
  %v4569 = vadd.f32 %v4240, %v4568
  %4570 = vmatmul.bf16.gmra.mxu0 %v3309
  %v4571 = vpop.f32.mrf.mxu0
  %v4572 = vadd.f32 %v4243, %v4571
  %v4573 = vpop.f32.mrf.mxu0
  %v4574 = vadd.f32 %v4245, %v4573
  %4575 = vmatmul.bf16.gmra.mxu0 %v3317
  %v4576 = vpop.f32.mrf.mxu0
  %v4577 = vadd.f32 %v4248, %v4576
  %v4578 = vpop.f32.mrf.mxu0
  %v4579 = vadd.f32 %v4250, %v4578
  %4580 = vmatmul.bf16.gmra.mxu0 %v3325
  %v4581 = vpop.f32.mrf.mxu0
  %v4582 = vadd.f32 %v4253, %v4581
  %v4583 = vpop.f32.mrf.mxu0
  %v4584 = vadd.f32 %v4255, %v4583
  %4585 = vmatmul.bf16.gmra.mxu0 %v3333
  %v4586 = vpop.f32.mrf.mxu0
  %v4587 = vadd.f32 %v4258, %v4586
  %v4588 = vpop.f32.mrf.mxu0
  %v4589 = vadd.f32 %v4260, %v4588
  %4590 = vmatmul.bf16.gmra.mxu0 %v3341
  %v4591 = vpop.f32.mrf.mxu0
  %v4592 = vadd.f32 %v4263, %v4591
  %v4593 = vpop.f32.mrf.mxu0
  %v4594 = vadd.f32 %v4265, %v4593
  %4595 = vmatmul.bf16.gmra.mxu0 %v3349
  %v4596 = vpop.f32.mrf.mxu0
  %v4597 = vadd.f32 %v4268, %v4596
  %v4598 = vpop.f32.mrf.mxu0
  %v4599 = vadd.f32 %v4270, %v4598
  %4600 = vmatmul.bf16.gmra.mxu0 %v3357
  %v4601 = vpop.f32.mrf.mxu0
  %v4602 = vadd.f32 %v4273, %v4601
  %v4603 = vpop.f32.mrf.mxu0
  %v4604 = vadd.f32 %v4275, %v4603
  %4605 = vmatmul.bf16.gmra.mxu0 %v3365
  %v4606 = vpop.f32.mrf.mxu0
  %v4607 = vadd.f32 %v4278, %v4606
  %v4608 = vpop.f32.mrf.mxu0
  %v4609 = vadd.f32 %v4280, %v4608
  %4610 = vmatmul.bf16.gmra.mxu0 %v3373
  %v4611 = vpop.f32.mrf.mxu0
  %v4612 = vadd.f32 %v4283, %v4611
  %v4613 = vpop.f32.mrf.mxu0
  %v4614 = vadd.f32 %v4285, %v4613
  %4615 = vmatmul.bf16.gmra.mxu0 %v3381
  %v4616 = vpop.f32.mrf.mxu0
  %v4617 = vadd.f32 %v4288, %v4616
  %v4618 = vpop.f32.mrf.mxu0
  %v4619 = vadd.f32 %v4290, %v4618
  %4620 = vmatmul.bf16.gmra.mxu0 %v3389
  %v4621 = vpop.f32.mrf.mxu0
  %v4622 = vadd.f32 %v4293, %v4621
  %v4623 = vpop.f32.mrf.mxu0
  %v4624 = vadd.f32 %v4295, %v4623
  %4625 = vmatmul.bf16.gmra.mxu0 %v3397
  %v4626 = vpop.f32.mrf.mxu0
  %v4627 = vadd.f32 %v4298, %v4626
  %v4628 = vpop.f32.mrf.mxu0
  %v4629 = vadd.f32 %v4300, %v4628
  %4630 = vmatmul.bf16.gmra.mxu0 %v3405
  %v4631 = vpop.f32.mrf.mxu0
  %v4632 = vadd.f32 %v4303, %v4631
  %v4633 = vpop.f32.mrf.mxu0
  %v4634 = vadd.f32 %v4305, %v4633
  %4635 = vmatmul.bf16.gmra.mxu0 %v3413
  %v4636 = vpop.f32.mrf.mxu0
  %v4637 = vadd.f32 %v4308, %v4636
  %v4638 = vpop.f32.mrf.mxu0
  %v4639 = vadd.f32 %v4310, %v4638
  %4640 = vmatmul.bf16.gmra.mxu0 %v3421
  %v4641 = vpop.f32.mrf.mxu0
  %v4642 = vadd.f32 %v4313, %v4641
  %v4643 = vpop.f32.mrf.mxu0
  %v4644 = vadd.f32 %v4315, %v4643
  %4645 = vmatmul.bf16.gmra.mxu0 %v3429
  %v4646 = vpop.f32.mrf.mxu0
  %v4647 = vadd.f32 %v4318, %v4646
  %v4648 = vpop.f32.mrf.mxu0
  %v4649 = vadd.f32 %v4320, %v4648
  %4650 = vmatmul.bf16.gmra.mxu0 %v3437
  %v4651 = vpop.f32.mrf.mxu0
  %v4652 = vadd.f32 %v4323, %v4651
  %v4653 = vpop.f32.mrf.mxu0
  %v4654 = vadd.f32 %v4325, %v4653
  %4655 = vmatmul.bf16.gmra.mxu0 %v3445
  %v4656 = vpop.f32.mrf.mxu0
  %v4657 = vadd.f32 %v4328, %v4656
  %v4658 = vpop.f32.mrf.mxu0
  %v4659 = vadd.f32 %v4330, %v4658
  %4660 = vmatmul.bf16.gmra.mxu0 %v3453
  %v4661 = vpop.f32.mrf.mxu0
  %v4662 = vadd.f32 %v4333, %v4661
  %v4663 = vpop.f32.mrf.mxu0
  %v4664 = vadd.f32 %v4335, %v4663
  %4665 = vmatmul.bf16.gmra.mxu0 %v3461
  %v4666 = vpop.f32.mrf.mxu0
  %v4667 = vadd.f32 %v4338, %v4666
  %v4668 = vpop.f32.mrf.mxu0
  %v4669 = vadd.f32 %v4340, %v4668
  %4670 = vmatmul.bf16.gmra.mxu0 %v3469
  %v4671 = vpop.f32.mrf.mxu0
  %v4672 = vadd.f32 %v4343, %v4671
  %v4673 = vpop.f32.mrf.mxu0
  %v4674 = vadd.f32 %v4345, %v4673
  %4675 = vmatmul.bf16.gmra.mxu0 %v3477
  %v4676 = vpop.f32.mrf.mxu0
  %v4677 = vadd.f32 %v4348, %v4676
  %v4678 = vpop.f32.mrf.mxu0
  %v4679 = vadd.f32 %v4350, %v4678
  %4680 = vmatmul.bf16.gmra.mxu0 %v3485
  %v4681 = vpop.f32.mrf.mxu0
  %v4682 = vadd.f32 %v4353, %v4681
  %v4683 = vpop.f32.mrf.mxu0
  %v4684 = vadd.f32 %v4355, %v4683
  %4685 = vmatmul.bf16.gmra.mxu0 %v3493
  %v4686 = vpop.f32.mrf.mxu0
  %v4687 = vadd.f32 %v4358, %v4686
  %v4688 = vpop.f32.mrf.mxu0
  %v4689 = vadd.f32 %v4360, %v4688
  %4690 = vmatmul.bf16.gmra.mxu0 %v3501
  %v4691 = vpop.f32.mrf.mxu0
  %v4692 = vadd.f32 %v4363, %v4691
  %v4693 = vpop.f32.mrf.mxu0
  %v4694 = vadd.f32 %v4365, %v4693
  %4695 = vmatmul.bf16.gmra.mxu0 %v3509
  %v4696 = vpop.f32.mrf.mxu0
  %v4697 = vadd.f32 %v4368, %v4696
  %v4698 = vpop.f32.mrf.mxu0
  %v4699 = vadd.f32 %v4370, %v4698
  %4700 = vmatmul.bf16.gmra.mxu0 %v3517
  %v4701 = vpop.f32.mrf.mxu0
  %v4702 = vadd.f32 %v4373, %v4701
  %v4703 = vpop.f32.mrf.mxu0
  %v4704 = vadd.f32 %v4375, %v4703
  %4705 = vmatmul.bf16.gmra.mxu0 %v3525
  %v4706 = vpop.f32.mrf.mxu0
  %v4707 = vadd.f32 %v4378, %v4706
  %v4708 = vpop.f32.mrf.mxu0
  %v4709 = vadd.f32 %v4380, %v4708
  %4710 = vmatmul.bf16.gmra.mxu0 %v3533
  %v4711 = vpop.f32.mrf.mxu0
  %v4712 = vadd.f32 %v4383, %v4711
  %v4713 = vpop.f32.mrf.mxu0
  %v4714 = vadd.f32 %v4385, %v4713
  %4715 = vmatmul.bf16.gmra.mxu0 %v3541
  %v4716 = vpop.f32.mrf.mxu0
  %v4717 = vadd.f32 %v4388, %v4716
  %v4718 = vpop.f32.mrf.mxu0
  %v4719 = vadd.f32 %v4390, %v4718
  %4720 = vmatmul.bf16.gmra.mxu0 %v3549
  %v4721 = vpop.f32.mrf.mxu0
  %v4722 = vadd.f32 %v4393, %v4721
  %v4723 = vpop.f32.mrf.mxu0
  %v4724 = vadd.f32 %v4395, %v4723
  %4725 = vdwg.mxu0
  %4726 = vmatpush.bf16.msra.mxu0 %v951
  %4727 = vmatpush.bf16.msra.mxu0 %v950
  %4728 = vmatpush.bf16.msra.mxu0 %v949
  %4729 = vmatpush.bf16.msra.mxu0 %v948
  %4730 = vmatpush.bf16.msra.mxu0 %v947
  %4731 = vmatpush.bf16.msra.mxu0 %v946
  %4732 = vmatpush.bf16.msra.mxu0 %v945
  %4733 = vmatpush.bf16.msra.mxu0 %v944
  %4734 = vmatmul.bf16.gmra.mxu0 %v3046
  %v4735 = vpop.f32.mrf.mxu0
  %v4736 = vadd.f32 %v4407, %v4735
  %v4737 = vpop.f32.mrf.mxu0
  %v4738 = vadd.f32 %v4409, %v4737
  %4739 = vmatmul.bf16.gmra.mxu0 %v3054
  %v4740 = vpop.f32.mrf.mxu0
  %v4741 = vadd.f32 %v4412, %v4740
  %v4742 = vpop.f32.mrf.mxu0
  %v4743 = vadd.f32 %v4414, %v4742
  %4744 = vmatmul.bf16.gmra.mxu0 %v3062
  %v4745 = vpop.f32.mrf.mxu0
  %v4746 = vadd.f32 %v4417, %v4745
  %v4747 = vpop.f32.mrf.mxu0
  %v4748 = vadd.f32 %v4419, %v4747
  %4749 = vmatmul.bf16.gmra.mxu0 %v3070
  %v4750 = vpop.f32.mrf.mxu0
  %v4751 = vadd.f32 %v4422, %v4750
  %v4752 = vpop.f32.mrf.mxu0
  %v4753 = vadd.f32 %v4424, %v4752
  %4754 = vmatmul.bf16.gmra.mxu0 %v3078
  %v4755 = vpop.f32.mrf.mxu0
  %v4756 = vadd.f32 %v4427, %v4755
  %v4757 = vpop.f32.mrf.mxu0
  %v4758 = vadd.f32 %v4429, %v4757
  %4759 = vmatmul.bf16.gmra.mxu0 %v3086
  %v4760 = vpop.f32.mrf.mxu0
  %v4761 = vadd.f32 %v4432, %v4760
  %v4762 = vpop.f32.mrf.mxu0
  %v4763 = vadd.f32 %v4434, %v4762
  %4764 = vmatmul.bf16.gmra.mxu0 %v3094
  %v4765 = vpop.f32.mrf.mxu0
  %v4766 = vadd.f32 %v4437, %v4765
  %v4767 = vpop.f32.mrf.mxu0
  %v4768 = vadd.f32 %v4439, %v4767
  %4769 = vmatmul.bf16.gmra.mxu0 %v3102
  %v4770 = vpop.f32.mrf.mxu0
  %v4771 = vadd.f32 %v4442, %v4770
  %v4772 = vpop.f32.mrf.mxu0
  %v4773 = vadd.f32 %v4444, %v4772
  %4774 = vmatmul.bf16.gmra.mxu0 %v3110
  %v4775 = vpop.f32.mrf.mxu0
  %v4776 = vadd.f32 %v4447, %v4775
  %v4777 = vpop.f32.mrf.mxu0
  %v4778 = vadd.f32 %v4449, %v4777
  %4779 = vmatmul.bf16.gmra.mxu0 %v3118
  %v4780 = vpop.f32.mrf.mxu0
  %v4781 = vadd.f32 %v4452, %v4780
  %v4782 = vpop.f32.mrf.mxu0
  %v4783 = vadd.f32 %v4454, %v4782
  %4784 = vmatmul.bf16.gmra.mxu0 %v3126
  %v4785 = vpop.f32.mrf.mxu0
  %v4786 = vadd.f32 %v4457, %v4785
  %v4787 = vpop.f32.mrf.mxu0
  %v4788 = vadd.f32 %v4459, %v4787
  %4789 = vmatmul.bf16.gmra.mxu0 %v3134
  %v4790 = vpop.f32.mrf.mxu0
  %v4791 = vadd.f32 %v4462, %v4790
  %v4792 = vpop.f32.mrf.mxu0
  %v4793 = vadd.f32 %v4464, %v4792
  %4794 = vmatmul.bf16.gmra.mxu0 %v3142
  %v4795 = vpop.f32.mrf.mxu0
  %v4796 = vadd.f32 %v4467, %v4795
  %v4797 = vpop.f32.mrf.mxu0
  %v4798 = vadd.f32 %v4469, %v4797
  %4799 = vmatmul.bf16.gmra.mxu0 %v3150
  %v4800 = vpop.f32.mrf.mxu0
  %v4801 = vadd.f32 %v4472, %v4800
  %v4802 = vpop.f32.mrf.mxu0
  %v4803 = vadd.f32 %v4474, %v4802
  %4804 = vmatmul.bf16.gmra.mxu0 %v3158
  %v4805 = vpop.f32.mrf.mxu0
  %v4806 = vadd.f32 %v4477, %v4805
  %v4807 = vpop.f32.mrf.mxu0
  %v4808 = vadd.f32 %v4479, %v4807
  %4809 = vmatmul.bf16.gmra.mxu0 %v3166
  %v4810 = vpop.f32.mrf.mxu0
  %v4811 = vadd.f32 %v4482, %v4810
  %v4812 = vpop.f32.mrf.mxu0
  %v4813 = vadd.f32 %v4484, %v4812
  %4814 = vmatmul.bf16.gmra.mxu0 %v3174
  %v4815 = vpop.f32.mrf.mxu0
  %v4816 = vadd.f32 %v4487, %v4815
  %v4817 = vpop.f32.mrf.mxu0
  %v4818 = vadd.f32 %v4489, %v4817
  %4819 = vmatmul.bf16.gmra.mxu0 %v3182
  %v4820 = vpop.f32.mrf.mxu0
  %v4821 = vadd.f32 %v4492, %v4820
  %v4822 = vpop.f32.mrf.mxu0
  %v4823 = vadd.f32 %v4494, %v4822
  %4824 = vmatmul.bf16.gmra.mxu0 %v3190
  %v4825 = vpop.f32.mrf.mxu0
  %v4826 = vadd.f32 %v4497, %v4825
  %v4827 = vpop.f32.mrf.mxu0
  %v4828 = vadd.f32 %v4499, %v4827
  %4829 = vmatmul.bf16.gmra.mxu0 %v3198
  %v4830 = vpop.f32.mrf.mxu0
  %v4831 = vadd.f32 %v4502, %v4830
  %v4832 = vpop.f32.mrf.mxu0
  %v4833 = vadd.f32 %v4504, %v4832
  %4834 = vmatmul.bf16.gmra.mxu0 %v3206
  %v4835 = vpop.f32.mrf.mxu0
  %v4836 = vadd.f32 %v4507, %v4835
  %v4837 = vpop.f32.mrf.mxu0
  %v4838 = vadd.f32 %v4509, %v4837
  %4839 = vmatmul.bf16.gmra.mxu0 %v3214
  %v4840 = vpop.f32.mrf.mxu0
  %v4841 = vadd.f32 %v4512, %v4840
  %v4842 = vpop.f32.mrf.mxu0
  %v4843 = vadd.f32 %v4514, %v4842
  %4844 = vmatmul.bf16.gmra.mxu0 %v3222
  %v4845 = vpop.f32.mrf.mxu0
  %v4846 = vadd.f32 %v4517, %v4845
  %v4847 = vpop.f32.mrf.mxu0
  %v4848 = vadd.f32 %v4519, %v4847
  %4849 = vmatmul.bf16.gmra.mxu0 %v3230
  %v4850 = vpop.f32.mrf.mxu0
  %v4851 = vadd.f32 %v4522, %v4850
  %v4852 = vpop.f32.mrf.mxu0
  %v4853 = vadd.f32 %v4524, %v4852
  %4854 = vmatmul.bf16.gmra.mxu0 %v3238
  %v4855 = vpop.f32.mrf.mxu0
  %v4856 = vadd.f32 %v4527, %v4855
  %v4857 = vpop.f32.mrf.mxu0
  %v4858 = vadd.f32 %v4529, %v4857
  %4859 = vmatmul.bf16.gmra.mxu0 %v3246
  %v4860 = vpop.f32.mrf.mxu0
  %v4861 = vadd.f32 %v4532, %v4860
  %v4862 = vpop.f32.mrf.mxu0
  %v4863 = vadd.f32 %v4534, %v4862
  %4864 = vmatmul.bf16.gmra.mxu0 %v3254
  %v4865 = vpop.f32.mrf.mxu0
  %v4866 = vadd.f32 %v4537, %v4865
  %v4867 = vpop.f32.mrf.mxu0
  %v4868 = vadd.f32 %v4539, %v4867
  %4869 = vmatmul.bf16.gmra.mxu0 %v3262
  %v4870 = vpop.f32.mrf.mxu0
  %v4871 = vadd.f32 %v4542, %v4870
  %v4872 = vpop.f32.mrf.mxu0
  %v4873 = vadd.f32 %v4544, %v4872
  %4874 = vmatmul.bf16.gmra.mxu0 %v3270
  %v4875 = vpop.f32.mrf.mxu0
  %v4876 = vadd.f32 %v4547, %v4875
  %v4877 = vpop.f32.mrf.mxu0
  %v4878 = vadd.f32 %v4549, %v4877
  %4879 = vmatmul.bf16.gmra.mxu0 %v3278
  %v4880 = vpop.f32.mrf.mxu0
  %v4881 = vadd.f32 %v4552, %v4880
  %v4882 = vpop.f32.mrf.mxu0
  %v4883 = vadd.f32 %v4554, %v4882
  %4884 = vmatmul.bf16.gmra.mxu0 %v3286
  %v4885 = vpop.f32.mrf.mxu0
  %v4886 = vadd.f32 %v4557, %v4885
  %v4887 = vpop.f32.mrf.mxu0
  %v4888 = vadd.f32 %v4559, %v4887
  %4889 = vmatmul.bf16.gmra.mxu0 %v3294
  %v4890 = vpop.f32.mrf.mxu0
  %v4891 = vadd.f32 %v4562, %v4890
  %v4892 = vpop.f32.mrf.mxu0
  %v4893 = vadd.f32 %v4564, %v4892
  %4894 = vmatmul.bf16.gmra.mxu0 %v3302
  %v4895 = vpop.f32.mrf.mxu0
  %v4896 = vadd.f32 %v4567, %v4895
  %v4897 = vpop.f32.mrf.mxu0
  %v4898 = vadd.f32 %v4569, %v4897
  %4899 = vmatmul.bf16.gmra.mxu0 %v3310
  %v4900 = vpop.f32.mrf.mxu0
  %v4901 = vadd.f32 %v4572, %v4900
  %v4902 = vpop.f32.mrf.mxu0
  %v4903 = vadd.f32 %v4574, %v4902
  %4904 = vmatmul.bf16.gmra.mxu0 %v3318
  %v4905 = vpop.f32.mrf.mxu0
  %v4906 = vadd.f32 %v4577, %v4905
  %v4907 = vpop.f32.mrf.mxu0
  %v4908 = vadd.f32 %v4579, %v4907
  %4909 = vmatmul.bf16.gmra.mxu0 %v3326
  %v4910 = vpop.f32.mrf.mxu0
  %v4911 = vadd.f32 %v4582, %v4910
  %v4912 = vpop.f32.mrf.mxu0
  %v4913 = vadd.f32 %v4584, %v4912
  %4914 = vmatmul.bf16.gmra.mxu0 %v3334
  %v4915 = vpop.f32.mrf.mxu0
  %v4916 = vadd.f32 %v4587, %v4915
  %v4917 = vpop.f32.mrf.mxu0
  %v4918 = vadd.f32 %v4589, %v4917
  %4919 = vmatmul.bf16.gmra.mxu0 %v3342
  %v4920 = vpop.f32.mrf.mxu0
  %v4921 = vadd.f32 %v4592, %v4920
  %v4922 = vpop.f32.mrf.mxu0
  %v4923 = vadd.f32 %v4594, %v4922
  %4924 = vmatmul.bf16.gmra.mxu0 %v3350
  %v4925 = vpop.f32.mrf.mxu0
  %v4926 = vadd.f32 %v4597, %v4925
  %v4927 = vpop.f32.mrf.mxu0
  %v4928 = vadd.f32 %v4599, %v4927
  %4929 = vmatmul.bf16.gmra.mxu0 %v3358
  %v4930 = vpop.f32.mrf.mxu0
  %v4931 = vadd.f32 %v4602, %v4930
  %v4932 = vpop.f32.mrf.mxu0
  %v4933 = vadd.f32 %v4604, %v4932
  %4934 = vmatmul.bf16.gmra.mxu0 %v3366
  %v4935 = vpop.f32.mrf.mxu0
  %v4936 = vadd.f32 %v4607, %v4935
  %v4937 = vpop.f32.mrf.mxu0
  %v4938 = vadd.f32 %v4609, %v4937
  %4939 = vmatmul.bf16.gmra.mxu0 %v3374
  %v4940 = vpop.f32.mrf.mxu0
  %v4941 = vadd.f32 %v4612, %v4940
  %v4942 = vpop.f32.mrf.mxu0
  %v4943 = vadd.f32 %v4614, %v4942
  %4944 = vmatmul.bf16.gmra.mxu0 %v3382
  %v4945 = vpop.f32.mrf.mxu0
  %v4946 = vadd.f32 %v4617, %v4945
  %v4947 = vpop.f32.mrf.mxu0
  %v4948 = vadd.f32 %v4619, %v4947
  %4949 = vmatmul.bf16.gmra.mxu0 %v3390
  %v4950 = vpop.f32.mrf.mxu0
  %v4951 = vadd.f32 %v4622, %v4950
  %v4952 = vpop.f32.mrf.mxu0
  %v4953 = vadd.f32 %v4624, %v4952
  %4954 = vmatmul.bf16.gmra.mxu0 %v3398
  %v4955 = vpop.f32.mrf.mxu0
  %v4956 = vadd.f32 %v4627, %v4955
  %v4957 = vpop.f32.mrf.mxu0
  %v4958 = vadd.f32 %v4629, %v4957
  %4959 = vmatmul.bf16.gmra.mxu0 %v3406
  %v4960 = vpop.f32.mrf.mxu0
  %v4961 = vadd.f32 %v4632, %v4960
  %v4962 = vpop.f32.mrf.mxu0
  %v4963 = vadd.f32 %v4634, %v4962
  %4964 = vmatmul.bf16.gmra.mxu0 %v3414
  %v4965 = vpop.f32.mrf.mxu0
  %v4966 = vadd.f32 %v4637, %v4965
  %v4967 = vpop.f32.mrf.mxu0
  %v4968 = vadd.f32 %v4639, %v4967
  %4969 = vmatmul.bf16.gmra.mxu0 %v3422
  %v4970 = vpop.f32.mrf.mxu0
  %v4971 = vadd.f32 %v4642, %v4970
  %v4972 = vpop.f32.mrf.mxu0
  %v4973 = vadd.f32 %v4644, %v4972
  %4974 = vmatmul.bf16.gmra.mxu0 %v3430
  %v4975 = vpop.f32.mrf.mxu0
  %v4976 = vadd.f32 %v4647, %v4975
  %v4977 = vpop.f32.mrf.mxu0
  %v4978 = vadd.f32 %v4649, %v4977
  %4979 = vmatmul.bf16.gmra.mxu0 %v3438
  %v4980 = vpop.f32.mrf.mxu0
  %v4981 = vadd.f32 %v4652, %v4980
  %v4982 = vpop.f32.mrf.mxu0
  %v4983 = vadd.f32 %v4654, %v4982
  %4984 = vmatmul.bf16.gmra.mxu0 %v3446
  %v4985 = vpop.f32.mrf.mxu0
  %v4986 = vadd.f32 %v4657, %v4985
  %v4987 = vpop.f32.mrf.mxu0
  %v4988 = vadd.f32 %v4659, %v4987
  %4989 = vmatmul.bf16.gmra.mxu0 %v3454
  %v4990 = vpop.f32.mrf.mxu0
  %v4991 = vadd.f32 %v4662, %v4990
  %v4992 = vpop.f32.mrf.mxu0
  %v4993 = vadd.f32 %v4664, %v4992
  %4994 = vmatmul.bf16.gmra.mxu0 %v3462
  %v4995 = vpop.f32.mrf.mxu0
  %v4996 = vadd.f32 %v4667, %v4995
  %v4997 = vpop.f32.mrf.mxu0
  %v4998 = vadd.f32 %v4669, %v4997
  %4999 = vmatmul.bf16.gmra.mxu0 %v3470
  %v5000 = vpop.f32.mrf.mxu0
  %v5001 = vadd.f32 %v4672, %v5000
  %v5002 = vpop.f32.mrf.mxu0
  %v5003 = vadd.f32 %v4674, %v5002
  %5004 = vmatmul.bf16.gmra.mxu0 %v3478
  %v5005 = vpop.f32.mrf.mxu0
  %v5006 = vadd.f32 %v4677, %v5005
  %v5007 = vpop.f32.mrf.mxu0
  %v5008 = vadd.f32 %v4679, %v5007
  %5009 = vmatmul.bf16.gmra.mxu0 %v3486
  %v5010 = vpop.f32.mrf.mxu0
  %v5011 = vadd.f32 %v4682, %v5010
  %v5012 = vpop.f32.mrf.mxu0
  %v5013 = vadd.f32 %v4684, %v5012
  %5014 = vmatmul.bf16.gmra.mxu0 %v3494
  %v5015 = vpop.f32.mrf.mxu0
  %v5016 = vadd.f32 %v4687, %v5015
  %v5017 = vpop.f32.mrf.mxu0
  %v5018 = vadd.f32 %v4689, %v5017
  %5019 = vmatmul.bf16.gmra.mxu0 %v3502
  %v5020 = vpop.f32.mrf.mxu0
  %v5021 = vadd.f32 %v4692, %v5020
  %v5022 = vpop.f32.mrf.mxu0
  %v5023 = vadd.f32 %v4694, %v5022
  %5024 = vmatmul.bf16.gmra.mxu0 %v3510
  %v5025 = vpop.f32.mrf.mxu0
  %v5026 = vadd.f32 %v4697, %v5025
  %v5027 = vpop.f32.mrf.mxu0
  %v5028 = vadd.f32 %v4699, %v5027
  %5029 = vmatmul.bf16.gmra.mxu0 %v3518
  %v5030 = vpop.f32.mrf.mxu0
  %v5031 = vadd.f32 %v4702, %v5030
  %v5032 = vpop.f32.mrf.mxu0
  %v5033 = vadd.f32 %v4704, %v5032
  %5034 = vmatmul.bf16.gmra.mxu0 %v3526
  %v5035 = vpop.f32.mrf.mxu0
  %v5036 = vadd.f32 %v4707, %v5035
  %v5037 = vpop.f32.mrf.mxu0
  %v5038 = vadd.f32 %v4709, %v5037
  %5039 = vmatmul.bf16.gmra.mxu0 %v3534
  %v5040 = vpop.f32.mrf.mxu0
  %v5041 = vadd.f32 %v4712, %v5040
  %v5042 = vpop.f32.mrf.mxu0
  %v5043 = vadd.f32 %v4714, %v5042
  %5044 = vmatmul.bf16.gmra.mxu0 %v3542
  %v5045 = vpop.f32.mrf.mxu0
  %v5046 = vadd.f32 %v4717, %v5045
  %v5047 = vpop.f32.mrf.mxu0
  %v5048 = vadd.f32 %v4719, %v5047
  %5049 = vmatmul.bf16.gmra.mxu0 %v3550
  %v5050 = vpop.f32.mrf.mxu0
  %v5051 = vadd.f32 %v4722, %v5050
  %v5052 = vpop.f32.mrf.mxu0
  %v5053 = vadd.f32 %v4724, %v5052
  %5054 = vdwg.mxu0
  %5055 = vmatpush.bf16.msra.mxu0 %v959
  %5056 = vmatpush.bf16.msra.mxu0 %v958
  %5057 = vmatpush.bf16.msra.mxu0 %v957
  %5058 = vmatpush.bf16.msra.mxu0 %v956
  %5059 = vmatpush.bf16.msra.mxu0 %v955
  %5060 = vmatpush.bf16.msra.mxu0 %v954
  %5061 = vmatpush.bf16.msra.mxu0 %v953
  %5062 = vmatpush.bf16.msra.mxu0 %v952
  %5063 = vmatmul.bf16.gmra.mxu0 %v3047
  %v5064 = vpop.f32.mrf.mxu0
  %v5065 = vadd.f32 %v4736, %v5064
  %v5066 = vpop.f32.mrf.mxu0
  %v5067 = vadd.f32 %v4738, %v5066
  %5068 = vmatmul.bf16.gmra.mxu0 %v3055
  %v5069 = vpop.f32.mrf.mxu0
  %v5070 = vadd.f32 %v4741, %v5069
  %v5071 = vpop.f32.mrf.mxu0
  %v5072 = vadd.f32 %v4743, %v5071
  %5073 = vmatmul.bf16.gmra.mxu0 %v3063
  %v5074 = vpop.f32.mrf.mxu0
  %v5075 = vadd.f32 %v4746, %v5074
  %v5076 = vpop.f32.mrf.mxu0
  %v5077 = vadd.f32 %v4748, %v5076
  %5078 = vmatmul.bf16.gmra.mxu0 %v3071
  %v5079 = vpop.f32.mrf.mxu0
  %v5080 = vadd.f32 %v4751, %v5079
  %v5081 = vpop.f32.mrf.mxu0
  %v5082 = vadd.f32 %v4753, %v5081
  %5083 = vmatmul.bf16.gmra.mxu0 %v3079
  %v5084 = vpop.f32.mrf.mxu0
  %v5085 = vadd.f32 %v4756, %v5084
  %v5086 = vpop.f32.mrf.mxu0
  %v5087 = vadd.f32 %v4758, %v5086
  %5088 = vmatmul.bf16.gmra.mxu0 %v3087
  %v5089 = vpop.f32.mrf.mxu0
  %v5090 = vadd.f32 %v4761, %v5089
  %v5091 = vpop.f32.mrf.mxu0
  %v5092 = vadd.f32 %v4763, %v5091
  %5093 = vmatmul.bf16.gmra.mxu0 %v3095
  %v5094 = vpop.f32.mrf.mxu0
  %v5095 = vadd.f32 %v4766, %v5094
  %v5096 = vpop.f32.mrf.mxu0
  %v5097 = vadd.f32 %v4768, %v5096
  %5098 = vmatmul.bf16.gmra.mxu0 %v3103
  %v5099 = vpop.f32.mrf.mxu0
  %v5100 = vadd.f32 %v4771, %v5099
  %v5101 = vpop.f32.mrf.mxu0
  %v5102 = vadd.f32 %v4773, %v5101
  %5103 = vmatmul.bf16.gmra.mxu0 %v3111
  %v5104 = vpop.f32.mrf.mxu0
  %v5105 = vadd.f32 %v4776, %v5104
  %v5106 = vpop.f32.mrf.mxu0
  %v5107 = vadd.f32 %v4778, %v5106
  %5108 = vmatmul.bf16.gmra.mxu0 %v3119
  %v5109 = vpop.f32.mrf.mxu0
  %v5110 = vadd.f32 %v4781, %v5109
  %v5111 = vpop.f32.mrf.mxu0
  %v5112 = vadd.f32 %v4783, %v5111
  %5113 = vmatmul.bf16.gmra.mxu0 %v3127
  %v5114 = vpop.f32.mrf.mxu0
  %v5115 = vadd.f32 %v4786, %v5114
  %v5116 = vpop.f32.mrf.mxu0
  %v5117 = vadd.f32 %v4788, %v5116
  %5118 = vmatmul.bf16.gmra.mxu0 %v3135
  %v5119 = vpop.f32.mrf.mxu0
  %v5120 = vadd.f32 %v4791, %v5119
  %v5121 = vpop.f32.mrf.mxu0
  %v5122 = vadd.f32 %v4793, %v5121
  %5123 = vmatmul.bf16.gmra.mxu0 %v3143
  %v5124 = vpop.f32.mrf.mxu0
  %v5125 = vadd.f32 %v4796, %v5124
  %v5126 = vpop.f32.mrf.mxu0
  %v5127 = vadd.f32 %v4798, %v5126
  %5128 = vmatmul.bf16.gmra.mxu0 %v3151
  %v5129 = vpop.f32.mrf.mxu0
  %v5130 = vadd.f32 %v4801, %v5129
  %v5131 = vpop.f32.mrf.mxu0
  %v5132 = vadd.f32 %v4803, %v5131
  %5133 = vmatmul.bf16.gmra.mxu0 %v3159
  %v5134 = vpop.f32.mrf.mxu0
  %v5135 = vadd.f32 %v4806, %v5134
  %v5136 = vpop.f32.mrf.mxu0
  %v5137 = vadd.f32 %v4808, %v5136
  %5138 = vmatmul.bf16.gmra.mxu0 %v3167
  %v5139 = vpop.f32.mrf.mxu0
  %v5140 = vadd.f32 %v4811, %v5139
  %v5141 = vpop.f32.mrf.mxu0
  %v5142 = vadd.f32 %v4813, %v5141
  %5143 = vmatmul.bf16.gmra.mxu0 %v3175
  %v5144 = vpop.f32.mrf.mxu0
  %v5145 = vadd.f32 %v4816, %v5144
  %v5146 = vpop.f32.mrf.mxu0
  %v5147 = vadd.f32 %v4818, %v5146
  %5148 = vmatmul.bf16.gmra.mxu0 %v3183
  %v5149 = vpop.f32.mrf.mxu0
  %v5150 = vadd.f32 %v4821, %v5149
  %v5151 = vpop.f32.mrf.mxu0
  %v5152 = vadd.f32 %v4823, %v5151
  %5153 = vmatmul.bf16.gmra.mxu0 %v3191
  %v5154 = vpop.f32.mrf.mxu0
  %v5155 = vadd.f32 %v4826, %v5154
  %v5156 = vpop.f32.mrf.mxu0
  %v5157 = vadd.f32 %v4828, %v5156
  %5158 = vmatmul.bf16.gmra.mxu0 %v3199
  %v5159 = vpop.f32.mrf.mxu0
  %v5160 = vadd.f32 %v4831, %v5159
  %v5161 = vpop.f32.mrf.mxu0
  %v5162 = vadd.f32 %v4833, %v5161
  %5163 = vmatmul.bf16.gmra.mxu0 %v3207
  %v5164 = vpop.f32.mrf.mxu0
  %v5165 = vadd.f32 %v4836, %v5164
  %v5166 = vpop.f32.mrf.mxu0
  %v5167 = vadd.f32 %v4838, %v5166
  %5168 = vmatmul.bf16.gmra.mxu0 %v3215
  %v5169 = vpop.f32.mrf.mxu0
  %v5170 = vadd.f32 %v4841, %v5169
  %v5171 = vpop.f32.mrf.mxu0
  %v5172 = vadd.f32 %v4843, %v5171
  %5173 = vmatmul.bf16.gmra.mxu0 %v3223
  %v5174 = vpop.f32.mrf.mxu0
  %v5175 = vadd.f32 %v4846, %v5174
  %v5176 = vpop.f32.mrf.mxu0
  %v5177 = vadd.f32 %v4848, %v5176
  %5178 = vmatmul.bf16.gmra.mxu0 %v3231
  %v5179 = vpop.f32.mrf.mxu0
  %v5180 = vadd.f32 %v4851, %v5179
  %v5181 = vpop.f32.mrf.mxu0
  %v5182 = vadd.f32 %v4853, %v5181
  %5183 = vmatmul.bf16.gmra.mxu0 %v3239
  %v5184 = vpop.f32.mrf.mxu0
  %v5185 = vadd.f32 %v4856, %v5184
  %v5186 = vpop.f32.mrf.mxu0
  %v5187 = vadd.f32 %v4858, %v5186
  %5188 = vmatmul.bf16.gmra.mxu0 %v3247
  %v5189 = vpop.f32.mrf.mxu0
  %v5190 = vadd.f32 %v4861, %v5189
  %v5191 = vpop.f32.mrf.mxu0
  %v5192 = vadd.f32 %v4863, %v5191
  %5193 = vmatmul.bf16.gmra.mxu0 %v3255
  %v5194 = vpop.f32.mrf.mxu0
  %v5195 = vadd.f32 %v4866, %v5194
  %v5196 = vpop.f32.mrf.mxu0
  %v5197 = vadd.f32 %v4868, %v5196
  %5198 = vmatmul.bf16.gmra.mxu0 %v3263
  %v5199 = vpop.f32.mrf.mxu0
  %v5200 = vadd.f32 %v4871, %v5199
  %v5201 = vpop.f32.mrf.mxu0
  %v5202 = vadd.f32 %v4873, %v5201
  %5203 = vmatmul.bf16.gmra.mxu0 %v3271
  %v5204 = vpop.f32.mrf.mxu0
  %v5205 = vadd.f32 %v4876, %v5204
  %v5206 = vpop.f32.mrf.mxu0
  %v5207 = vadd.f32 %v4878, %v5206
  %5208 = vmatmul.bf16.gmra.mxu0 %v3279
  %v5209 = vpop.f32.mrf.mxu0
  %v5210 = vadd.f32 %v4881, %v5209
  %v5211 = vpop.f32.mrf.mxu0
  %v5212 = vadd.f32 %v4883, %v5211
  %5213 = vmatmul.bf16.gmra.mxu0 %v3287
  %v5214 = vpop.f32.mrf.mxu0
  %v5215 = vadd.f32 %v4886, %v5214
  %v5216 = vpop.f32.mrf.mxu0
  %v5217 = vadd.f32 %v4888, %v5216
  %5218 = vmatmul.bf16.gmra.mxu0 %v3295
  %v5219 = vpop.f32.mrf.mxu0
  %v5220 = vadd.f32 %v4891, %v5219
  %v5221 = vpop.f32.mrf.mxu0
  %v5222 = vadd.f32 %v4893, %v5221
  %5223 = vmatmul.bf16.gmra.mxu0 %v3303
  %v5224 = vpop.f32.mrf.mxu0
  %v5225 = vadd.f32 %v4896, %v5224
  %v5226 = vpop.f32.mrf.mxu0
  %v5227 = vadd.f32 %v4898, %v5226
  %5228 = vmatmul.bf16.gmra.mxu0 %v3311
  %v5229 = vpop.f32.mrf.mxu0
  %v5230 = vadd.f32 %v4901, %v5229
  %v5231 = vpop.f32.mrf.mxu0
  %v5232 = vadd.f32 %v4903, %v5231
  %5233 = vmatmul.bf16.gmra.mxu0 %v3319
  %v5234 = vpop.f32.mrf.mxu0
  %v5235 = vadd.f32 %v4906, %v5234
  %v5236 = vpop.f32.mrf.mxu0
  %v5237 = vadd.f32 %v4908, %v5236
  %5238 = vmatmul.bf16.gmra.mxu0 %v3327
  %v5239 = vpop.f32.mrf.mxu0
  %v5240 = vadd.f32 %v4911, %v5239
  %v5241 = vpop.f32.mrf.mxu0
  %v5242 = vadd.f32 %v4913, %v5241
  %5243 = vmatmul.bf16.gmra.mxu0 %v3335
  %v5244 = vpop.f32.mrf.mxu0
  %v5245 = vadd.f32 %v4916, %v5244
  %v5246 = vpop.f32.mrf.mxu0
  %v5247 = vadd.f32 %v4918, %v5246
  %5248 = vmatmul.bf16.gmra.mxu0 %v3343
  %v5249 = vpop.f32.mrf.mxu0
  %v5250 = vadd.f32 %v4921, %v5249
  %v5251 = vpop.f32.mrf.mxu0
  %v5252 = vadd.f32 %v4923, %v5251
  %5253 = vmatmul.bf16.gmra.mxu0 %v3351
  %v5254 = vpop.f32.mrf.mxu0
  %v5255 = vadd.f32 %v4926, %v5254
  %v5256 = vpop.f32.mrf.mxu0
  %v5257 = vadd.f32 %v4928, %v5256
  %5258 = vmatmul.bf16.gmra.mxu0 %v3359
  %v5259 = vpop.f32.mrf.mxu0
  %v5260 = vadd.f32 %v4931, %v5259
  %v5261 = vpop.f32.mrf.mxu0
  %v5262 = vadd.f32 %v4933, %v5261
  %5263 = vmatmul.bf16.gmra.mxu0 %v3367
  %v5264 = vpop.f32.mrf.mxu0
  %v5265 = vadd.f32 %v4936, %v5264
  %v5266 = vpop.f32.mrf.mxu0
  %v5267 = vadd.f32 %v4938, %v5266
  %5268 = vmatmul.bf16.gmra.mxu0 %v3375
  %v5269 = vpop.f32.mrf.mxu0
  %v5270 = vadd.f32 %v4941, %v5269
  %v5271 = vpop.f32.mrf.mxu0
  %v5272 = vadd.f32 %v4943, %v5271
  %5273 = vmatmul.bf16.gmra.mxu0 %v3383
  %v5274 = vpop.f32.mrf.mxu0
  %v5275 = vadd.f32 %v4946, %v5274
  %v5276 = vpop.f32.mrf.mxu0
  %v5277 = vadd.f32 %v4948, %v5276
  %5278 = vmatmul.bf16.gmra.mxu0 %v3391
  %v5279 = vpop.f32.mrf.mxu0
  %v5280 = vadd.f32 %v4951, %v5279
  %v5281 = vpop.f32.mrf.mxu0
  %v5282 = vadd.f32 %v4953, %v5281
  %5283 = vmatmul.bf16.gmra.mxu0 %v3399
  %v5284 = vpop.f32.mrf.mxu0
  %v5285 = vadd.f32 %v4956, %v5284
  %v5286 = vpop.f32.mrf.mxu0
  %v5287 = vadd.f32 %v4958, %v5286
  %5288 = vmatmul.bf16.gmra.mxu0 %v3407
  %v5289 = vpop.f32.mrf.mxu0
  %v5290 = vadd.f32 %v4961, %v5289
  %v5291 = vpop.f32.mrf.mxu0
  %v5292 = vadd.f32 %v4963, %v5291
  %5293 = vmatmul.bf16.gmra.mxu0 %v3415
  %v5294 = vpop.f32.mrf.mxu0
  %v5295 = vadd.f32 %v4966, %v5294
  %v5296 = vpop.f32.mrf.mxu0
  %v5297 = vadd.f32 %v4968, %v5296
  %5298 = vmatmul.bf16.gmra.mxu0 %v3423
  %v5299 = vpop.f32.mrf.mxu0
  %v5300 = vadd.f32 %v4971, %v5299
  %v5301 = vpop.f32.mrf.mxu0
  %v5302 = vadd.f32 %v4973, %v5301
  %5303 = vmatmul.bf16.gmra.mxu0 %v3431
  %v5304 = vpop.f32.mrf.mxu0
  %v5305 = vadd.f32 %v4976, %v5304
  %v5306 = vpop.f32.mrf.mxu0
  %v5307 = vadd.f32 %v4978, %v5306
  %5308 = vmatmul.bf16.gmra.mxu0 %v3439
  %v5309 = vpop.f32.mrf.mxu0
  %v5310 = vadd.f32 %v4981, %v5309
  %v5311 = vpop.f32.mrf.mxu0
  %v5312 = vadd.f32 %v4983, %v5311
  %5313 = vmatmul.bf16.gmra.mxu0 %v3447
  %v5314 = vpop.f32.mrf.mxu0
  %v5315 = vadd.f32 %v4986, %v5314
  %v5316 = vpop.f32.mrf.mxu0
  %v5317 = vadd.f32 %v4988, %v5316
  %5318 = vmatmul.bf16.gmra.mxu0 %v3455
  %v5319 = vpop.f32.mrf.mxu0
  %v5320 = vadd.f32 %v4991, %v5319
  %v5321 = vpop.f32.mrf.mxu0
  %v5322 = vadd.f32 %v4993, %v5321
  %5323 = vmatmul.bf16.gmra.mxu0 %v3463
  %v5324 = vpop.f32.mrf.mxu0
  %v5325 = vadd.f32 %v4996, %v5324
  %v5326 = vpop.f32.mrf.mxu0
  %v5327 = vadd.f32 %v4998, %v5326
  %5328 = vmatmul.bf16.gmra.mxu0 %v3471
  %v5329 = vpop.f32.mrf.mxu0
  %v5330 = vadd.f32 %v5001, %v5329
  %v5331 = vpop.f32.mrf.mxu0
  %v5332 = vadd.f32 %v5003, %v5331
  %5333 = vmatmul.bf16.gmra.mxu0 %v3479
  %v5334 = vpop.f32.mrf.mxu0
  %v5335 = vadd.f32 %v5006, %v5334
  %v5336 = vpop.f32.mrf.mxu0
  %v5337 = vadd.f32 %v5008, %v5336
  %5338 = vmatmul.bf16.gmra.mxu0 %v3487
  %v5339 = vpop.f32.mrf.mxu0
  %v5340 = vadd.f32 %v5011, %v5339
  %v5341 = vpop.f32.mrf.mxu0
  %v5342 = vadd.f32 %v5013, %v5341
  %5343 = vmatmul.bf16.gmra.mxu0 %v3495
  %v5344 = vpop.f32.mrf.mxu0
  %v5345 = vadd.f32 %v5016, %v5344
  %v5346 = vpop.f32.mrf.mxu0
  %v5347 = vadd.f32 %v5018, %v5346
  %5348 = vmatmul.bf16.gmra.mxu0 %v3503
  %v5349 = vpop.f32.mrf.mxu0
  %v5350 = vadd.f32 %v5021, %v5349
  %v5351 = vpop.f32.mrf.mxu0
  %v5352 = vadd.f32 %v5023, %v5351
  %5353 = vmatmul.bf16.gmra.mxu0 %v3511
  %v5354 = vpop.f32.mrf.mxu0
  %v5355 = vadd.f32 %v5026, %v5354
  %v5356 = vpop.f32.mrf.mxu0
  %v5357 = vadd.f32 %v5028, %v5356
  %5358 = vmatmul.bf16.gmra.mxu0 %v3519
  %v5359 = vpop.f32.mrf.mxu0
  %v5360 = vadd.f32 %v5031, %v5359
  %v5361 = vpop.f32.mrf.mxu0
  %v5362 = vadd.f32 %v5033, %v5361
  %5363 = vmatmul.bf16.gmra.mxu0 %v3527
  %v5364 = vpop.f32.mrf.mxu0
  %v5365 = vadd.f32 %v5036, %v5364
  %v5366 = vpop.f32.mrf.mxu0
  %v5367 = vadd.f32 %v5038, %v5366
  %5368 = vmatmul.bf16.gmra.mxu0 %v3535
  %v5369 = vpop.f32.mrf.mxu0
  %v5370 = vadd.f32 %v5041, %v5369
  %v5371 = vpop.f32.mrf.mxu0
  %v5372 = vadd.f32 %v5043, %v5371
  %5373 = vmatmul.bf16.gmra.mxu0 %v3543
  %v5374 = vpop.f32.mrf.mxu0
  %v5375 = vadd.f32 %v5046, %v5374
  %v5376 = vpop.f32.mrf.mxu0
  %v5377 = vadd.f32 %v5048, %v5376
  %5378 = vmatmul.bf16.gmra.mxu0 %v3551
  %v5379 = vpop.f32.mrf.mxu0
  %v5380 = vadd.f32 %v5051, %v5379
  %v5381 = vpop.f32.mrf.mxu0
  %v5382 = vadd.f32 %v5053, %v5381
  %5383 = vdwg.mxu0
  %5384 = vmatpush.bf16.msra.mxu0 %v967
  %5385 = vmatpush.bf16.msra.mxu0 %v966
  %5386 = vmatpush.bf16.msra.mxu0 %v965
  %5387 = vmatpush.bf16.msra.mxu0 %v964
  %5388 = vmatpush.bf16.msra.mxu0 %v963
  %5389 = vmatpush.bf16.msra.mxu0 %v962
  %5390 = vmatpush.bf16.msra.mxu0 %v961
  %5391 = vmatpush.bf16.msra.mxu0 %v960
  %5392 = vmatmul.bf16.gmra.mxu0 %v3048
  %v5393 = vpop.f32.mrf.mxu0
  %v5394 = vadd.f32 %v5065, %v5393
  %v5395 = vpop.f32.mrf.mxu0
  %v5396 = vadd.f32 %v5067, %v5395
  %5397 = vmatmul.bf16.gmra.mxu0 %v3056
  %v5398 = vpop.f32.mrf.mxu0
  %v5399 = vadd.f32 %v5070, %v5398
  %v5400 = vpop.f32.mrf.mxu0
  %v5401 = vadd.f32 %v5072, %v5400
  %5402 = vmatmul.bf16.gmra.mxu0 %v3064
  %v5403 = vpop.f32.mrf.mxu0
  %v5404 = vadd.f32 %v5075, %v5403
  %v5405 = vpop.f32.mrf.mxu0
  %v5406 = vadd.f32 %v5077, %v5405
  %5407 = vmatmul.bf16.gmra.mxu0 %v3072
  %v5408 = vpop.f32.mrf.mxu0
  %v5409 = vadd.f32 %v5080, %v5408
  %v5410 = vpop.f32.mrf.mxu0
  %v5411 = vadd.f32 %v5082, %v5410
  %5412 = vmatmul.bf16.gmra.mxu0 %v3080
  %v5413 = vpop.f32.mrf.mxu0
  %v5414 = vadd.f32 %v5085, %v5413
  %v5415 = vpop.f32.mrf.mxu0
  %v5416 = vadd.f32 %v5087, %v5415
  %5417 = vmatmul.bf16.gmra.mxu0 %v3088
  %v5418 = vpop.f32.mrf.mxu0
  %v5419 = vadd.f32 %v5090, %v5418
  %v5420 = vpop.f32.mrf.mxu0
  %v5421 = vadd.f32 %v5092, %v5420
  %5422 = vmatmul.bf16.gmra.mxu0 %v3096
  %v5423 = vpop.f32.mrf.mxu0
  %v5424 = vadd.f32 %v5095, %v5423
  %v5425 = vpop.f32.mrf.mxu0
  %v5426 = vadd.f32 %v5097, %v5425
  %5427 = vmatmul.bf16.gmra.mxu0 %v3104
  %v5428 = vpop.f32.mrf.mxu0
  %v5429 = vadd.f32 %v5100, %v5428
  %v5430 = vpop.f32.mrf.mxu0
  %v5431 = vadd.f32 %v5102, %v5430
  %5432 = vmatmul.bf16.gmra.mxu0 %v3112
  %v5433 = vpop.f32.mrf.mxu0
  %v5434 = vadd.f32 %v5105, %v5433
  %v5435 = vpop.f32.mrf.mxu0
  %v5436 = vadd.f32 %v5107, %v5435
  %5437 = vmatmul.bf16.gmra.mxu0 %v3120
  %v5438 = vpop.f32.mrf.mxu0
  %v5439 = vadd.f32 %v5110, %v5438
  %v5440 = vpop.f32.mrf.mxu0
  %v5441 = vadd.f32 %v5112, %v5440
  %5442 = vmatmul.bf16.gmra.mxu0 %v3128
  %v5443 = vpop.f32.mrf.mxu0
  %v5444 = vadd.f32 %v5115, %v5443
  %v5445 = vpop.f32.mrf.mxu0
  %v5446 = vadd.f32 %v5117, %v5445
  %5447 = vmatmul.bf16.gmra.mxu0 %v3136
  %v5448 = vpop.f32.mrf.mxu0
  %v5449 = vadd.f32 %v5120, %v5448
  %v5450 = vpop.f32.mrf.mxu0
  %v5451 = vadd.f32 %v5122, %v5450
  %5452 = vmatmul.bf16.gmra.mxu0 %v3144
  %v5453 = vpop.f32.mrf.mxu0
  %v5454 = vadd.f32 %v5125, %v5453
  %v5455 = vpop.f32.mrf.mxu0
  %v5456 = vadd.f32 %v5127, %v5455
  %5457 = vmatmul.bf16.gmra.mxu0 %v3152
  %v5458 = vpop.f32.mrf.mxu0
  %v5459 = vadd.f32 %v5130, %v5458
  %v5460 = vpop.f32.mrf.mxu0
  %v5461 = vadd.f32 %v5132, %v5460
  %5462 = vmatmul.bf16.gmra.mxu0 %v3160
  %v5463 = vpop.f32.mrf.mxu0
  %v5464 = vadd.f32 %v5135, %v5463
  %v5465 = vpop.f32.mrf.mxu0
  %v5466 = vadd.f32 %v5137, %v5465
  %5467 = vmatmul.bf16.gmra.mxu0 %v3168
  %v5468 = vpop.f32.mrf.mxu0
  %v5469 = vadd.f32 %v5140, %v5468
  %v5470 = vpop.f32.mrf.mxu0
  %v5471 = vadd.f32 %v5142, %v5470
  %5472 = vmatmul.bf16.gmra.mxu0 %v3176
  %v5473 = vpop.f32.mrf.mxu0
  %v5474 = vadd.f32 %v5145, %v5473
  %v5475 = vpop.f32.mrf.mxu0
  %v5476 = vadd.f32 %v5147, %v5475
  %5477 = vmatmul.bf16.gmra.mxu0 %v3184
  %v5478 = vpop.f32.mrf.mxu0
  %v5479 = vadd.f32 %v5150, %v5478
  %v5480 = vpop.f32.mrf.mxu0
  %v5481 = vadd.f32 %v5152, %v5480
  %5482 = vmatmul.bf16.gmra.mxu0 %v3192
  %v5483 = vpop.f32.mrf.mxu0
  %v5484 = vadd.f32 %v5155, %v5483
  %v5485 = vpop.f32.mrf.mxu0
  %v5486 = vadd.f32 %v5157, %v5485
  %5487 = vmatmul.bf16.gmra.mxu0 %v3200
  %v5488 = vpop.f32.mrf.mxu0
  %v5489 = vadd.f32 %v5160, %v5488
  %v5490 = vpop.f32.mrf.mxu0
  %v5491 = vadd.f32 %v5162, %v5490
  %5492 = vmatmul.bf16.gmra.mxu0 %v3208
  %v5493 = vpop.f32.mrf.mxu0
  %v5494 = vadd.f32 %v5165, %v5493
  %v5495 = vpop.f32.mrf.mxu0
  %v5496 = vadd.f32 %v5167, %v5495
  %5497 = vmatmul.bf16.gmra.mxu0 %v3216
  %v5498 = vpop.f32.mrf.mxu0
  %v5499 = vadd.f32 %v5170, %v5498
  %v5500 = vpop.f32.mrf.mxu0
  %v5501 = vadd.f32 %v5172, %v5500
  %5502 = vmatmul.bf16.gmra.mxu0 %v3224
  %v5503 = vpop.f32.mrf.mxu0
  %v5504 = vadd.f32 %v5175, %v5503
  %v5505 = vpop.f32.mrf.mxu0
  %v5506 = vadd.f32 %v5177, %v5505
  %5507 = vmatmul.bf16.gmra.mxu0 %v3232
  %v5508 = vpop.f32.mrf.mxu0
  %v5509 = vadd.f32 %v5180, %v5508
  %v5510 = vpop.f32.mrf.mxu0
  %v5511 = vadd.f32 %v5182, %v5510
  %5512 = vmatmul.bf16.gmra.mxu0 %v3240
  %v5513 = vpop.f32.mrf.mxu0
  %v5514 = vadd.f32 %v5185, %v5513
  %v5515 = vpop.f32.mrf.mxu0
  %v5516 = vadd.f32 %v5187, %v5515
  %5517 = vmatmul.bf16.gmra.mxu0 %v3248
  %v5518 = vpop.f32.mrf.mxu0
  %v5519 = vadd.f32 %v5190, %v5518
  %v5520 = vpop.f32.mrf.mxu0
  %v5521 = vadd.f32 %v5192, %v5520
  %5522 = vmatmul.bf16.gmra.mxu0 %v3256
  %v5523 = vpop.f32.mrf.mxu0
  %v5524 = vadd.f32 %v5195, %v5523
  %v5525 = vpop.f32.mrf.mxu0
  %v5526 = vadd.f32 %v5197, %v5525
  %5527 = vmatmul.bf16.gmra.mxu0 %v3264
  %v5528 = vpop.f32.mrf.mxu0
  %v5529 = vadd.f32 %v5200, %v5528
  %v5530 = vpop.f32.mrf.mxu0
  %v5531 = vadd.f32 %v5202, %v5530
  %5532 = vmatmul.bf16.gmra.mxu0 %v3272
  %v5533 = vpop.f32.mrf.mxu0
  %v5534 = vadd.f32 %v5205, %v5533
  %v5535 = vpop.f32.mrf.mxu0
  %v5536 = vadd.f32 %v5207, %v5535
  %5537 = vmatmul.bf16.gmra.mxu0 %v3280
  %v5538 = vpop.f32.mrf.mxu0
  %v5539 = vadd.f32 %v5210, %v5538
  %v5540 = vpop.f32.mrf.mxu0
  %v5541 = vadd.f32 %v5212, %v5540
  %5542 = vmatmul.bf16.gmra.mxu0 %v3288
  %v5543 = vpop.f32.mrf.mxu0
  %v5544 = vadd.f32 %v5215, %v5543
  %v5545 = vpop.f32.mrf.mxu0
  %v5546 = vadd.f32 %v5217, %v5545
  %5547 = vmatmul.bf16.gmra.mxu0 %v3296
  %v5548 = vpop.f32.mrf.mxu0
  %v5549 = vadd.f32 %v5220, %v5548
  %v5550 = vpop.f32.mrf.mxu0
  %v5551 = vadd.f32 %v5222, %v5550
  %5552 = vmatmul.bf16.gmra.mxu0 %v3304
  %v5553 = vpop.f32.mrf.mxu0
  %v5554 = vadd.f32 %v5225, %v5553
  %v5555 = vpop.f32.mrf.mxu0
  %v5556 = vadd.f32 %v5227, %v5555
  %5557 = vmatmul.bf16.gmra.mxu0 %v3312
  %v5558 = vpop.f32.mrf.mxu0
  %v5559 = vadd.f32 %v5230, %v5558
  %v5560 = vpop.f32.mrf.mxu0
  %v5561 = vadd.f32 %v5232, %v5560
  %5562 = vmatmul.bf16.gmra.mxu0 %v3320
  %v5563 = vpop.f32.mrf.mxu0
  %v5564 = vadd.f32 %v5235, %v5563
  %v5565 = vpop.f32.mrf.mxu0
  %v5566 = vadd.f32 %v5237, %v5565
  %5567 = vmatmul.bf16.gmra.mxu0 %v3328
  %v5568 = vpop.f32.mrf.mxu0
  %v5569 = vadd.f32 %v5240, %v5568
  %v5570 = vpop.f32.mrf.mxu0
  %v5571 = vadd.f32 %v5242, %v5570
  %5572 = vmatmul.bf16.gmra.mxu0 %v3336
  %v5573 = vpop.f32.mrf.mxu0
  %v5574 = vadd.f32 %v5245, %v5573
  %v5575 = vpop.f32.mrf.mxu0
  %v5576 = vadd.f32 %v5247, %v5575
  %5577 = vmatmul.bf16.gmra.mxu0 %v3344
  %v5578 = vpop.f32.mrf.mxu0
  %v5579 = vadd.f32 %v5250, %v5578
  %v5580 = vpop.f32.mrf.mxu0
  %v5581 = vadd.f32 %v5252, %v5580
  %5582 = vmatmul.bf16.gmra.mxu0 %v3352
  %v5583 = vpop.f32.mrf.mxu0
  %v5584 = vadd.f32 %v5255, %v5583
  %v5585 = vpop.f32.mrf.mxu0
  %v5586 = vadd.f32 %v5257, %v5585
  %5587 = vmatmul.bf16.gmra.mxu0 %v3360
  %v5588 = vpop.f32.mrf.mxu0
  %v5589 = vadd.f32 %v5260, %v5588
  %v5590 = vpop.f32.mrf.mxu0
  %v5591 = vadd.f32 %v5262, %v5590
  %5592 = vmatmul.bf16.gmra.mxu0 %v3368
  %v5593 = vpop.f32.mrf.mxu0
  %v5594 = vadd.f32 %v5265, %v5593
  %v5595 = vpop.f32.mrf.mxu0
  %v5596 = vadd.f32 %v5267, %v5595
  %5597 = vmatmul.bf16.gmra.mxu0 %v3376
  %v5598 = vpop.f32.mrf.mxu0
  %v5599 = vadd.f32 %v5270, %v5598
  %v5600 = vpop.f32.mrf.mxu0
  %v5601 = vadd.f32 %v5272, %v5600
  %5602 = vmatmul.bf16.gmra.mxu0 %v3384
  %v5603 = vpop.f32.mrf.mxu0
  %v5604 = vadd.f32 %v5275, %v5603
  %v5605 = vpop.f32.mrf.mxu0
  %v5606 = vadd.f32 %v5277, %v5605
  %5607 = vmatmul.bf16.gmra.mxu0 %v3392
  %v5608 = vpop.f32.mrf.mxu0
  %v5609 = vadd.f32 %v5280, %v5608
  %v5610 = vpop.f32.mrf.mxu0
  %v5611 = vadd.f32 %v5282, %v5610
  %5612 = vmatmul.bf16.gmra.mxu0 %v3400
  %v5613 = vpop.f32.mrf.mxu0
  %v5614 = vadd.f32 %v5285, %v5613
  %v5615 = vpop.f32.mrf.mxu0
  %v5616 = vadd.f32 %v5287, %v5615
  %5617 = vmatmul.bf16.gmra.mxu0 %v3408
  %v5618 = vpop.f32.mrf.mxu0
  %v5619 = vadd.f32 %v5290, %v5618
  %v5620 = vpop.f32.mrf.mxu0
  %v5621 = vadd.f32 %v5292, %v5620
  %5622 = vmatmul.bf16.gmra.mxu0 %v3416
  %v5623 = vpop.f32.mrf.mxu0
  %v5624 = vadd.f32 %v5295, %v5623
  %v5625 = vpop.f32.mrf.mxu0
  %v5626 = vadd.f32 %v5297, %v5625
  %5627 = vmatmul.bf16.gmra.mxu0 %v3424
  %v5628 = vpop.f32.mrf.mxu0
  %v5629 = vadd.f32 %v5300, %v5628
  %v5630 = vpop.f32.mrf.mxu0
  %v5631 = vadd.f32 %v5302, %v5630
  %5632 = vmatmul.bf16.gmra.mxu0 %v3432
  %v5633 = vpop.f32.mrf.mxu0
  %v5634 = vadd.f32 %v5305, %v5633
  %v5635 = vpop.f32.mrf.mxu0
  %v5636 = vadd.f32 %v5307, %v5635
  %5637 = vmatmul.bf16.gmra.mxu0 %v3440
  %v5638 = vpop.f32.mrf.mxu0
  %v5639 = vadd.f32 %v5310, %v5638
  %v5640 = vpop.f32.mrf.mxu0
  %v5641 = vadd.f32 %v5312, %v5640
  %5642 = vmatmul.bf16.gmra.mxu0 %v3448
  %v5643 = vpop.f32.mrf.mxu0
  %v5644 = vadd.f32 %v5315, %v5643
  %v5645 = vpop.f32.mrf.mxu0
  %v5646 = vadd.f32 %v5317, %v5645
  %5647 = vmatmul.bf16.gmra.mxu0 %v3456
  %v5648 = vpop.f32.mrf.mxu0
  %v5649 = vadd.f32 %v5320, %v5648
  %v5650 = vpop.f32.mrf.mxu0
  %v5651 = vadd.f32 %v5322, %v5650
  %5652 = vmatmul.bf16.gmra.mxu0 %v3464
  %v5653 = vpop.f32.mrf.mxu0
  %v5654 = vadd.f32 %v5325, %v5653
  %v5655 = vpop.f32.mrf.mxu0
  %v5656 = vadd.f32 %v5327, %v5655
  %5657 = vmatmul.bf16.gmra.mxu0 %v3472
  %v5658 = vpop.f32.mrf.mxu0
  %v5659 = vadd.f32 %v5330, %v5658
  %v5660 = vpop.f32.mrf.mxu0
  %v5661 = vadd.f32 %v5332, %v5660
  %5662 = vmatmul.bf16.gmra.mxu0 %v3480
  %v5663 = vpop.f32.mrf.mxu0
  %v5664 = vadd.f32 %v5335, %v5663
  %v5665 = vpop.f32.mrf.mxu0
  %v5666 = vadd.f32 %v5337, %v5665
  %5667 = vmatmul.bf16.gmra.mxu0 %v3488
  %v5668 = vpop.f32.mrf.mxu0
  %v5669 = vadd.f32 %v5340, %v5668
  %v5670 = vpop.f32.mrf.mxu0
  %v5671 = vadd.f32 %v5342, %v5670
  %5672 = vmatmul.bf16.gmra.mxu0 %v3496
  %v5673 = vpop.f32.mrf.mxu0
  %v5674 = vadd.f32 %v5345, %v5673
  %v5675 = vpop.f32.mrf.mxu0
  %v5676 = vadd.f32 %v5347, %v5675
  %5677 = vmatmul.bf16.gmra.mxu0 %v3504
  %v5678 = vpop.f32.mrf.mxu0
  %v5679 = vadd.f32 %v5350, %v5678
  %v5680 = vpop.f32.mrf.mxu0
  %v5681 = vadd.f32 %v5352, %v5680
  %5682 = vmatmul.bf16.gmra.mxu0 %v3512
  %v5683 = vpop.f32.mrf.mxu0
  %v5684 = vadd.f32 %v5355, %v5683
  %v5685 = vpop.f32.mrf.mxu0
  %v5686 = vadd.f32 %v5357, %v5685
  %5687 = vmatmul.bf16.gmra.mxu0 %v3520
  %v5688 = vpop.f32.mrf.mxu0
  %v5689 = vadd.f32 %v5360, %v5688
  %v5690 = vpop.f32.mrf.mxu0
  %v5691 = vadd.f32 %v5362, %v5690
  %5692 = vmatmul.bf16.gmra.mxu0 %v3528
  %v5693 = vpop.f32.mrf.mxu0
  %v5694 = vadd.f32 %v5365, %v5693
  %v5695 = vpop.f32.mrf.mxu0
  %v5696 = vadd.f32 %v5367, %v5695
  %5697 = vmatmul.bf16.gmra.mxu0 %v3536
  %v5698 = vpop.f32.mrf.mxu0
  %v5699 = vadd.f32 %v5370, %v5698
  %v5700 = vpop.f32.mrf.mxu0
  %v5701 = vadd.f32 %v5372, %v5700
  %5702 = vmatmul.bf16.gmra.mxu0 %v3544
  %v5703 = vpop.f32.mrf.mxu0
  %v5704 = vadd.f32 %v5375, %v5703
  %v5705 = vpop.f32.mrf.mxu0
  %v5706 = vadd.f32 %v5377, %v5705
  %5707 = vmatmul.bf16.gmra.mxu0 %v3552
  %v5708 = vpop.f32.mrf.mxu0
  %v5709 = vadd.f32 %v5380, %v5708
  %v5710 = vpop.f32.mrf.mxu0
  %v5711 = vadd.f32 %v5382, %v5710
  %5712 = vdwg.mxu0
  %5713 = vmatpush.bf16.msra.mxu0 %v975
  %5714 = vmatpush.bf16.msra.mxu0 %v974
  %5715 = vmatpush.bf16.msra.mxu0 %v973
  %5716 = vmatpush.bf16.msra.mxu0 %v972
  %5717 = vmatpush.bf16.msra.mxu0 %v971
  %5718 = vmatpush.bf16.msra.mxu0 %v970
  %5719 = vmatpush.bf16.msra.mxu0 %v969
  %5720 = vmatpush.bf16.msra.mxu0 %v968
  %5721 = vmatmul.bf16.gmra.mxu0 %v3049
  %v5722 = vpop.f32.mrf.mxu0
  %v5723 = vadd.f32 %v5394, %v5722
  %v5724 = vpop.f32.mrf.mxu0
  %v5725 = vadd.f32 %v5396, %v5724
  %5726 = vmatmul.bf16.gmra.mxu0 %v3057
  %v5727 = vpop.f32.mrf.mxu0
  %v5728 = vadd.f32 %v5399, %v5727
  %v5729 = vpop.f32.mrf.mxu0
  %v5730 = vadd.f32 %v5401, %v5729
  %5731 = vmatmul.bf16.gmra.mxu0 %v3065
  %v5732 = vpop.f32.mrf.mxu0
  %v5733 = vadd.f32 %v5404, %v5732
  %v5734 = vpop.f32.mrf.mxu0
  %v5735 = vadd.f32 %v5406, %v5734
  %5736 = vmatmul.bf16.gmra.mxu0 %v3073
  %v5737 = vpop.f32.mrf.mxu0
  %v5738 = vadd.f32 %v5409, %v5737
  %v5739 = vpop.f32.mrf.mxu0
  %v5740 = vadd.f32 %v5411, %v5739
  %5741 = vmatmul.bf16.gmra.mxu0 %v3081
  %v5742 = vpop.f32.mrf.mxu0
  %v5743 = vadd.f32 %v5414, %v5742
  %v5744 = vpop.f32.mrf.mxu0
  %v5745 = vadd.f32 %v5416, %v5744
  %5746 = vmatmul.bf16.gmra.mxu0 %v3089
  %v5747 = vpop.f32.mrf.mxu0
  %v5748 = vadd.f32 %v5419, %v5747
  %v5749 = vpop.f32.mrf.mxu0
  %v5750 = vadd.f32 %v5421, %v5749
  %5751 = vmatmul.bf16.gmra.mxu0 %v3097
  %v5752 = vpop.f32.mrf.mxu0
  %v5753 = vadd.f32 %v5424, %v5752
  %v5754 = vpop.f32.mrf.mxu0
  %v5755 = vadd.f32 %v5426, %v5754
  %5756 = vmatmul.bf16.gmra.mxu0 %v3105
  %v5757 = vpop.f32.mrf.mxu0
  %v5758 = vadd.f32 %v5429, %v5757
  %v5759 = vpop.f32.mrf.mxu0
  %v5760 = vadd.f32 %v5431, %v5759
  %5761 = vmatmul.bf16.gmra.mxu0 %v3113
  %v5762 = vpop.f32.mrf.mxu0
  %v5763 = vadd.f32 %v5434, %v5762
  %v5764 = vpop.f32.mrf.mxu0
  %v5765 = vadd.f32 %v5436, %v5764
  %5766 = vmatmul.bf16.gmra.mxu0 %v3121
  %v5767 = vpop.f32.mrf.mxu0
  %v5768 = vadd.f32 %v5439, %v5767
  %v5769 = vpop.f32.mrf.mxu0
  %v5770 = vadd.f32 %v5441, %v5769
  %5771 = vmatmul.bf16.gmra.mxu0 %v3129
  %v5772 = vpop.f32.mrf.mxu0
  %v5773 = vadd.f32 %v5444, %v5772
  %v5774 = vpop.f32.mrf.mxu0
  %v5775 = vadd.f32 %v5446, %v5774
  %5776 = vmatmul.bf16.gmra.mxu0 %v3137
  %v5777 = vpop.f32.mrf.mxu0
  %v5778 = vadd.f32 %v5449, %v5777
  %v5779 = vpop.f32.mrf.mxu0
  %v5780 = vadd.f32 %v5451, %v5779
  %5781 = vmatmul.bf16.gmra.mxu0 %v3145
  %v5782 = vpop.f32.mrf.mxu0
  %v5783 = vadd.f32 %v5454, %v5782
  %v5784 = vpop.f32.mrf.mxu0
  %v5785 = vadd.f32 %v5456, %v5784
  %5786 = vmatmul.bf16.gmra.mxu0 %v3153
  %v5787 = vpop.f32.mrf.mxu0
  %v5788 = vadd.f32 %v5459, %v5787
  %v5789 = vpop.f32.mrf.mxu0
  %v5790 = vadd.f32 %v5461, %v5789
  %5791 = vmatmul.bf16.gmra.mxu0 %v3161
  %v5792 = vpop.f32.mrf.mxu0
  %v5793 = vadd.f32 %v5464, %v5792
  %v5794 = vpop.f32.mrf.mxu0
  %v5795 = vadd.f32 %v5466, %v5794
  %5796 = vmatmul.bf16.gmra.mxu0 %v3169
  %v5797 = vpop.f32.mrf.mxu0
  %v5798 = vadd.f32 %v5469, %v5797
  %v5799 = vpop.f32.mrf.mxu0
  %v5800 = vadd.f32 %v5471, %v5799
  %5801 = vmatmul.bf16.gmra.mxu0 %v3177
  %v5802 = vpop.f32.mrf.mxu0
  %v5803 = vadd.f32 %v5474, %v5802
  %v5804 = vpop.f32.mrf.mxu0
  %v5805 = vadd.f32 %v5476, %v5804
  %5806 = vmatmul.bf16.gmra.mxu0 %v3185
  %v5807 = vpop.f32.mrf.mxu0
  %v5808 = vadd.f32 %v5479, %v5807
  %v5809 = vpop.f32.mrf.mxu0
  %v5810 = vadd.f32 %v5481, %v5809
  %5811 = vmatmul.bf16.gmra.mxu0 %v3193
  %v5812 = vpop.f32.mrf.mxu0
  %v5813 = vadd.f32 %v5484, %v5812
  %v5814 = vpop.f32.mrf.mxu0
  %v5815 = vadd.f32 %v5486, %v5814
  %5816 = vmatmul.bf16.gmra.mxu0 %v3201
  %v5817 = vpop.f32.mrf.mxu0
  %v5818 = vadd.f32 %v5489, %v5817
  %v5819 = vpop.f32.mrf.mxu0
  %v5820 = vadd.f32 %v5491, %v5819
  %5821 = vmatmul.bf16.gmra.mxu0 %v3209
  %v5822 = vpop.f32.mrf.mxu0
  %v5823 = vadd.f32 %v5494, %v5822
  %v5824 = vpop.f32.mrf.mxu0
  %v5825 = vadd.f32 %v5496, %v5824
  %5826 = vmatmul.bf16.gmra.mxu0 %v3217
  %v5827 = vpop.f32.mrf.mxu0
  %v5828 = vadd.f32 %v5499, %v5827
  %v5829 = vpop.f32.mrf.mxu0
  %v5830 = vadd.f32 %v5501, %v5829
  %5831 = vmatmul.bf16.gmra.mxu0 %v3225
  %v5832 = vpop.f32.mrf.mxu0
  %v5833 = vadd.f32 %v5504, %v5832
  %v5834 = vpop.f32.mrf.mxu0
  %v5835 = vadd.f32 %v5506, %v5834
  %5836 = vmatmul.bf16.gmra.mxu0 %v3233
  %v5837 = vpop.f32.mrf.mxu0
  %v5838 = vadd.f32 %v5509, %v5837
  %v5839 = vpop.f32.mrf.mxu0
  %v5840 = vadd.f32 %v5511, %v5839
  %5841 = vmatmul.bf16.gmra.mxu0 %v3241
  %v5842 = vpop.f32.mrf.mxu0
  %v5843 = vadd.f32 %v5514, %v5842
  %v5844 = vpop.f32.mrf.mxu0
  %v5845 = vadd.f32 %v5516, %v5844
  %5846 = vmatmul.bf16.gmra.mxu0 %v3249
  %v5847 = vpop.f32.mrf.mxu0
  %v5848 = vadd.f32 %v5519, %v5847
  %v5849 = vpop.f32.mrf.mxu0
  %v5850 = vadd.f32 %v5521, %v5849
  %5851 = vmatmul.bf16.gmra.mxu0 %v3257
  %v5852 = vpop.f32.mrf.mxu0
  %v5853 = vadd.f32 %v5524, %v5852
  %v5854 = vpop.f32.mrf.mxu0
  %v5855 = vadd.f32 %v5526, %v5854
  %5856 = vmatmul.bf16.gmra.mxu0 %v3265
  %v5857 = vpop.f32.mrf.mxu0
  %v5858 = vadd.f32 %v5529, %v5857
  %v5859 = vpop.f32.mrf.mxu0
  %v5860 = vadd.f32 %v5531, %v5859
  %5861 = vmatmul.bf16.gmra.mxu0 %v3273
  %v5862 = vpop.f32.mrf.mxu0
  %v5863 = vadd.f32 %v5534, %v5862
  %v5864 = vpop.f32.mrf.mxu0
  %v5865 = vadd.f32 %v5536, %v5864
  %5866 = vmatmul.bf16.gmra.mxu0 %v3281
  %v5867 = vpop.f32.mrf.mxu0
  %v5868 = vadd.f32 %v5539, %v5867
  %v5869 = vpop.f32.mrf.mxu0
  %v5870 = vadd.f32 %v5541, %v5869
  %5871 = vmatmul.bf16.gmra.mxu0 %v3289
  %v5872 = vpop.f32.mrf.mxu0
  %v5873 = vadd.f32 %v5544, %v5872
  %v5874 = vpop.f32.mrf.mxu0
  %v5875 = vadd.f32 %v5546, %v5874
  %5876 = vmatmul.bf16.gmra.mxu0 %v3297
  %v5877 = vpop.f32.mrf.mxu0
  %v5878 = vadd.f32 %v5549, %v5877
  %v5879 = vpop.f32.mrf.mxu0
  %v5880 = vadd.f32 %v5551, %v5879
  %5881 = vmatmul.bf16.gmra.mxu0 %v3305
  %v5882 = vpop.f32.mrf.mxu0
  %v5883 = vadd.f32 %v5554, %v5882
  %v5884 = vpop.f32.mrf.mxu0
  %v5885 = vadd.f32 %v5556, %v5884
  %5886 = vmatmul.bf16.gmra.mxu0 %v3313
  %v5887 = vpop.f32.mrf.mxu0
  %v5888 = vadd.f32 %v5559, %v5887
  %v5889 = vpop.f32.mrf.mxu0
  %v5890 = vadd.f32 %v5561, %v5889
  %5891 = vmatmul.bf16.gmra.mxu0 %v3321
  %v5892 = vpop.f32.mrf.mxu0
  %v5893 = vadd.f32 %v5564, %v5892
  %v5894 = vpop.f32.mrf.mxu0
  %v5895 = vadd.f32 %v5566, %v5894
  %5896 = vmatmul.bf16.gmra.mxu0 %v3329
  %v5897 = vpop.f32.mrf.mxu0
  %v5898 = vadd.f32 %v5569, %v5897
  %v5899 = vpop.f32.mrf.mxu0
  %v5900 = vadd.f32 %v5571, %v5899
  %5901 = vmatmul.bf16.gmra.mxu0 %v3337
  %v5902 = vpop.f32.mrf.mxu0
  %v5903 = vadd.f32 %v5574, %v5902
  %v5904 = vpop.f32.mrf.mxu0
  %v5905 = vadd.f32 %v5576, %v5904
  %5906 = vmatmul.bf16.gmra.mxu0 %v3345
  %v5907 = vpop.f32.mrf.mxu0
  %v5908 = vadd.f32 %v5579, %v5907
  %v5909 = vpop.f32.mrf.mxu0
  %v5910 = vadd.f32 %v5581, %v5909
  %5911 = vmatmul.bf16.gmra.mxu0 %v3353
  %v5912 = vpop.f32.mrf.mxu0
  %v5913 = vadd.f32 %v5584, %v5912
  %v5914 = vpop.f32.mrf.mxu0
  %v5915 = vadd.f32 %v5586, %v5914
  %5916 = vmatmul.bf16.gmra.mxu0 %v3361
  %v5917 = vpop.f32.mrf.mxu0
  %v5918 = vadd.f32 %v5589, %v5917
  %v5919 = vpop.f32.mrf.mxu0
  %v5920 = vadd.f32 %v5591, %v5919
  %5921 = vmatmul.bf16.gmra.mxu0 %v3369
  %v5922 = vpop.f32.mrf.mxu0
  %v5923 = vadd.f32 %v5594, %v5922
  %v5924 = vpop.f32.mrf.mxu0
  %v5925 = vadd.f32 %v5596, %v5924
  %5926 = vmatmul.bf16.gmra.mxu0 %v3377
  %v5927 = vpop.f32.mrf.mxu0
  %v5928 = vadd.f32 %v5599, %v5927
  %v5929 = vpop.f32.mrf.mxu0
  %v5930 = vadd.f32 %v5601, %v5929
  %5931 = vmatmul.bf16.gmra.mxu0 %v3385
  %v5932 = vpop.f32.mrf.mxu0
  %v5933 = vadd.f32 %v5604, %v5932
  %v5934 = vpop.f32.mrf.mxu0
  %v5935 = vadd.f32 %v5606, %v5934
  %5936 = vmatmul.bf16.gmra.mxu0 %v3393
  %v5937 = vpop.f32.mrf.mxu0
  %v5938 = vadd.f32 %v5609, %v5937
  %v5939 = vpop.f32.mrf.mxu0
  %v5940 = vadd.f32 %v5611, %v5939
  %5941 = vmatmul.bf16.gmra.mxu0 %v3401
  %v5942 = vpop.f32.mrf.mxu0
  %v5943 = vadd.f32 %v5614, %v5942
  %v5944 = vpop.f32.mrf.mxu0
  %v5945 = vadd.f32 %v5616, %v5944
  %5946 = vmatmul.bf16.gmra.mxu0 %v3409
  %v5947 = vpop.f32.mrf.mxu0
  %v5948 = vadd.f32 %v5619, %v5947
  %v5949 = vpop.f32.mrf.mxu0
  %v5950 = vadd.f32 %v5621, %v5949
  %5951 = vmatmul.bf16.gmra.mxu0 %v3417
  %v5952 = vpop.f32.mrf.mxu0
  %v5953 = vadd.f32 %v5624, %v5952
  %v5954 = vpop.f32.mrf.mxu0
  %v5955 = vadd.f32 %v5626, %v5954
  %5956 = vmatmul.bf16.gmra.mxu0 %v3425
  %v5957 = vpop.f32.mrf.mxu0
  %v5958 = vadd.f32 %v5629, %v5957
  %v5959 = vpop.f32.mrf.mxu0
  %v5960 = vadd.f32 %v5631, %v5959
  %5961 = vmatmul.bf16.gmra.mxu0 %v3433
  %v5962 = vpop.f32.mrf.mxu0
  %v5963 = vadd.f32 %v5634, %v5962
  %v5964 = vpop.f32.mrf.mxu0
  %v5965 = vadd.f32 %v5636, %v5964
  %5966 = vmatmul.bf16.gmra.mxu0 %v3441
  %v5967 = vpop.f32.mrf.mxu0
  %v5968 = vadd.f32 %v5639, %v5967
  %v5969 = vpop.f32.mrf.mxu0
  %v5970 = vadd.f32 %v5641, %v5969
  %5971 = vmatmul.bf16.gmra.mxu0 %v3449
  %v5972 = vpop.f32.mrf.mxu0
  %v5973 = vadd.f32 %v5644, %v5972
  %v5974 = vpop.f32.mrf.mxu0
  %v5975 = vadd.f32 %v5646, %v5974
  %5976 = vmatmul.bf16.gmra.mxu0 %v3457
  %v5977 = vpop.f32.mrf.mxu0
  %v5978 = vadd.f32 %v5649, %v5977
  %v5979 = vpop.f32.mrf.mxu0
  %v5980 = vadd.f32 %v5651, %v5979
  %5981 = vmatmul.bf16.gmra.mxu0 %v3465
  %v5982 = vpop.f32.mrf.mxu0
  %v5983 = vadd.f32 %v5654, %v5982
  %v5984 = vpop.f32.mrf.mxu0
  %v5985 = vadd.f32 %v5656, %v5984
  %5986 = vmatmul.bf16.gmra.mxu0 %v3473
  %v5987 = vpop.f32.mrf.mxu0
  %v5988 = vadd.f32 %v5659, %v5987
  %v5989 = vpop.f32.mrf.mxu0
  %v5990 = vadd.f32 %v5661, %v5989
  %5991 = vmatmul.bf16.gmra.mxu0 %v3481
  %v5992 = vpop.f32.mrf.mxu0
  %v5993 = vadd.f32 %v5664, %v5992
  %v5994 = vpop.f32.mrf.mxu0
  %v5995 = vadd.f32 %v5666, %v5994
  %5996 = vmatmul.bf16.gmra.mxu0 %v3489
  %v5997 = vpop.f32.mrf.mxu0
  %v5998 = vadd.f32 %v5669, %v5997
  %v5999 = vpop.f32.mrf.mxu0
  %v6000 = vadd.f32 %v5671, %v5999
  %6001 = vmatmul.bf16.gmra.mxu0 %v3497
  %v6002 = vpop.f32.mrf.mxu0
  %v6003 = vadd.f32 %v5674, %v6002
  %v6004 = vpop.f32.mrf.mxu0
  %v6005 = vadd.f32 %v5676, %v6004
  %6006 = vmatmul.bf16.gmra.mxu0 %v3505
  %v6007 = vpop.f32.mrf.mxu0
  %v6008 = vadd.f32 %v5679, %v6007
  %v6009 = vpop.f32.mrf.mxu0
  %v6010 = vadd.f32 %v5681, %v6009
  %6011 = vmatmul.bf16.gmra.mxu0 %v3513
  %v6012 = vpop.f32.mrf.mxu0
  %v6013 = vadd.f32 %v5684, %v6012
  %v6014 = vpop.f32.mrf.mxu0
  %v6015 = vadd.f32 %v5686, %v6014
  %6016 = vmatmul.bf16.gmra.mxu0 %v3521
  %v6017 = vpop.f32.mrf.mxu0
  %v6018 = vadd.f32 %v5689, %v6017
  %v6019 = vpop.f32.mrf.mxu0
  %v6020 = vadd.f32 %v5691, %v6019
  %6021 = vmatmul.bf16.gmra.mxu0 %v3529
  %v6022 = vpop.f32.mrf.mxu0
  %v6023 = vadd.f32 %v5694, %v6022
  %v6024 = vpop.f32.mrf.mxu0
  %v6025 = vadd.f32 %v5696, %v6024
  %6026 = vmatmul.bf16.gmra.mxu0 %v3537
  %v6027 = vpop.f32.mrf.mxu0
  %v6028 = vadd.f32 %v5699, %v6027
  %v6029 = vpop.f32.mrf.mxu0
  %v6030 = vadd.f32 %v5701, %v6029
  %6031 = vmatmul.bf16.gmra.mxu0 %v3545
  %v6032 = vpop.f32.mrf.mxu0
  %v6033 = vadd.f32 %v5704, %v6032
  %v6034 = vpop.f32.mrf.mxu0
  %v6035 = vadd.f32 %v5706, %v6034
  %6036 = vmatmul.bf16.gmra.mxu0 %v3553
  %v6037 = vpop.f32.mrf.mxu0
  %v6038 = vadd.f32 %v5709, %v6037
  %v6039 = vpop.f32.mrf.mxu0
  %v6040 = vadd.f32 %v5711, %v6039
  %6041 = vdwg.mxu0
  %6042 = vmatpush.bf16.msra.mxu0 %v983
  %6043 = vmatpush.bf16.msra.mxu0 %v982
  %6044 = vmatpush.bf16.msra.mxu0 %v981
  %6045 = vmatpush.bf16.msra.mxu0 %v980
  %6046 = vmatpush.bf16.msra.mxu0 %v979
  %6047 = vmatpush.bf16.msra.mxu0 %v978
  %6048 = vmatpush.bf16.msra.mxu0 %v977
  %6049 = vmatpush.bf16.msra.mxu0 %v976
  %6050 = vmatmul.bf16.gmra.mxu0 %v3050
  %v6051 = vpop.f32.mrf.mxu0
  %v6052 = vadd.f32 %v5723, %v6051
  %v6053 = vpop.f32.mrf.mxu0
  %v6054 = vadd.f32 %v5725, %v6053
  %6055 = vmatmul.bf16.gmra.mxu0 %v3058
  %v6056 = vpop.f32.mrf.mxu0
  %v6057 = vadd.f32 %v5728, %v6056
  %v6058 = vpop.f32.mrf.mxu0
  %v6059 = vadd.f32 %v5730, %v6058
  %6060 = vmatmul.bf16.gmra.mxu0 %v3066
  %v6061 = vpop.f32.mrf.mxu0
  %v6062 = vadd.f32 %v5733, %v6061
  %v6063 = vpop.f32.mrf.mxu0
  %v6064 = vadd.f32 %v5735, %v6063
  %6065 = vmatmul.bf16.gmra.mxu0 %v3074
  %v6066 = vpop.f32.mrf.mxu0
  %v6067 = vadd.f32 %v5738, %v6066
  %v6068 = vpop.f32.mrf.mxu0
  %v6069 = vadd.f32 %v5740, %v6068
  %6070 = vmatmul.bf16.gmra.mxu0 %v3082
  %v6071 = vpop.f32.mrf.mxu0
  %v6072 = vadd.f32 %v5743, %v6071
  %v6073 = vpop.f32.mrf.mxu0
  %v6074 = vadd.f32 %v5745, %v6073
  %6075 = vmatmul.bf16.gmra.mxu0 %v3090
  %v6076 = vpop.f32.mrf.mxu0
  %v6077 = vadd.f32 %v5748, %v6076
  %v6078 = vpop.f32.mrf.mxu0
  %v6079 = vadd.f32 %v5750, %v6078
  %6080 = vmatmul.bf16.gmra.mxu0 %v3098
  %v6081 = vpop.f32.mrf.mxu0
  %v6082 = vadd.f32 %v5753, %v6081
  %v6083 = vpop.f32.mrf.mxu0
  %v6084 = vadd.f32 %v5755, %v6083
  %6085 = vmatmul.bf16.gmra.mxu0 %v3106
  %v6086 = vpop.f32.mrf.mxu0
  %v6087 = vadd.f32 %v5758, %v6086
  %v6088 = vpop.f32.mrf.mxu0
  %v6089 = vadd.f32 %v5760, %v6088
  %6090 = vmatmul.bf16.gmra.mxu0 %v3114
  %v6091 = vpop.f32.mrf.mxu0
  %v6092 = vadd.f32 %v5763, %v6091
  %v6093 = vpop.f32.mrf.mxu0
  %v6094 = vadd.f32 %v5765, %v6093
  %6095 = vmatmul.bf16.gmra.mxu0 %v3122
  %v6096 = vpop.f32.mrf.mxu0
  %v6097 = vadd.f32 %v5768, %v6096
  %v6098 = vpop.f32.mrf.mxu0
  %v6099 = vadd.f32 %v5770, %v6098
  %6100 = vmatmul.bf16.gmra.mxu0 %v3130
  %v6101 = vpop.f32.mrf.mxu0
  %v6102 = vadd.f32 %v5773, %v6101
  %v6103 = vpop.f32.mrf.mxu0
  %v6104 = vadd.f32 %v5775, %v6103
  %6105 = vmatmul.bf16.gmra.mxu0 %v3138
  %v6106 = vpop.f32.mrf.mxu0
  %v6107 = vadd.f32 %v5778, %v6106
  %v6108 = vpop.f32.mrf.mxu0
  %v6109 = vadd.f32 %v5780, %v6108
  %6110 = vmatmul.bf16.gmra.mxu0 %v3146
  %v6111 = vpop.f32.mrf.mxu0
  %v6112 = vadd.f32 %v5783, %v6111
  %v6113 = vpop.f32.mrf.mxu0
  %v6114 = vadd.f32 %v5785, %v6113
  %6115 = vmatmul.bf16.gmra.mxu0 %v3154
  %v6116 = vpop.f32.mrf.mxu0
  %v6117 = vadd.f32 %v5788, %v6116
  %v6118 = vpop.f32.mrf.mxu0
  %v6119 = vadd.f32 %v5790, %v6118
  %6120 = vmatmul.bf16.gmra.mxu0 %v3162
  %v6121 = vpop.f32.mrf.mxu0
  %v6122 = vadd.f32 %v5793, %v6121
  %v6123 = vpop.f32.mrf.mxu0
  %v6124 = vadd.f32 %v5795, %v6123
  %6125 = vmatmul.bf16.gmra.mxu0 %v3170
  %v6126 = vpop.f32.mrf.mxu0
  %v6127 = vadd.f32 %v5798, %v6126
  %v6128 = vpop.f32.mrf.mxu0
  %v6129 = vadd.f32 %v5800, %v6128
  %6130 = vmatmul.bf16.gmra.mxu0 %v3178
  %v6131 = vpop.f32.mrf.mxu0
  %v6132 = vadd.f32 %v5803, %v6131
  %v6133 = vpop.f32.mrf.mxu0
  %v6134 = vadd.f32 %v5805, %v6133
  %6135 = vmatmul.bf16.gmra.mxu0 %v3186
  %v6136 = vpop.f32.mrf.mxu0
  %v6137 = vadd.f32 %v5808, %v6136
  %v6138 = vpop.f32.mrf.mxu0
  %v6139 = vadd.f32 %v5810, %v6138
  %6140 = vmatmul.bf16.gmra.mxu0 %v3194
  %v6141 = vpop.f32.mrf.mxu0
  %v6142 = vadd.f32 %v5813, %v6141
  %v6143 = vpop.f32.mrf.mxu0
  %v6144 = vadd.f32 %v5815, %v6143
  %6145 = vmatmul.bf16.gmra.mxu0 %v3202
  %v6146 = vpop.f32.mrf.mxu0
  %v6147 = vadd.f32 %v5818, %v6146
  %v6148 = vpop.f32.mrf.mxu0
  %v6149 = vadd.f32 %v5820, %v6148
  %6150 = vmatmul.bf16.gmra.mxu0 %v3210
  %v6151 = vpop.f32.mrf.mxu0
  %v6152 = vadd.f32 %v5823, %v6151
  %v6153 = vpop.f32.mrf.mxu0
  %v6154 = vadd.f32 %v5825, %v6153
  %6155 = vmatmul.bf16.gmra.mxu0 %v3218
  %v6156 = vpop.f32.mrf.mxu0
  %v6157 = vadd.f32 %v5828, %v6156
  %v6158 = vpop.f32.mrf.mxu0
  %v6159 = vadd.f32 %v5830, %v6158
  %6160 = vmatmul.bf16.gmra.mxu0 %v3226
  %v6161 = vpop.f32.mrf.mxu0
  %v6162 = vadd.f32 %v5833, %v6161
  %v6163 = vpop.f32.mrf.mxu0
  %v6164 = vadd.f32 %v5835, %v6163
  %6165 = vmatmul.bf16.gmra.mxu0 %v3234
  %v6166 = vpop.f32.mrf.mxu0
  %v6167 = vadd.f32 %v5838, %v6166
  %v6168 = vpop.f32.mrf.mxu0
  %v6169 = vadd.f32 %v5840, %v6168
  %6170 = vmatmul.bf16.gmra.mxu0 %v3242
  %v6171 = vpop.f32.mrf.mxu0
  %v6172 = vadd.f32 %v5843, %v6171
  %v6173 = vpop.f32.mrf.mxu0
  %v6174 = vadd.f32 %v5845, %v6173
  %6175 = vmatmul.bf16.gmra.mxu0 %v3250
  %v6176 = vpop.f32.mrf.mxu0
  %v6177 = vadd.f32 %v5848, %v6176
  %v6178 = vpop.f32.mrf.mxu0
  %v6179 = vadd.f32 %v5850, %v6178
  %6180 = vmatmul.bf16.gmra.mxu0 %v3258
  %v6181 = vpop.f32.mrf.mxu0
  %v6182 = vadd.f32 %v5853, %v6181
  %v6183 = vpop.f32.mrf.mxu0
  %v6184 = vadd.f32 %v5855, %v6183
  %6185 = vmatmul.bf16.gmra.mxu0 %v3266
  %v6186 = vpop.f32.mrf.mxu0
  %v6187 = vadd.f32 %v5858, %v6186
  %v6188 = vpop.f32.mrf.mxu0
  %v6189 = vadd.f32 %v5860, %v6188
  %6190 = vmatmul.bf16.gmra.mxu0 %v3274
  %v6191 = vpop.f32.mrf.mxu0
  %v6192 = vadd.f32 %v5863, %v6191
  %v6193 = vpop.f32.mrf.mxu0
  %v6194 = vadd.f32 %v5865, %v6193
  %6195 = vmatmul.bf16.gmra.mxu0 %v3282
  %v6196 = vpop.f32.mrf.mxu0
  %v6197 = vadd.f32 %v5868, %v6196
  %v6198 = vpop.f32.mrf.mxu0
  %v6199 = vadd.f32 %v5870, %v6198
  %6200 = vmatmul.bf16.gmra.mxu0 %v3290
  %v6201 = vpop.f32.mrf.mxu0
  %v6202 = vadd.f32 %v5873, %v6201
  %v6203 = vpop.f32.mrf.mxu0
  %v6204 = vadd.f32 %v5875, %v6203
  %6205 = vmatmul.bf16.gmra.mxu0 %v3298
  %v6206 = vpop.f32.mrf.mxu0
  %v6207 = vadd.f32 %v5878, %v6206
  %v6208 = vpop.f32.mrf.mxu0
  %v6209 = vadd.f32 %v5880, %v6208
  %6210 = vmatmul.bf16.gmra.mxu0 %v3306
  %v6211 = vpop.f32.mrf.mxu0
  %v6212 = vadd.f32 %v5883, %v6211
  %v6213 = vpop.f32.mrf.mxu0
  %v6214 = vadd.f32 %v5885, %v6213
  %6215 = vmatmul.bf16.gmra.mxu0 %v3314
  %v6216 = vpop.f32.mrf.mxu0
  %v6217 = vadd.f32 %v5888, %v6216
  %v6218 = vpop.f32.mrf.mxu0
  %v6219 = vadd.f32 %v5890, %v6218
  %6220 = vmatmul.bf16.gmra.mxu0 %v3322
  %v6221 = vpop.f32.mrf.mxu0
  %v6222 = vadd.f32 %v5893, %v6221
  %v6223 = vpop.f32.mrf.mxu0
  %v6224 = vadd.f32 %v5895, %v6223
  %6225 = vmatmul.bf16.gmra.mxu0 %v3330
  %v6226 = vpop.f32.mrf.mxu0
  %v6227 = vadd.f32 %v5898, %v6226
  %v6228 = vpop.f32.mrf.mxu0
  %v6229 = vadd.f32 %v5900, %v6228
  %6230 = vmatmul.bf16.gmra.mxu0 %v3338
  %v6231 = vpop.f32.mrf.mxu0
  %v6232 = vadd.f32 %v5903, %v6231
  %v6233 = vpop.f32.mrf.mxu0
  %v6234 = vadd.f32 %v5905, %v6233
  %6235 = vmatmul.bf16.gmra.mxu0 %v3346
  %v6236 = vpop.f32.mrf.mxu0
  %v6237 = vadd.f32 %v5908, %v6236
  %v6238 = vpop.f32.mrf.mxu0
  %v6239 = vadd.f32 %v5910, %v6238
  %6240 = vmatmul.bf16.gmra.mxu0 %v3354
  %v6241 = vpop.f32.mrf.mxu0
  %v6242 = vadd.f32 %v5913, %v6241
  %v6243 = vpop.f32.mrf.mxu0
  %v6244 = vadd.f32 %v5915, %v6243
  %6245 = vmatmul.bf16.gmra.mxu0 %v3362
  %v6246 = vpop.f32.mrf.mxu0
  %v6247 = vadd.f32 %v5918, %v6246
  %v6248 = vpop.f32.mrf.mxu0
  %v6249 = vadd.f32 %v5920, %v6248
  %6250 = vmatmul.bf16.gmra.mxu0 %v3370
  %v6251 = vpop.f32.mrf.mxu0
  %v6252 = vadd.f32 %v5923, %v6251
  %v6253 = vpop.f32.mrf.mxu0
  %v6254 = vadd.f32 %v5925, %v6253
  %6255 = vmatmul.bf16.gmra.mxu0 %v3378
  %v6256 = vpop.f32.mrf.mxu0
  %v6257 = vadd.f32 %v5928, %v6256
  %v6258 = vpop.f32.mrf.mxu0
  %v6259 = vadd.f32 %v5930, %v6258
  %6260 = vmatmul.bf16.gmra.mxu0 %v3386
  %v6261 = vpop.f32.mrf.mxu0
  %v6262 = vadd.f32 %v5933, %v6261
  %v6263 = vpop.f32.mrf.mxu0
  %v6264 = vadd.f32 %v5935, %v6263
  %6265 = vmatmul.bf16.gmra.mxu0 %v3394
  %v6266 = vpop.f32.mrf.mxu0
  %v6267 = vadd.f32 %v5938, %v6266
  %v6268 = vpop.f32.mrf.mxu0
  %v6269 = vadd.f32 %v5940, %v6268
  %6270 = vmatmul.bf16.gmra.mxu0 %v3402
  %v6271 = vpop.f32.mrf.mxu0
  %v6272 = vadd.f32 %v5943, %v6271
  %v6273 = vpop.f32.mrf.mxu0
  %v6274 = vadd.f32 %v5945, %v6273
  %6275 = vmatmul.bf16.gmra.mxu0 %v3410
  %v6276 = vpop.f32.mrf.mxu0
  %v6277 = vadd.f32 %v5948, %v6276
  %v6278 = vpop.f32.mrf.mxu0
  %v6279 = vadd.f32 %v5950, %v6278
  %6280 = vmatmul.bf16.gmra.mxu0 %v3418
  %v6281 = vpop.f32.mrf.mxu0
  %v6282 = vadd.f32 %v5953, %v6281
  %v6283 = vpop.f32.mrf.mxu0
  %v6284 = vadd.f32 %v5955, %v6283
  %6285 = vmatmul.bf16.gmra.mxu0 %v3426
  %v6286 = vpop.f32.mrf.mxu0
  %v6287 = vadd.f32 %v5958, %v6286
  %v6288 = vpop.f32.mrf.mxu0
  %v6289 = vadd.f32 %v5960, %v6288
  %6290 = vmatmul.bf16.gmra.mxu0 %v3434
  %v6291 = vpop.f32.mrf.mxu0
  %v6292 = vadd.f32 %v5963, %v6291
  %v6293 = vpop.f32.mrf.mxu0
  %v6294 = vadd.f32 %v5965, %v6293
  %6295 = vmatmul.bf16.gmra.mxu0 %v3442
  %v6296 = vpop.f32.mrf.mxu0
  %v6297 = vadd.f32 %v5968, %v6296
  %v6298 = vpop.f32.mrf.mxu0
  %v6299 = vadd.f32 %v5970, %v6298
  %6300 = vmatmul.bf16.gmra.mxu0 %v3450
  %v6301 = vpop.f32.mrf.mxu0
  %v6302 = vadd.f32 %v5973, %v6301
  %v6303 = vpop.f32.mrf.mxu0
  %v6304 = vadd.f32 %v5975, %v6303
  %6305 = vmatmul.bf16.gmra.mxu0 %v3458
  %v6306 = vpop.f32.mrf.mxu0
  %v6307 = vadd.f32 %v5978, %v6306
  %v6308 = vpop.f32.mrf.mxu0
  %v6309 = vadd.f32 %v5980, %v6308
  %6310 = vmatmul.bf16.gmra.mxu0 %v3466
  %v6311 = vpop.f32.mrf.mxu0
  %v6312 = vadd.f32 %v5983, %v6311
  %v6313 = vpop.f32.mrf.mxu0
  %v6314 = vadd.f32 %v5985, %v6313
  %6315 = vmatmul.bf16.gmra.mxu0 %v3474
  %v6316 = vpop.f32.mrf.mxu0
  %v6317 = vadd.f32 %v5988, %v6316
  %v6318 = vpop.f32.mrf.mxu0
  %v6319 = vadd.f32 %v5990, %v6318
  %6320 = vmatmul.bf16.gmra.mxu0 %v3482
  %v6321 = vpop.f32.mrf.mxu0
  %v6322 = vadd.f32 %v5993, %v6321
  %v6323 = vpop.f32.mrf.mxu0
  %v6324 = vadd.f32 %v5995, %v6323
  %6325 = vmatmul.bf16.gmra.mxu0 %v3490
  %v6326 = vpop.f32.mrf.mxu0
  %v6327 = vadd.f32 %v5998, %v6326
  %v6328 = vpop.f32.mrf.mxu0
  %v6329 = vadd.f32 %v6000, %v6328
  %6330 = vmatmul.bf16.gmra.mxu0 %v3498
  %v6331 = vpop.f32.mrf.mxu0
  %v6332 = vadd.f32 %v6003, %v6331
  %v6333 = vpop.f32.mrf.mxu0
  %v6334 = vadd.f32 %v6005, %v6333
  %6335 = vmatmul.bf16.gmra.mxu0 %v3506
  %v6336 = vpop.f32.mrf.mxu0
  %v6337 = vadd.f32 %v6008, %v6336
  %v6338 = vpop.f32.mrf.mxu0
  %v6339 = vadd.f32 %v6010, %v6338
  %6340 = vmatmul.bf16.gmra.mxu0 %v3514
  %v6341 = vpop.f32.mrf.mxu0
  %v6342 = vadd.f32 %v6013, %v6341
  %v6343 = vpop.f32.mrf.mxu0
  %v6344 = vadd.f32 %v6015, %v6343
  %6345 = vmatmul.bf16.gmra.mxu0 %v3522
  %v6346 = vpop.f32.mrf.mxu0
  %v6347 = vadd.f32 %v6018, %v6346
  %v6348 = vpop.f32.mrf.mxu0
  %v6349 = vadd.f32 %v6020, %v6348
  %6350 = vmatmul.bf16.gmra.mxu0 %v3530
  %v6351 = vpop.f32.mrf.mxu0
  %v6352 = vadd.f32 %v6023, %v6351
  %v6353 = vpop.f32.mrf.mxu0
  %v6354 = vadd.f32 %v6025, %v6353
  %6355 = vmatmul.bf16.gmra.mxu0 %v3538
  %v6356 = vpop.f32.mrf.mxu0
  %v6357 = vadd.f32 %v6028, %v6356
  %v6358 = vpop.f32.mrf.mxu0
  %v6359 = vadd.f32 %v6030, %v6358
  %6360 = vmatmul.bf16.gmra.mxu0 %v3546
  %v6361 = vpop.f32.mrf.mxu0
  %v6362 = vadd.f32 %v6033, %v6361
  %v6363 = vpop.f32.mrf.mxu0
  %v6364 = vadd.f32 %v6035, %v6363
  %6365 = vmatmul.bf16.gmra.mxu0 %v3554
  %v6366 = vpop.f32.mrf.mxu0
  %v6367 = vadd.f32 %v6038, %v6366
  %v6368 = vpop.f32.mrf.mxu0
  %v6369 = vadd.f32 %v6040, %v6368
  %6370 = vdwg.mxu0
  %6371 = vmatpush.bf16.msra.mxu0 %v991
  %6372 = vmatpush.bf16.msra.mxu0 %v990
  %6373 = vmatpush.bf16.msra.mxu0 %v989
  %6374 = vmatpush.bf16.msra.mxu0 %v988
  %6375 = vmatpush.bf16.msra.mxu0 %v987
  %6376 = vmatpush.bf16.msra.mxu0 %v986
  %6377 = vmatpush.bf16.msra.mxu0 %v985
  %6378 = vmatpush.bf16.msra.mxu0 %v984
  %6379 = vmatmul.bf16.gmra.mxu0 %v3051
  %v6380 = vpop.f32.mrf.mxu0
  %v6381 = vadd.f32 %v6052, %v6380
  %v6382 = vpop.f32.mrf.mxu0
  %v6383 = vadd.f32 %v6054, %v6382
  %6384 = vmatmul.bf16.gmra.mxu0 %v3059
  %v6385 = vpop.f32.mrf.mxu0
  %v6386 = vadd.f32 %v6057, %v6385
  %v6387 = vpop.f32.mrf.mxu0
  %v6388 = vadd.f32 %v6059, %v6387
  %6389 = vmatmul.bf16.gmra.mxu0 %v3067
  %v6390 = vpop.f32.mrf.mxu0
  %v6391 = vadd.f32 %v6062, %v6390
  %v6392 = vpop.f32.mrf.mxu0
  %v6393 = vadd.f32 %v6064, %v6392
  %6394 = vmatmul.bf16.gmra.mxu0 %v3075
  %v6395 = vpop.f32.mrf.mxu0
  %v6396 = vadd.f32 %v6067, %v6395
  %v6397 = vpop.f32.mrf.mxu0
  %v6398 = vadd.f32 %v6069, %v6397
  %6399 = vmatmul.bf16.gmra.mxu0 %v3083
  %v6400 = vpop.f32.mrf.mxu0
  %v6401 = vadd.f32 %v6072, %v6400
  %v6402 = vpop.f32.mrf.mxu0
  %v6403 = vadd.f32 %v6074, %v6402
  %6404 = vmatmul.bf16.gmra.mxu0 %v3091
  %v6405 = vpop.f32.mrf.mxu0
  %v6406 = vadd.f32 %v6077, %v6405
  %v6407 = vpop.f32.mrf.mxu0
  %v6408 = vadd.f32 %v6079, %v6407
  %6409 = vmatmul.bf16.gmra.mxu0 %v3099
  %v6410 = vpop.f32.mrf.mxu0
  %v6411 = vadd.f32 %v6082, %v6410
  %v6412 = vpop.f32.mrf.mxu0
  %v6413 = vadd.f32 %v6084, %v6412
  %6414 = vmatmul.bf16.gmra.mxu0 %v3107
  %v6415 = vpop.f32.mrf.mxu0
  %v6416 = vadd.f32 %v6087, %v6415
  %v6417 = vpop.f32.mrf.mxu0
  %v6418 = vadd.f32 %v6089, %v6417
  %6419 = vmatmul.bf16.gmra.mxu0 %v3115
  %v6420 = vpop.f32.mrf.mxu0
  %v6421 = vadd.f32 %v6092, %v6420
  %v6422 = vpop.f32.mrf.mxu0
  %v6423 = vadd.f32 %v6094, %v6422
  %6424 = vmatmul.bf16.gmra.mxu0 %v3123
  %v6425 = vpop.f32.mrf.mxu0
  %v6426 = vadd.f32 %v6097, %v6425
  %v6427 = vpop.f32.mrf.mxu0
  %v6428 = vadd.f32 %v6099, %v6427
  %6429 = vmatmul.bf16.gmra.mxu0 %v3131
  %v6430 = vpop.f32.mrf.mxu0
  %v6431 = vadd.f32 %v6102, %v6430
  %v6432 = vpop.f32.mrf.mxu0
  %v6433 = vadd.f32 %v6104, %v6432
  %6434 = vmatmul.bf16.gmra.mxu0 %v3139
  %v6435 = vpop.f32.mrf.mxu0
  %v6436 = vadd.f32 %v6107, %v6435
  %v6437 = vpop.f32.mrf.mxu0
  %v6438 = vadd.f32 %v6109, %v6437
  %6439 = vmatmul.bf16.gmra.mxu0 %v3147
  %v6440 = vpop.f32.mrf.mxu0
  %v6441 = vadd.f32 %v6112, %v6440
  %v6442 = vpop.f32.mrf.mxu0
  %v6443 = vadd.f32 %v6114, %v6442
  %6444 = vmatmul.bf16.gmra.mxu0 %v3155
  %v6445 = vpop.f32.mrf.mxu0
  %v6446 = vadd.f32 %v6117, %v6445
  %v6447 = vpop.f32.mrf.mxu0
  %v6448 = vadd.f32 %v6119, %v6447
  %6449 = vmatmul.bf16.gmra.mxu0 %v3163
  %v6450 = vpop.f32.mrf.mxu0
  %v6451 = vadd.f32 %v6122, %v6450
  %v6452 = vpop.f32.mrf.mxu0
  %v6453 = vadd.f32 %v6124, %v6452
  %6454 = vmatmul.bf16.gmra.mxu0 %v3171
  %v6455 = vpop.f32.mrf.mxu0
  %v6456 = vadd.f32 %v6127, %v6455
  %v6457 = vpop.f32.mrf.mxu0
  %v6458 = vadd.f32 %v6129, %v6457
  %6459 = vmatmul.bf16.gmra.mxu0 %v3179
  %v6460 = vpop.f32.mrf.mxu0
  %v6461 = vadd.f32 %v6132, %v6460
  %v6462 = vpop.f32.mrf.mxu0
  %v6463 = vadd.f32 %v6134, %v6462
  %6464 = vmatmul.bf16.gmra.mxu0 %v3187
  %v6465 = vpop.f32.mrf.mxu0
  %v6466 = vadd.f32 %v6137, %v6465
  %v6467 = vpop.f32.mrf.mxu0
  %v6468 = vadd.f32 %v6139, %v6467
  %6469 = vmatmul.bf16.gmra.mxu0 %v3195
  %v6470 = vpop.f32.mrf.mxu0
  %v6471 = vadd.f32 %v6142, %v6470
  %v6472 = vpop.f32.mrf.mxu0
  %v6473 = vadd.f32 %v6144, %v6472
  %6474 = vmatmul.bf16.gmra.mxu0 %v3203
  %v6475 = vpop.f32.mrf.mxu0
  %v6476 = vadd.f32 %v6147, %v6475
  %v6477 = vpop.f32.mrf.mxu0
  %v6478 = vadd.f32 %v6149, %v6477
  %6479 = vmatmul.bf16.gmra.mxu0 %v3211
  %v6480 = vpop.f32.mrf.mxu0
  %v6481 = vadd.f32 %v6152, %v6480
  %v6482 = vpop.f32.mrf.mxu0
  %v6483 = vadd.f32 %v6154, %v6482
  %6484 = vmatmul.bf16.gmra.mxu0 %v3219
  %v6485 = vpop.f32.mrf.mxu0
  %v6486 = vadd.f32 %v6157, %v6485
  %v6487 = vpop.f32.mrf.mxu0
  %v6488 = vadd.f32 %v6159, %v6487
  %6489 = vmatmul.bf16.gmra.mxu0 %v3227
  %v6490 = vpop.f32.mrf.mxu0
  %v6491 = vadd.f32 %v6162, %v6490
  %v6492 = vpop.f32.mrf.mxu0
  %v6493 = vadd.f32 %v6164, %v6492
  %6494 = vmatmul.bf16.gmra.mxu0 %v3235
  %v6495 = vpop.f32.mrf.mxu0
  %v6496 = vadd.f32 %v6167, %v6495
  %v6497 = vpop.f32.mrf.mxu0
  %v6498 = vadd.f32 %v6169, %v6497
  %6499 = vmatmul.bf16.gmra.mxu0 %v3243
  %v6500 = vpop.f32.mrf.mxu0
  %v6501 = vadd.f32 %v6172, %v6500
  %v6502 = vpop.f32.mrf.mxu0
  %v6503 = vadd.f32 %v6174, %v6502
  %6504 = vmatmul.bf16.gmra.mxu0 %v3251
  %v6505 = vpop.f32.mrf.mxu0
  %v6506 = vadd.f32 %v6177, %v6505
  %v6507 = vpop.f32.mrf.mxu0
  %v6508 = vadd.f32 %v6179, %v6507
  %6509 = vmatmul.bf16.gmra.mxu0 %v3259
  %v6510 = vpop.f32.mrf.mxu0
  %v6511 = vadd.f32 %v6182, %v6510
  %v6512 = vpop.f32.mrf.mxu0
  %v6513 = vadd.f32 %v6184, %v6512
  %6514 = vmatmul.bf16.gmra.mxu0 %v3267
  %v6515 = vpop.f32.mrf.mxu0
  %v6516 = vadd.f32 %v6187, %v6515
  %v6517 = vpop.f32.mrf.mxu0
  %v6518 = vadd.f32 %v6189, %v6517
  %6519 = vmatmul.bf16.gmra.mxu0 %v3275
  %v6520 = vpop.f32.mrf.mxu0
  %v6521 = vadd.f32 %v6192, %v6520
  %v6522 = vpop.f32.mrf.mxu0
  %v6523 = vadd.f32 %v6194, %v6522
  %6524 = vmatmul.bf16.gmra.mxu0 %v3283
  %v6525 = vpop.f32.mrf.mxu0
  %v6526 = vadd.f32 %v6197, %v6525
  %v6527 = vpop.f32.mrf.mxu0
  %v6528 = vadd.f32 %v6199, %v6527
  %6529 = vmatmul.bf16.gmra.mxu0 %v3291
  %v6530 = vpop.f32.mrf.mxu0
  %v6531 = vadd.f32 %v6202, %v6530
  %v6532 = vpop.f32.mrf.mxu0
  %v6533 = vadd.f32 %v6204, %v6532
  %6534 = vmatmul.bf16.gmra.mxu0 %v3299
  %v6535 = vpop.f32.mrf.mxu0
  %v6536 = vadd.f32 %v6207, %v6535
  %v6537 = vpop.f32.mrf.mxu0
  %v6538 = vadd.f32 %v6209, %v6537
  %6539 = vmatmul.bf16.gmra.mxu0 %v3307
  %v6540 = vpop.f32.mrf.mxu0
  %v6541 = vadd.f32 %v6212, %v6540
  %v6542 = vpop.f32.mrf.mxu0
  %v6543 = vadd.f32 %v6214, %v6542
  %6544 = vmatmul.bf16.gmra.mxu0 %v3315
  %v6545 = vpop.f32.mrf.mxu0
  %v6546 = vadd.f32 %v6217, %v6545
  %v6547 = vpop.f32.mrf.mxu0
  %v6548 = vadd.f32 %v6219, %v6547
  %6549 = vmatmul.bf16.gmra.mxu0 %v3323
  %v6550 = vpop.f32.mrf.mxu0
  %v6551 = vadd.f32 %v6222, %v6550
  %v6552 = vpop.f32.mrf.mxu0
  %v6553 = vadd.f32 %v6224, %v6552
  %6554 = vmatmul.bf16.gmra.mxu0 %v3331
  %v6555 = vpop.f32.mrf.mxu0
  %v6556 = vadd.f32 %v6227, %v6555
  %v6557 = vpop.f32.mrf.mxu0
  %v6558 = vadd.f32 %v6229, %v6557
  %6559 = vmatmul.bf16.gmra.mxu0 %v3339
  %v6560 = vpop.f32.mrf.mxu0
  %v6561 = vadd.f32 %v6232, %v6560
  %v6562 = vpop.f32.mrf.mxu0
  %v6563 = vadd.f32 %v6234, %v6562
  %6564 = vmatmul.bf16.gmra.mxu0 %v3347
  %v6565 = vpop.f32.mrf.mxu0
  %v6566 = vadd.f32 %v6237, %v6565
  %v6567 = vpop.f32.mrf.mxu0
  %v6568 = vadd.f32 %v6239, %v6567
  %6569 = vmatmul.bf16.gmra.mxu0 %v3355
  %v6570 = vpop.f32.mrf.mxu0
  %v6571 = vadd.f32 %v6242, %v6570
  %v6572 = vpop.f32.mrf.mxu0
  %v6573 = vadd.f32 %v6244, %v6572
  %6574 = vmatmul.bf16.gmra.mxu0 %v3363
  %v6575 = vpop.f32.mrf.mxu0
  %v6576 = vadd.f32 %v6247, %v6575
  %v6577 = vpop.f32.mrf.mxu0
  %v6578 = vadd.f32 %v6249, %v6577
  %6579 = vmatmul.bf16.gmra.mxu0 %v3371
  %v6580 = vpop.f32.mrf.mxu0
  %v6581 = vadd.f32 %v6252, %v6580
  %v6582 = vpop.f32.mrf.mxu0
  %v6583 = vadd.f32 %v6254, %v6582
  %6584 = vmatmul.bf16.gmra.mxu0 %v3379
  %v6585 = vpop.f32.mrf.mxu0
  %v6586 = vadd.f32 %v6257, %v6585
  %v6587 = vpop.f32.mrf.mxu0
  %v6588 = vadd.f32 %v6259, %v6587
  %6589 = vmatmul.bf16.gmra.mxu0 %v3387
  %v6590 = vpop.f32.mrf.mxu0
  %v6591 = vadd.f32 %v6262, %v6590
  %v6592 = vpop.f32.mrf.mxu0
  %v6593 = vadd.f32 %v6264, %v6592
  %6594 = vmatmul.bf16.gmra.mxu0 %v3395
  %v6595 = vpop.f32.mrf.mxu0
  %v6596 = vadd.f32 %v6267, %v6595
  %v6597 = vpop.f32.mrf.mxu0
  %v6598 = vadd.f32 %v6269, %v6597
  %6599 = vmatmul.bf16.gmra.mxu0 %v3403
  %v6600 = vpop.f32.mrf.mxu0
  %v6601 = vadd.f32 %v6272, %v6600
  %v6602 = vpop.f32.mrf.mxu0
  %v6603 = vadd.f32 %v6274, %v6602
  %6604 = vmatmul.bf16.gmra.mxu0 %v3411
  %v6605 = vpop.f32.mrf.mxu0
  %v6606 = vadd.f32 %v6277, %v6605
  %v6607 = vpop.f32.mrf.mxu0
  %v6608 = vadd.f32 %v6279, %v6607
  %6609 = vmatmul.bf16.gmra.mxu0 %v3419
  %v6610 = vpop.f32.mrf.mxu0
  %v6611 = vadd.f32 %v6282, %v6610
  %v6612 = vpop.f32.mrf.mxu0
  %v6613 = vadd.f32 %v6284, %v6612
  %6614 = vmatmul.bf16.gmra.mxu0 %v3427
  %v6615 = vpop.f32.mrf.mxu0
  %v6616 = vadd.f32 %v6287, %v6615
  %v6617 = vpop.f32.mrf.mxu0
  %v6618 = vadd.f32 %v6289, %v6617
  %6619 = vmatmul.bf16.gmra.mxu0 %v3435
  %v6620 = vpop.f32.mrf.mxu0
  %v6621 = vadd.f32 %v6292, %v6620
  %v6622 = vpop.f32.mrf.mxu0
  %v6623 = vadd.f32 %v6294, %v6622
  %6624 = vmatmul.bf16.gmra.mxu0 %v3443
  %v6625 = vpop.f32.mrf.mxu0
  %v6626 = vadd.f32 %v6297, %v6625
  %v6627 = vpop.f32.mrf.mxu0
  %v6628 = vadd.f32 %v6299, %v6627
  %6629 = vmatmul.bf16.gmra.mxu0 %v3451
  %v6630 = vpop.f32.mrf.mxu0
  %v6631 = vadd.f32 %v6302, %v6630
  %v6632 = vpop.f32.mrf.mxu0
  %v6633 = vadd.f32 %v6304, %v6632
  %6634 = vmatmul.bf16.gmra.mxu0 %v3459
  %v6635 = vpop.f32.mrf.mxu0
  %v6636 = vadd.f32 %v6307, %v6635
  %v6637 = vpop.f32.mrf.mxu0
  %v6638 = vadd.f32 %v6309, %v6637
  %6639 = vmatmul.bf16.gmra.mxu0 %v3467
  %v6640 = vpop.f32.mrf.mxu0
  %v6641 = vadd.f32 %v6312, %v6640
  %v6642 = vpop.f32.mrf.mxu0
  %v6643 = vadd.f32 %v6314, %v6642
  %6644 = vmatmul.bf16.gmra.mxu0 %v3475
  %v6645 = vpop.f32.mrf.mxu0
  %v6646 = vadd.f32 %v6317, %v6645
  %v6647 = vpop.f32.mrf.mxu0
  %v6648 = vadd.f32 %v6319, %v6647
  %6649 = vmatmul.bf16.gmra.mxu0 %v3483
  %v6650 = vpop.f32.mrf.mxu0
  %v6651 = vadd.f32 %v6322, %v6650
  %v6652 = vpop.f32.mrf.mxu0
  %v6653 = vadd.f32 %v6324, %v6652
  %6654 = vmatmul.bf16.gmra.mxu0 %v3491
  %v6655 = vpop.f32.mrf.mxu0
  %v6656 = vadd.f32 %v6327, %v6655
  %v6657 = vpop.f32.mrf.mxu0
  %v6658 = vadd.f32 %v6329, %v6657
  %6659 = vmatmul.bf16.gmra.mxu0 %v3499
  %v6660 = vpop.f32.mrf.mxu0
  %v6661 = vadd.f32 %v6332, %v6660
  %v6662 = vpop.f32.mrf.mxu0
  %v6663 = vadd.f32 %v6334, %v6662
  %6664 = vmatmul.bf16.gmra.mxu0 %v3507
  %v6665 = vpop.f32.mrf.mxu0
  %v6666 = vadd.f32 %v6337, %v6665
  %v6667 = vpop.f32.mrf.mxu0
  %v6668 = vadd.f32 %v6339, %v6667
  %6669 = vmatmul.bf16.gmra.mxu0 %v3515
  %v6670 = vpop.f32.mrf.mxu0
  %v6671 = vadd.f32 %v6342, %v6670
  %v6672 = vpop.f32.mrf.mxu0
  %v6673 = vadd.f32 %v6344, %v6672
  %6674 = vmatmul.bf16.gmra.mxu0 %v3523
  %v6675 = vpop.f32.mrf.mxu0
  %v6676 = vadd.f32 %v6347, %v6675
  %v6677 = vpop.f32.mrf.mxu0
  %v6678 = vadd.f32 %v6349, %v6677
  %6679 = vmatmul.bf16.gmra.mxu0 %v3531
  %v6680 = vpop.f32.mrf.mxu0
  %v6681 = vadd.f32 %v6352, %v6680
  %v6682 = vpop.f32.mrf.mxu0
  %v6683 = vadd.f32 %v6354, %v6682
  %6684 = vmatmul.bf16.gmra.mxu0 %v3539
  %v6685 = vpop.f32.mrf.mxu0
  %v6686 = vadd.f32 %v6357, %v6685
  %v6687 = vpop.f32.mrf.mxu0
  %v6688 = vadd.f32 %v6359, %v6687
  %6689 = vmatmul.bf16.gmra.mxu0 %v3547
  %v6690 = vpop.f32.mrf.mxu0
  %v6691 = vadd.f32 %v6362, %v6690
  %v6692 = vpop.f32.mrf.mxu0
  %v6693 = vadd.f32 %v6364, %v6692
  %6694 = vmatmul.bf16.gmra.mxu0 %v3555
  %v6695 = vpop.f32.mrf.mxu0
  %v6696 = vadd.f32 %v6367, %v6695
  %v6697 = vpop.f32.mrf.mxu0
  %v6698 = vadd.f32 %v6369, %v6697
  %6699 = vdwg.mxu0
  %v6700 = vmax.f32 %v6381, 0.0
  %v6701 = vmax.f32 %v6383, 0.0
  %v6702 = vmax.f32 %v6386, 0.0
  %v6703 = vmax.f32 %v6388, 0.0
  %v6704 = vmax.f32 %v6391, 0.0
  %v6705 = vmax.f32 %v6393, 0.0
  %v6706 = vmax.f32 %v6396, 0.0
  %v6707 = vmax.f32 %v6398, 0.0
  %v6708 = vmax.f32 %v6401, 0.0
  %v6709 = vmax.f32 %v6403, 0.0
  %v6710 = vmax.f32 %v6406, 0.0
  %v6711 = vmax.f32 %v6408, 0.0
  %v6712 = vmax.f32 %v6411, 0.0
  %v6713 = vmax.f32 %v6413, 0.0
  %v6714 = vmax.f32 %v6416, 0.0
  %v6715 = vmax.f32 %v6418, 0.0
  %v6716 = vmax.f32 %v6421, 0.0
  %v6717 = vmax.f32 %v6423, 0.0
  %v6718 = vmax.f32 %v6426, 0.0
  %v6719 = vmax.f32 %v6428, 0.0
  %v6720 = vmax.f32 %v6431, 0.0
  %v6721 = vmax.f32 %v6433, 0.0
  %v6722 = vmax.f32 %v6436, 0.0
  %v6723 = vmax.f32 %v6438, 0.0
  %v6724 = vmax.f32 %v6441, 0.0
  %v6725 = vmax.f32 %v6443, 0.0
  %v6726 = vmax.f32 %v6446, 0.0
  %v6727 = vmax.f32 %v6448, 0.0
  %v6728 = vmax.f32 %v6451, 0.0
  %v6729 = vmax.f32 %v6453, 0.0
  %v6730 = vmax.f32 %v6456, 0.0
  %v6731 = vmax.f32 %v6458, 0.0
  %v6732 = vmax.f32 %v6461, 0.0
  %v6733 = vmax.f32 %v6463, 0.0
  %v6734 = vmax.f32 %v6466, 0.0
  %v6735 = vmax.f32 %v6468, 0.0
  %v6736 = vmax.f32 %v6471, 0.0
  %v6737 = vmax.f32 %v6473, 0.0
  %v6738 = vmax.f32 %v6476, 0.0
  %v6739 = vmax.f32 %v6478, 0.0
  %v6740 = vmax.f32 %v6481, 0.0
  %v6741 = vmax.f32 %v6483, 0.0
  %v6742 = vmax.f32 %v6486, 0.0
  %v6743 = vmax.f32 %v6488, 0.0
  %v6744 = vmax.f32 %v6491, 0.0
  %v6745 = vmax.f32 %v6493, 0.0
  %v6746 = vmax.f32 %v6496, 0.0
  %v6747 = vmax.f32 %v6498, 0.0
  %v6748 = vmax.f32 %v6501, 0.0
  %v6749 = vmax.f32 %v6503, 0.0
  %v6750 = vmax.f32 %v6506, 0.0
  %v6751 = vmax.f32 %v6508, 0.0
  %v6752 = vmax.f32 %v6511, 0.0
  %v6753 = vmax.f32 %v6513, 0.0
  %v6754 = vmax.f32 %v6516, 0.0
  %v6755 = vmax.f32 %v6518, 0.0
  %v6756 = vmax.f32 %v6521, 0.0
  %v6757 = vmax.f32 %v6523, 0.0
  %v6758 = vmax.f32 %v6526, 0.0
  %v6759 = vmax.f32 %v6528, 0.0
  %v6760 = vmax.f32 %v6531, 0.0
  %v6761 = vmax.f32 %v6533, 0.0
  %v6762 = vmax.f32 %v6536, 0.0
  %v6763 = vmax.f32 %v6538, 0.0
  %v6764 = vmax.f32 %v6541, 0.0
  %v6765 = vmax.f32 %v6543, 0.0
  %v6766 = vmax.f32 %v6546, 0.0
  %v6767 = vmax.f32 %v6548, 0.0
  %v6768 = vmax.f32 %v6551, 0.0
  %v6769 = vmax.f32 %v6553, 0.0
  %v6770 = vmax.f32 %v6556, 0.0
  %v6771 = vmax.f32 %v6558, 0.0
  %v6772 = vmax.f32 %v6561, 0.0
  %v6773 = vmax.f32 %v6563, 0.0
  %v6774 = vmax.f32 %v6566, 0.0
  %v6775 = vmax.f32 %v6568, 0.0
  %v6776 = vmax.f32 %v6571, 0.0
  %v6777 = vmax.f32 %v6573, 0.0
  %v6778 = vmax.f32 %v6576, 0.0
  %v6779 = vmax.f32 %v6578, 0.0
  %v6780 = vmax.f32 %v6581, 0.0
  %v6781 = vmax.f32 %v6583, 0.0
  %v6782 = vmax.f32 %v6586, 0.0
  %v6783 = vmax.f32 %v6588, 0.0
  %v6784 = vmax.f32 %v6591, 0.0
  %v6785 = vmax.f32 %v6593, 0.0
  %v6786 = vmax.f32 %v6596, 0.0
  %v6787 = vmax.f32 %v6598, 0.0
  %v6788 = vmax.f32 %v6601, 0.0
  %v6789 = vmax.f32 %v6603, 0.0
  %v6790 = vmax.f32 %v6606, 0.0
  %v6791 = vmax.f32 %v6608, 0.0
  %v6792 = vmax.f32 %v6611, 0.0
  %v6793 = vmax.f32 %v6613, 0.0
  %v6794 = vmax.f32 %v6616, 0.0
  %v6795 = vmax.f32 %v6618, 0.0
  %v6796 = vmax.f32 %v6621, 0.0
  %v6797 = vmax.f32 %v6623, 0.0
  %v6798 = vmax.f32 %v6626, 0.0
  %v6799 = vmax.f32 %v6628, 0.0
  %v6800 = vmax.f32 %v6631, 0.0
  %v6801 = vmax.f32 %v6633, 0.0
  %v6802 = vmax.f32 %v6636, 0.0
  %v6803 = vmax.f32 %v6638, 0.0
  %v6804 = vmax.f32 %v6641, 0.0
  %v6805 = vmax.f32 %v6643, 0.0
  %v6806 = vmax.f32 %v6646, 0.0
  %v6807 = vmax.f32 %v6648, 0.0
  %v6808 = vmax.f32 %v6651, 0.0
  %v6809 = vmax.f32 %v6653, 0.0
  %v6810 = vmax.f32 %v6656, 0.0
  %v6811 = vmax.f32 %v6658, 0.0
  %v6812 = vmax.f32 %v6661, 0.0
  %v6813 = vmax.f32 %v6663, 0.0
  %v6814 = vmax.f32 %v6666, 0.0
  %v6815 = vmax.f32 %v6668, 0.0
  %v6816 = vmax.f32 %v6671, 0.0
  %v6817 = vmax.f32 %v6673, 0.0
  %v6818 = vmax.f32 %v6676, 0.0
  %v6819 = vmax.f32 %v6678, 0.0
  %v6820 = vmax.f32 %v6681, 0.0
  %v6821 = vmax.f32 %v6683, 0.0
  %v6822 = vmax.f32 %v6686, 0.0
  %v6823 = vmax.f32 %v6688, 0.0
  %v6824 = vmax.f32 %v6691, 0.0
  %v6825 = vmax.f32 %v6693, 0.0
  %v6826 = vmax.f32 %v6696, 0.0
  %v6827 = vmax.f32 %v6698, 0.0
  %v6828 = vpack.c.bf16 %v6701, %v6700
  %v6829 = vpack.c.bf16 %v6703, %v6702
  %v6830 = vpack.c.bf16 %v6705, %v6704
  %v6831 = vpack.c.bf16 %v6707, %v6706
  %v6832 = vpack.c.bf16 %v6709, %v6708
  %v6833 = vpack.c.bf16 %v6711, %v6710
  %v6834 = vpack.c.bf16 %v6713, %v6712
  %v6835 = vpack.c.bf16 %v6715, %v6714
  %v6836 = vpack.c.bf16 %v6717, %v6716
  %v6837 = vpack.c.bf16 %v6719, %v6718
  %v6838 = vpack.c.bf16 %v6721, %v6720
  %v6839 = vpack.c.bf16 %v6723, %v6722
  %v6840 = vpack.c.bf16 %v6725, %v6724
  %v6841 = vpack.c.bf16 %v6727, %v6726
  %v6842 = vpack.c.bf16 %v6729, %v6728
  %v6843 = vpack.c.bf16 %v6731, %v6730
  %v6844 = vpack.c.bf16 %v6733, %v6732
  %v6845 = vpack.c.bf16 %v6735, %v6734
  %v6846 = vpack.c.bf16 %v6737, %v6736
  %v6847 = vpack.c.bf16 %v6739, %v6738
  %v6848 = vpack.c.bf16 %v6741, %v6740
  %v6849 = vpack.c.bf16 %v6743, %v6742
  %v6850 = vpack.c.bf16 %v6745, %v6744
  %v6851 = vpack.c.bf16 %v6747, %v6746
  %v6852 = vpack.c.bf16 %v6749, %v6748
  %v6853 = vpack.c.bf16 %v6751, %v6750
  %v6854 = vpack.c.bf16 %v6753, %v6752
  %v6855 = vpack.c.bf16 %v6755, %v6754
  %v6856 = vpack.c.bf16 %v6757, %v6756
  %v6857 = vpack.c.bf16 %v6759, %v6758
  %v6858 = vpack.c.bf16 %v6761, %v6760
  %v6859 = vpack.c.bf16 %v6763, %v6762
  %v6860 = vpack.c.bf16 %v6765, %v6764
  %v6861 = vpack.c.bf16 %v6767, %v6766
  %v6862 = vpack.c.bf16 %v6769, %v6768
  %v6863 = vpack.c.bf16 %v6771, %v6770
  %v6864 = vpack.c.bf16 %v6773, %v6772
  %v6865 = vpack.c.bf16 %v6775, %v6774
  %v6866 = vpack.c.bf16 %v6777, %v6776
  %v6867 = vpack.c.bf16 %v6779, %v6778
  %v6868 = vpack.c.bf16 %v6781, %v6780
  %v6869 = vpack.c.bf16 %v6783, %v6782
  %v6870 = vpack.c.bf16 %v6785, %v6784
  %v6871 = vpack.c.bf16 %v6787, %v6786
  %v6872 = vpack.c.bf16 %v6789, %v6788
  %v6873 = vpack.c.bf16 %v6791, %v6790
  %v6874 = vpack.c.bf16 %v6793, %v6792
  %v6875 = vpack.c.bf16 %v6795, %v6794
  %v6876 = vpack.c.bf16 %v6797, %v6796
  %v6877 = vpack.c.bf16 %v6799, %v6798
  %v6878 = vpack.c.bf16 %v6801, %v6800
  %v6879 = vpack.c.bf16 %v6803, %v6802
  %v6880 = vpack.c.bf16 %v6805, %v6804
  %v6881 = vpack.c.bf16 %v6807, %v6806
  %v6882 = vpack.c.bf16 %v6809, %v6808
  %v6883 = vpack.c.bf16 %v6811, %v6810
  %v6884 = vpack.c.bf16 %v6813, %v6812
  %v6885 = vpack.c.bf16 %v6815, %v6814
  %v6886 = vpack.c.bf16 %v6817, %v6816
  %v6887 = vpack.c.bf16 %v6819, %v6818
  %v6888 = vpack.c.bf16 %v6821, %v6820
  %v6889 = vpack.c.bf16 %v6823, %v6822
  %v6890 = vpack.c.bf16 %v6825, %v6824
  %v6891 = vpack.c.bf16 %v6827, %v6826
  %v6892 = vld [vmem:[%s4] sm:$0xf]
  %v6893 = vld [vmem:[%s4 + $0x4] sm:$0xf]
  %v6894 = vld [vmem:[%s4 + $0x8] sm:$0xf]
  %v6895 = vld [vmem:[%s4 + $0xc] sm:$0xf]
  %v6896 = vld [vmem:[%s4 + $0x10] sm:$0xf]
  %v6897 = vld [vmem:[%s4 + $0x14] sm:$0xf]
  %v6898 = vld [vmem:[%s4 + $0x18] sm:$0xf]
  %v6899 = vld [vmem:[%s4 + $0x1c] sm:$0xf]
  %v6900 = vld [vmem:[%s4 + $0x20] sm:$0xf]
  %v6901 = vld [vmem:[%s4 + $0x24] sm:$0xf]
  %v6902 = vld [vmem:[%s4 + $0x28] sm:$0xf]
  %v6903 = vld [vmem:[%s4 + $0x2c] sm:$0xf]
  %v6904 = vld [vmem:[%s4 + $0x30] sm:$0xf]
  %v6905 = vld [vmem:[%s4 + $0x34] sm:$0xf]
  %v6906 = vld [vmem:[%s4 + $0x38] sm:$0xf]
  %v6907 = vld [vmem:[%s4 + $0x3c] sm:$0xf]
  %v6924 = vunpack.c.l.b16 %v6892
  %v6925 = vunpack.c.l.b16 %v6893
  %v6926 = vunpack.c.l.b16 %v6894
  %v6927 = vunpack.c.l.b16 %v6895
  %v6928 = vunpack.c.l.b16 %v6896
  %v6929 = vunpack.c.l.b16 %v6897
  %v6930 = vunpack.c.l.b16 %v6898
  %v6931 = vunpack.c.l.b16 %v6899
  %v6932 = vunpack.c.l.b16 %v6900
  %v6933 = vunpack.c.l.b16 %v6901
  %v6934 = vunpack.c.l.b16 %v6902
  %v6935 = vunpack.c.l.b16 %v6903
  %v6936 = vunpack.c.l.b16 %v6904
  %v6937 = vunpack.c.l.b16 %v6905
  %v6938 = vunpack.c.l.b16 %v6906
  %v6939 = vunpack.c.l.b16 %v6907
  %v6940 = vpack.c.b16 %v6925, %v6924
  %v6941 = vpack.c.b16 %v6927, %v6926
  %v6942 = vpack.c.b16 %v6929, %v6928
  %v6943 = vpack.c.b16 %v6931, %v6930
  %v6944 = vpack.c.b16 %v6933, %v6932
  %v6945 = vpack.c.b16 %v6935, %v6934
  %v6946 = vpack.c.b16 %v6937, %v6936
  %v6947 = vpack.c.b16 %v6939, %v6938
  %6956 = vmatpush.bf16.msra.mxu0 %v6947
  %6957 = vmatpush.bf16.msra.mxu0 %v6946
  %6958 = vmatpush.bf16.msra.mxu0 %v6945
  %6959 = vmatpush.bf16.msra.mxu0 %v6944
  %6960 = vmatpush.bf16.msra.mxu0 %v6943
  %6961 = vmatpush.bf16.msra.mxu0 %v6942
  %6962 = vmatpush.bf16.msra.mxu0 %v6941
  %6963 = vmatpush.bf16.msra.mxu0 %v6940
  %6964 = vmatmul.bf16.gmra.mxu0 %v6828
  %v6965 = vpop.f32.mrf.mxu0
  %v6966 = vadd.f32 0.0, %v6965
  %v6967 = vpop.f32.mrf.mxu0
  %v6968 = vadd.f32 0.0, %v6967
  %6969 = vmatmul.bf16.gmra.mxu0 %v6829
  %v6970 = vpop.f32.mrf.mxu0
  %v6971 = vadd.f32 0.0, %v6970
  %v6972 = vpop.f32.mrf.mxu0
  %v6973 = vadd.f32 0.0, %v6972
  %6974 = vmatmul.bf16.gmra.mxu0 %v6830
  %v6975 = vpop.f32.mrf.mxu0
  %v6976 = vadd.f32 0.0, %v6975
  %v6977 = vpop.f32.mrf.mxu0
  %v6978 = vadd.f32 0.0, %v6977
  %6979 = vmatmul.bf16.gmra.mxu0 %v6831
  %v6980 = vpop.f32.mrf.mxu0
  %v6981 = vadd.f32 0.0, %v6980
  %v6982 = vpop.f32.mrf.mxu0
  %v6983 = vadd.f32 0.0, %v6982
  %6984 = vmatmul.bf16.gmra.mxu0 %v6832
  %v6985 = vpop.f32.mrf.mxu0
  %v6986 = vadd.f32 0.0, %v6985
  %v6987 = vpop.f32.mrf.mxu0
  %v6988 = vadd.f32 0.0, %v6987
  %6989 = vmatmul.bf16.gmra.mxu0 %v6833
  %v6990 = vpop.f32.mrf.mxu0
  %v6991 = vadd.f32 0.0, %v6990
  %v6992 = vpop.f32.mrf.mxu0
  %v6993 = vadd.f32 0.0, %v6992
  %6994 = vmatmul.bf16.gmra.mxu0 %v6834
  %v6995 = vpop.f32.mrf.mxu0
  %v6996 = vadd.f32 0.0, %v6995
  %v6997 = vpop.f32.mrf.mxu0
  %v6998 = vadd.f32 0.0, %v6997
  %6999 = vmatmul.bf16.gmra.mxu0 %v6835
  %v7000 = vpop.f32.mrf.mxu0
  %v7001 = vadd.f32 0.0, %v7000
  %v7002 = vpop.f32.mrf.mxu0
  %v7003 = vadd.f32 0.0, %v7002
  %7004 = vmatmul.bf16.gmra.mxu0 %v6836
  %v7005 = vpop.f32.mrf.mxu0
  %v7006 = vadd.f32 0.0, %v7005
  %v7007 = vpop.f32.mrf.mxu0
  %v7008 = vadd.f32 0.0, %v7007
  %7009 = vmatmul.bf16.gmra.mxu0 %v6837
  %v7010 = vpop.f32.mrf.mxu0
  %v7011 = vadd.f32 0.0, %v7010
  %v7012 = vpop.f32.mrf.mxu0
  %v7013 = vadd.f32 0.0, %v7012
  %7014 = vmatmul.bf16.gmra.mxu0 %v6838
  %v7015 = vpop.f32.mrf.mxu0
  %v7016 = vadd.f32 0.0, %v7015
  %v7017 = vpop.f32.mrf.mxu0
  %v7018 = vadd.f32 0.0, %v7017
  %7019 = vmatmul.bf16.gmra.mxu0 %v6839
  %v7020 = vpop.f32.mrf.mxu0
  %v7021 = vadd.f32 0.0, %v7020
  %v7022 = vpop.f32.mrf.mxu0
  %v7023 = vadd.f32 0.0, %v7022
  %7024 = vmatmul.bf16.gmra.mxu0 %v6840
  %v7025 = vpop.f32.mrf.mxu0
  %v7026 = vadd.f32 0.0, %v7025
  %v7027 = vpop.f32.mrf.mxu0
  %v7028 = vadd.f32 0.0, %v7027
  %7029 = vmatmul.bf16.gmra.mxu0 %v6841
  %v7030 = vpop.f32.mrf.mxu0
  %v7031 = vadd.f32 0.0, %v7030
  %v7032 = vpop.f32.mrf.mxu0
  %v7033 = vadd.f32 0.0, %v7032
  %7034 = vmatmul.bf16.gmra.mxu0 %v6842
  %v7035 = vpop.f32.mrf.mxu0
  %v7036 = vadd.f32 0.0, %v7035
  %v7037 = vpop.f32.mrf.mxu0
  %v7038 = vadd.f32 0.0, %v7037
  %7039 = vmatmul.bf16.gmra.mxu0 %v6843
  %v7040 = vpop.f32.mrf.mxu0
  %v7041 = vadd.f32 0.0, %v7040
  %v7042 = vpop.f32.mrf.mxu0
  %v7043 = vadd.f32 0.0, %v7042
  %7044 = vmatmul.bf16.gmra.mxu0 %v6844
  %v7045 = vpop.f32.mrf.mxu0
  %v7046 = vadd.f32 0.0, %v7045
  %v7047 = vpop.f32.mrf.mxu0
  %v7048 = vadd.f32 0.0, %v7047
  %7049 = vmatmul.bf16.gmra.mxu0 %v6845
  %v7050 = vpop.f32.mrf.mxu0
  %v7051 = vadd.f32 0.0, %v7050
  %v7052 = vpop.f32.mrf.mxu0
  %v7053 = vadd.f32 0.0, %v7052
  %7054 = vmatmul.bf16.gmra.mxu0 %v6846
  %v7055 = vpop.f32.mrf.mxu0
  %v7056 = vadd.f32 0.0, %v7055
  %v7057 = vpop.f32.mrf.mxu0
  %v7058 = vadd.f32 0.0, %v7057
  %7059 = vmatmul.bf16.gmra.mxu0 %v6847
  %v7060 = vpop.f32.mrf.mxu0
  %v7061 = vadd.f32 0.0, %v7060
  %v7062 = vpop.f32.mrf.mxu0
  %v7063 = vadd.f32 0.0, %v7062
  %7064 = vmatmul.bf16.gmra.mxu0 %v6848
  %v7065 = vpop.f32.mrf.mxu0
  %v7066 = vadd.f32 0.0, %v7065
  %v7067 = vpop.f32.mrf.mxu0
  %v7068 = vadd.f32 0.0, %v7067
  %7069 = vmatmul.bf16.gmra.mxu0 %v6849
  %v7070 = vpop.f32.mrf.mxu0
  %v7071 = vadd.f32 0.0, %v7070
  %v7072 = vpop.f32.mrf.mxu0
  %v7073 = vadd.f32 0.0, %v7072
  %7074 = vmatmul.bf16.gmra.mxu0 %v6850
  %v7075 = vpop.f32.mrf.mxu0
  %v7076 = vadd.f32 0.0, %v7075
  %v7077 = vpop.f32.mrf.mxu0
  %v7078 = vadd.f32 0.0, %v7077
  %7079 = vmatmul.bf16.gmra.mxu0 %v6851
  %v7080 = vpop.f32.mrf.mxu0
  %v7081 = vadd.f32 0.0, %v7080
  %v7082 = vpop.f32.mrf.mxu0
  %v7083 = vadd.f32 0.0, %v7082
  %7084 = vmatmul.bf16.gmra.mxu0 %v6852
  %v7085 = vpop.f32.mrf.mxu0
  %v7086 = vadd.f32 0.0, %v7085
  %v7087 = vpop.f32.mrf.mxu0
  %v7088 = vadd.f32 0.0, %v7087
  %7089 = vmatmul.bf16.gmra.mxu0 %v6853
  %v7090 = vpop.f32.mrf.mxu0
  %v7091 = vadd.f32 0.0, %v7090
  %v7092 = vpop.f32.mrf.mxu0
  %v7093 = vadd.f32 0.0, %v7092
  %7094 = vmatmul.bf16.gmra.mxu0 %v6854
  %v7095 = vpop.f32.mrf.mxu0
  %v7096 = vadd.f32 0.0, %v7095
  %v7097 = vpop.f32.mrf.mxu0
  %v7098 = vadd.f32 0.0, %v7097
  %7099 = vmatmul.bf16.gmra.mxu0 %v6855
  %v7100 = vpop.f32.mrf.mxu0
  %v7101 = vadd.f32 0.0, %v7100
  %v7102 = vpop.f32.mrf.mxu0
  %v7103 = vadd.f32 0.0, %v7102
  %7104 = vmatmul.bf16.gmra.mxu0 %v6856
  %v7105 = vpop.f32.mrf.mxu0
  %v7106 = vadd.f32 0.0, %v7105
  %v7107 = vpop.f32.mrf.mxu0
  %v7108 = vadd.f32 0.0, %v7107
  %7109 = vmatmul.bf16.gmra.mxu0 %v6857
  %v7110 = vpop.f32.mrf.mxu0
  %v7111 = vadd.f32 0.0, %v7110
  %v7112 = vpop.f32.mrf.mxu0
  %v7113 = vadd.f32 0.0, %v7112
  %7114 = vmatmul.bf16.gmra.mxu0 %v6858
  %v7115 = vpop.f32.mrf.mxu0
  %v7116 = vadd.f32 0.0, %v7115
  %v7117 = vpop.f32.mrf.mxu0
  %v7118 = vadd.f32 0.0, %v7117
  %7119 = vmatmul.bf16.gmra.mxu0 %v6859
  %v7120 = vpop.f32.mrf.mxu0
  %v7121 = vadd.f32 0.0, %v7120
  %v7122 = vpop.f32.mrf.mxu0
  %v7123 = vadd.f32 0.0, %v7122
  %7124 = vmatmul.bf16.gmra.mxu0 %v6860
  %v7125 = vpop.f32.mrf.mxu0
  %v7126 = vadd.f32 0.0, %v7125
  %v7127 = vpop.f32.mrf.mxu0
  %v7128 = vadd.f32 0.0, %v7127
  %7129 = vmatmul.bf16.gmra.mxu0 %v6861
  %v7130 = vpop.f32.mrf.mxu0
  %v7131 = vadd.f32 0.0, %v7130
  %v7132 = vpop.f32.mrf.mxu0
  %v7133 = vadd.f32 0.0, %v7132
  %7134 = vmatmul.bf16.gmra.mxu0 %v6862
  %v7135 = vpop.f32.mrf.mxu0
  %v7136 = vadd.f32 0.0, %v7135
  %v7137 = vpop.f32.mrf.mxu0
  %v7138 = vadd.f32 0.0, %v7137
  %7139 = vmatmul.bf16.gmra.mxu0 %v6863
  %v7140 = vpop.f32.mrf.mxu0
  %v7141 = vadd.f32 0.0, %v7140
  %v7142 = vpop.f32.mrf.mxu0
  %v7143 = vadd.f32 0.0, %v7142
  %7144 = vmatmul.bf16.gmra.mxu0 %v6864
  %v7145 = vpop.f32.mrf.mxu0
  %v7146 = vadd.f32 0.0, %v7145
  %v7147 = vpop.f32.mrf.mxu0
  %v7148 = vadd.f32 0.0, %v7147
  %7149 = vmatmul.bf16.gmra.mxu0 %v6865
  %v7150 = vpop.f32.mrf.mxu0
  %v7151 = vadd.f32 0.0, %v7150
  %v7152 = vpop.f32.mrf.mxu0
  %v7153 = vadd.f32 0.0, %v7152
  %7154 = vmatmul.bf16.gmra.mxu0 %v6866
  %v7155 = vpop.f32.mrf.mxu0
  %v7156 = vadd.f32 0.0, %v7155
  %v7157 = vpop.f32.mrf.mxu0
  %v7158 = vadd.f32 0.0, %v7157
  %7159 = vmatmul.bf16.gmra.mxu0 %v6867
  %v7160 = vpop.f32.mrf.mxu0
  %v7161 = vadd.f32 0.0, %v7160
  %v7162 = vpop.f32.mrf.mxu0
  %v7163 = vadd.f32 0.0, %v7162
  %7164 = vmatmul.bf16.gmra.mxu0 %v6868
  %v7165 = vpop.f32.mrf.mxu0
  %v7166 = vadd.f32 0.0, %v7165
  %v7167 = vpop.f32.mrf.mxu0
  %v7168 = vadd.f32 0.0, %v7167
  %7169 = vmatmul.bf16.gmra.mxu0 %v6869
  %v7170 = vpop.f32.mrf.mxu0
  %v7171 = vadd.f32 0.0, %v7170
  %v7172 = vpop.f32.mrf.mxu0
  %v7173 = vadd.f32 0.0, %v7172
  %7174 = vmatmul.bf16.gmra.mxu0 %v6870
  %v7175 = vpop.f32.mrf.mxu0
  %v7176 = vadd.f32 0.0, %v7175
  %v7177 = vpop.f32.mrf.mxu0
  %v7178 = vadd.f32 0.0, %v7177
  %7179 = vmatmul.bf16.gmra.mxu0 %v6871
  %v7180 = vpop.f32.mrf.mxu0
  %v7181 = vadd.f32 0.0, %v7180
  %v7182 = vpop.f32.mrf.mxu0
  %v7183 = vadd.f32 0.0, %v7182
  %7184 = vmatmul.bf16.gmra.mxu0 %v6872
  %v7185 = vpop.f32.mrf.mxu0
  %v7186 = vadd.f32 0.0, %v7185
  %v7187 = vpop.f32.mrf.mxu0
  %v7188 = vadd.f32 0.0, %v7187
  %7189 = vmatmul.bf16.gmra.mxu0 %v6873
  %v7190 = vpop.f32.mrf.mxu0
  %v7191 = vadd.f32 0.0, %v7190
  %v7192 = vpop.f32.mrf.mxu0
  %v7193 = vadd.f32 0.0, %v7192
  %7194 = vmatmul.bf16.gmra.mxu0 %v6874
  %v7195 = vpop.f32.mrf.mxu0
  %v7196 = vadd.f32 0.0, %v7195
  %v7197 = vpop.f32.mrf.mxu0
  %v7198 = vadd.f32 0.0, %v7197
  %7199 = vmatmul.bf16.gmra.mxu0 %v6875
  %v7200 = vpop.f32.mrf.mxu0
  %v7201 = vadd.f32 0.0, %v7200
  %v7202 = vpop.f32.mrf.mxu0
  %v7203 = vadd.f32 0.0, %v7202
  %7204 = vmatmul.bf16.gmra.mxu0 %v6876
  %v7205 = vpop.f32.mrf.mxu0
  %v7206 = vadd.f32 0.0, %v7205
  %v7207 = vpop.f32.mrf.mxu0
  %v7208 = vadd.f32 0.0, %v7207
  %7209 = vmatmul.bf16.gmra.mxu0 %v6877
  %v7210 = vpop.f32.mrf.mxu0
  %v7211 = vadd.f32 0.0, %v7210
  %v7212 = vpop.f32.mrf.mxu0
  %v7213 = vadd.f32 0.0, %v7212
  %7214 = vmatmul.bf16.gmra.mxu0 %v6878
  %v7215 = vpop.f32.mrf.mxu0
  %v7216 = vadd.f32 0.0, %v7215
  %v7217 = vpop.f32.mrf.mxu0
  %v7218 = vadd.f32 0.0, %v7217
  %7219 = vmatmul.bf16.gmra.mxu0 %v6879
  %v7220 = vpop.f32.mrf.mxu0
  %v7221 = vadd.f32 0.0, %v7220
  %v7222 = vpop.f32.mrf.mxu0
  %v7223 = vadd.f32 0.0, %v7222
  %7224 = vmatmul.bf16.gmra.mxu0 %v6880
  %v7225 = vpop.f32.mrf.mxu0
  %v7226 = vadd.f32 0.0, %v7225
  %v7227 = vpop.f32.mrf.mxu0
  %v7228 = vadd.f32 0.0, %v7227
  %7229 = vmatmul.bf16.gmra.mxu0 %v6881
  %v7230 = vpop.f32.mrf.mxu0
  %v7231 = vadd.f32 0.0, %v7230
  %v7232 = vpop.f32.mrf.mxu0
  %v7233 = vadd.f32 0.0, %v7232
  %7234 = vmatmul.bf16.gmra.mxu0 %v6882
  %v7235 = vpop.f32.mrf.mxu0
  %v7236 = vadd.f32 0.0, %v7235
  %v7237 = vpop.f32.mrf.mxu0
  %v7238 = vadd.f32 0.0, %v7237
  %7239 = vmatmul.bf16.gmra.mxu0 %v6883
  %v7240 = vpop.f32.mrf.mxu0
  %v7241 = vadd.f32 0.0, %v7240
  %v7242 = vpop.f32.mrf.mxu0
  %v7243 = vadd.f32 0.0, %v7242
  %7244 = vmatmul.bf16.gmra.mxu0 %v6884
  %v7245 = vpop.f32.mrf.mxu0
  %v7246 = vadd.f32 0.0, %v7245
  %v7247 = vpop.f32.mrf.mxu0
  %v7248 = vadd.f32 0.0, %v7247
  %7249 = vmatmul.bf16.gmra.mxu0 %v6885
  %v7250 = vpop.f32.mrf.mxu0
  %v7251 = vadd.f32 0.0, %v7250
  %v7252 = vpop.f32.mrf.mxu0
  %v7253 = vadd.f32 0.0, %v7252
  %7254 = vmatmul.bf16.gmra.mxu0 %v6886
  %v7255 = vpop.f32.mrf.mxu0
  %v7256 = vadd.f32 0.0, %v7255
  %v7257 = vpop.f32.mrf.mxu0
  %v7258 = vadd.f32 0.0, %v7257
  %7259 = vmatmul.bf16.gmra.mxu0 %v6887
  %v7260 = vpop.f32.mrf.mxu0
  %v7261 = vadd.f32 0.0, %v7260
  %v7262 = vpop.f32.mrf.mxu0
  %v7263 = vadd.f32 0.0, %v7262
  %7264 = vmatmul.bf16.gmra.mxu0 %v6888
  %v7265 = vpop.f32.mrf.mxu0
  %v7266 = vadd.f32 0.0, %v7265
  %v7267 = vpop.f32.mrf.mxu0
  %v7268 = vadd.f32 0.0, %v7267
  %7269 = vmatmul.bf16.gmra.mxu0 %v6889
  %v7270 = vpop.f32.mrf.mxu0
  %v7271 = vadd.f32 0.0, %v7270
  %v7272 = vpop.f32.mrf.mxu0
  %v7273 = vadd.f32 0.0, %v7272
  %7274 = vmatmul.bf16.gmra.mxu0 %v6890
  %v7275 = vpop.f32.mrf.mxu0
  %v7276 = vadd.f32 0.0, %v7275
  %v7277 = vpop.f32.mrf.mxu0
  %v7278 = vadd.f32 0.0, %v7277
  %7279 = vmatmul.bf16.gmra.mxu0 %v6891
  %v7280 = vpop.f32.mrf.mxu0
  %v7281 = vadd.f32 0.0, %v7280
  %v7282 = vpop.f32.mrf.mxu0
  %v7283 = vadd.f32 0.0, %v7282
  %7284 = vdwg.mxu0
  %v7285 = vpack.c.bf16 %v6968, %v6966
  %v7286 = vpack.c.bf16 %v6973, %v6971
  %v7287 = vpack.c.bf16 %v6978, %v6976
  %v7288 = vpack.c.bf16 %v6983, %v6981
  %v7289 = vpack.c.bf16 %v6988, %v6986
  %v7290 = vpack.c.bf16 %v6993, %v6991
  %v7291 = vpack.c.bf16 %v6998, %v6996
  %v7292 = vpack.c.bf16 %v7003, %v7001
  %v7293 = vpack.c.bf16 %v7008, %v7006
  %v7294 = vpack.c.bf16 %v7013, %v7011
  %v7295 = vpack.c.bf16 %v7018, %v7016
  %v7296 = vpack.c.bf16 %v7023, %v7021
  %v7297 = vpack.c.bf16 %v7028, %v7026
  %v7298 = vpack.c.bf16 %v7033, %v7031
  %v7299 = vpack.c.bf16 %v7038, %v7036
  %v7300 = vpack.c.bf16 %v7043, %v7041
  %v7301 = vpack.c.bf16 %v7048, %v7046
  %v7302 = vpack.c.bf16 %v7053, %v7051
  %v7303 = vpack.c.bf16 %v7058, %v7056
  %v7304 = vpack.c.bf16 %v7063, %v7061
  %v7305 = vpack.c.bf16 %v7068, %v7066
  %v7306 = vpack.c.bf16 %v7073, %v7071
  %v7307 = vpack.c.bf16 %v7078, %v7076
  %v7308 = vpack.c.bf16 %v7083, %v7081
  %v7309 = vpack.c.bf16 %v7088, %v7086
  %v7310 = vpack.c.bf16 %v7093, %v7091
  %v7311 = vpack.c.bf16 %v7098, %v7096
  %v7312 = vpack.c.bf16 %v7103, %v7101
  %v7313 = vpack.c.bf16 %v7108, %v7106
  %v7314 = vpack.c.bf16 %v7113, %v7111
  %v7315 = vpack.c.bf16 %v7118, %v7116
  %v7316 = vpack.c.bf16 %v7123, %v7121
  %v7317 = vpack.c.bf16 %v7128, %v7126
  %v7318 = vpack.c.bf16 %v7133, %v7131
  %v7319 = vpack.c.bf16 %v7138, %v7136
  %v7320 = vpack.c.bf16 %v7143, %v7141
  %v7321 = vpack.c.bf16 %v7148, %v7146
  %v7322 = vpack.c.bf16 %v7153, %v7151
  %v7323 = vpack.c.bf16 %v7158, %v7156
  %v7324 = vpack.c.bf16 %v7163, %v7161
  %v7325 = vpack.c.bf16 %v7168, %v7166
  %v7326 = vpack.c.bf16 %v7173, %v7171
  %v7327 = vpack.c.bf16 %v7178, %v7176
  %v7328 = vpack.c.bf16 %v7183, %v7181
  %v7329 = vpack.c.bf16 %v7188, %v7186
  %v7330 = vpack.c.bf16 %v7193, %v7191
  %v7331 = vpack.c.bf16 %v7198, %v7196
  %v7332 = vpack.c.bf16 %v7203, %v7201
  %v7333 = vpack.c.bf16 %v7208, %v7206
  %v7334 = vpack.c.bf16 %v7213, %v7211
  %v7335 = vpack.c.bf16 %v7218, %v7216
  %v7336 = vpack.c.bf16 %v7223, %v7221
  %v7337 = vpack.c.bf16 %v7228, %v7226
  %v7338 = vpack.c.bf16 %v7233, %v7231
  %v7339 = vpack.c.bf16 %v7238, %v7236
  %v7340 = vpack.c.bf16 %v7243, %v7241
  %v7341 = vpack.c.bf16 %v7248, %v7246
  %v7342 = vpack.c.bf16 %v7253, %v7251
  %v7343 = vpack.c.bf16 %v7258, %v7256
  %v7344 = vpack.c.bf16 %v7263, %v7261
  %v7345 = vpack.c.bf16 %v7268, %v7266
  %v7346 = vpack.c.bf16 %v7273, %v7271
  %v7347 = vpack.c.bf16 %v7278, %v7276
  %v7348 = vpack.c.bf16 %v7283, %v7281
  %v7349 = vld [vmem:[%s5] sm:$0x1]
  %v7351 = vperm.slane %v7349, 0
  %7353 = vmatpush.bf16.msra.mxu0 %v7292
  %7354 = vmatpush.bf16.msra.mxu0 %v7291
  %7355 = vmatpush.bf16.msra.mxu0 %v7290
  %7356 = vmatpush.bf16.msra.mxu0 %v7289
  %7357 = vmatpush.bf16.msra.mxu0 %v7288
  %7358 = vmatpush.bf16.msra.mxu0 %v7287
  %7359 = vmatpush.bf16.msra.mxu0 %v7286
  %7360 = vmatpush.bf16.msra.mxu0 %v7285
  %7361 = vmatmul.bf16.gmra.mxu0 %v3044
  %v7362 = vpop.f32.mrf.mxu0
  %v7363 = vadd.f32 %v7351, %v7362
  %v7364 = vpop.f32.mrf.mxu0
  %v7365 = vadd.f32 %v7351, %v7364
  %7366 = vmatmul.bf16.gmra.mxu0 %v3052
  %v7367 = vpop.f32.mrf.mxu0
  %v7368 = vadd.f32 %v7351, %v7367
  %v7369 = vpop.f32.mrf.mxu0
  %v7370 = vadd.f32 %v7351, %v7369
  %7371 = vmatmul.bf16.gmra.mxu0 %v3060
  %v7372 = vpop.f32.mrf.mxu0
  %v7373 = vadd.f32 %v7351, %v7372
  %v7374 = vpop.f32.mrf.mxu0
  %v7375 = vadd.f32 %v7351, %v7374
  %7376 = vmatmul.bf16.gmra.mxu0 %v3068
  %v7377 = vpop.f32.mrf.mxu0
  %v7378 = vadd.f32 %v7351, %v7377
  %v7379 = vpop.f32.mrf.mxu0
  %v7380 = vadd.f32 %v7351, %v7379
  %7381 = vmatmul.bf16.gmra.mxu0 %v3076
  %v7382 = vpop.f32.mrf.mxu0
  %v7383 = vadd.f32 %v7351, %v7382
  %v7384 = vpop.f32.mrf.mxu0
  %v7385 = vadd.f32 %v7351, %v7384
  %7386 = vmatmul.bf16.gmra.mxu0 %v3084
  %v7387 = vpop.f32.mrf.mxu0
  %v7388 = vadd.f32 %v7351, %v7387
  %v7389 = vpop.f32.mrf.mxu0
  %v7390 = vadd.f32 %v7351, %v7389
  %7391 = vmatmul.bf16.gmra.mxu0 %v3092
  %v7392 = vpop.f32.mrf.mxu0
  %v7393 = vadd.f32 %v7351, %v7392
  %v7394 = vpop.f32.mrf.mxu0
  %v7395 = vadd.f32 %v7351, %v7394
  %7396 = vmatmul.bf16.gmra.mxu0 %v3100
  %v7397 = vpop.f32.mrf.mxu0
  %v7398 = vadd.f32 %v7351, %v7397
  %v7399 = vpop.f32.mrf.mxu0
  %v7400 = vadd.f32 %v7351, %v7399
  %7401 = vmatmul.bf16.gmra.mxu0 %v3108
  %v7402 = vpop.f32.mrf.mxu0
  %v7403 = vadd.f32 %v7351, %v7402
  %v7404 = vpop.f32.mrf.mxu0
  %v7405 = vadd.f32 %v7351, %v7404
  %7406 = vmatmul.bf16.gmra.mxu0 %v3116
  %v7407 = vpop.f32.mrf.mxu0
  %v7408 = vadd.f32 %v7351, %v7407
  %v7409 = vpop.f32.mrf.mxu0
  %v7410 = vadd.f32 %v7351, %v7409
  %7411 = vmatmul.bf16.gmra.mxu0 %v3124
  %v7412 = vpop.f32.mrf.mxu0
  %v7413 = vadd.f32 %v7351, %v7412
  %v7414 = vpop.f32.mrf.mxu0
  %v7415 = vadd.f32 %v7351, %v7414
  %7416 = vmatmul.bf16.gmra.mxu0 %v3132
  %v7417 = vpop.f32.mrf.mxu0
  %v7418 = vadd.f32 %v7351, %v7417
  %v7419 = vpop.f32.mrf.mxu0
  %v7420 = vadd.f32 %v7351, %v7419
  %7421 = vmatmul.bf16.gmra.mxu0 %v3140
  %v7422 = vpop.f32.mrf.mxu0
  %v7423 = vadd.f32 %v7351, %v7422
  %v7424 = vpop.f32.mrf.mxu0
  %v7425 = vadd.f32 %v7351, %v7424
  %7426 = vmatmul.bf16.gmra.mxu0 %v3148
  %v7427 = vpop.f32.mrf.mxu0
  %v7428 = vadd.f32 %v7351, %v7427
  %v7429 = vpop.f32.mrf.mxu0
  %v7430 = vadd.f32 %v7351, %v7429
  %7431 = vmatmul.bf16.gmra.mxu0 %v3156
  %v7432 = vpop.f32.mrf.mxu0
  %v7433 = vadd.f32 %v7351, %v7432
  %v7434 = vpop.f32.mrf.mxu0
  %v7435 = vadd.f32 %v7351, %v7434
  %7436 = vmatmul.bf16.gmra.mxu0 %v3164
  %v7437 = vpop.f32.mrf.mxu0
  %v7438 = vadd.f32 %v7351, %v7437
  %v7439 = vpop.f32.mrf.mxu0
  %v7440 = vadd.f32 %v7351, %v7439
  %7441 = vmatmul.bf16.gmra.mxu0 %v3172
  %v7442 = vpop.f32.mrf.mxu0
  %v7443 = vadd.f32 %v7351, %v7442
  %v7444 = vpop.f32.mrf.mxu0
  %v7445 = vadd.f32 %v7351, %v7444
  %7446 = vmatmul.bf16.gmra.mxu0 %v3180
  %v7447 = vpop.f32.mrf.mxu0
  %v7448 = vadd.f32 %v7351, %v7447
  %v7449 = vpop.f32.mrf.mxu0
  %v7450 = vadd.f32 %v7351, %v7449
  %7451 = vmatmul.bf16.gmra.mxu0 %v3188
  %v7452 = vpop.f32.mrf.mxu0
  %v7453 = vadd.f32 %v7351, %v7452
  %v7454 = vpop.f32.mrf.mxu0
  %v7455 = vadd.f32 %v7351, %v7454
  %7456 = vmatmul.bf16.gmra.mxu0 %v3196
  %v7457 = vpop.f32.mrf.mxu0
  %v7458 = vadd.f32 %v7351, %v7457
  %v7459 = vpop.f32.mrf.mxu0
  %v7460 = vadd.f32 %v7351, %v7459
  %7461 = vmatmul.bf16.gmra.mxu0 %v3204
  %v7462 = vpop.f32.mrf.mxu0
  %v7463 = vadd.f32 %v7351, %v7462
  %v7464 = vpop.f32.mrf.mxu0
  %v7465 = vadd.f32 %v7351, %v7464
  %7466 = vmatmul.bf16.gmra.mxu0 %v3212
  %v7467 = vpop.f32.mrf.mxu0
  %v7468 = vadd.f32 %v7351, %v7467
  %v7469 = vpop.f32.mrf.mxu0
  %v7470 = vadd.f32 %v7351, %v7469
  %7471 = vmatmul.bf16.gmra.mxu0 %v3220
  %v7472 = vpop.f32.mrf.mxu0
  %v7473 = vadd.f32 %v7351, %v7472
  %v7474 = vpop.f32.mrf.mxu0
  %v7475 = vadd.f32 %v7351, %v7474
  %7476 = vmatmul.bf16.gmra.mxu0 %v3228
  %v7477 = vpop.f32.mrf.mxu0
  %v7478 = vadd.f32 %v7351, %v7477
  %v7479 = vpop.f32.mrf.mxu0
  %v7480 = vadd.f32 %v7351, %v7479
  %7481 = vmatmul.bf16.gmra.mxu0 %v3236
  %v7482 = vpop.f32.mrf.mxu0
  %v7483 = vadd.f32 %v7351, %v7482
  %v7484 = vpop.f32.mrf.mxu0
  %v7485 = vadd.f32 %v7351, %v7484
  %7486 = vmatmul.bf16.gmra.mxu0 %v3244
  %v7487 = vpop.f32.mrf.mxu0
  %v7488 = vadd.f32 %v7351, %v7487
  %v7489 = vpop.f32.mrf.mxu0
  %v7490 = vadd.f32 %v7351, %v7489
  %7491 = vmatmul.bf16.gmra.mxu0 %v3252
  %v7492 = vpop.f32.mrf.mxu0
  %v7493 = vadd.f32 %v7351, %v7492
  %v7494 = vpop.f32.mrf.mxu0
  %v7495 = vadd.f32 %v7351, %v7494
  %7496 = vmatmul.bf16.gmra.mxu0 %v3260
  %v7497 = vpop.f32.mrf.mxu0
  %v7498 = vadd.f32 %v7351, %v7497
  %v7499 = vpop.f32.mrf.mxu0
  %v7500 = vadd.f32 %v7351, %v7499
  %7501 = vmatmul.bf16.gmra.mxu0 %v3268
  %v7502 = vpop.f32.mrf.mxu0
  %v7503 = vadd.f32 %v7351, %v7502
  %v7504 = vpop.f32.mrf.mxu0
  %v7505 = vadd.f32 %v7351, %v7504
  %7506 = vmatmul.bf16.gmra.mxu0 %v3276
  %v7507 = vpop.f32.mrf.mxu0
  %v7508 = vadd.f32 %v7351, %v7507
  %v7509 = vpop.f32.mrf.mxu0
  %v7510 = vadd.f32 %v7351, %v7509
  %7511 = vmatmul.bf16.gmra.mxu0 %v3284
  %v7512 = vpop.f32.mrf.mxu0
  %v7513 = vadd.f32 %v7351, %v7512
  %v7514 = vpop.f32.mrf.mxu0
  %v7515 = vadd.f32 %v7351, %v7514
  %7516 = vmatmul.bf16.gmra.mxu0 %v3292
  %v7517 = vpop.f32.mrf.mxu0
  %v7518 = vadd.f32 %v7351, %v7517
  %v7519 = vpop.f32.mrf.mxu0
  %v7520 = vadd.f32 %v7351, %v7519
  %7521 = vmatmul.bf16.gmra.mxu0 %v3300
  %v7522 = vpop.f32.mrf.mxu0
  %v7523 = vadd.f32 %v7351, %v7522
  %v7524 = vpop.f32.mrf.mxu0
  %v7525 = vadd.f32 %v7351, %v7524
  %7526 = vmatmul.bf16.gmra.mxu0 %v3308
  %v7527 = vpop.f32.mrf.mxu0
  %v7528 = vadd.f32 %v7351, %v7527
  %v7529 = vpop.f32.mrf.mxu0
  %v7530 = vadd.f32 %v7351, %v7529
  %7531 = vmatmul.bf16.gmra.mxu0 %v3316
  %v7532 = vpop.f32.mrf.mxu0
  %v7533 = vadd.f32 %v7351, %v7532
  %v7534 = vpop.f32.mrf.mxu0
  %v7535 = vadd.f32 %v7351, %v7534
  %7536 = vmatmul.bf16.gmra.mxu0 %v3324
  %v7537 = vpop.f32.mrf.mxu0
  %v7538 = vadd.f32 %v7351, %v7537
  %v7539 = vpop.f32.mrf.mxu0
  %v7540 = vadd.f32 %v7351, %v7539
  %7541 = vmatmul.bf16.gmra.mxu0 %v3332
  %v7542 = vpop.f32.mrf.mxu0
  %v7543 = vadd.f32 %v7351, %v7542
  %v7544 = vpop.f32.mrf.mxu0
  %v7545 = vadd.f32 %v7351, %v7544
  %7546 = vmatmul.bf16.gmra.mxu0 %v3340
  %v7547 = vpop.f32.mrf.mxu0
  %v7548 = vadd.f32 %v7351, %v7547
  %v7549 = vpop.f32.mrf.mxu0
  %v7550 = vadd.f32 %v7351, %v7549
  %7551 = vmatmul.bf16.gmra.mxu0 %v3348
  %v7552 = vpop.f32.mrf.mxu0
  %v7553 = vadd.f32 %v7351, %v7552
  %v7554 = vpop.f32.mrf.mxu0
  %v7555 = vadd.f32 %v7351, %v7554
  %7556 = vmatmul.bf16.gmra.mxu0 %v3356
  %v7557 = vpop.f32.mrf.mxu0
  %v7558 = vadd.f32 %v7351, %v7557
  %v7559 = vpop.f32.mrf.mxu0
  %v7560 = vadd.f32 %v7351, %v7559
  %7561 = vmatmul.bf16.gmra.mxu0 %v3364
  %v7562 = vpop.f32.mrf.mxu0
  %v7563 = vadd.f32 %v7351, %v7562
  %v7564 = vpop.f32.mrf.mxu0
  %v7565 = vadd.f32 %v7351, %v7564
  %7566 = vmatmul.bf16.gmra.mxu0 %v3372
  %v7567 = vpop.f32.mrf.mxu0
  %v7568 = vadd.f32 %v7351, %v7567
  %v7569 = vpop.f32.mrf.mxu0
  %v7570 = vadd.f32 %v7351, %v7569
  %7571 = vmatmul.bf16.gmra.mxu0 %v3380
  %v7572 = vpop.f32.mrf.mxu0
  %v7573 = vadd.f32 %v7351, %v7572
  %v7574 = vpop.f32.mrf.mxu0
  %v7575 = vadd.f32 %v7351, %v7574
  %7576 = vmatmul.bf16.gmra.mxu0 %v3388
  %v7577 = vpop.f32.mrf.mxu0
  %v7578 = vadd.f32 %v7351, %v7577
  %v7579 = vpop.f32.mrf.mxu0
  %v7580 = vadd.f32 %v7351, %v7579
  %7581 = vmatmul.bf16.gmra.mxu0 %v3396
  %v7582 = vpop.f32.mrf.mxu0
  %v7583 = vadd.f32 %v7351, %v7582
  %v7584 = vpop.f32.mrf.mxu0
  %v7585 = vadd.f32 %v7351, %v7584
  %7586 = vmatmul.bf16.gmra.mxu0 %v3404
  %v7587 = vpop.f32.mrf.mxu0
  %v7588 = vadd.f32 %v7351, %v7587
  %v7589 = vpop.f32.mrf.mxu0
  %v7590 = vadd.f32 %v7351, %v7589
  %7591 = vmatmul.bf16.gmra.mxu0 %v3412
  %v7592 = vpop.f32.mrf.mxu0
  %v7593 = vadd.f32 %v7351, %v7592
  %v7594 = vpop.f32.mrf.mxu0
  %v7595 = vadd.f32 %v7351, %v7594
  %7596 = vmatmul.bf16.gmra.mxu0 %v3420
  %v7597 = vpop.f32.mrf.mxu0
  %v7598 = vadd.f32 %v7351, %v7597
  %v7599 = vpop.f32.mrf.mxu0
  %v7600 = vadd.f32 %v7351, %v7599
  %7601 = vmatmul.bf16.gmra.mxu0 %v3428
  %v7602 = vpop.f32.mrf.mxu0
  %v7603 = vadd.f32 %v7351, %v7602
  %v7604 = vpop.f32.mrf.mxu0
  %v7605 = vadd.f32 %v7351, %v7604
  %7606 = vmatmul.bf16.gmra.mxu0 %v3436
  %v7607 = vpop.f32.mrf.mxu0
  %v7608 = vadd.f32 %v7351, %v7607
  %v7609 = vpop.f32.mrf.mxu0
  %v7610 = vadd.f32 %v7351, %v7609
  %7611 = vmatmul.bf16.gmra.mxu0 %v3444
  %v7612 = vpop.f32.mrf.mxu0
  %v7613 = vadd.f32 %v7351, %v7612
  %v7614 = vpop.f32.mrf.mxu0
  %v7615 = vadd.f32 %v7351, %v7614
  %7616 = vmatmul.bf16.gmra.mxu0 %v3452
  %v7617 = vpop.f32.mrf.mxu0
  %v7618 = vadd.f32 %v7351, %v7617
  %v7619 = vpop.f32.mrf.mxu0
  %v7620 = vadd.f32 %v7351, %v7619
  %7621 = vmatmul.bf16.gmra.mxu0 %v3460
  %v7622 = vpop.f32.mrf.mxu0
  %v7623 = vadd.f32 %v7351, %v7622
  %v7624 = vpop.f32.mrf.mxu0
  %v7625 = vadd.f32 %v7351, %v7624
  %7626 = vmatmul.bf16.gmra.mxu0 %v3468
  %v7627 = vpop.f32.mrf.mxu0
  %v7628 = vadd.f32 %v7351, %v7627
  %v7629 = vpop.f32.mrf.mxu0
  %v7630 = vadd.f32 %v7351, %v7629
  %7631 = vmatmul.bf16.gmra.mxu0 %v3476
  %v7632 = vpop.f32.mrf.mxu0
  %v7633 = vadd.f32 %v7351, %v7632
  %v7634 = vpop.f32.mrf.mxu0
  %v7635 = vadd.f32 %v7351, %v7634
  %7636 = vmatmul.bf16.gmra.mxu0 %v3484
  %v7637 = vpop.f32.mrf.mxu0
  %v7638 = vadd.f32 %v7351, %v7637
  %v7639 = vpop.f32.mrf.mxu0
  %v7640 = vadd.f32 %v7351, %v7639
  %7641 = vmatmul.bf16.gmra.mxu0 %v3492
  %v7642 = vpop.f32.mrf.mxu0
  %v7643 = vadd.f32 %v7351, %v7642
  %v7644 = vpop.f32.mrf.mxu0
  %v7645 = vadd.f32 %v7351, %v7644
  %7646 = vmatmul.bf16.gmra.mxu0 %v3500
  %v7647 = vpop.f32.mrf.mxu0
  %v7648 = vadd.f32 %v7351, %v7647
  %v7649 = vpop.f32.mrf.mxu0
  %v7650 = vadd.f32 %v7351, %v7649
  %7651 = vmatmul.bf16.gmra.mxu0 %v3508
  %v7652 = vpop.f32.mrf.mxu0
  %v7653 = vadd.f32 %v7351, %v7652
  %v7654 = vpop.f32.mrf.mxu0
  %v7655 = vadd.f32 %v7351, %v7654
  %7656 = vmatmul.bf16.gmra.mxu0 %v3516
  %v7657 = vpop.f32.mrf.mxu0
  %v7658 = vadd.f32 %v7351, %v7657
  %v7659 = vpop.f32.mrf.mxu0
  %v7660 = vadd.f32 %v7351, %v7659
  %7661 = vmatmul.bf16.gmra.mxu0 %v3524
  %v7662 = vpop.f32.mrf.mxu0
  %v7663 = vadd.f32 %v7351, %v7662
  %v7664 = vpop.f32.mrf.mxu0
  %v7665 = vadd.f32 %v7351, %v7664
  %7666 = vmatmul.bf16.gmra.mxu0 %v3532
  %v7667 = vpop.f32.mrf.mxu0
  %v7668 = vadd.f32 %v7351, %v7667
  %v7669 = vpop.f32.mrf.mxu0
  %v7670 = vadd.f32 %v7351, %v7669
  %7671 = vmatmul.bf16.gmra.mxu0 %v3540
  %v7672 = vpop.f32.mrf.mxu0
  %v7673 = vadd.f32 %v7351, %v7672
  %v7674 = vpop.f32.mrf.mxu0
  %v7675 = vadd.f32 %v7351, %v7674
  %7676 = vmatmul.bf16.gmra.mxu0 %v3548
  %v7677 = vpop.f32.mrf.mxu0
  %v7678 = vadd.f32 %v7351, %v7677
  %v7679 = vpop.f32.mrf.mxu0
  %v7680 = vadd.f32 %v7351, %v7679
  %7681 = vdwg.mxu0
  %7682 = vmatpush.bf16.msra.mxu0 %v7300
  %7683 = vmatpush.bf16.msra.mxu0 %v7299
  %7684 = vmatpush.bf16.msra.mxu0 %v7298
  %7685 = vmatpush.bf16.msra.mxu0 %v7297
  %7686 = vmatpush.bf16.msra.mxu0 %v7296
  %7687 = vmatpush.bf16.msra.mxu0 %v7295
  %7688 = vmatpush.bf16.msra.mxu0 %v7294
  %7689 = vmatpush.bf16.msra.mxu0 %v7293
  %7690 = vmatmul.bf16.gmra.mxu0 %v3045
  %v7691 = vpop.f32.mrf.mxu0
  %v7692 = vadd.f32 %v7363, %v7691
  %v7693 = vpop.f32.mrf.mxu0
  %v7694 = vadd.f32 %v7365, %v7693
  %7695 = vmatmul.bf16.gmra.mxu0 %v3053
  %v7696 = vpop.f32.mrf.mxu0
  %v7697 = vadd.f32 %v7368, %v7696
  %v7698 = vpop.f32.mrf.mxu0
  %v7699 = vadd.f32 %v7370, %v7698
  %7700 = vmatmul.bf16.gmra.mxu0 %v3061
  %v7701 = vpop.f32.mrf.mxu0
  %v7702 = vadd.f32 %v7373, %v7701
  %v7703 = vpop.f32.mrf.mxu0
  %v7704 = vadd.f32 %v7375, %v7703
  %7705 = vmatmul.bf16.gmra.mxu0 %v3069
  %v7706 = vpop.f32.mrf.mxu0
  %v7707 = vadd.f32 %v7378, %v7706
  %v7708 = vpop.f32.mrf.mxu0
  %v7709 = vadd.f32 %v7380, %v7708
  %7710 = vmatmul.bf16.gmra.mxu0 %v3077
  %v7711 = vpop.f32.mrf.mxu0
  %v7712 = vadd.f32 %v7383, %v7711
  %v7713 = vpop.f32.mrf.mxu0
  %v7714 = vadd.f32 %v7385, %v7713
  %7715 = vmatmul.bf16.gmra.mxu0 %v3085
  %v7716 = vpop.f32.mrf.mxu0
  %v7717 = vadd.f32 %v7388, %v7716
  %v7718 = vpop.f32.mrf.mxu0
  %v7719 = vadd.f32 %v7390, %v7718
  %7720 = vmatmul.bf16.gmra.mxu0 %v3093
  %v7721 = vpop.f32.mrf.mxu0
  %v7722 = vadd.f32 %v7393, %v7721
  %v7723 = vpop.f32.mrf.mxu0
  %v7724 = vadd.f32 %v7395, %v7723
  %7725 = vmatmul.bf16.gmra.mxu0 %v3101
  %v7726 = vpop.f32.mrf.mxu0
  %v7727 = vadd.f32 %v7398, %v7726
  %v7728 = vpop.f32.mrf.mxu0
  %v7729 = vadd.f32 %v7400, %v7728
  %7730 = vmatmul.bf16.gmra.mxu0 %v3109
  %v7731 = vpop.f32.mrf.mxu0
  %v7732 = vadd.f32 %v7403, %v7731
  %v7733 = vpop.f32.mrf.mxu0
  %v7734 = vadd.f32 %v7405, %v7733
  %7735 = vmatmul.bf16.gmra.mxu0 %v3117
  %v7736 = vpop.f32.mrf.mxu0
  %v7737 = vadd.f32 %v7408, %v7736
  %v7738 = vpop.f32.mrf.mxu0
  %v7739 = vadd.f32 %v7410, %v7738
  %7740 = vmatmul.bf16.gmra.mxu0 %v3125
  %v7741 = vpop.f32.mrf.mxu0
  %v7742 = vadd.f32 %v7413, %v7741
  %v7743 = vpop.f32.mrf.mxu0
  %v7744 = vadd.f32 %v7415, %v7743
  %7745 = vmatmul.bf16.gmra.mxu0 %v3133
  %v7746 = vpop.f32.mrf.mxu0
  %v7747 = vadd.f32 %v7418, %v7746
  %v7748 = vpop.f32.mrf.mxu0
  %v7749 = vadd.f32 %v7420, %v7748
  %7750 = vmatmul.bf16.gmra.mxu0 %v3141
  %v7751 = vpop.f32.mrf.mxu0
  %v7752 = vadd.f32 %v7423, %v7751
  %v7753 = vpop.f32.mrf.mxu0
  %v7754 = vadd.f32 %v7425, %v7753
  %7755 = vmatmul.bf16.gmra.mxu0 %v3149
  %v7756 = vpop.f32.mrf.mxu0
  %v7757 = vadd.f32 %v7428, %v7756
  %v7758 = vpop.f32.mrf.mxu0
  %v7759 = vadd.f32 %v7430, %v7758
  %7760 = vmatmul.bf16.gmra.mxu0 %v3157
  %v7761 = vpop.f32.mrf.mxu0
  %v7762 = vadd.f32 %v7433, %v7761
  %v7763 = vpop.f32.mrf.mxu0
  %v7764 = vadd.f32 %v7435, %v7763
  %7765 = vmatmul.bf16.gmra.mxu0 %v3165
  %v7766 = vpop.f32.mrf.mxu0
  %v7767 = vadd.f32 %v7438, %v7766
  %v7768 = vpop.f32.mrf.mxu0
  %v7769 = vadd.f32 %v7440, %v7768
  %7770 = vmatmul.bf16.gmra.mxu0 %v3173
  %v7771 = vpop.f32.mrf.mxu0
  %v7772 = vadd.f32 %v7443, %v7771
  %v7773 = vpop.f32.mrf.mxu0
  %v7774 = vadd.f32 %v7445, %v7773
  %7775 = vmatmul.bf16.gmra.mxu0 %v3181
  %v7776 = vpop.f32.mrf.mxu0
  %v7777 = vadd.f32 %v7448, %v7776
  %v7778 = vpop.f32.mrf.mxu0
  %v7779 = vadd.f32 %v7450, %v7778
  %7780 = vmatmul.bf16.gmra.mxu0 %v3189
  %v7781 = vpop.f32.mrf.mxu0
  %v7782 = vadd.f32 %v7453, %v7781
  %v7783 = vpop.f32.mrf.mxu0
  %v7784 = vadd.f32 %v7455, %v7783
  %7785 = vmatmul.bf16.gmra.mxu0 %v3197
  %v7786 = vpop.f32.mrf.mxu0
  %v7787 = vadd.f32 %v7458, %v7786
  %v7788 = vpop.f32.mrf.mxu0
  %v7789 = vadd.f32 %v7460, %v7788
  %7790 = vmatmul.bf16.gmra.mxu0 %v3205
  %v7791 = vpop.f32.mrf.mxu0
  %v7792 = vadd.f32 %v7463, %v7791
  %v7793 = vpop.f32.mrf.mxu0
  %v7794 = vadd.f32 %v7465, %v7793
  %7795 = vmatmul.bf16.gmra.mxu0 %v3213
  %v7796 = vpop.f32.mrf.mxu0
  %v7797 = vadd.f32 %v7468, %v7796
  %v7798 = vpop.f32.mrf.mxu0
  %v7799 = vadd.f32 %v7470, %v7798
  %7800 = vmatmul.bf16.gmra.mxu0 %v3221
  %v7801 = vpop.f32.mrf.mxu0
  %v7802 = vadd.f32 %v7473, %v7801
  %v7803 = vpop.f32.mrf.mxu0
  %v7804 = vadd.f32 %v7475, %v7803
  %7805 = vmatmul.bf16.gmra.mxu0 %v3229
  %v7806 = vpop.f32.mrf.mxu0
  %v7807 = vadd.f32 %v7478, %v7806
  %v7808 = vpop.f32.mrf.mxu0
  %v7809 = vadd.f32 %v7480, %v7808
  %7810 = vmatmul.bf16.gmra.mxu0 %v3237
  %v7811 = vpop.f32.mrf.mxu0
  %v7812 = vadd.f32 %v7483, %v7811
  %v7813 = vpop.f32.mrf.mxu0
  %v7814 = vadd.f32 %v7485, %v7813
  %7815 = vmatmul.bf16.gmra.mxu0 %v3245
  %v7816 = vpop.f32.mrf.mxu0
  %v7817 = vadd.f32 %v7488, %v7816
  %v7818 = vpop.f32.mrf.mxu0
  %v7819 = vadd.f32 %v7490, %v7818
  %7820 = vmatmul.bf16.gmra.mxu0 %v3253
  %v7821 = vpop.f32.mrf.mxu0
  %v7822 = vadd.f32 %v7493, %v7821
  %v7823 = vpop.f32.mrf.mxu0
  %v7824 = vadd.f32 %v7495, %v7823
  %7825 = vmatmul.bf16.gmra.mxu0 %v3261
  %v7826 = vpop.f32.mrf.mxu0
  %v7827 = vadd.f32 %v7498, %v7826
  %v7828 = vpop.f32.mrf.mxu0
  %v7829 = vadd.f32 %v7500, %v7828
  %7830 = vmatmul.bf16.gmra.mxu0 %v3269
  %v7831 = vpop.f32.mrf.mxu0
  %v7832 = vadd.f32 %v7503, %v7831
  %v7833 = vpop.f32.mrf.mxu0
  %v7834 = vadd.f32 %v7505, %v7833
  %7835 = vmatmul.bf16.gmra.mxu0 %v3277
  %v7836 = vpop.f32.mrf.mxu0
  %v7837 = vadd.f32 %v7508, %v7836
  %v7838 = vpop.f32.mrf.mxu0
  %v7839 = vadd.f32 %v7510, %v7838
  %7840 = vmatmul.bf16.gmra.mxu0 %v3285
  %v7841 = vpop.f32.mrf.mxu0
  %v7842 = vadd.f32 %v7513, %v7841
  %v7843 = vpop.f32.mrf.mxu0
  %v7844 = vadd.f32 %v7515, %v7843
  %7845 = vmatmul.bf16.gmra.mxu0 %v3293
  %v7846 = vpop.f32.mrf.mxu0
  %v7847 = vadd.f32 %v7518, %v7846
  %v7848 = vpop.f32.mrf.mxu0
  %v7849 = vadd.f32 %v7520, %v7848
  %7850 = vmatmul.bf16.gmra.mxu0 %v3301
  %v7851 = vpop.f32.mrf.mxu0
  %v7852 = vadd.f32 %v7523, %v7851
  %v7853 = vpop.f32.mrf.mxu0
  %v7854 = vadd.f32 %v7525, %v7853
  %7855 = vmatmul.bf16.gmra.mxu0 %v3309
  %v7856 = vpop.f32.mrf.mxu0
  %v7857 = vadd.f32 %v7528, %v7856
  %v7858 = vpop.f32.mrf.mxu0
  %v7859 = vadd.f32 %v7530, %v7858
  %7860 = vmatmul.bf16.gmra.mxu0 %v3317
  %v7861 = vpop.f32.mrf.mxu0
  %v7862 = vadd.f32 %v7533, %v7861
  %v7863 = vpop.f32.mrf.mxu0
  %v7864 = vadd.f32 %v7535, %v7863
  %7865 = vmatmul.bf16.gmra.mxu0 %v3325
  %v7866 = vpop.f32.mrf.mxu0
  %v7867 = vadd.f32 %v7538, %v7866
  %v7868 = vpop.f32.mrf.mxu0
  %v7869 = vadd.f32 %v7540, %v7868
  %7870 = vmatmul.bf16.gmra.mxu0 %v3333
  %v7871 = vpop.f32.mrf.mxu0
  %v7872 = vadd.f32 %v7543, %v7871
  %v7873 = vpop.f32.mrf.mxu0
  %v7874 = vadd.f32 %v7545, %v7873
  %7875 = vmatmul.bf16.gmra.mxu0 %v3341
  %v7876 = vpop.f32.mrf.mxu0
  %v7877 = vadd.f32 %v7548, %v7876
  %v7878 = vpop.f32.mrf.mxu0
  %v7879 = vadd.f32 %v7550, %v7878
  %7880 = vmatmul.bf16.gmra.mxu0 %v3349
  %v7881 = vpop.f32.mrf.mxu0
  %v7882 = vadd.f32 %v7553, %v7881
  %v7883 = vpop.f32.mrf.mxu0
  %v7884 = vadd.f32 %v7555, %v7883
  %7885 = vmatmul.bf16.gmra.mxu0 %v3357
  %v7886 = vpop.f32.mrf.mxu0
  %v7887 = vadd.f32 %v7558, %v7886
  %v7888 = vpop.f32.mrf.mxu0
  %v7889 = vadd.f32 %v7560, %v7888
  %7890 = vmatmul.bf16.gmra.mxu0 %v3365
  %v7891 = vpop.f32.mrf.mxu0
  %v7892 = vadd.f32 %v7563, %v7891
  %v7893 = vpop.f32.mrf.mxu0
  %v7894 = vadd.f32 %v7565, %v7893
  %7895 = vmatmul.bf16.gmra.mxu0 %v3373
  %v7896 = vpop.f32.mrf.mxu0
  %v7897 = vadd.f32 %v7568, %v7896
  %v7898 = vpop.f32.mrf.mxu0
  %v7899 = vadd.f32 %v7570, %v7898
  %7900 = vmatmul.bf16.gmra.mxu0 %v3381
  %v7901 = vpop.f32.mrf.mxu0
  %v7902 = vadd.f32 %v7573, %v7901
  %v7903 = vpop.f32.mrf.mxu0
  %v7904 = vadd.f32 %v7575, %v7903
  %7905 = vmatmul.bf16.gmra.mxu0 %v3389
  %v7906 = vpop.f32.mrf.mxu0
  %v7907 = vadd.f32 %v7578, %v7906
  %v7908 = vpop.f32.mrf.mxu0
  %v7909 = vadd.f32 %v7580, %v7908
  %7910 = vmatmul.bf16.gmra.mxu0 %v3397
  %v7911 = vpop.f32.mrf.mxu0
  %v7912 = vadd.f32 %v7583, %v7911
  %v7913 = vpop.f32.mrf.mxu0
  %v7914 = vadd.f32 %v7585, %v7913
  %7915 = vmatmul.bf16.gmra.mxu0 %v3405
  %v7916 = vpop.f32.mrf.mxu0
  %v7917 = vadd.f32 %v7588, %v7916
  %v7918 = vpop.f32.mrf.mxu0
  %v7919 = vadd.f32 %v7590, %v7918
  %7920 = vmatmul.bf16.gmra.mxu0 %v3413
  %v7921 = vpop.f32.mrf.mxu0
  %v7922 = vadd.f32 %v7593, %v7921
  %v7923 = vpop.f32.mrf.mxu0
  %v7924 = vadd.f32 %v7595, %v7923
  %7925 = vmatmul.bf16.gmra.mxu0 %v3421
  %v7926 = vpop.f32.mrf.mxu0
  %v7927 = vadd.f32 %v7598, %v7926
  %v7928 = vpop.f32.mrf.mxu0
  %v7929 = vadd.f32 %v7600, %v7928
  %7930 = vmatmul.bf16.gmra.mxu0 %v3429
  %v7931 = vpop.f32.mrf.mxu0
  %v7932 = vadd.f32 %v7603, %v7931
  %v7933 = vpop.f32.mrf.mxu0
  %v7934 = vadd.f32 %v7605, %v7933
  %7935 = vmatmul.bf16.gmra.mxu0 %v3437
  %v7936 = vpop.f32.mrf.mxu0
  %v7937 = vadd.f32 %v7608, %v7936
  %v7938 = vpop.f32.mrf.mxu0
  %v7939 = vadd.f32 %v7610, %v7938
  %7940 = vmatmul.bf16.gmra.mxu0 %v3445
  %v7941 = vpop.f32.mrf.mxu0
  %v7942 = vadd.f32 %v7613, %v7941
  %v7943 = vpop.f32.mrf.mxu0
  %v7944 = vadd.f32 %v7615, %v7943
  %7945 = vmatmul.bf16.gmra.mxu0 %v3453
  %v7946 = vpop.f32.mrf.mxu0
  %v7947 = vadd.f32 %v7618, %v7946
  %v7948 = vpop.f32.mrf.mxu0
  %v7949 = vadd.f32 %v7620, %v7948
  %7950 = vmatmul.bf16.gmra.mxu0 %v3461
  %v7951 = vpop.f32.mrf.mxu0
  %v7952 = vadd.f32 %v7623, %v7951
  %v7953 = vpop.f32.mrf.mxu0
  %v7954 = vadd.f32 %v7625, %v7953
  %7955 = vmatmul.bf16.gmra.mxu0 %v3469
  %v7956 = vpop.f32.mrf.mxu0
  %v7957 = vadd.f32 %v7628, %v7956
  %v7958 = vpop.f32.mrf.mxu0
  %v7959 = vadd.f32 %v7630, %v7958
  %7960 = vmatmul.bf16.gmra.mxu0 %v3477
  %v7961 = vpop.f32.mrf.mxu0
  %v7962 = vadd.f32 %v7633, %v7961
  %v7963 = vpop.f32.mrf.mxu0
  %v7964 = vadd.f32 %v7635, %v7963
  %7965 = vmatmul.bf16.gmra.mxu0 %v3485
  %v7966 = vpop.f32.mrf.mxu0
  %v7967 = vadd.f32 %v7638, %v7966
  %v7968 = vpop.f32.mrf.mxu0
  %v7969 = vadd.f32 %v7640, %v7968
  %7970 = vmatmul.bf16.gmra.mxu0 %v3493
  %v7971 = vpop.f32.mrf.mxu0
  %v7972 = vadd.f32 %v7643, %v7971
  %v7973 = vpop.f32.mrf.mxu0
  %v7974 = vadd.f32 %v7645, %v7973
  %7975 = vmatmul.bf16.gmra.mxu0 %v3501
  %v7976 = vpop.f32.mrf.mxu0
  %v7977 = vadd.f32 %v7648, %v7976
  %v7978 = vpop.f32.mrf.mxu0
  %v7979 = vadd.f32 %v7650, %v7978
  %7980 = vmatmul.bf16.gmra.mxu0 %v3509
  %v7981 = vpop.f32.mrf.mxu0
  %v7982 = vadd.f32 %v7653, %v7981
  %v7983 = vpop.f32.mrf.mxu0
  %v7984 = vadd.f32 %v7655, %v7983
  %7985 = vmatmul.bf16.gmra.mxu0 %v3517
  %v7986 = vpop.f32.mrf.mxu0
  %v7987 = vadd.f32 %v7658, %v7986
  %v7988 = vpop.f32.mrf.mxu0
  %v7989 = vadd.f32 %v7660, %v7988
  %7990 = vmatmul.bf16.gmra.mxu0 %v3525
  %v7991 = vpop.f32.mrf.mxu0
  %v7992 = vadd.f32 %v7663, %v7991
  %v7993 = vpop.f32.mrf.mxu0
  %v7994 = vadd.f32 %v7665, %v7993
  %7995 = vmatmul.bf16.gmra.mxu0 %v3533
  %v7996 = vpop.f32.mrf.mxu0
  %v7997 = vadd.f32 %v7668, %v7996
  %v7998 = vpop.f32.mrf.mxu0
  %v7999 = vadd.f32 %v7670, %v7998
  %8000 = vmatmul.bf16.gmra.mxu0 %v3541
  %v8001 = vpop.f32.mrf.mxu0
  %v8002 = vadd.f32 %v7673, %v8001
  %v8003 = vpop.f32.mrf.mxu0
  %v8004 = vadd.f32 %v7675, %v8003
  %8005 = vmatmul.bf16.gmra.mxu0 %v3549
  %v8006 = vpop.f32.mrf.mxu0
  %v8007 = vadd.f32 %v7678, %v8006
  %v8008 = vpop.f32.mrf.mxu0
  %v8009 = vadd.f32 %v7680, %v8008
  %8010 = vdwg.mxu0
  %8011 = vmatpush.bf16.msra.mxu0 %v7308
  %8012 = vmatpush.bf16.msra.mxu0 %v7307
  %8013 = vmatpush.bf16.msra.mxu0 %v7306
  %8014 = vmatpush.bf16.msra.mxu0 %v7305
  %8015 = vmatpush.bf16.msra.mxu0 %v7304
  %8016 = vmatpush.bf16.msra.mxu0 %v7303
  %8017 = vmatpush.bf16.msra.mxu0 %v7302
  %8018 = vmatpush.bf16.msra.mxu0 %v7301
  %8019 = vmatmul.bf16.gmra.mxu0 %v3046
  %v8020 = vpop.f32.mrf.mxu0
  %v8021 = vadd.f32 %v7692, %v8020
  %v8022 = vpop.f32.mrf.mxu0
  %v8023 = vadd.f32 %v7694, %v8022
  %8024 = vmatmul.bf16.gmra.mxu0 %v3054
  %v8025 = vpop.f32.mrf.mxu0
  %v8026 = vadd.f32 %v7697, %v8025
  %v8027 = vpop.f32.mrf.mxu0
  %v8028 = vadd.f32 %v7699, %v8027
  %8029 = vmatmul.bf16.gmra.mxu0 %v3062
  %v8030 = vpop.f32.mrf.mxu0
  %v8031 = vadd.f32 %v7702, %v8030
  %v8032 = vpop.f32.mrf.mxu0
  %v8033 = vadd.f32 %v7704, %v8032
  %8034 = vmatmul.bf16.gmra.mxu0 %v3070
  %v8035 = vpop.f32.mrf.mxu0
  %v8036 = vadd.f32 %v7707, %v8035
  %v8037 = vpop.f32.mrf.mxu0
  %v8038 = vadd.f32 %v7709, %v8037
  %8039 = vmatmul.bf16.gmra.mxu0 %v3078
  %v8040 = vpop.f32.mrf.mxu0
  %v8041 = vadd.f32 %v7712, %v8040
  %v8042 = vpop.f32.mrf.mxu0
  %v8043 = vadd.f32 %v7714, %v8042
  %8044 = vmatmul.bf16.gmra.mxu0 %v3086
  %v8045 = vpop.f32.mrf.mxu0
  %v8046 = vadd.f32 %v7717, %v8045
  %v8047 = vpop.f32.mrf.mxu0
  %v8048 = vadd.f32 %v7719, %v8047
  %8049 = vmatmul.bf16.gmra.mxu0 %v3094
  %v8050 = vpop.f32.mrf.mxu0
  %v8051 = vadd.f32 %v7722, %v8050
  %v8052 = vpop.f32.mrf.mxu0
  %v8053 = vadd.f32 %v7724, %v8052
  %8054 = vmatmul.bf16.gmra.mxu0 %v3102
  %v8055 = vpop.f32.mrf.mxu0
  %v8056 = vadd.f32 %v7727, %v8055
  %v8057 = vpop.f32.mrf.mxu0
  %v8058 = vadd.f32 %v7729, %v8057
  %8059 = vmatmul.bf16.gmra.mxu0 %v3110
  %v8060 = vpop.f32.mrf.mxu0
  %v8061 = vadd.f32 %v7732, %v8060
  %v8062 = vpop.f32.mrf.mxu0
  %v8063 = vadd.f32 %v7734, %v8062
  %8064 = vmatmul.bf16.gmra.mxu0 %v3118
  %v8065 = vpop.f32.mrf.mxu0
  %v8066 = vadd.f32 %v7737, %v8065
  %v8067 = vpop.f32.mrf.mxu0
  %v8068 = vadd.f32 %v7739, %v8067
  %8069 = vmatmul.bf16.gmra.mxu0 %v3126
  %v8070 = vpop.f32.mrf.mxu0
  %v8071 = vadd.f32 %v7742, %v8070
  %v8072 = vpop.f32.mrf.mxu0
  %v8073 = vadd.f32 %v7744, %v8072
  %8074 = vmatmul.bf16.gmra.mxu0 %v3134
  %v8075 = vpop.f32.mrf.mxu0
  %v8076 = vadd.f32 %v7747, %v8075
  %v8077 = vpop.f32.mrf.mxu0
  %v8078 = vadd.f32 %v7749, %v8077
  %8079 = vmatmul.bf16.gmra.mxu0 %v3142
  %v8080 = vpop.f32.mrf.mxu0
  %v8081 = vadd.f32 %v7752, %v8080
  %v8082 = vpop.f32.mrf.mxu0
  %v8083 = vadd.f32 %v7754, %v8082
  %8084 = vmatmul.bf16.gmra.mxu0 %v3150
  %v8085 = vpop.f32.mrf.mxu0
  %v8086 = vadd.f32 %v7757, %v8085
  %v8087 = vpop.f32.mrf.mxu0
  %v8088 = vadd.f32 %v7759, %v8087
  %8089 = vmatmul.bf16.gmra.mxu0 %v3158
  %v8090 = vpop.f32.mrf.mxu0
  %v8091 = vadd.f32 %v7762, %v8090
  %v8092 = vpop.f32.mrf.mxu0
  %v8093 = vadd.f32 %v7764, %v8092
  %8094 = vmatmul.bf16.gmra.mxu0 %v3166
  %v8095 = vpop.f32.mrf.mxu0
  %v8096 = vadd.f32 %v7767, %v8095
  %v8097 = vpop.f32.mrf.mxu0
  %v8098 = vadd.f32 %v7769, %v8097
  %8099 = vmatmul.bf16.gmra.mxu0 %v3174
  %v8100 = vpop.f32.mrf.mxu0
  %v8101 = vadd.f32 %v7772, %v8100
  %v8102 = vpop.f32.mrf.mxu0
  %v8103 = vadd.f32 %v7774, %v8102
  %8104 = vmatmul.bf16.gmra.mxu0 %v3182
  %v8105 = vpop.f32.mrf.mxu0
  %v8106 = vadd.f32 %v7777, %v8105
  %v8107 = vpop.f32.mrf.mxu0
  %v8108 = vadd.f32 %v7779, %v8107
  %8109 = vmatmul.bf16.gmra.mxu0 %v3190
  %v8110 = vpop.f32.mrf.mxu0
  %v8111 = vadd.f32 %v7782, %v8110
  %v8112 = vpop.f32.mrf.mxu0
  %v8113 = vadd.f32 %v7784, %v8112
  %8114 = vmatmul.bf16.gmra.mxu0 %v3198
  %v8115 = vpop.f32.mrf.mxu0
  %v8116 = vadd.f32 %v7787, %v8115
  %v8117 = vpop.f32.mrf.mxu0
  %v8118 = vadd.f32 %v7789, %v8117
  %8119 = vmatmul.bf16.gmra.mxu0 %v3206
  %v8120 = vpop.f32.mrf.mxu0
  %v8121 = vadd.f32 %v7792, %v8120
  %v8122 = vpop.f32.mrf.mxu0
  %v8123 = vadd.f32 %v7794, %v8122
  %8124 = vmatmul.bf16.gmra.mxu0 %v3214
  %v8125 = vpop.f32.mrf.mxu0
  %v8126 = vadd.f32 %v7797, %v8125
  %v8127 = vpop.f32.mrf.mxu0
  %v8128 = vadd.f32 %v7799, %v8127
  %8129 = vmatmul.bf16.gmra.mxu0 %v3222
  %v8130 = vpop.f32.mrf.mxu0
  %v8131 = vadd.f32 %v7802, %v8130
  %v8132 = vpop.f32.mrf.mxu0
  %v8133 = vadd.f32 %v7804, %v8132
  %8134 = vmatmul.bf16.gmra.mxu0 %v3230
  %v8135 = vpop.f32.mrf.mxu0
  %v8136 = vadd.f32 %v7807, %v8135
  %v8137 = vpop.f32.mrf.mxu0
  %v8138 = vadd.f32 %v7809, %v8137
  %8139 = vmatmul.bf16.gmra.mxu0 %v3238
  %v8140 = vpop.f32.mrf.mxu0
  %v8141 = vadd.f32 %v7812, %v8140
  %v8142 = vpop.f32.mrf.mxu0
  %v8143 = vadd.f32 %v7814, %v8142
  %8144 = vmatmul.bf16.gmra.mxu0 %v3246
  %v8145 = vpop.f32.mrf.mxu0
  %v8146 = vadd.f32 %v7817, %v8145
  %v8147 = vpop.f32.mrf.mxu0
  %v8148 = vadd.f32 %v7819, %v8147
  %8149 = vmatmul.bf16.gmra.mxu0 %v3254
  %v8150 = vpop.f32.mrf.mxu0
  %v8151 = vadd.f32 %v7822, %v8150
  %v8152 = vpop.f32.mrf.mxu0
  %v8153 = vadd.f32 %v7824, %v8152
  %8154 = vmatmul.bf16.gmra.mxu0 %v3262
  %v8155 = vpop.f32.mrf.mxu0
  %v8156 = vadd.f32 %v7827, %v8155
  %v8157 = vpop.f32.mrf.mxu0
  %v8158 = vadd.f32 %v7829, %v8157
  %8159 = vmatmul.bf16.gmra.mxu0 %v3270
  %v8160 = vpop.f32.mrf.mxu0
  %v8161 = vadd.f32 %v7832, %v8160
  %v8162 = vpop.f32.mrf.mxu0
  %v8163 = vadd.f32 %v7834, %v8162
  %8164 = vmatmul.bf16.gmra.mxu0 %v3278
  %v8165 = vpop.f32.mrf.mxu0
  %v8166 = vadd.f32 %v7837, %v8165
  %v8167 = vpop.f32.mrf.mxu0
  %v8168 = vadd.f32 %v7839, %v8167
  %8169 = vmatmul.bf16.gmra.mxu0 %v3286
  %v8170 = vpop.f32.mrf.mxu0
  %v8171 = vadd.f32 %v7842, %v8170
  %v8172 = vpop.f32.mrf.mxu0
  %v8173 = vadd.f32 %v7844, %v8172
  %8174 = vmatmul.bf16.gmra.mxu0 %v3294
  %v8175 = vpop.f32.mrf.mxu0
  %v8176 = vadd.f32 %v7847, %v8175
  %v8177 = vpop.f32.mrf.mxu0
  %v8178 = vadd.f32 %v7849, %v8177
  %8179 = vmatmul.bf16.gmra.mxu0 %v3302
  %v8180 = vpop.f32.mrf.mxu0
  %v8181 = vadd.f32 %v7852, %v8180
  %v8182 = vpop.f32.mrf.mxu0
  %v8183 = vadd.f32 %v7854, %v8182
  %8184 = vmatmul.bf16.gmra.mxu0 %v3310
  %v8185 = vpop.f32.mrf.mxu0
  %v8186 = vadd.f32 %v7857, %v8185
  %v8187 = vpop.f32.mrf.mxu0
  %v8188 = vadd.f32 %v7859, %v8187
  %8189 = vmatmul.bf16.gmra.mxu0 %v3318
  %v8190 = vpop.f32.mrf.mxu0
  %v8191 = vadd.f32 %v7862, %v8190
  %v8192 = vpop.f32.mrf.mxu0
  %v8193 = vadd.f32 %v7864, %v8192
  %8194 = vmatmul.bf16.gmra.mxu0 %v3326
  %v8195 = vpop.f32.mrf.mxu0
  %v8196 = vadd.f32 %v7867, %v8195
  %v8197 = vpop.f32.mrf.mxu0
  %v8198 = vadd.f32 %v7869, %v8197
  %8199 = vmatmul.bf16.gmra.mxu0 %v3334
  %v8200 = vpop.f32.mrf.mxu0
  %v8201 = vadd.f32 %v7872, %v8200
  %v8202 = vpop.f32.mrf.mxu0
  %v8203 = vadd.f32 %v7874, %v8202
  %8204 = vmatmul.bf16.gmra.mxu0 %v3342
  %v8205 = vpop.f32.mrf.mxu0
  %v8206 = vadd.f32 %v7877, %v8205
  %v8207 = vpop.f32.mrf.mxu0
  %v8208 = vadd.f32 %v7879, %v8207
  %8209 = vmatmul.bf16.gmra.mxu0 %v3350
  %v8210 = vpop.f32.mrf.mxu0
  %v8211 = vadd.f32 %v7882, %v8210
  %v8212 = vpop.f32.mrf.mxu0
  %v8213 = vadd.f32 %v7884, %v8212
  %8214 = vmatmul.bf16.gmra.mxu0 %v3358
  %v8215 = vpop.f32.mrf.mxu0
  %v8216 = vadd.f32 %v7887, %v8215
  %v8217 = vpop.f32.mrf.mxu0
  %v8218 = vadd.f32 %v7889, %v8217
  %8219 = vmatmul.bf16.gmra.mxu0 %v3366
  %v8220 = vpop.f32.mrf.mxu0
  %v8221 = vadd.f32 %v7892, %v8220
  %v8222 = vpop.f32.mrf.mxu0
  %v8223 = vadd.f32 %v7894, %v8222
  %8224 = vmatmul.bf16.gmra.mxu0 %v3374
  %v8225 = vpop.f32.mrf.mxu0
  %v8226 = vadd.f32 %v7897, %v8225
  %v8227 = vpop.f32.mrf.mxu0
  %v8228 = vadd.f32 %v7899, %v8227
  %8229 = vmatmul.bf16.gmra.mxu0 %v3382
  %v8230 = vpop.f32.mrf.mxu0
  %v8231 = vadd.f32 %v7902, %v8230
  %v8232 = vpop.f32.mrf.mxu0
  %v8233 = vadd.f32 %v7904, %v8232
  %8234 = vmatmul.bf16.gmra.mxu0 %v3390
  %v8235 = vpop.f32.mrf.mxu0
  %v8236 = vadd.f32 %v7907, %v8235
  %v8237 = vpop.f32.mrf.mxu0
  %v8238 = vadd.f32 %v7909, %v8237
  %8239 = vmatmul.bf16.gmra.mxu0 %v3398
  %v8240 = vpop.f32.mrf.mxu0
  %v8241 = vadd.f32 %v7912, %v8240
  %v8242 = vpop.f32.mrf.mxu0
  %v8243 = vadd.f32 %v7914, %v8242
  %8244 = vmatmul.bf16.gmra.mxu0 %v3406
  %v8245 = vpop.f32.mrf.mxu0
  %v8246 = vadd.f32 %v7917, %v8245
  %v8247 = vpop.f32.mrf.mxu0
  %v8248 = vadd.f32 %v7919, %v8247
  %8249 = vmatmul.bf16.gmra.mxu0 %v3414
  %v8250 = vpop.f32.mrf.mxu0
  %v8251 = vadd.f32 %v7922, %v8250
  %v8252 = vpop.f32.mrf.mxu0
  %v8253 = vadd.f32 %v7924, %v8252
  %8254 = vmatmul.bf16.gmra.mxu0 %v3422
  %v8255 = vpop.f32.mrf.mxu0
  %v8256 = vadd.f32 %v7927, %v8255
  %v8257 = vpop.f32.mrf.mxu0
  %v8258 = vadd.f32 %v7929, %v8257
  %8259 = vmatmul.bf16.gmra.mxu0 %v3430
  %v8260 = vpop.f32.mrf.mxu0
  %v8261 = vadd.f32 %v7932, %v8260
  %v8262 = vpop.f32.mrf.mxu0
  %v8263 = vadd.f32 %v7934, %v8262
  %8264 = vmatmul.bf16.gmra.mxu0 %v3438
  %v8265 = vpop.f32.mrf.mxu0
  %v8266 = vadd.f32 %v7937, %v8265
  %v8267 = vpop.f32.mrf.mxu0
  %v8268 = vadd.f32 %v7939, %v8267
  %8269 = vmatmul.bf16.gmra.mxu0 %v3446
  %v8270 = vpop.f32.mrf.mxu0
  %v8271 = vadd.f32 %v7942, %v8270
  %v8272 = vpop.f32.mrf.mxu0
  %v8273 = vadd.f32 %v7944, %v8272
  %8274 = vmatmul.bf16.gmra.mxu0 %v3454
  %v8275 = vpop.f32.mrf.mxu0
  %v8276 = vadd.f32 %v7947, %v8275
  %v8277 = vpop.f32.mrf.mxu0
  %v8278 = vadd.f32 %v7949, %v8277
  %8279 = vmatmul.bf16.gmra.mxu0 %v3462
  %v8280 = vpop.f32.mrf.mxu0
  %v8281 = vadd.f32 %v7952, %v8280
  %v8282 = vpop.f32.mrf.mxu0
  %v8283 = vadd.f32 %v7954, %v8282
  %8284 = vmatmul.bf16.gmra.mxu0 %v3470
  %v8285 = vpop.f32.mrf.mxu0
  %v8286 = vadd.f32 %v7957, %v8285
  %v8287 = vpop.f32.mrf.mxu0
  %v8288 = vadd.f32 %v7959, %v8287
  %8289 = vmatmul.bf16.gmra.mxu0 %v3478
  %v8290 = vpop.f32.mrf.mxu0
  %v8291 = vadd.f32 %v7962, %v8290
  %v8292 = vpop.f32.mrf.mxu0
  %v8293 = vadd.f32 %v7964, %v8292
  %8294 = vmatmul.bf16.gmra.mxu0 %v3486
  %v8295 = vpop.f32.mrf.mxu0
  %v8296 = vadd.f32 %v7967, %v8295
  %v8297 = vpop.f32.mrf.mxu0
  %v8298 = vadd.f32 %v7969, %v8297
  %8299 = vmatmul.bf16.gmra.mxu0 %v3494
  %v8300 = vpop.f32.mrf.mxu0
  %v8301 = vadd.f32 %v7972, %v8300
  %v8302 = vpop.f32.mrf.mxu0
  %v8303 = vadd.f32 %v7974, %v8302
  %8304 = vmatmul.bf16.gmra.mxu0 %v3502
  %v8305 = vpop.f32.mrf.mxu0
  %v8306 = vadd.f32 %v7977, %v8305
  %v8307 = vpop.f32.mrf.mxu0
  %v8308 = vadd.f32 %v7979, %v8307
  %8309 = vmatmul.bf16.gmra.mxu0 %v3510
  %v8310 = vpop.f32.mrf.mxu0
  %v8311 = vadd.f32 %v7982, %v8310
  %v8312 = vpop.f32.mrf.mxu0
  %v8313 = vadd.f32 %v7984, %v8312
  %8314 = vmatmul.bf16.gmra.mxu0 %v3518
  %v8315 = vpop.f32.mrf.mxu0
  %v8316 = vadd.f32 %v7987, %v8315
  %v8317 = vpop.f32.mrf.mxu0
  %v8318 = vadd.f32 %v7989, %v8317
  %8319 = vmatmul.bf16.gmra.mxu0 %v3526
  %v8320 = vpop.f32.mrf.mxu0
  %v8321 = vadd.f32 %v7992, %v8320
  %v8322 = vpop.f32.mrf.mxu0
  %v8323 = vadd.f32 %v7994, %v8322
  %8324 = vmatmul.bf16.gmra.mxu0 %v3534
  %v8325 = vpop.f32.mrf.mxu0
  %v8326 = vadd.f32 %v7997, %v8325
  %v8327 = vpop.f32.mrf.mxu0
  %v8328 = vadd.f32 %v7999, %v8327
  %8329 = vmatmul.bf16.gmra.mxu0 %v3542
  %v8330 = vpop.f32.mrf.mxu0
  %v8331 = vadd.f32 %v8002, %v8330
  %v8332 = vpop.f32.mrf.mxu0
  %v8333 = vadd.f32 %v8004, %v8332
  %8334 = vmatmul.bf16.gmra.mxu0 %v3550
  %v8335 = vpop.f32.mrf.mxu0
  %v8336 = vadd.f32 %v8007, %v8335
  %v8337 = vpop.f32.mrf.mxu0
  %v8338 = vadd.f32 %v8009, %v8337
  %8339 = vdwg.mxu0
  %8340 = vmatpush.bf16.msra.mxu0 %v7316
  %8341 = vmatpush.bf16.msra.mxu0 %v7315
  %8342 = vmatpush.bf16.msra.mxu0 %v7314
  %8343 = vmatpush.bf16.msra.mxu0 %v7313
  %8344 = vmatpush.bf16.msra.mxu0 %v7312
  %8345 = vmatpush.bf16.msra.mxu0 %v7311
  %8346 = vmatpush.bf16.msra.mxu0 %v7310
  %8347 = vmatpush.bf16.msra.mxu0 %v7309
  %8348 = vmatmul.bf16.gmra.mxu0 %v3047
  %v8349 = vpop.f32.mrf.mxu0
  %v8350 = vadd.f32 %v8021, %v8349
  %v8351 = vpop.f32.mrf.mxu0
  %v8352 = vadd.f32 %v8023, %v8351
  %8353 = vmatmul.bf16.gmra.mxu0 %v3055
  %v8354 = vpop.f32.mrf.mxu0
  %v8355 = vadd.f32 %v8026, %v8354
  %v8356 = vpop.f32.mrf.mxu0
  %v8357 = vadd.f32 %v8028, %v8356
  %8358 = vmatmul.bf16.gmra.mxu0 %v3063
  %v8359 = vpop.f32.mrf.mxu0
  %v8360 = vadd.f32 %v8031, %v8359
  %v8361 = vpop.f32.mrf.mxu0
  %v8362 = vadd.f32 %v8033, %v8361
  %8363 = vmatmul.bf16.gmra.mxu0 %v3071
  %v8364 = vpop.f32.mrf.mxu0
  %v8365 = vadd.f32 %v8036, %v8364
  %v8366 = vpop.f32.mrf.mxu0
  %v8367 = vadd.f32 %v8038, %v8366
  %8368 = vmatmul.bf16.gmra.mxu0 %v3079
  %v8369 = vpop.f32.mrf.mxu0
  %v8370 = vadd.f32 %v8041, %v8369
  %v8371 = vpop.f32.mrf.mxu0
  %v8372 = vadd.f32 %v8043, %v8371
  %8373 = vmatmul.bf16.gmra.mxu0 %v3087
  %v8374 = vpop.f32.mrf.mxu0
  %v8375 = vadd.f32 %v8046, %v8374
  %v8376 = vpop.f32.mrf.mxu0
  %v8377 = vadd.f32 %v8048, %v8376
  %8378 = vmatmul.bf16.gmra.mxu0 %v3095
  %v8379 = vpop.f32.mrf.mxu0
  %v8380 = vadd.f32 %v8051, %v8379
  %v8381 = vpop.f32.mrf.mxu0
  %v8382 = vadd.f32 %v8053, %v8381
  %8383 = vmatmul.bf16.gmra.mxu0 %v3103
  %v8384 = vpop.f32.mrf.mxu0
  %v8385 = vadd.f32 %v8056, %v8384
  %v8386 = vpop.f32.mrf.mxu0
  %v8387 = vadd.f32 %v8058, %v8386
  %8388 = vmatmul.bf16.gmra.mxu0 %v3111
  %v8389 = vpop.f32.mrf.mxu0
  %v8390 = vadd.f32 %v8061, %v8389
  %v8391 = vpop.f32.mrf.mxu0
  %v8392 = vadd.f32 %v8063, %v8391
  %8393 = vmatmul.bf16.gmra.mxu0 %v3119
  %v8394 = vpop.f32.mrf.mxu0
  %v8395 = vadd.f32 %v8066, %v8394
  %v8396 = vpop.f32.mrf.mxu0
  %v8397 = vadd.f32 %v8068, %v8396
  %8398 = vmatmul.bf16.gmra.mxu0 %v3127
  %v8399 = vpop.f32.mrf.mxu0
  %v8400 = vadd.f32 %v8071, %v8399
  %v8401 = vpop.f32.mrf.mxu0
  %v8402 = vadd.f32 %v8073, %v8401
  %8403 = vmatmul.bf16.gmra.mxu0 %v3135
  %v8404 = vpop.f32.mrf.mxu0
  %v8405 = vadd.f32 %v8076, %v8404
  %v8406 = vpop.f32.mrf.mxu0
  %v8407 = vadd.f32 %v8078, %v8406
  %8408 = vmatmul.bf16.gmra.mxu0 %v3143
  %v8409 = vpop.f32.mrf.mxu0
  %v8410 = vadd.f32 %v8081, %v8409
  %v8411 = vpop.f32.mrf.mxu0
  %v8412 = vadd.f32 %v8083, %v8411
  %8413 = vmatmul.bf16.gmra.mxu0 %v3151
  %v8414 = vpop.f32.mrf.mxu0
  %v8415 = vadd.f32 %v8086, %v8414
  %v8416 = vpop.f32.mrf.mxu0
  %v8417 = vadd.f32 %v8088, %v8416
  %8418 = vmatmul.bf16.gmra.mxu0 %v3159
  %v8419 = vpop.f32.mrf.mxu0
  %v8420 = vadd.f32 %v8091, %v8419
  %v8421 = vpop.f32.mrf.mxu0
  %v8422 = vadd.f32 %v8093, %v8421
  %8423 = vmatmul.bf16.gmra.mxu0 %v3167
  %v8424 = vpop.f32.mrf.mxu0
  %v8425 = vadd.f32 %v8096, %v8424
  %v8426 = vpop.f32.mrf.mxu0
  %v8427 = vadd.f32 %v8098, %v8426
  %8428 = vmatmul.bf16.gmra.mxu0 %v3175
  %v8429 = vpop.f32.mrf.mxu0
  %v8430 = vadd.f32 %v8101, %v8429
  %v8431 = vpop.f32.mrf.mxu0
  %v8432 = vadd.f32 %v8103, %v8431
  %8433 = vmatmul.bf16.gmra.mxu0 %v3183
  %v8434 = vpop.f32.mrf.mxu0
  %v8435 = vadd.f32 %v8106, %v8434
  %v8436 = vpop.f32.mrf.mxu0
  %v8437 = vadd.f32 %v8108, %v8436
  %8438 = vmatmul.bf16.gmra.mxu0 %v3191
  %v8439 = vpop.f32.mrf.mxu0
  %v8440 = vadd.f32 %v8111, %v8439
  %v8441 = vpop.f32.mrf.mxu0
  %v8442 = vadd.f32 %v8113, %v8441
  %8443 = vmatmul.bf16.gmra.mxu0 %v3199
  %v8444 = vpop.f32.mrf.mxu0
  %v8445 = vadd.f32 %v8116, %v8444
  %v8446 = vpop.f32.mrf.mxu0
  %v8447 = vadd.f32 %v8118, %v8446
  %8448 = vmatmul.bf16.gmra.mxu0 %v3207
  %v8449 = vpop.f32.mrf.mxu0
  %v8450 = vadd.f32 %v8121, %v8449
  %v8451 = vpop.f32.mrf.mxu0
  %v8452 = vadd.f32 %v8123, %v8451
  %8453 = vmatmul.bf16.gmra.mxu0 %v3215
  %v8454 = vpop.f32.mrf.mxu0
  %v8455 = vadd.f32 %v8126, %v8454
  %v8456 = vpop.f32.mrf.mxu0
  %v8457 = vadd.f32 %v8128, %v8456
  %8458 = vmatmul.bf16.gmra.mxu0 %v3223
  %v8459 = vpop.f32.mrf.mxu0
  %v8460 = vadd.f32 %v8131, %v8459
  %v8461 = vpop.f32.mrf.mxu0
  %v8462 = vadd.f32 %v8133, %v8461
  %8463 = vmatmul.bf16.gmra.mxu0 %v3231
  %v8464 = vpop.f32.mrf.mxu0
  %v8465 = vadd.f32 %v8136, %v8464
  %v8466 = vpop.f32.mrf.mxu0
  %v8467 = vadd.f32 %v8138, %v8466
  %8468 = vmatmul.bf16.gmra.mxu0 %v3239
  %v8469 = vpop.f32.mrf.mxu0
  %v8470 = vadd.f32 %v8141, %v8469
  %v8471 = vpop.f32.mrf.mxu0
  %v8472 = vadd.f32 %v8143, %v8471
  %8473 = vmatmul.bf16.gmra.mxu0 %v3247
  %v8474 = vpop.f32.mrf.mxu0
  %v8475 = vadd.f32 %v8146, %v8474
  %v8476 = vpop.f32.mrf.mxu0
  %v8477 = vadd.f32 %v8148, %v8476
  %8478 = vmatmul.bf16.gmra.mxu0 %v3255
  %v8479 = vpop.f32.mrf.mxu0
  %v8480 = vadd.f32 %v8151, %v8479
  %v8481 = vpop.f32.mrf.mxu0
  %v8482 = vadd.f32 %v8153, %v8481
  %8483 = vmatmul.bf16.gmra.mxu0 %v3263
  %v8484 = vpop.f32.mrf.mxu0
  %v8485 = vadd.f32 %v8156, %v8484
  %v8486 = vpop.f32.mrf.mxu0
  %v8487 = vadd.f32 %v8158, %v8486
  %8488 = vmatmul.bf16.gmra.mxu0 %v3271
  %v8489 = vpop.f32.mrf.mxu0
  %v8490 = vadd.f32 %v8161, %v8489
  %v8491 = vpop.f32.mrf.mxu0
  %v8492 = vadd.f32 %v8163, %v8491
  %8493 = vmatmul.bf16.gmra.mxu0 %v3279
  %v8494 = vpop.f32.mrf.mxu0
  %v8495 = vadd.f32 %v8166, %v8494
  %v8496 = vpop.f32.mrf.mxu0
  %v8497 = vadd.f32 %v8168, %v8496
  %8498 = vmatmul.bf16.gmra.mxu0 %v3287
  %v8499 = vpop.f32.mrf.mxu0
  %v8500 = vadd.f32 %v8171, %v8499
  %v8501 = vpop.f32.mrf.mxu0
  %v8502 = vadd.f32 %v8173, %v8501
  %8503 = vmatmul.bf16.gmra.mxu0 %v3295
  %v8504 = vpop.f32.mrf.mxu0
  %v8505 = vadd.f32 %v8176, %v8504
  %v8506 = vpop.f32.mrf.mxu0
  %v8507 = vadd.f32 %v8178, %v8506
  %8508 = vmatmul.bf16.gmra.mxu0 %v3303
  %v8509 = vpop.f32.mrf.mxu0
  %v8510 = vadd.f32 %v8181, %v8509
  %v8511 = vpop.f32.mrf.mxu0
  %v8512 = vadd.f32 %v8183, %v8511
  %8513 = vmatmul.bf16.gmra.mxu0 %v3311
  %v8514 = vpop.f32.mrf.mxu0
  %v8515 = vadd.f32 %v8186, %v8514
  %v8516 = vpop.f32.mrf.mxu0
  %v8517 = vadd.f32 %v8188, %v8516
  %8518 = vmatmul.bf16.gmra.mxu0 %v3319
  %v8519 = vpop.f32.mrf.mxu0
  %v8520 = vadd.f32 %v8191, %v8519
  %v8521 = vpop.f32.mrf.mxu0
  %v8522 = vadd.f32 %v8193, %v8521
  %8523 = vmatmul.bf16.gmra.mxu0 %v3327
  %v8524 = vpop.f32.mrf.mxu0
  %v8525 = vadd.f32 %v8196, %v8524
  %v8526 = vpop.f32.mrf.mxu0
  %v8527 = vadd.f32 %v8198, %v8526
  %8528 = vmatmul.bf16.gmra.mxu0 %v3335
  %v8529 = vpop.f32.mrf.mxu0
  %v8530 = vadd.f32 %v8201, %v8529
  %v8531 = vpop.f32.mrf.mxu0
  %v8532 = vadd.f32 %v8203, %v8531
  %8533 = vmatmul.bf16.gmra.mxu0 %v3343
  %v8534 = vpop.f32.mrf.mxu0
  %v8535 = vadd.f32 %v8206, %v8534
  %v8536 = vpop.f32.mrf.mxu0
  %v8537 = vadd.f32 %v8208, %v8536
  %8538 = vmatmul.bf16.gmra.mxu0 %v3351
  %v8539 = vpop.f32.mrf.mxu0
  %v8540 = vadd.f32 %v8211, %v8539
  %v8541 = vpop.f32.mrf.mxu0
  %v8542 = vadd.f32 %v8213, %v8541
  %8543 = vmatmul.bf16.gmra.mxu0 %v3359
  %v8544 = vpop.f32.mrf.mxu0
  %v8545 = vadd.f32 %v8216, %v8544
  %v8546 = vpop.f32.mrf.mxu0
  %v8547 = vadd.f32 %v8218, %v8546
  %8548 = vmatmul.bf16.gmra.mxu0 %v3367
  %v8549 = vpop.f32.mrf.mxu0
  %v8550 = vadd.f32 %v8221, %v8549
  %v8551 = vpop.f32.mrf.mxu0
  %v8552 = vadd.f32 %v8223, %v8551
  %8553 = vmatmul.bf16.gmra.mxu0 %v3375
  %v8554 = vpop.f32.mrf.mxu0
  %v8555 = vadd.f32 %v8226, %v8554
  %v8556 = vpop.f32.mrf.mxu0
  %v8557 = vadd.f32 %v8228, %v8556
  %8558 = vmatmul.bf16.gmra.mxu0 %v3383
  %v8559 = vpop.f32.mrf.mxu0
  %v8560 = vadd.f32 %v8231, %v8559
  %v8561 = vpop.f32.mrf.mxu0
  %v8562 = vadd.f32 %v8233, %v8561
  %8563 = vmatmul.bf16.gmra.mxu0 %v3391
  %v8564 = vpop.f32.mrf.mxu0
  %v8565 = vadd.f32 %v8236, %v8564
  %v8566 = vpop.f32.mrf.mxu0
  %v8567 = vadd.f32 %v8238, %v8566
  %8568 = vmatmul.bf16.gmra.mxu0 %v3399
  %v8569 = vpop.f32.mrf.mxu0
  %v8570 = vadd.f32 %v8241, %v8569
  %v8571 = vpop.f32.mrf.mxu0
  %v8572 = vadd.f32 %v8243, %v8571
  %8573 = vmatmul.bf16.gmra.mxu0 %v3407
  %v8574 = vpop.f32.mrf.mxu0
  %v8575 = vadd.f32 %v8246, %v8574
  %v8576 = vpop.f32.mrf.mxu0
  %v8577 = vadd.f32 %v8248, %v8576
  %8578 = vmatmul.bf16.gmra.mxu0 %v3415
  %v8579 = vpop.f32.mrf.mxu0
  %v8580 = vadd.f32 %v8251, %v8579
  %v8581 = vpop.f32.mrf.mxu0
  %v8582 = vadd.f32 %v8253, %v8581
  %8583 = vmatmul.bf16.gmra.mxu0 %v3423
  %v8584 = vpop.f32.mrf.mxu0
  %v8585 = vadd.f32 %v8256, %v8584
  %v8586 = vpop.f32.mrf.mxu0
  %v8587 = vadd.f32 %v8258, %v8586
  %8588 = vmatmul.bf16.gmra.mxu0 %v3431
  %v8589 = vpop.f32.mrf.mxu0
  %v8590 = vadd.f32 %v8261, %v8589
  %v8591 = vpop.f32.mrf.mxu0
  %v8592 = vadd.f32 %v8263, %v8591
  %8593 = vmatmul.bf16.gmra.mxu0 %v3439
  %v8594 = vpop.f32.mrf.mxu0
  %v8595 = vadd.f32 %v8266, %v8594
  %v8596 = vpop.f32.mrf.mxu0
  %v8597 = vadd.f32 %v8268, %v8596
  %8598 = vmatmul.bf16.gmra.mxu0 %v3447
  %v8599 = vpop.f32.mrf.mxu0
  %v8600 = vadd.f32 %v8271, %v8599
  %v8601 = vpop.f32.mrf.mxu0
  %v8602 = vadd.f32 %v8273, %v8601
  %8603 = vmatmul.bf16.gmra.mxu0 %v3455
  %v8604 = vpop.f32.mrf.mxu0
  %v8605 = vadd.f32 %v8276, %v8604
  %v8606 = vpop.f32.mrf.mxu0
  %v8607 = vadd.f32 %v8278, %v8606
  %8608 = vmatmul.bf16.gmra.mxu0 %v3463
  %v8609 = vpop.f32.mrf.mxu0
  %v8610 = vadd.f32 %v8281, %v8609
  %v8611 = vpop.f32.mrf.mxu0
  %v8612 = vadd.f32 %v8283, %v8611
  %8613 = vmatmul.bf16.gmra.mxu0 %v3471
  %v8614 = vpop.f32.mrf.mxu0
  %v8615 = vadd.f32 %v8286, %v8614
  %v8616 = vpop.f32.mrf.mxu0
  %v8617 = vadd.f32 %v8288, %v8616
  %8618 = vmatmul.bf16.gmra.mxu0 %v3479
  %v8619 = vpop.f32.mrf.mxu0
  %v8620 = vadd.f32 %v8291, %v8619
  %v8621 = vpop.f32.mrf.mxu0
  %v8622 = vadd.f32 %v8293, %v8621
  %8623 = vmatmul.bf16.gmra.mxu0 %v3487
  %v8624 = vpop.f32.mrf.mxu0
  %v8625 = vadd.f32 %v8296, %v8624
  %v8626 = vpop.f32.mrf.mxu0
  %v8627 = vadd.f32 %v8298, %v8626
  %8628 = vmatmul.bf16.gmra.mxu0 %v3495
  %v8629 = vpop.f32.mrf.mxu0
  %v8630 = vadd.f32 %v8301, %v8629
  %v8631 = vpop.f32.mrf.mxu0
  %v8632 = vadd.f32 %v8303, %v8631
  %8633 = vmatmul.bf16.gmra.mxu0 %v3503
  %v8634 = vpop.f32.mrf.mxu0
  %v8635 = vadd.f32 %v8306, %v8634
  %v8636 = vpop.f32.mrf.mxu0
  %v8637 = vadd.f32 %v8308, %v8636
  %8638 = vmatmul.bf16.gmra.mxu0 %v3511
  %v8639 = vpop.f32.mrf.mxu0
  %v8640 = vadd.f32 %v8311, %v8639
  %v8641 = vpop.f32.mrf.mxu0
  %v8642 = vadd.f32 %v8313, %v8641
  %8643 = vmatmul.bf16.gmra.mxu0 %v3519
  %v8644 = vpop.f32.mrf.mxu0
  %v8645 = vadd.f32 %v8316, %v8644
  %v8646 = vpop.f32.mrf.mxu0
  %v8647 = vadd.f32 %v8318, %v8646
  %8648 = vmatmul.bf16.gmra.mxu0 %v3527
  %v8649 = vpop.f32.mrf.mxu0
  %v8650 = vadd.f32 %v8321, %v8649
  %v8651 = vpop.f32.mrf.mxu0
  %v8652 = vadd.f32 %v8323, %v8651
  %8653 = vmatmul.bf16.gmra.mxu0 %v3535
  %v8654 = vpop.f32.mrf.mxu0
  %v8655 = vadd.f32 %v8326, %v8654
  %v8656 = vpop.f32.mrf.mxu0
  %v8657 = vadd.f32 %v8328, %v8656
  %8658 = vmatmul.bf16.gmra.mxu0 %v3543
  %v8659 = vpop.f32.mrf.mxu0
  %v8660 = vadd.f32 %v8331, %v8659
  %v8661 = vpop.f32.mrf.mxu0
  %v8662 = vadd.f32 %v8333, %v8661
  %8663 = vmatmul.bf16.gmra.mxu0 %v3551
  %v8664 = vpop.f32.mrf.mxu0
  %v8665 = vadd.f32 %v8336, %v8664
  %v8666 = vpop.f32.mrf.mxu0
  %v8667 = vadd.f32 %v8338, %v8666
  %8668 = vdwg.mxu0
  %8669 = vmatpush.bf16.msra.mxu0 %v7324
  %8670 = vmatpush.bf16.msra.mxu0 %v7323
  %8671 = vmatpush.bf16.msra.mxu0 %v7322
  %8672 = vmatpush.bf16.msra.mxu0 %v7321
  %8673 = vmatpush.bf16.msra.mxu0 %v7320
  %8674 = vmatpush.bf16.msra.mxu0 %v7319
  %8675 = vmatpush.bf16.msra.mxu0 %v7318
  %8676 = vmatpush.bf16.msra.mxu0 %v7317
  %8677 = vmatmul.bf16.gmra.mxu0 %v3048
  %v8678 = vpop.f32.mrf.mxu0
  %v8679 = vadd.f32 %v8350, %v8678
  %v8680 = vpop.f32.mrf.mxu0
  %v8681 = vadd.f32 %v8352, %v8680
  %8682 = vmatmul.bf16.gmra.mxu0 %v3056
  %v8683 = vpop.f32.mrf.mxu0
  %v8684 = vadd.f32 %v8355, %v8683
  %v8685 = vpop.f32.mrf.mxu0
  %v8686 = vadd.f32 %v8357, %v8685
  %8687 = vmatmul.bf16.gmra.mxu0 %v3064
  %v8688 = vpop.f32.mrf.mxu0
  %v8689 = vadd.f32 %v8360, %v8688
  %v8690 = vpop.f32.mrf.mxu0
  %v8691 = vadd.f32 %v8362, %v8690
  %8692 = vmatmul.bf16.gmra.mxu0 %v3072
  %v8693 = vpop.f32.mrf.mxu0
  %v8694 = vadd.f32 %v8365, %v8693
  %v8695 = vpop.f32.mrf.mxu0
  %v8696 = vadd.f32 %v8367, %v8695
  %8697 = vmatmul.bf16.gmra.mxu0 %v3080
  %v8698 = vpop.f32.mrf.mxu0
  %v8699 = vadd.f32 %v8370, %v8698
  %v8700 = vpop.f32.mrf.mxu0
  %v8701 = vadd.f32 %v8372, %v8700
  %8702 = vmatmul.bf16.gmra.mxu0 %v3088
  %v8703 = vpop.f32.mrf.mxu0
  %v8704 = vadd.f32 %v8375, %v8703
  %v8705 = vpop.f32.mrf.mxu0
  %v8706 = vadd.f32 %v8377, %v8705
  %8707 = vmatmul.bf16.gmra.mxu0 %v3096
  %v8708 = vpop.f32.mrf.mxu0
  %v8709 = vadd.f32 %v8380, %v8708
  %v8710 = vpop.f32.mrf.mxu0
  %v8711 = vadd.f32 %v8382, %v8710
  %8712 = vmatmul.bf16.gmra.mxu0 %v3104
  %v8713 = vpop.f32.mrf.mxu0
  %v8714 = vadd.f32 %v8385, %v8713
  %v8715 = vpop.f32.mrf.mxu0
  %v8716 = vadd.f32 %v8387, %v8715
  %8717 = vmatmul.bf16.gmra.mxu0 %v3112
  %v8718 = vpop.f32.mrf.mxu0
  %v8719 = vadd.f32 %v8390, %v8718
  %v8720 = vpop.f32.mrf.mxu0
  %v8721 = vadd.f32 %v8392, %v8720
  %8722 = vmatmul.bf16.gmra.mxu0 %v3120
  %v8723 = vpop.f32.mrf.mxu0
  %v8724 = vadd.f32 %v8395, %v8723
  %v8725 = vpop.f32.mrf.mxu0
  %v8726 = vadd.f32 %v8397, %v8725
  %8727 = vmatmul.bf16.gmra.mxu0 %v3128
  %v8728 = vpop.f32.mrf.mxu0
  %v8729 = vadd.f32 %v8400, %v8728
  %v8730 = vpop.f32.mrf.mxu0
  %v8731 = vadd.f32 %v8402, %v8730
  %8732 = vmatmul.bf16.gmra.mxu0 %v3136
  %v8733 = vpop.f32.mrf.mxu0
  %v8734 = vadd.f32 %v8405, %v8733
  %v8735 = vpop.f32.mrf.mxu0
  %v8736 = vadd.f32 %v8407, %v8735
  %8737 = vmatmul.bf16.gmra.mxu0 %v3144
  %v8738 = vpop.f32.mrf.mxu0
  %v8739 = vadd.f32 %v8410, %v8738
  %v8740 = vpop.f32.mrf.mxu0
  %v8741 = vadd.f32 %v8412, %v8740
  %8742 = vmatmul.bf16.gmra.mxu0 %v3152
  %v8743 = vpop.f32.mrf.mxu0
  %v8744 = vadd.f32 %v8415, %v8743
  %v8745 = vpop.f32.mrf.mxu0
  %v8746 = vadd.f32 %v8417, %v8745
  %8747 = vmatmul.bf16.gmra.mxu0 %v3160
  %v8748 = vpop.f32.mrf.mxu0
  %v8749 = vadd.f32 %v8420, %v8748
  %v8750 = vpop.f32.mrf.mxu0
  %v8751 = vadd.f32 %v8422, %v8750
  %8752 = vmatmul.bf16.gmra.mxu0 %v3168
  %v8753 = vpop.f32.mrf.mxu0
  %v8754 = vadd.f32 %v8425, %v8753
  %v8755 = vpop.f32.mrf.mxu0
  %v8756 = vadd.f32 %v8427, %v8755
  %8757 = vmatmul.bf16.gmra.mxu0 %v3176
  %v8758 = vpop.f32.mrf.mxu0
  %v8759 = vadd.f32 %v8430, %v8758
  %v8760 = vpop.f32.mrf.mxu0
  %v8761 = vadd.f32 %v8432, %v8760
  %8762 = vmatmul.bf16.gmra.mxu0 %v3184
  %v8763 = vpop.f32.mrf.mxu0
  %v8764 = vadd.f32 %v8435, %v8763
  %v8765 = vpop.f32.mrf.mxu0
  %v8766 = vadd.f32 %v8437, %v8765
  %8767 = vmatmul.bf16.gmra.mxu0 %v3192
  %v8768 = vpop.f32.mrf.mxu0
  %v8769 = vadd.f32 %v8440, %v8768
  %v8770 = vpop.f32.mrf.mxu0
  %v8771 = vadd.f32 %v8442, %v8770
  %8772 = vmatmul.bf16.gmra.mxu0 %v3200
  %v8773 = vpop.f32.mrf.mxu0
  %v8774 = vadd.f32 %v8445, %v8773
  %v8775 = vpop.f32.mrf.mxu0
  %v8776 = vadd.f32 %v8447, %v8775
  %8777 = vmatmul.bf16.gmra.mxu0 %v3208
  %v8778 = vpop.f32.mrf.mxu0
  %v8779 = vadd.f32 %v8450, %v8778
  %v8780 = vpop.f32.mrf.mxu0
  %v8781 = vadd.f32 %v8452, %v8780
  %8782 = vmatmul.bf16.gmra.mxu0 %v3216
  %v8783 = vpop.f32.mrf.mxu0
  %v8784 = vadd.f32 %v8455, %v8783
  %v8785 = vpop.f32.mrf.mxu0
  %v8786 = vadd.f32 %v8457, %v8785
  %8787 = vmatmul.bf16.gmra.mxu0 %v3224
  %v8788 = vpop.f32.mrf.mxu0
  %v8789 = vadd.f32 %v8460, %v8788
  %v8790 = vpop.f32.mrf.mxu0
  %v8791 = vadd.f32 %v8462, %v8790
  %8792 = vmatmul.bf16.gmra.mxu0 %v3232
  %v8793 = vpop.f32.mrf.mxu0
  %v8794 = vadd.f32 %v8465, %v8793
  %v8795 = vpop.f32.mrf.mxu0
  %v8796 = vadd.f32 %v8467, %v8795
  %8797 = vmatmul.bf16.gmra.mxu0 %v3240
  %v8798 = vpop.f32.mrf.mxu0
  %v8799 = vadd.f32 %v8470, %v8798
  %v8800 = vpop.f32.mrf.mxu0
  %v8801 = vadd.f32 %v8472, %v8800
  %8802 = vmatmul.bf16.gmra.mxu0 %v3248
  %v8803 = vpop.f32.mrf.mxu0
  %v8804 = vadd.f32 %v8475, %v8803
  %v8805 = vpop.f32.mrf.mxu0
  %v8806 = vadd.f32 %v8477, %v8805
  %8807 = vmatmul.bf16.gmra.mxu0 %v3256
  %v8808 = vpop.f32.mrf.mxu0
  %v8809 = vadd.f32 %v8480, %v8808
  %v8810 = vpop.f32.mrf.mxu0
  %v8811 = vadd.f32 %v8482, %v8810
  %8812 = vmatmul.bf16.gmra.mxu0 %v3264
  %v8813 = vpop.f32.mrf.mxu0
  %v8814 = vadd.f32 %v8485, %v8813
  %v8815 = vpop.f32.mrf.mxu0
  %v8816 = vadd.f32 %v8487, %v8815
  %8817 = vmatmul.bf16.gmra.mxu0 %v3272
  %v8818 = vpop.f32.mrf.mxu0
  %v8819 = vadd.f32 %v8490, %v8818
  %v8820 = vpop.f32.mrf.mxu0
  %v8821 = vadd.f32 %v8492, %v8820
  %8822 = vmatmul.bf16.gmra.mxu0 %v3280
  %v8823 = vpop.f32.mrf.mxu0
  %v8824 = vadd.f32 %v8495, %v8823
  %v8825 = vpop.f32.mrf.mxu0
  %v8826 = vadd.f32 %v8497, %v8825
  %8827 = vmatmul.bf16.gmra.mxu0 %v3288
  %v8828 = vpop.f32.mrf.mxu0
  %v8829 = vadd.f32 %v8500, %v8828
  %v8830 = vpop.f32.mrf.mxu0
  %v8831 = vadd.f32 %v8502, %v8830
  %8832 = vmatmul.bf16.gmra.mxu0 %v3296
  %v8833 = vpop.f32.mrf.mxu0
  %v8834 = vadd.f32 %v8505, %v8833
  %v8835 = vpop.f32.mrf.mxu0
  %v8836 = vadd.f32 %v8507, %v8835
  %8837 = vmatmul.bf16.gmra.mxu0 %v3304
  %v8838 = vpop.f32.mrf.mxu0
  %v8839 = vadd.f32 %v8510, %v8838
  %v8840 = vpop.f32.mrf.mxu0
  %v8841 = vadd.f32 %v8512, %v8840
  %8842 = vmatmul.bf16.gmra.mxu0 %v3312
  %v8843 = vpop.f32.mrf.mxu0
  %v8844 = vadd.f32 %v8515, %v8843
  %v8845 = vpop.f32.mrf.mxu0
  %v8846 = vadd.f32 %v8517, %v8845
  %8847 = vmatmul.bf16.gmra.mxu0 %v3320
  %v8848 = vpop.f32.mrf.mxu0
  %v8849 = vadd.f32 %v8520, %v8848
  %v8850 = vpop.f32.mrf.mxu0
  %v8851 = vadd.f32 %v8522, %v8850
  %8852 = vmatmul.bf16.gmra.mxu0 %v3328
  %v8853 = vpop.f32.mrf.mxu0
  %v8854 = vadd.f32 %v8525, %v8853
  %v8855 = vpop.f32.mrf.mxu0
  %v8856 = vadd.f32 %v8527, %v8855
  %8857 = vmatmul.bf16.gmra.mxu0 %v3336
  %v8858 = vpop.f32.mrf.mxu0
  %v8859 = vadd.f32 %v8530, %v8858
  %v8860 = vpop.f32.mrf.mxu0
  %v8861 = vadd.f32 %v8532, %v8860
  %8862 = vmatmul.bf16.gmra.mxu0 %v3344
  %v8863 = vpop.f32.mrf.mxu0
  %v8864 = vadd.f32 %v8535, %v8863
  %v8865 = vpop.f32.mrf.mxu0
  %v8866 = vadd.f32 %v8537, %v8865
  %8867 = vmatmul.bf16.gmra.mxu0 %v3352
  %v8868 = vpop.f32.mrf.mxu0
  %v8869 = vadd.f32 %v8540, %v8868
  %v8870 = vpop.f32.mrf.mxu0
  %v8871 = vadd.f32 %v8542, %v8870
  %8872 = vmatmul.bf16.gmra.mxu0 %v3360
  %v8873 = vpop.f32.mrf.mxu0
  %v8874 = vadd.f32 %v8545, %v8873
  %v8875 = vpop.f32.mrf.mxu0
  %v8876 = vadd.f32 %v8547, %v8875
  %8877 = vmatmul.bf16.gmra.mxu0 %v3368
  %v8878 = vpop.f32.mrf.mxu0
  %v8879 = vadd.f32 %v8550, %v8878
  %v8880 = vpop.f32.mrf.mxu0
  %v8881 = vadd.f32 %v8552, %v8880
  %8882 = vmatmul.bf16.gmra.mxu0 %v3376
  %v8883 = vpop.f32.mrf.mxu0
  %v8884 = vadd.f32 %v8555, %v8883
  %v8885 = vpop.f32.mrf.mxu0
  %v8886 = vadd.f32 %v8557, %v8885
  %8887 = vmatmul.bf16.gmra.mxu0 %v3384
  %v8888 = vpop.f32.mrf.mxu0
  %v8889 = vadd.f32 %v8560, %v8888
  %v8890 = vpop.f32.mrf.mxu0
  %v8891 = vadd.f32 %v8562, %v8890
  %8892 = vmatmul.bf16.gmra.mxu0 %v3392
  %v8893 = vpop.f32.mrf.mxu0
  %v8894 = vadd.f32 %v8565, %v8893
  %v8895 = vpop.f32.mrf.mxu0
  %v8896 = vadd.f32 %v8567, %v8895
  %8897 = vmatmul.bf16.gmra.mxu0 %v3400
  %v8898 = vpop.f32.mrf.mxu0
  %v8899 = vadd.f32 %v8570, %v8898
  %v8900 = vpop.f32.mrf.mxu0
  %v8901 = vadd.f32 %v8572, %v8900
  %8902 = vmatmul.bf16.gmra.mxu0 %v3408
  %v8903 = vpop.f32.mrf.mxu0
  %v8904 = vadd.f32 %v8575, %v8903
  %v8905 = vpop.f32.mrf.mxu0
  %v8906 = vadd.f32 %v8577, %v8905
  %8907 = vmatmul.bf16.gmra.mxu0 %v3416
  %v8908 = vpop.f32.mrf.mxu0
  %v8909 = vadd.f32 %v8580, %v8908
  %v8910 = vpop.f32.mrf.mxu0
  %v8911 = vadd.f32 %v8582, %v8910
  %8912 = vmatmul.bf16.gmra.mxu0 %v3424
  %v8913 = vpop.f32.mrf.mxu0
  %v8914 = vadd.f32 %v8585, %v8913
  %v8915 = vpop.f32.mrf.mxu0
  %v8916 = vadd.f32 %v8587, %v8915
  %8917 = vmatmul.bf16.gmra.mxu0 %v3432
  %v8918 = vpop.f32.mrf.mxu0
  %v8919 = vadd.f32 %v8590, %v8918
  %v8920 = vpop.f32.mrf.mxu0
  %v8921 = vadd.f32 %v8592, %v8920
  %8922 = vmatmul.bf16.gmra.mxu0 %v3440
  %v8923 = vpop.f32.mrf.mxu0
  %v8924 = vadd.f32 %v8595, %v8923
  %v8925 = vpop.f32.mrf.mxu0
  %v8926 = vadd.f32 %v8597, %v8925
  %8927 = vmatmul.bf16.gmra.mxu0 %v3448
  %v8928 = vpop.f32.mrf.mxu0
  %v8929 = vadd.f32 %v8600, %v8928
  %v8930 = vpop.f32.mrf.mxu0
  %v8931 = vadd.f32 %v8602, %v8930
  %8932 = vmatmul.bf16.gmra.mxu0 %v3456
  %v8933 = vpop.f32.mrf.mxu0
  %v8934 = vadd.f32 %v8605, %v8933
  %v8935 = vpop.f32.mrf.mxu0
  %v8936 = vadd.f32 %v8607, %v8935
  %8937 = vmatmul.bf16.gmra.mxu0 %v3464
  %v8938 = vpop.f32.mrf.mxu0
  %v8939 = vadd.f32 %v8610, %v8938
  %v8940 = vpop.f32.mrf.mxu0
  %v8941 = vadd.f32 %v8612, %v8940
  %8942 = vmatmul.bf16.gmra.mxu0 %v3472
  %v8943 = vpop.f32.mrf.mxu0
  %v8944 = vadd.f32 %v8615, %v8943
  %v8945 = vpop.f32.mrf.mxu0
  %v8946 = vadd.f32 %v8617, %v8945
  %8947 = vmatmul.bf16.gmra.mxu0 %v3480
  %v8948 = vpop.f32.mrf.mxu0
  %v8949 = vadd.f32 %v8620, %v8948
  %v8950 = vpop.f32.mrf.mxu0
  %v8951 = vadd.f32 %v8622, %v8950
  %8952 = vmatmul.bf16.gmra.mxu0 %v3488
  %v8953 = vpop.f32.mrf.mxu0
  %v8954 = vadd.f32 %v8625, %v8953
  %v8955 = vpop.f32.mrf.mxu0
  %v8956 = vadd.f32 %v8627, %v8955
  %8957 = vmatmul.bf16.gmra.mxu0 %v3496
  %v8958 = vpop.f32.mrf.mxu0
  %v8959 = vadd.f32 %v8630, %v8958
  %v8960 = vpop.f32.mrf.mxu0
  %v8961 = vadd.f32 %v8632, %v8960
  %8962 = vmatmul.bf16.gmra.mxu0 %v3504
  %v8963 = vpop.f32.mrf.mxu0
  %v8964 = vadd.f32 %v8635, %v8963
  %v8965 = vpop.f32.mrf.mxu0
  %v8966 = vadd.f32 %v8637, %v8965
  %8967 = vmatmul.bf16.gmra.mxu0 %v3512
  %v8968 = vpop.f32.mrf.mxu0
  %v8969 = vadd.f32 %v8640, %v8968
  %v8970 = vpop.f32.mrf.mxu0
  %v8971 = vadd.f32 %v8642, %v8970
  %8972 = vmatmul.bf16.gmra.mxu0 %v3520
  %v8973 = vpop.f32.mrf.mxu0
  %v8974 = vadd.f32 %v8645, %v8973
  %v8975 = vpop.f32.mrf.mxu0
  %v8976 = vadd.f32 %v8647, %v8975
  %8977 = vmatmul.bf16.gmra.mxu0 %v3528
  %v8978 = vpop.f32.mrf.mxu0
  %v8979 = vadd.f32 %v8650, %v8978
  %v8980 = vpop.f32.mrf.mxu0
  %v8981 = vadd.f32 %v8652, %v8980
  %8982 = vmatmul.bf16.gmra.mxu0 %v3536
  %v8983 = vpop.f32.mrf.mxu0
  %v8984 = vadd.f32 %v8655, %v8983
  %v8985 = vpop.f32.mrf.mxu0
  %v8986 = vadd.f32 %v8657, %v8985
  %8987 = vmatmul.bf16.gmra.mxu0 %v3544
  %v8988 = vpop.f32.mrf.mxu0
  %v8989 = vadd.f32 %v8660, %v8988
  %v8990 = vpop.f32.mrf.mxu0
  %v8991 = vadd.f32 %v8662, %v8990
  %8992 = vmatmul.bf16.gmra.mxu0 %v3552
  %v8993 = vpop.f32.mrf.mxu0
  %v8994 = vadd.f32 %v8665, %v8993
  %v8995 = vpop.f32.mrf.mxu0
  %v8996 = vadd.f32 %v8667, %v8995
  %8997 = vdwg.mxu0
  %8998 = vmatpush.bf16.msra.mxu0 %v7332
  %8999 = vmatpush.bf16.msra.mxu0 %v7331
  %9000 = vmatpush.bf16.msra.mxu0 %v7330
  %9001 = vmatpush.bf16.msra.mxu0 %v7329
  %9002 = vmatpush.bf16.msra.mxu0 %v7328
  %9003 = vmatpush.bf16.msra.mxu0 %v7327
  %9004 = vmatpush.bf16.msra.mxu0 %v7326
  %9005 = vmatpush.bf16.msra.mxu0 %v7325
  %9006 = vmatmul.bf16.gmra.mxu0 %v3049
  %v9007 = vpop.f32.mrf.mxu0
  %v9008 = vadd.f32 %v8679, %v9007
  %v9009 = vpop.f32.mrf.mxu0
  %v9010 = vadd.f32 %v8681, %v9009
  %9011 = vmatmul.bf16.gmra.mxu0 %v3057
  %v9012 = vpop.f32.mrf.mxu0
  %v9013 = vadd.f32 %v8684, %v9012
  %v9014 = vpop.f32.mrf.mxu0
  %v9015 = vadd.f32 %v8686, %v9014
  %9016 = vmatmul.bf16.gmra.mxu0 %v3065
  %v9017 = vpop.f32.mrf.mxu0
  %v9018 = vadd.f32 %v8689, %v9017
  %v9019 = vpop.f32.mrf.mxu0
  %v9020 = vadd.f32 %v8691, %v9019
  %9021 = vmatmul.bf16.gmra.mxu0 %v3073
  %v9022 = vpop.f32.mrf.mxu0
  %v9023 = vadd.f32 %v8694, %v9022
  %v9024 = vpop.f32.mrf.mxu0
  %v9025 = vadd.f32 %v8696, %v9024
  %9026 = vmatmul.bf16.gmra.mxu0 %v3081
  %v9027 = vpop.f32.mrf.mxu0
  %v9028 = vadd.f32 %v8699, %v9027
  %v9029 = vpop.f32.mrf.mxu0
  %v9030 = vadd.f32 %v8701, %v9029
  %9031 = vmatmul.bf16.gmra.mxu0 %v3089
  %v9032 = vpop.f32.mrf.mxu0
  %v9033 = vadd.f32 %v8704, %v9032
  %v9034 = vpop.f32.mrf.mxu0
  %v9035 = vadd.f32 %v8706, %v9034
  %9036 = vmatmul.bf16.gmra.mxu0 %v3097
  %v9037 = vpop.f32.mrf.mxu0
  %v9038 = vadd.f32 %v8709, %v9037
  %v9039 = vpop.f32.mrf.mxu0
  %v9040 = vadd.f32 %v8711, %v9039
  %9041 = vmatmul.bf16.gmra.mxu0 %v3105
  %v9042 = vpop.f32.mrf.mxu0
  %v9043 = vadd.f32 %v8714, %v9042
  %v9044 = vpop.f32.mrf.mxu0
  %v9045 = vadd.f32 %v8716, %v9044
  %9046 = vmatmul.bf16.gmra.mxu0 %v3113
  %v9047 = vpop.f32.mrf.mxu0
  %v9048 = vadd.f32 %v8719, %v9047
  %v9049 = vpop.f32.mrf.mxu0
  %v9050 = vadd.f32 %v8721, %v9049
  %9051 = vmatmul.bf16.gmra.mxu0 %v3121
  %v9052 = vpop.f32.mrf.mxu0
  %v9053 = vadd.f32 %v8724, %v9052
  %v9054 = vpop.f32.mrf.mxu0
  %v9055 = vadd.f32 %v8726, %v9054
  %9056 = vmatmul.bf16.gmra.mxu0 %v3129
  %v9057 = vpop.f32.mrf.mxu0
  %v9058 = vadd.f32 %v8729, %v9057
  %v9059 = vpop.f32.mrf.mxu0
  %v9060 = vadd.f32 %v8731, %v9059
  %9061 = vmatmul.bf16.gmra.mxu0 %v3137
  %v9062 = vpop.f32.mrf.mxu0
  %v9063 = vadd.f32 %v8734, %v9062
  %v9064 = vpop.f32.mrf.mxu0
  %v9065 = vadd.f32 %v8736, %v9064
  %9066 = vmatmul.bf16.gmra.mxu0 %v3145
  %v9067 = vpop.f32.mrf.mxu0
  %v9068 = vadd.f32 %v8739, %v9067
  %v9069 = vpop.f32.mrf.mxu0
  %v9070 = vadd.f32 %v8741, %v9069
  %9071 = vmatmul.bf16.gmra.mxu0 %v3153
  %v9072 = vpop.f32.mrf.mxu0
  %v9073 = vadd.f32 %v8744, %v9072
  %v9074 = vpop.f32.mrf.mxu0
  %v9075 = vadd.f32 %v8746, %v9074
  %9076 = vmatmul.bf16.gmra.mxu0 %v3161
  %v9077 = vpop.f32.mrf.mxu0
  %v9078 = vadd.f32 %v8749, %v9077
  %v9079 = vpop.f32.mrf.mxu0
  %v9080 = vadd.f32 %v8751, %v9079
  %9081 = vmatmul.bf16.gmra.mxu0 %v3169
  %v9082 = vpop.f32.mrf.mxu0
  %v9083 = vadd.f32 %v8754, %v9082
  %v9084 = vpop.f32.mrf.mxu0
  %v9085 = vadd.f32 %v8756, %v9084
  %9086 = vmatmul.bf16.gmra.mxu0 %v3177
  %v9087 = vpop.f32.mrf.mxu0
  %v9088 = vadd.f32 %v8759, %v9087
  %v9089 = vpop.f32.mrf.mxu0
  %v9090 = vadd.f32 %v8761, %v9089
  %9091 = vmatmul.bf16.gmra.mxu0 %v3185
  %v9092 = vpop.f32.mrf.mxu0
  %v9093 = vadd.f32 %v8764, %v9092
  %v9094 = vpop.f32.mrf.mxu0
  %v9095 = vadd.f32 %v8766, %v9094
  %9096 = vmatmul.bf16.gmra.mxu0 %v3193
  %v9097 = vpop.f32.mrf.mxu0
  %v9098 = vadd.f32 %v8769, %v9097
  %v9099 = vpop.f32.mrf.mxu0
  %v9100 = vadd.f32 %v8771, %v9099
  %9101 = vmatmul.bf16.gmra.mxu0 %v3201
  %v9102 = vpop.f32.mrf.mxu0
  %v9103 = vadd.f32 %v8774, %v9102
  %v9104 = vpop.f32.mrf.mxu0
  %v9105 = vadd.f32 %v8776, %v9104
  %9106 = vmatmul.bf16.gmra.mxu0 %v3209
  %v9107 = vpop.f32.mrf.mxu0
  %v9108 = vadd.f32 %v8779, %v9107
  %v9109 = vpop.f32.mrf.mxu0
  %v9110 = vadd.f32 %v8781, %v9109
  %9111 = vmatmul.bf16.gmra.mxu0 %v3217
  %v9112 = vpop.f32.mrf.mxu0
  %v9113 = vadd.f32 %v8784, %v9112
  %v9114 = vpop.f32.mrf.mxu0
  %v9115 = vadd.f32 %v8786, %v9114
  %9116 = vmatmul.bf16.gmra.mxu0 %v3225
  %v9117 = vpop.f32.mrf.mxu0
  %v9118 = vadd.f32 %v8789, %v9117
  %v9119 = vpop.f32.mrf.mxu0
  %v9120 = vadd.f32 %v8791, %v9119
  %9121 = vmatmul.bf16.gmra.mxu0 %v3233
  %v9122 = vpop.f32.mrf.mxu0
  %v9123 = vadd.f32 %v8794, %v9122
  %v9124 = vpop.f32.mrf.mxu0
  %v9125 = vadd.f32 %v8796, %v9124
  %9126 = vmatmul.bf16.gmra.mxu0 %v3241
  %v9127 = vpop.f32.mrf.mxu0
  %v9128 = vadd.f32 %v8799, %v9127
  %v9129 = vpop.f32.mrf.mxu0
  %v9130 = vadd.f32 %v8801, %v9129
  %9131 = vmatmul.bf16.gmra.mxu0 %v3249
  %v9132 = vpop.f32.mrf.mxu0
  %v9133 = vadd.f32 %v8804, %v9132
  %v9134 = vpop.f32.mrf.mxu0
  %v9135 = vadd.f32 %v8806, %v9134
  %9136 = vmatmul.bf16.gmra.mxu0 %v3257
  %v9137 = vpop.f32.mrf.mxu0
  %v9138 = vadd.f32 %v8809, %v9137
  %v9139 = vpop.f32.mrf.mxu0
  %v9140 = vadd.f32 %v8811, %v9139
  %9141 = vmatmul.bf16.gmra.mxu0 %v3265
  %v9142 = vpop.f32.mrf.mxu0
  %v9143 = vadd.f32 %v8814, %v9142
  %v9144 = vpop.f32.mrf.mxu0
  %v9145 = vadd.f32 %v8816, %v9144
  %9146 = vmatmul.bf16.gmra.mxu0 %v3273
  %v9147 = vpop.f32.mrf.mxu0
  %v9148 = vadd.f32 %v8819, %v9147
  %v9149 = vpop.f32.mrf.mxu0
  %v9150 = vadd.f32 %v8821, %v9149
  %9151 = vmatmul.bf16.gmra.mxu0 %v3281
  %v9152 = vpop.f32.mrf.mxu0
  %v9153 = vadd.f32 %v8824, %v9152
  %v9154 = vpop.f32.mrf.mxu0
  %v9155 = vadd.f32 %v8826, %v9154
  %9156 = vmatmul.bf16.gmra.mxu0 %v3289
  %v9157 = vpop.f32.mrf.mxu0
  %v9158 = vadd.f32 %v8829, %v9157
  %v9159 = vpop.f32.mrf.mxu0
  %v9160 = vadd.f32 %v8831, %v9159
  %9161 = vmatmul.bf16.gmra.mxu0 %v3297
  %v9162 = vpop.f32.mrf.mxu0
  %v9163 = vadd.f32 %v8834, %v9162
  %v9164 = vpop.f32.mrf.mxu0
  %v9165 = vadd.f32 %v8836, %v9164
  %9166 = vmatmul.bf16.gmra.mxu0 %v3305
  %v9167 = vpop.f32.mrf.mxu0
  %v9168 = vadd.f32 %v8839, %v9167
  %v9169 = vpop.f32.mrf.mxu0
  %v9170 = vadd.f32 %v8841, %v9169
  %9171 = vmatmul.bf16.gmra.mxu0 %v3313
  %v9172 = vpop.f32.mrf.mxu0
  %v9173 = vadd.f32 %v8844, %v9172
  %v9174 = vpop.f32.mrf.mxu0
  %v9175 = vadd.f32 %v8846, %v9174
  %9176 = vmatmul.bf16.gmra.mxu0 %v3321
  %v9177 = vpop.f32.mrf.mxu0
  %v9178 = vadd.f32 %v8849, %v9177
  %v9179 = vpop.f32.mrf.mxu0
  %v9180 = vadd.f32 %v8851, %v9179
  %9181 = vmatmul.bf16.gmra.mxu0 %v3329
  %v9182 = vpop.f32.mrf.mxu0
  %v9183 = vadd.f32 %v8854, %v9182
  %v9184 = vpop.f32.mrf.mxu0
  %v9185 = vadd.f32 %v8856, %v9184
  %9186 = vmatmul.bf16.gmra.mxu0 %v3337
  %v9187 = vpop.f32.mrf.mxu0
  %v9188 = vadd.f32 %v8859, %v9187
  %v9189 = vpop.f32.mrf.mxu0
  %v9190 = vadd.f32 %v8861, %v9189
  %9191 = vmatmul.bf16.gmra.mxu0 %v3345
  %v9192 = vpop.f32.mrf.mxu0
  %v9193 = vadd.f32 %v8864, %v9192
  %v9194 = vpop.f32.mrf.mxu0
  %v9195 = vadd.f32 %v8866, %v9194
  %9196 = vmatmul.bf16.gmra.mxu0 %v3353
  %v9197 = vpop.f32.mrf.mxu0
  %v9198 = vadd.f32 %v8869, %v9197
  %v9199 = vpop.f32.mrf.mxu0
  %v9200 = vadd.f32 %v8871, %v9199
  %9201 = vmatmul.bf16.gmra.mxu0 %v3361
  %v9202 = vpop.f32.mrf.mxu0
  %v9203 = vadd.f32 %v8874, %v9202
  %v9204 = vpop.f32.mrf.mxu0
  %v9205 = vadd.f32 %v8876, %v9204
  %9206 = vmatmul.bf16.gmra.mxu0 %v3369
  %v9207 = vpop.f32.mrf.mxu0
  %v9208 = vadd.f32 %v8879, %v9207
  %v9209 = vpop.f32.mrf.mxu0
  %v9210 = vadd.f32 %v8881, %v9209
  %9211 = vmatmul.bf16.gmra.mxu0 %v3377
  %v9212 = vpop.f32.mrf.mxu0
  %v9213 = vadd.f32 %v8884, %v9212
  %v9214 = vpop.f32.mrf.mxu0
  %v9215 = vadd.f32 %v8886, %v9214
  %9216 = vmatmul.bf16.gmra.mxu0 %v3385
  %v9217 = vpop.f32.mrf.mxu0
  %v9218 = vadd.f32 %v8889, %v9217
  %v9219 = vpop.f32.mrf.mxu0
  %v9220 = vadd.f32 %v8891, %v9219
  %9221 = vmatmul.bf16.gmra.mxu0 %v3393
  %v9222 = vpop.f32.mrf.mxu0
  %v9223 = vadd.f32 %v8894, %v9222
  %v9224 = vpop.f32.mrf.mxu0
  %v9225 = vadd.f32 %v8896, %v9224
  %9226 = vmatmul.bf16.gmra.mxu0 %v3401
  %v9227 = vpop.f32.mrf.mxu0
  %v9228 = vadd.f32 %v8899, %v9227
  %v9229 = vpop.f32.mrf.mxu0
  %v9230 = vadd.f32 %v8901, %v9229
  %9231 = vmatmul.bf16.gmra.mxu0 %v3409
  %v9232 = vpop.f32.mrf.mxu0
  %v9233 = vadd.f32 %v8904, %v9232
  %v9234 = vpop.f32.mrf.mxu0
  %v9235 = vadd.f32 %v8906, %v9234
  %9236 = vmatmul.bf16.gmra.mxu0 %v3417
  %v9237 = vpop.f32.mrf.mxu0
  %v9238 = vadd.f32 %v8909, %v9237
  %v9239 = vpop.f32.mrf.mxu0
  %v9240 = vadd.f32 %v8911, %v9239
  %9241 = vmatmul.bf16.gmra.mxu0 %v3425
  %v9242 = vpop.f32.mrf.mxu0
  %v9243 = vadd.f32 %v8914, %v9242
  %v9244 = vpop.f32.mrf.mxu0
  %v9245 = vadd.f32 %v8916, %v9244
  %9246 = vmatmul.bf16.gmra.mxu0 %v3433
  %v9247 = vpop.f32.mrf.mxu0
  %v9248 = vadd.f32 %v8919, %v9247
  %v9249 = vpop.f32.mrf.mxu0
  %v9250 = vadd.f32 %v8921, %v9249
  %9251 = vmatmul.bf16.gmra.mxu0 %v3441
  %v9252 = vpop.f32.mrf.mxu0
  %v9253 = vadd.f32 %v8924, %v9252
  %v9254 = vpop.f32.mrf.mxu0
  %v9255 = vadd.f32 %v8926, %v9254
  %9256 = vmatmul.bf16.gmra.mxu0 %v3449
  %v9257 = vpop.f32.mrf.mxu0
  %v9258 = vadd.f32 %v8929, %v9257
  %v9259 = vpop.f32.mrf.mxu0
  %v9260 = vadd.f32 %v8931, %v9259
  %9261 = vmatmul.bf16.gmra.mxu0 %v3457
  %v9262 = vpop.f32.mrf.mxu0
  %v9263 = vadd.f32 %v8934, %v9262
  %v9264 = vpop.f32.mrf.mxu0
  %v9265 = vadd.f32 %v8936, %v9264
  %9266 = vmatmul.bf16.gmra.mxu0 %v3465
  %v9267 = vpop.f32.mrf.mxu0
  %v9268 = vadd.f32 %v8939, %v9267
  %v9269 = vpop.f32.mrf.mxu0
  %v9270 = vadd.f32 %v8941, %v9269
  %9271 = vmatmul.bf16.gmra.mxu0 %v3473
  %v9272 = vpop.f32.mrf.mxu0
  %v9273 = vadd.f32 %v8944, %v9272
  %v9274 = vpop.f32.mrf.mxu0
  %v9275 = vadd.f32 %v8946, %v9274
  %9276 = vmatmul.bf16.gmra.mxu0 %v3481
  %v9277 = vpop.f32.mrf.mxu0
  %v9278 = vadd.f32 %v8949, %v9277
  %v9279 = vpop.f32.mrf.mxu0
  %v9280 = vadd.f32 %v8951, %v9279
  %9281 = vmatmul.bf16.gmra.mxu0 %v3489
  %v9282 = vpop.f32.mrf.mxu0
  %v9283 = vadd.f32 %v8954, %v9282
  %v9284 = vpop.f32.mrf.mxu0
  %v9285 = vadd.f32 %v8956, %v9284
  %9286 = vmatmul.bf16.gmra.mxu0 %v3497
  %v9287 = vpop.f32.mrf.mxu0
  %v9288 = vadd.f32 %v8959, %v9287
  %v9289 = vpop.f32.mrf.mxu0
  %v9290 = vadd.f32 %v8961, %v9289
  %9291 = vmatmul.bf16.gmra.mxu0 %v3505
  %v9292 = vpop.f32.mrf.mxu0
  %v9293 = vadd.f32 %v8964, %v9292
  %v9294 = vpop.f32.mrf.mxu0
  %v9295 = vadd.f32 %v8966, %v9294
  %9296 = vmatmul.bf16.gmra.mxu0 %v3513
  %v9297 = vpop.f32.mrf.mxu0
  %v9298 = vadd.f32 %v8969, %v9297
  %v9299 = vpop.f32.mrf.mxu0
  %v9300 = vadd.f32 %v8971, %v9299
  %9301 = vmatmul.bf16.gmra.mxu0 %v3521
  %v9302 = vpop.f32.mrf.mxu0
  %v9303 = vadd.f32 %v8974, %v9302
  %v9304 = vpop.f32.mrf.mxu0
  %v9305 = vadd.f32 %v8976, %v9304
  %9306 = vmatmul.bf16.gmra.mxu0 %v3529
  %v9307 = vpop.f32.mrf.mxu0
  %v9308 = vadd.f32 %v8979, %v9307
  %v9309 = vpop.f32.mrf.mxu0
  %v9310 = vadd.f32 %v8981, %v9309
  %9311 = vmatmul.bf16.gmra.mxu0 %v3537
  %v9312 = vpop.f32.mrf.mxu0
  %v9313 = vadd.f32 %v8984, %v9312
  %v9314 = vpop.f32.mrf.mxu0
  %v9315 = vadd.f32 %v8986, %v9314
  %9316 = vmatmul.bf16.gmra.mxu0 %v3545
  %v9317 = vpop.f32.mrf.mxu0
  %v9318 = vadd.f32 %v8989, %v9317
  %v9319 = vpop.f32.mrf.mxu0
  %v9320 = vadd.f32 %v8991, %v9319
  %9321 = vmatmul.bf16.gmra.mxu0 %v3553
  %v9322 = vpop.f32.mrf.mxu0
  %v9323 = vadd.f32 %v8994, %v9322
  %v9324 = vpop.f32.mrf.mxu0
  %v9325 = vadd.f32 %v8996, %v9324
  %9326 = vdwg.mxu0
  %9327 = vmatpush.bf16.msra.mxu0 %v7340
  %9328 = vmatpush.bf16.msra.mxu0 %v7339
  %9329 = vmatpush.bf16.msra.mxu0 %v7338
  %9330 = vmatpush.bf16.msra.mxu0 %v7337
  %9331 = vmatpush.bf16.msra.mxu0 %v7336
  %9332 = vmatpush.bf16.msra.mxu0 %v7335
  %9333 = vmatpush.bf16.msra.mxu0 %v7334
  %9334 = vmatpush.bf16.msra.mxu0 %v7333
  %9335 = vmatmul.bf16.gmra.mxu0 %v3050
  %v9336 = vpop.f32.mrf.mxu0
  %v9337 = vadd.f32 %v9008, %v9336
  %v9338 = vpop.f32.mrf.mxu0
  %v9339 = vadd.f32 %v9010, %v9338
  %9340 = vmatmul.bf16.gmra.mxu0 %v3058
  %v9341 = vpop.f32.mrf.mxu0
  %v9342 = vadd.f32 %v9013, %v9341
  %v9343 = vpop.f32.mrf.mxu0
  %v9344 = vadd.f32 %v9015, %v9343
  %9345 = vmatmul.bf16.gmra.mxu0 %v3066
  %v9346 = vpop.f32.mrf.mxu0
  %v9347 = vadd.f32 %v9018, %v9346
  %v9348 = vpop.f32.mrf.mxu0
  %v9349 = vadd.f32 %v9020, %v9348
  %9350 = vmatmul.bf16.gmra.mxu0 %v3074
  %v9351 = vpop.f32.mrf.mxu0
  %v9352 = vadd.f32 %v9023, %v9351
  %v9353 = vpop.f32.mrf.mxu0
  %v9354 = vadd.f32 %v9025, %v9353
  %9355 = vmatmul.bf16.gmra.mxu0 %v3082
  %v9356 = vpop.f32.mrf.mxu0
  %v9357 = vadd.f32 %v9028, %v9356
  %v9358 = vpop.f32.mrf.mxu0
  %v9359 = vadd.f32 %v9030, %v9358
  %9360 = vmatmul.bf16.gmra.mxu0 %v3090
  %v9361 = vpop.f32.mrf.mxu0
  %v9362 = vadd.f32 %v9033, %v9361
  %v9363 = vpop.f32.mrf.mxu0
  %v9364 = vadd.f32 %v9035, %v9363
  %9365 = vmatmul.bf16.gmra.mxu0 %v3098
  %v9366 = vpop.f32.mrf.mxu0
  %v9367 = vadd.f32 %v9038, %v9366
  %v9368 = vpop.f32.mrf.mxu0
  %v9369 = vadd.f32 %v9040, %v9368
  %9370 = vmatmul.bf16.gmra.mxu0 %v3106
  %v9371 = vpop.f32.mrf.mxu0
  %v9372 = vadd.f32 %v9043, %v9371
  %v9373 = vpop.f32.mrf.mxu0
  %v9374 = vadd.f32 %v9045, %v9373
  %9375 = vmatmul.bf16.gmra.mxu0 %v3114
  %v9376 = vpop.f32.mrf.mxu0
  %v9377 = vadd.f32 %v9048, %v9376
  %v9378 = vpop.f32.mrf.mxu0
  %v9379 = vadd.f32 %v9050, %v9378
  %9380 = vmatmul.bf16.gmra.mxu0 %v3122
  %v9381 = vpop.f32.mrf.mxu0
  %v9382 = vadd.f32 %v9053, %v9381
  %v9383 = vpop.f32.mrf.mxu0
  %v9384 = vadd.f32 %v9055, %v9383
  %9385 = vmatmul.bf16.gmra.mxu0 %v3130
  %v9386 = vpop.f32.mrf.mxu0
  %v9387 = vadd.f32 %v9058, %v9386
  %v9388 = vpop.f32.mrf.mxu0
  %v9389 = vadd.f32 %v9060, %v9388
  %9390 = vmatmul.bf16.gmra.mxu0 %v3138
  %v9391 = vpop.f32.mrf.mxu0
  %v9392 = vadd.f32 %v9063, %v9391
  %v9393 = vpop.f32.mrf.mxu0
  %v9394 = vadd.f32 %v9065, %v9393
  %9395 = vmatmul.bf16.gmra.mxu0 %v3146
  %v9396 = vpop.f32.mrf.mxu0
  %v9397 = vadd.f32 %v9068, %v9396
  %v9398 = vpop.f32.mrf.mxu0
  %v9399 = vadd.f32 %v9070, %v9398
  %9400 = vmatmul.bf16.gmra.mxu0 %v3154
  %v9401 = vpop.f32.mrf.mxu0
  %v9402 = vadd.f32 %v9073, %v9401
  %v9403 = vpop.f32.mrf.mxu0
  %v9404 = vadd.f32 %v9075, %v9403
  %9405 = vmatmul.bf16.gmra.mxu0 %v3162
  %v9406 = vpop.f32.mrf.mxu0
  %v9407 = vadd.f32 %v9078, %v9406
  %v9408 = vpop.f32.mrf.mxu0
  %v9409 = vadd.f32 %v9080, %v9408
  %9410 = vmatmul.bf16.gmra.mxu0 %v3170
  %v9411 = vpop.f32.mrf.mxu0
  %v9412 = vadd.f32 %v9083, %v9411
  %v9413 = vpop.f32.mrf.mxu0
  %v9414 = vadd.f32 %v9085, %v9413
  %9415 = vmatmul.bf16.gmra.mxu0 %v3178
  %v9416 = vpop.f32.mrf.mxu0
  %v9417 = vadd.f32 %v9088, %v9416
  %v9418 = vpop.f32.mrf.mxu0
  %v9419 = vadd.f32 %v9090, %v9418
  %9420 = vmatmul.bf16.gmra.mxu0 %v3186
  %v9421 = vpop.f32.mrf.mxu0
  %v9422 = vadd.f32 %v9093, %v9421
  %v9423 = vpop.f32.mrf.mxu0
  %v9424 = vadd.f32 %v9095, %v9423
  %9425 = vmatmul.bf16.gmra.mxu0 %v3194
  %v9426 = vpop.f32.mrf.mxu0
  %v9427 = vadd.f32 %v9098, %v9426
  %v9428 = vpop.f32.mrf.mxu0
  %v9429 = vadd.f32 %v9100, %v9428
  %9430 = vmatmul.bf16.gmra.mxu0 %v3202
  %v9431 = vpop.f32.mrf.mxu0
  %v9432 = vadd.f32 %v9103, %v9431
  %v9433 = vpop.f32.mrf.mxu0
  %v9434 = vadd.f32 %v9105, %v9433
  %9435 = vmatmul.bf16.gmra.mxu0 %v3210
  %v9436 = vpop.f32.mrf.mxu0
  %v9437 = vadd.f32 %v9108, %v9436
  %v9438 = vpop.f32.mrf.mxu0
  %v9439 = vadd.f32 %v9110, %v9438
  %9440 = vmatmul.bf16.gmra.mxu0 %v3218
  %v9441 = vpop.f32.mrf.mxu0
  %v9442 = vadd.f32 %v9113, %v9441
  %v9443 = vpop.f32.mrf.mxu0
  %v9444 = vadd.f32 %v9115, %v9443
  %9445 = vmatmul.bf16.gmra.mxu0 %v3226
  %v9446 = vpop.f32.mrf.mxu0
  %v9447 = vadd.f32 %v9118, %v9446
  %v9448 = vpop.f32.mrf.mxu0
  %v9449 = vadd.f32 %v9120, %v9448
  %9450 = vmatmul.bf16.gmra.mxu0 %v3234
  %v9451 = vpop.f32.mrf.mxu0
  %v9452 = vadd.f32 %v9123, %v9451
  %v9453 = vpop.f32.mrf.mxu0
  %v9454 = vadd.f32 %v9125, %v9453
  %9455 = vmatmul.bf16.gmra.mxu0 %v3242
  %v9456 = vpop.f32.mrf.mxu0
  %v9457 = vadd.f32 %v9128, %v9456
  %v9458 = vpop.f32.mrf.mxu0
  %v9459 = vadd.f32 %v9130, %v9458
  %9460 = vmatmul.bf16.gmra.mxu0 %v3250
  %v9461 = vpop.f32.mrf.mxu0
  %v9462 = vadd.f32 %v9133, %v9461
  %v9463 = vpop.f32.mrf.mxu0
  %v9464 = vadd.f32 %v9135, %v9463
  %9465 = vmatmul.bf16.gmra.mxu0 %v3258
  %v9466 = vpop.f32.mrf.mxu0
  %v9467 = vadd.f32 %v9138, %v9466
  %v9468 = vpop.f32.mrf.mxu0
  %v9469 = vadd.f32 %v9140, %v9468
  %9470 = vmatmul.bf16.gmra.mxu0 %v3266
  %v9471 = vpop.f32.mrf.mxu0
  %v9472 = vadd.f32 %v9143, %v9471
  %v9473 = vpop.f32.mrf.mxu0
  %v9474 = vadd.f32 %v9145, %v9473
  %9475 = vmatmul.bf16.gmra.mxu0 %v3274
  %v9476 = vpop.f32.mrf.mxu0
  %v9477 = vadd.f32 %v9148, %v9476
  %v9478 = vpop.f32.mrf.mxu0
  %v9479 = vadd.f32 %v9150, %v9478
  %9480 = vmatmul.bf16.gmra.mxu0 %v3282
  %v9481 = vpop.f32.mrf.mxu0
  %v9482 = vadd.f32 %v9153, %v9481
  %v9483 = vpop.f32.mrf.mxu0
  %v9484 = vadd.f32 %v9155, %v9483
  %9485 = vmatmul.bf16.gmra.mxu0 %v3290
  %v9486 = vpop.f32.mrf.mxu0
  %v9487 = vadd.f32 %v9158, %v9486
  %v9488 = vpop.f32.mrf.mxu0
  %v9489 = vadd.f32 %v9160, %v9488
  %9490 = vmatmul.bf16.gmra.mxu0 %v3298
  %v9491 = vpop.f32.mrf.mxu0
  %v9492 = vadd.f32 %v9163, %v9491
  %v9493 = vpop.f32.mrf.mxu0
  %v9494 = vadd.f32 %v9165, %v9493
  %9495 = vmatmul.bf16.gmra.mxu0 %v3306
  %v9496 = vpop.f32.mrf.mxu0
  %v9497 = vadd.f32 %v9168, %v9496
  %v9498 = vpop.f32.mrf.mxu0
  %v9499 = vadd.f32 %v9170, %v9498
  %9500 = vmatmul.bf16.gmra.mxu0 %v3314
  %v9501 = vpop.f32.mrf.mxu0
  %v9502 = vadd.f32 %v9173, %v9501
  %v9503 = vpop.f32.mrf.mxu0
  %v9504 = vadd.f32 %v9175, %v9503
  %9505 = vmatmul.bf16.gmra.mxu0 %v3322
  %v9506 = vpop.f32.mrf.mxu0
  %v9507 = vadd.f32 %v9178, %v9506
  %v9508 = vpop.f32.mrf.mxu0
  %v9509 = vadd.f32 %v9180, %v9508
  %9510 = vmatmul.bf16.gmra.mxu0 %v3330
  %v9511 = vpop.f32.mrf.mxu0
  %v9512 = vadd.f32 %v9183, %v9511
  %v9513 = vpop.f32.mrf.mxu0
  %v9514 = vadd.f32 %v9185, %v9513
  %9515 = vmatmul.bf16.gmra.mxu0 %v3338
  %v9516 = vpop.f32.mrf.mxu0
  %v9517 = vadd.f32 %v9188, %v9516
  %v9518 = vpop.f32.mrf.mxu0
  %v9519 = vadd.f32 %v9190, %v9518
  %9520 = vmatmul.bf16.gmra.mxu0 %v3346
  %v9521 = vpop.f32.mrf.mxu0
  %v9522 = vadd.f32 %v9193, %v9521
  %v9523 = vpop.f32.mrf.mxu0
  %v9524 = vadd.f32 %v9195, %v9523
  %9525 = vmatmul.bf16.gmra.mxu0 %v3354
  %v9526 = vpop.f32.mrf.mxu0
  %v9527 = vadd.f32 %v9198, %v9526
  %v9528 = vpop.f32.mrf.mxu0
  %v9529 = vadd.f32 %v9200, %v9528
  %9530 = vmatmul.bf16.gmra.mxu0 %v3362
  %v9531 = vpop.f32.mrf.mxu0
  %v9532 = vadd.f32 %v9203, %v9531
  %v9533 = vpop.f32.mrf.mxu0
  %v9534 = vadd.f32 %v9205, %v9533
  %9535 = vmatmul.bf16.gmra.mxu0 %v3370
  %v9536 = vpop.f32.mrf.mxu0
  %v9537 = vadd.f32 %v9208, %v9536
  %v9538 = vpop.f32.mrf.mxu0
  %v9539 = vadd.f32 %v9210, %v9538
  %9540 = vmatmul.bf16.gmra.mxu0 %v3378
  %v9541 = vpop.f32.mrf.mxu0
  %v9542 = vadd.f32 %v9213, %v9541
  %v9543 = vpop.f32.mrf.mxu0
  %v9544 = vadd.f32 %v9215, %v9543
  %9545 = vmatmul.bf16.gmra.mxu0 %v3386
  %v9546 = vpop.f32.mrf.mxu0
  %v9547 = vadd.f32 %v9218, %v9546
  %v9548 = vpop.f32.mrf.mxu0
  %v9549 = vadd.f32 %v9220, %v9548
  %9550 = vmatmul.bf16.gmra.mxu0 %v3394
  %v9551 = vpop.f32.mrf.mxu0
  %v9552 = vadd.f32 %v9223, %v9551
  %v9553 = vpop.f32.mrf.mxu0
  %v9554 = vadd.f32 %v9225, %v9553
  %9555 = vmatmul.bf16.gmra.mxu0 %v3402
  %v9556 = vpop.f32.mrf.mxu0
  %v9557 = vadd.f32 %v9228, %v9556
  %v9558 = vpop.f32.mrf.mxu0
  %v9559 = vadd.f32 %v9230, %v9558
  %9560 = vmatmul.bf16.gmra.mxu0 %v3410
  %v9561 = vpop.f32.mrf.mxu0
  %v9562 = vadd.f32 %v9233, %v9561
  %v9563 = vpop.f32.mrf.mxu0
  %v9564 = vadd.f32 %v9235, %v9563
  %9565 = vmatmul.bf16.gmra.mxu0 %v3418
  %v9566 = vpop.f32.mrf.mxu0
  %v9567 = vadd.f32 %v9238, %v9566
  %v9568 = vpop.f32.mrf.mxu0
  %v9569 = vadd.f32 %v9240, %v9568
  %9570 = vmatmul.bf16.gmra.mxu0 %v3426
  %v9571 = vpop.f32.mrf.mxu0
  %v9572 = vadd.f32 %v9243, %v9571
  %v9573 = vpop.f32.mrf.mxu0
  %v9574 = vadd.f32 %v9245, %v9573
  %9575 = vmatmul.bf16.gmra.mxu0 %v3434
  %v9576 = vpop.f32.mrf.mxu0
  %v9577 = vadd.f32 %v9248, %v9576
  %v9578 = vpop.f32.mrf.mxu0
  %v9579 = vadd.f32 %v9250, %v9578
  %9580 = vmatmul.bf16.gmra.mxu0 %v3442
  %v9581 = vpop.f32.mrf.mxu0
  %v9582 = vadd.f32 %v9253, %v9581
  %v9583 = vpop.f32.mrf.mxu0
  %v9584 = vadd.f32 %v9255, %v9583
  %9585 = vmatmul.bf16.gmra.mxu0 %v3450
  %v9586 = vpop.f32.mrf.mxu0
  %v9587 = vadd.f32 %v9258, %v9586
  %v9588 = vpop.f32.mrf.mxu0
  %v9589 = vadd.f32 %v9260, %v9588
  %9590 = vmatmul.bf16.gmra.mxu0 %v3458
  %v9591 = vpop.f32.mrf.mxu0
  %v9592 = vadd.f32 %v9263, %v9591
  %v9593 = vpop.f32.mrf.mxu0
  %v9594 = vadd.f32 %v9265, %v9593
  %9595 = vmatmul.bf16.gmra.mxu0 %v3466
  %v9596 = vpop.f32.mrf.mxu0
  %v9597 = vadd.f32 %v9268, %v9596
  %v9598 = vpop.f32.mrf.mxu0
  %v9599 = vadd.f32 %v9270, %v9598
  %9600 = vmatmul.bf16.gmra.mxu0 %v3474
  %v9601 = vpop.f32.mrf.mxu0
  %v9602 = vadd.f32 %v9273, %v9601
  %v9603 = vpop.f32.mrf.mxu0
  %v9604 = vadd.f32 %v9275, %v9603
  %9605 = vmatmul.bf16.gmra.mxu0 %v3482
  %v9606 = vpop.f32.mrf.mxu0
  %v9607 = vadd.f32 %v9278, %v9606
  %v9608 = vpop.f32.mrf.mxu0
  %v9609 = vadd.f32 %v9280, %v9608
  %9610 = vmatmul.bf16.gmra.mxu0 %v3490
  %v9611 = vpop.f32.mrf.mxu0
  %v9612 = vadd.f32 %v9283, %v9611
  %v9613 = vpop.f32.mrf.mxu0
  %v9614 = vadd.f32 %v9285, %v9613
  %9615 = vmatmul.bf16.gmra.mxu0 %v3498
  %v9616 = vpop.f32.mrf.mxu0
  %v9617 = vadd.f32 %v9288, %v9616
  %v9618 = vpop.f32.mrf.mxu0
  %v9619 = vadd.f32 %v9290, %v9618
  %9620 = vmatmul.bf16.gmra.mxu0 %v3506
  %v9621 = vpop.f32.mrf.mxu0
  %v9622 = vadd.f32 %v9293, %v9621
  %v9623 = vpop.f32.mrf.mxu0
  %v9624 = vadd.f32 %v9295, %v9623
  %9625 = vmatmul.bf16.gmra.mxu0 %v3514
  %v9626 = vpop.f32.mrf.mxu0
  %v9627 = vadd.f32 %v9298, %v9626
  %v9628 = vpop.f32.mrf.mxu0
  %v9629 = vadd.f32 %v9300, %v9628
  %9630 = vmatmul.bf16.gmra.mxu0 %v3522
  %v9631 = vpop.f32.mrf.mxu0
  %v9632 = vadd.f32 %v9303, %v9631
  %v9633 = vpop.f32.mrf.mxu0
  %v9634 = vadd.f32 %v9305, %v9633
  %9635 = vmatmul.bf16.gmra.mxu0 %v3530
  %v9636 = vpop.f32.mrf.mxu0
  %v9637 = vadd.f32 %v9308, %v9636
  %v9638 = vpop.f32.mrf.mxu0
  %v9639 = vadd.f32 %v9310, %v9638
  %9640 = vmatmul.bf16.gmra.mxu0 %v3538
  %v9641 = vpop.f32.mrf.mxu0
  %v9642 = vadd.f32 %v9313, %v9641
  %v9643 = vpop.f32.mrf.mxu0
  %v9644 = vadd.f32 %v9315, %v9643
  %9645 = vmatmul.bf16.gmra.mxu0 %v3546
  %v9646 = vpop.f32.mrf.mxu0
  %v9647 = vadd.f32 %v9318, %v9646
  %v9648 = vpop.f32.mrf.mxu0
  %v9649 = vadd.f32 %v9320, %v9648
  %9650 = vmatmul.bf16.gmra.mxu0 %v3554
  %v9651 = vpop.f32.mrf.mxu0
  %v9652 = vadd.f32 %v9323, %v9651
  %v9653 = vpop.f32.mrf.mxu0
  %v9654 = vadd.f32 %v9325, %v9653
  %9655 = vdwg.mxu0
  %9656 = vmatpush.bf16.msra.mxu0 %v7348
  %9657 = vmatpush.bf16.msra.mxu0 %v7347
  %9658 = vmatpush.bf16.msra.mxu0 %v7346
  %9659 = vmatpush.bf16.msra.mxu0 %v7345
  %9660 = vmatpush.bf16.msra.mxu0 %v7344
  %9661 = vmatpush.bf16.msra.mxu0 %v7343
  %9662 = vmatpush.bf16.msra.mxu0 %v7342
  %9663 = vmatpush.bf16.msra.mxu0 %v7341
  %9664 = vmatmul.bf16.gmra.mxu0 %v3051
  %v9665 = vpop.f32.mrf.mxu0
  %v9666 = vadd.f32 %v9337, %v9665
  %v9667 = vpop.f32.mrf.mxu0
  %v9668 = vadd.f32 %v9339, %v9667
  %9669 = vmatmul.bf16.gmra.mxu0 %v3059
  %v9670 = vpop.f32.mrf.mxu0
  %v9671 = vadd.f32 %v9342, %v9670
  %v9672 = vpop.f32.mrf.mxu0
  %v9673 = vadd.f32 %v9344, %v9672
  %9674 = vmatmul.bf16.gmra.mxu0 %v3067
  %v9675 = vpop.f32.mrf.mxu0
  %v9676 = vadd.f32 %v9347, %v9675
  %v9677 = vpop.f32.mrf.mxu0
  %v9678 = vadd.f32 %v9349, %v9677
  %9679 = vmatmul.bf16.gmra.mxu0 %v3075
  %v9680 = vpop.f32.mrf.mxu0
  %v9681 = vadd.f32 %v9352, %v9680
  %v9682 = vpop.f32.mrf.mxu0
  %v9683 = vadd.f32 %v9354, %v9682
  %9684 = vmatmul.bf16.gmra.mxu0 %v3083
  %v9685 = vpop.f32.mrf.mxu0
  %v9686 = vadd.f32 %v9357, %v9685
  %v9687 = vpop.f32.mrf.mxu0
  %v9688 = vadd.f32 %v9359, %v9687
  %9689 = vmatmul.bf16.gmra.mxu0 %v3091
  %v9690 = vpop.f32.mrf.mxu0
  %v9691 = vadd.f32 %v9362, %v9690
  %v9692 = vpop.f32.mrf.mxu0
  %v9693 = vadd.f32 %v9364, %v9692
  %9694 = vmatmul.bf16.gmra.mxu0 %v3099
  %v9695 = vpop.f32.mrf.mxu0
  %v9696 = vadd.f32 %v9367, %v9695
  %v9697 = vpop.f32.mrf.mxu0
  %v9698 = vadd.f32 %v9369, %v9697
  %9699 = vmatmul.bf16.gmra.mxu0 %v3107
  %v9700 = vpop.f32.mrf.mxu0
  %v9701 = vadd.f32 %v9372, %v9700
  %v9702 = vpop.f32.mrf.mxu0
  %v9703 = vadd.f32 %v9374, %v9702
  %9704 = vmatmul.bf16.gmra.mxu0 %v3115
  %v9705 = vpop.f32.mrf.mxu0
  %v9706 = vadd.f32 %v9377, %v9705
  %v9707 = vpop.f32.mrf.mxu0
  %v9708 = vadd.f32 %v9379, %v9707
  %9709 = vmatmul.bf16.gmra.mxu0 %v3123
  %v9710 = vpop.f32.mrf.mxu0
  %v9711 = vadd.f32 %v9382, %v9710
  %v9712 = vpop.f32.mrf.mxu0
  %v9713 = vadd.f32 %v9384, %v9712
  %9714 = vmatmul.bf16.gmra.mxu0 %v3131
  %v9715 = vpop.f32.mrf.mxu0
  %v9716 = vadd.f32 %v9387, %v9715
  %v9717 = vpop.f32.mrf.mxu0
  %v9718 = vadd.f32 %v9389, %v9717
  %9719 = vmatmul.bf16.gmra.mxu0 %v3139
  %v9720 = vpop.f32.mrf.mxu0
  %v9721 = vadd.f32 %v9392, %v9720
  %v9722 = vpop.f32.mrf.mxu0
  %v9723 = vadd.f32 %v9394, %v9722
  %9724 = vmatmul.bf16.gmra.mxu0 %v3147
  %v9725 = vpop.f32.mrf.mxu0
  %v9726 = vadd.f32 %v9397, %v9725
  %v9727 = vpop.f32.mrf.mxu0
  %v9728 = vadd.f32 %v9399, %v9727
  %9729 = vmatmul.bf16.gmra.mxu0 %v3155
  %v9730 = vpop.f32.mrf.mxu0
  %v9731 = vadd.f32 %v9402, %v9730
  %v9732 = vpop.f32.mrf.mxu0
  %v9733 = vadd.f32 %v9404, %v9732
  %9734 = vmatmul.bf16.gmra.mxu0 %v3163
  %v9735 = vpop.f32.mrf.mxu0
  %v9736 = vadd.f32 %v9407, %v9735
  %v9737 = vpop.f32.mrf.mxu0
  %v9738 = vadd.f32 %v9409, %v9737
  %9739 = vmatmul.bf16.gmra.mxu0 %v3171
  %v9740 = vpop.f32.mrf.mxu0
  %v9741 = vadd.f32 %v9412, %v9740
  %v9742 = vpop.f32.mrf.mxu0
  %v9743 = vadd.f32 %v9414, %v9742
  %9744 = vmatmul.bf16.gmra.mxu0 %v3179
  %v9745 = vpop.f32.mrf.mxu0
  %v9746 = vadd.f32 %v9417, %v9745
  %v9747 = vpop.f32.mrf.mxu0
  %v9748 = vadd.f32 %v9419, %v9747
  %9749 = vmatmul.bf16.gmra.mxu0 %v3187
  %v9750 = vpop.f32.mrf.mxu0
  %v9751 = vadd.f32 %v9422, %v9750
  %v9752 = vpop.f32.mrf.mxu0
  %v9753 = vadd.f32 %v9424, %v9752
  %9754 = vmatmul.bf16.gmra.mxu0 %v3195
  %v9755 = vpop.f32.mrf.mxu0
  %v9756 = vadd.f32 %v9427, %v9755
  %v9757 = vpop.f32.mrf.mxu0
  %v9758 = vadd.f32 %v9429, %v9757
  %9759 = vmatmul.bf16.gmra.mxu0 %v3203
  %v9760 = vpop.f32.mrf.mxu0
  %v9761 = vadd.f32 %v9432, %v9760
  %v9762 = vpop.f32.mrf.mxu0
  %v9763 = vadd.f32 %v9434, %v9762
  %9764 = vmatmul.bf16.gmra.mxu0 %v3211
  %v9765 = vpop.f32.mrf.mxu0
  %v9766 = vadd.f32 %v9437, %v9765
  %v9767 = vpop.f32.mrf.mxu0
  %v9768 = vadd.f32 %v9439, %v9767
  %9769 = vmatmul.bf16.gmra.mxu0 %v3219
  %v9770 = vpop.f32.mrf.mxu0
  %v9771 = vadd.f32 %v9442, %v9770
  %v9772 = vpop.f32.mrf.mxu0
  %v9773 = vadd.f32 %v9444, %v9772
  %9774 = vmatmul.bf16.gmra.mxu0 %v3227
  %v9775 = vpop.f32.mrf.mxu0
  %v9776 = vadd.f32 %v9447, %v9775
  %v9777 = vpop.f32.mrf.mxu0
  %v9778 = vadd.f32 %v9449, %v9777
  %9779 = vmatmul.bf16.gmra.mxu0 %v3235
  %v9780 = vpop.f32.mrf.mxu0
  %v9781 = vadd.f32 %v9452, %v9780
  %v9782 = vpop.f32.mrf.mxu0
  %v9783 = vadd.f32 %v9454, %v9782
  %9784 = vmatmul.bf16.gmra.mxu0 %v3243
  %v9785 = vpop.f32.mrf.mxu0
  %v9786 = vadd.f32 %v9457, %v9785
  %v9787 = vpop.f32.mrf.mxu0
  %v9788 = vadd.f32 %v9459, %v9787
  %9789 = vmatmul.bf16.gmra.mxu0 %v3251
  %v9790 = vpop.f32.mrf.mxu0
  %v9791 = vadd.f32 %v9462, %v9790
  %v9792 = vpop.f32.mrf.mxu0
  %v9793 = vadd.f32 %v9464, %v9792
  %9794 = vmatmul.bf16.gmra.mxu0 %v3259
  %v9795 = vpop.f32.mrf.mxu0
  %v9796 = vadd.f32 %v9467, %v9795
  %v9797 = vpop.f32.mrf.mxu0
  %v9798 = vadd.f32 %v9469, %v9797
  %9799 = vmatmul.bf16.gmra.mxu0 %v3267
  %v9800 = vpop.f32.mrf.mxu0
  %v9801 = vadd.f32 %v9472, %v9800
  %v9802 = vpop.f32.mrf.mxu0
  %v9803 = vadd.f32 %v9474, %v9802
  %9804 = vmatmul.bf16.gmra.mxu0 %v3275
  %v9805 = vpop.f32.mrf.mxu0
  %v9806 = vadd.f32 %v9477, %v9805
  %v9807 = vpop.f32.mrf.mxu0
  %v9808 = vadd.f32 %v9479, %v9807
  %9809 = vmatmul.bf16.gmra.mxu0 %v3283
  %v9810 = vpop.f32.mrf.mxu0
  %v9811 = vadd.f32 %v9482, %v9810
  %v9812 = vpop.f32.mrf.mxu0
  %v9813 = vadd.f32 %v9484, %v9812
  %9814 = vmatmul.bf16.gmra.mxu0 %v3291
  %v9815 = vpop.f32.mrf.mxu0
  %v9816 = vadd.f32 %v9487, %v9815
  %v9817 = vpop.f32.mrf.mxu0
  %v9818 = vadd.f32 %v9489, %v9817
  %9819 = vmatmul.bf16.gmra.mxu0 %v3299
  %v9820 = vpop.f32.mrf.mxu0
  %v9821 = vadd.f32 %v9492, %v9820
  %v9822 = vpop.f32.mrf.mxu0
  %v9823 = vadd.f32 %v9494, %v9822
  %9824 = vmatmul.bf16.gmra.mxu0 %v3307
  %v9825 = vpop.f32.mrf.mxu0
  %v9826 = vadd.f32 %v9497, %v9825
  %v9827 = vpop.f32.mrf.mxu0
  %v9828 = vadd.f32 %v9499, %v9827
  %9829 = vmatmul.bf16.gmra.mxu0 %v3315
  %v9830 = vpop.f32.mrf.mxu0
  %v9831 = vadd.f32 %v9502, %v9830
  %v9832 = vpop.f32.mrf.mxu0
  %v9833 = vadd.f32 %v9504, %v9832
  %9834 = vmatmul.bf16.gmra.mxu0 %v3323
  %v9835 = vpop.f32.mrf.mxu0
  %v9836 = vadd.f32 %v9507, %v9835
  %v9837 = vpop.f32.mrf.mxu0
  %v9838 = vadd.f32 %v9509, %v9837
  %9839 = vmatmul.bf16.gmra.mxu0 %v3331
  %v9840 = vpop.f32.mrf.mxu0
  %v9841 = vadd.f32 %v9512, %v9840
  %v9842 = vpop.f32.mrf.mxu0
  %v9843 = vadd.f32 %v9514, %v9842
  %9844 = vmatmul.bf16.gmra.mxu0 %v3339
  %v9845 = vpop.f32.mrf.mxu0
  %v9846 = vadd.f32 %v9517, %v9845
  %v9847 = vpop.f32.mrf.mxu0
  %v9848 = vadd.f32 %v9519, %v9847
  %9849 = vmatmul.bf16.gmra.mxu0 %v3347
  %v9850 = vpop.f32.mrf.mxu0
  %v9851 = vadd.f32 %v9522, %v9850
  %v9852 = vpop.f32.mrf.mxu0
  %v9853 = vadd.f32 %v9524, %v9852
  %9854 = vmatmul.bf16.gmra.mxu0 %v3355
  %v9855 = vpop.f32.mrf.mxu0
  %v9856 = vadd.f32 %v9527, %v9855
  %v9857 = vpop.f32.mrf.mxu0
  %v9858 = vadd.f32 %v9529, %v9857
  %9859 = vmatmul.bf16.gmra.mxu0 %v3363
  %v9860 = vpop.f32.mrf.mxu0
  %v9861 = vadd.f32 %v9532, %v9860
  %v9862 = vpop.f32.mrf.mxu0
  %v9863 = vadd.f32 %v9534, %v9862
  %9864 = vmatmul.bf16.gmra.mxu0 %v3371
  %v9865 = vpop.f32.mrf.mxu0
  %v9866 = vadd.f32 %v9537, %v9865
  %v9867 = vpop.f32.mrf.mxu0
  %v9868 = vadd.f32 %v9539, %v9867
  %9869 = vmatmul.bf16.gmra.mxu0 %v3379
  %v9870 = vpop.f32.mrf.mxu0
  %v9871 = vadd.f32 %v9542, %v9870
  %v9872 = vpop.f32.mrf.mxu0
  %v9873 = vadd.f32 %v9544, %v9872
  %9874 = vmatmul.bf16.gmra.mxu0 %v3387
  %v9875 = vpop.f32.mrf.mxu0
  %v9876 = vadd.f32 %v9547, %v9875
  %v9877 = vpop.f32.mrf.mxu0
  %v9878 = vadd.f32 %v9549, %v9877
  %9879 = vmatmul.bf16.gmra.mxu0 %v3395
  %v9880 = vpop.f32.mrf.mxu0
  %v9881 = vadd.f32 %v9552, %v9880
  %v9882 = vpop.f32.mrf.mxu0
  %v9883 = vadd.f32 %v9554, %v9882
  %9884 = vmatmul.bf16.gmra.mxu0 %v3403
  %v9885 = vpop.f32.mrf.mxu0
  %v9886 = vadd.f32 %v9557, %v9885
  %v9887 = vpop.f32.mrf.mxu0
  %v9888 = vadd.f32 %v9559, %v9887
  %9889 = vmatmul.bf16.gmra.mxu0 %v3411
  %v9890 = vpop.f32.mrf.mxu0
  %v9891 = vadd.f32 %v9562, %v9890
  %v9892 = vpop.f32.mrf.mxu0
  %v9893 = vadd.f32 %v9564, %v9892
  %9894 = vmatmul.bf16.gmra.mxu0 %v3419
  %v9895 = vpop.f32.mrf.mxu0
  %v9896 = vadd.f32 %v9567, %v9895
  %v9897 = vpop.f32.mrf.mxu0
  %v9898 = vadd.f32 %v9569, %v9897
  %9899 = vmatmul.bf16.gmra.mxu0 %v3427
  %v9900 = vpop.f32.mrf.mxu0
  %v9901 = vadd.f32 %v9572, %v9900
  %v9902 = vpop.f32.mrf.mxu0
  %v9903 = vadd.f32 %v9574, %v9902
  %9904 = vmatmul.bf16.gmra.mxu0 %v3435
  %v9905 = vpop.f32.mrf.mxu0
  %v9906 = vadd.f32 %v9577, %v9905
  %v9907 = vpop.f32.mrf.mxu0
  %v9908 = vadd.f32 %v9579, %v9907
  %9909 = vmatmul.bf16.gmra.mxu0 %v3443
  %v9910 = vpop.f32.mrf.mxu0
  %v9911 = vadd.f32 %v9582, %v9910
  %v9912 = vpop.f32.mrf.mxu0
  %v9913 = vadd.f32 %v9584, %v9912
  %9914 = vmatmul.bf16.gmra.mxu0 %v3451
  %v9915 = vpop.f32.mrf.mxu0
  %v9916 = vadd.f32 %v9587, %v9915
  %v9917 = vpop.f32.mrf.mxu0
  %v9918 = vadd.f32 %v9589, %v9917
  %9919 = vmatmul.bf16.gmra.mxu0 %v3459
  %v9920 = vpop.f32.mrf.mxu0
  %v9921 = vadd.f32 %v9592, %v9920
  %v9922 = vpop.f32.mrf.mxu0
  %v9923 = vadd.f32 %v9594, %v9922
  %9924 = vmatmul.bf16.gmra.mxu0 %v3467
  %v9925 = vpop.f32.mrf.mxu0
  %v9926 = vadd.f32 %v9597, %v9925
  %v9927 = vpop.f32.mrf.mxu0
  %v9928 = vadd.f32 %v9599, %v9927
  %9929 = vmatmul.bf16.gmra.mxu0 %v3475
  %v9930 = vpop.f32.mrf.mxu0
  %v9931 = vadd.f32 %v9602, %v9930
  %v9932 = vpop.f32.mrf.mxu0
  %v9933 = vadd.f32 %v9604, %v9932
  %9934 = vmatmul.bf16.gmra.mxu0 %v3483
  %v9935 = vpop.f32.mrf.mxu0
  %v9936 = vadd.f32 %v9607, %v9935
  %v9937 = vpop.f32.mrf.mxu0
  %v9938 = vadd.f32 %v9609, %v9937
  %9939 = vmatmul.bf16.gmra.mxu0 %v3491
  %v9940 = vpop.f32.mrf.mxu0
  %v9941 = vadd.f32 %v9612, %v9940
  %v9942 = vpop.f32.mrf.mxu0
  %v9943 = vadd.f32 %v9614, %v9942
  %9944 = vmatmul.bf16.gmra.mxu0 %v3499
  %v9945 = vpop.f32.mrf.mxu0
  %v9946 = vadd.f32 %v9617, %v9945
  %v9947 = vpop.f32.mrf.mxu0
  %v9948 = vadd.f32 %v9619, %v9947
  %9949 = vmatmul.bf16.gmra.mxu0 %v3507
  %v9950 = vpop.f32.mrf.mxu0
  %v9951 = vadd.f32 %v9622, %v9950
  %v9952 = vpop.f32.mrf.mxu0
  %v9953 = vadd.f32 %v9624, %v9952
  %9954 = vmatmul.bf16.gmra.mxu0 %v3515
  %v9955 = vpop.f32.mrf.mxu0
  %v9956 = vadd.f32 %v9627, %v9955
  %v9957 = vpop.f32.mrf.mxu0
  %v9958 = vadd.f32 %v9629, %v9957
  %9959 = vmatmul.bf16.gmra.mxu0 %v3523
  %v9960 = vpop.f32.mrf.mxu0
  %v9961 = vadd.f32 %v9632, %v9960
  %v9962 = vpop.f32.mrf.mxu0
  %v9963 = vadd.f32 %v9634, %v9962
  %9964 = vmatmul.bf16.gmra.mxu0 %v3531
  %v9965 = vpop.f32.mrf.mxu0
  %v9966 = vadd.f32 %v9637, %v9965
  %v9967 = vpop.f32.mrf.mxu0
  %v9968 = vadd.f32 %v9639, %v9967
  %9969 = vmatmul.bf16.gmra.mxu0 %v3539
  %v9970 = vpop.f32.mrf.mxu0
  %v9971 = vadd.f32 %v9642, %v9970
  %v9972 = vpop.f32.mrf.mxu0
  %v9973 = vadd.f32 %v9644, %v9972
  %9974 = vmatmul.bf16.gmra.mxu0 %v3547
  %v9975 = vpop.f32.mrf.mxu0
  %v9976 = vadd.f32 %v9647, %v9975
  %v9977 = vpop.f32.mrf.mxu0
  %v9978 = vadd.f32 %v9649, %v9977
  %9979 = vmatmul.bf16.gmra.mxu0 %v3555
  %v9980 = vpop.f32.mrf.mxu0
  %v9981 = vadd.f32 %v9652, %v9980
  %v9982 = vpop.f32.mrf.mxu0
  %v9983 = vadd.f32 %v9654, %v9982
  %9984 = vdwg.mxu0
  %9985 = vst [vmem:[%s6] sm:$0xff] %v9666
  %9986 = vst [vmem:[%s6 + $0x8] sm:$0xff] %v9668
  %9987 = vst [vmem:[%s6 + $0x10] sm:$0xff] %v9671
  %9988 = vst [vmem:[%s6 + $0x18] sm:$0xff] %v9673
  %9989 = vst [vmem:[%s6 + $0x20] sm:$0xff] %v9676
  %9990 = vst [vmem:[%s6 + $0x28] sm:$0xff] %v9678
  %9991 = vst [vmem:[%s6 + $0x30] sm:$0xff] %v9681
  %9992 = vst [vmem:[%s6 + $0x38] sm:$0xff] %v9683
  %9993 = vst [vmem:[%s6 + $0x40] sm:$0xff] %v9686
  %9994 = vst [vmem:[%s6 + $0x48] sm:$0xff] %v9688
  %9995 = vst [vmem:[%s6 + $0x50] sm:$0xff] %v9691
  %9996 = vst [vmem:[%s6 + $0x58] sm:$0xff] %v9693
  %9997 = vst [vmem:[%s6 + $0x60] sm:$0xff] %v9696
  %9998 = vst [vmem:[%s6 + $0x68] sm:$0xff] %v9698
  %9999 = vst [vmem:[%s6 + $0x70] sm:$0xff] %v9701
  %10000 = vst [vmem:[%s6 + $0x78] sm:$0xff] %v9703
  %10001 = vst [vmem:[%s6 + $0x80] sm:$0xff] %v9706
  %10002 = vst [vmem:[%s6 + $0x88] sm:$0xff] %v9708
  %10003 = vst [vmem:[%s6 + $0x90] sm:$0xff] %v9711
  %10004 = vst [vmem:[%s6 + $0x98] sm:$0xff] %v9713
  %10005 = vst [vmem:[%s6 + $0xa0] sm:$0xff] %v9716
  %10006 = vst [vmem:[%s6 + $0xa8] sm:$0xff] %v9718
  %10007 = vst [vmem:[%s6 + $0xb0] sm:$0xff] %v9721
  %10008 = vst [vmem:[%s6 + $0xb8] sm:$0xff] %v9723
  %10009 = vst [vmem:[%s6 + $0xc0] sm:$0xff] %v9726
  %10010 = vst [vmem:[%s6 + $0xc8] sm:$0xff] %v9728
  %10011 = vst [vmem:[%s6 + $0xd0] sm:$0xff] %v9731
  %10012 = vst [vmem:[%s6 + $0xd8] sm:$0xff] %v9733
  %10013 = vst [vmem:[%s6 + $0xe0] sm:$0xff] %v9736
  %10014 = vst [vmem:[%s6 + $0xe8] sm:$0xff] %v9738
  %10015 = vst [vmem:[%s6 + $0xf0] sm:$0xff] %v9741
  %10016 = vst [vmem:[%s6 + $0xf8] sm:$0xff] %v9743
  %10017 = vst [vmem:[%s6 + $0x100] sm:$0xff] %v9746
  %10018 = vst [vmem:[%s6 + $0x108] sm:$0xff] %v9748
  %10019 = vst [vmem:[%s6 + $0x110] sm:$0xff] %v9751
  %10020 = vst [vmem:[%s6 + $0x118] sm:$0xff] %v9753
  %10021 = vst [vmem:[%s6 + $0x120] sm:$0xff] %v9756
  %10022 = vst [vmem:[%s6 + $0x128] sm:$0xff] %v9758
  %10023 = vst [vmem:[%s6 + $0x130] sm:$0xff] %v9761
  %10024 = vst [vmem:[%s6 + $0x138] sm:$0xff] %v9763
  %10025 = vst [vmem:[%s6 + $0x140] sm:$0xff] %v9766
  %10026 = vst [vmem:[%s6 + $0x148] sm:$0xff] %v9768
  %10027 = vst [vmem:[%s6 + $0x150] sm:$0xff] %v9771
  %10028 = vst [vmem:[%s6 + $0x158] sm:$0xff] %v9773
  %10029 = vst [vmem:[%s6 + $0x160] sm:$0xff] %v9776
  %10030 = vst [vmem:[%s6 + $0x168] sm:$0xff] %v9778
  %10031 = vst [vmem:[%s6 + $0x170] sm:$0xff] %v9781
  %10032 = vst [vmem:[%s6 + $0x178] sm:$0xff] %v9783
  %10033 = vst [vmem:[%s6 + $0x180] sm:$0xff] %v9786
  %10034 = vst [vmem:[%s6 + $0x188] sm:$0xff] %v9788
  %10035 = vst [vmem:[%s6 + $0x190] sm:$0xff] %v9791
  %10036 = vst [vmem:[%s6 + $0x198] sm:$0xff] %v9793
  %10037 = vst [vmem:[%s6 + $0x1a0] sm:$0xff] %v9796
  %10038 = vst [vmem:[%s6 + $0x1a8] sm:$0xff] %v9798
  %10039 = vst [vmem:[%s6 + $0x1b0] sm:$0xff] %v9801
  %10040 = vst [vmem:[%s6 + $0x1b8] sm:$0xff] %v9803
  %10041 = vst [vmem:[%s6 + $0x1c0] sm:$0xff] %v9806
  %10042 = vst [vmem:[%s6 + $0x1c8] sm:$0xff] %v9808
  %10043 = vst [vmem:[%s6 + $0x1d0] sm:$0xff] %v9811
  %10044 = vst [vmem:[%s6 + $0x1d8] sm:$0xff] %v9813
  %10045 = vst [vmem:[%s6 + $0x1e0] sm:$0xff] %v9816
  %10046 = vst [vmem:[%s6 + $0x1e8] sm:$0xff] %v9818
  %10047 = vst [vmem:[%s6 + $0x1f0] sm:$0xff] %v9821
  %10048 = vst [vmem:[%s6 + $0x1f8] sm:$0xff] %v9823
  %10049 = vst [vmem:[%s6 + $0x200] sm:$0xff] %v9826
  %10050 = vst [vmem:[%s6 + $0x208] sm:$0xff] %v9828
  %10051 = vst [vmem:[%s6 + $0x210] sm:$0xff] %v9831
  %10052 = vst [vmem:[%s6 + $0x218] sm:$0xff] %v9833
  %10053 = vst [vmem:[%s6 + $0x220] sm:$0xff] %v9836
  %10054 = vst [vmem:[%s6 + $0x228] sm:$0xff] %v9838
  %10055 = vst [vmem:[%s6 + $0x230] sm:$0xff] %v9841
  %10056 = vst [vmem:[%s6 + $0x238] sm:$0xff] %v9843
  %10057 = vst [vmem:[%s6 + $0x240] sm:$0xff] %v9846
  %10058 = vst [vmem:[%s6 + $0x248] sm:$0xff] %v9848
  %10059 = vst [vmem:[%s6 + $0x250] sm:$0xff] %v9851
  %10060 = vst [vmem:[%s6 + $0x258] sm:$0xff] %v9853
  %10061 = vst [vmem:[%s6 + $0x260] sm:$0xff] %v9856
  %10062 = vst [vmem:[%s6 + $0x268] sm:$0xff] %v9858
  %10063 = vst [vmem:[%s6 + $0x270] sm:$0xff] %v9861
  %10064 = vst [vmem:[%s6 + $0x278] sm:$0xff] %v9863
  %10065 = vst [vmem:[%s6 + $0x280] sm:$0xff] %v9866
  %10066 = vst [vmem:[%s6 + $0x288] sm:$0xff] %v9868
  %10067 = vst [vmem:[%s6 + $0x290] sm:$0xff] %v9871
  %10068 = vst [vmem:[%s6 + $0x298] sm:$0xff] %v9873
  %10069 = vst [vmem:[%s6 + $0x2a0] sm:$0xff] %v9876
  %10070 = vst [vmem:[%s6 + $0x2a8] sm:$0xff] %v9878
  %10071 = vst [vmem:[%s6 + $0x2b0] sm:$0xff] %v9881
  %10072 = vst [vmem:[%s6 + $0x2b8] sm:$0xff] %v9883
  %10073 = vst [vmem:[%s6 + $0x2c0] sm:$0xff] %v9886
  %10074 = vst [vmem:[%s6 + $0x2c8] sm:$0xff] %v9888
  %10075 = vst [vmem:[%s6 + $0x2d0] sm:$0xff] %v9891
  %10076 = vst [vmem:[%s6 + $0x2d8] sm:$0xff] %v9893
  %10077 = vst [vmem:[%s6 + $0x2e0] sm:$0xff] %v9896
  %10078 = vst [vmem:[%s6 + $0x2e8] sm:$0xff] %v9898
  %10079 = vst [vmem:[%s6 + $0x2f0] sm:$0xff] %v9901
  %10080 = vst [vmem:[%s6 + $0x2f8] sm:$0xff] %v9903
  %10081 = vst [vmem:[%s6 + $0x300] sm:$0xff] %v9906
  %10082 = vst [vmem:[%s6 + $0x308] sm:$0xff] %v9908
  %10083 = vst [vmem:[%s6 + $0x310] sm:$0xff] %v9911
  %10084 = vst [vmem:[%s6 + $0x318] sm:$0xff] %v9913
  %10085 = vst [vmem:[%s6 + $0x320] sm:$0xff] %v9916
  %10086 = vst [vmem:[%s6 + $0x328] sm:$0xff] %v9918
  %10087 = vst [vmem:[%s6 + $0x330] sm:$0xff] %v9921
  %10088 = vst [vmem:[%s6 + $0x338] sm:$0xff] %v9923
  %10089 = vst [vmem:[%s6 + $0x340] sm:$0xff] %v9926
  %10090 = vst [vmem:[%s6 + $0x348] sm:$0xff] %v9928
  %10091 = vst [vmem:[%s6 + $0x350] sm:$0xff] %v9931
  %10092 = vst [vmem:[%s6 + $0x358] sm:$0xff] %v9933
  %10093 = vst [vmem:[%s6 + $0x360] sm:$0xff] %v9936
  %10094 = vst [vmem:[%s6 + $0x368] sm:$0xff] %v9938
  %10095 = vst [vmem:[%s6 + $0x370] sm:$0xff] %v9941
  %10096 = vst [vmem:[%s6 + $0x378] sm:$0xff] %v9943
  %10097 = vst [vmem:[%s6 + $0x380] sm:$0xff] %v9946
  %10098 = vst [vmem:[%s6 + $0x388] sm:$0xff] %v9948
  %10099 = vst [vmem:[%s6 + $0x390] sm:$0xff] %v9951
  %10100 = vst [vmem:[%s6 + $0x398] sm:$0xff] %v9953
  %10101 = vst [vmem:[%s6 + $0x3a0] sm:$0xff] %v9956
  %10102 = vst [vmem:[%s6 + $0x3a8] sm:$0xff] %v9958
  %10103 = vst [vmem:[%s6 + $0x3b0] sm:$0xff] %v9961
  %10104 = vst [vmem:[%s6 + $0x3b8] sm:$0xff] %v9963
  %10105 = vst [vmem:[%s6 + $0x3c0] sm:$0xff] %v9966
  %10106 = vst [vmem:[%s6 + $0x3c8] sm:$0xff] %v9968
  %10107 = vst [vmem:[%s6 + $0x3d0] sm:$0xff] %v9971
  %10108 = vst [vmem:[%s6 + $0x3d8] sm:$0xff] %v9973
  %10109 = vst [vmem:[%s6 + $0x3e0] sm:$0xff] %v9976
  %10110 = vst [vmem:[%s6 + $0x3e8] sm:$0xff] %v9978
  %10111 = vst [vmem:[%s6 + $0x3f0] sm:$0xff] %v9981
  %10112 = vst [vmem:[%s6 + $0x3f8] sm:$0xff] %v9983
  // Predicated region
  $region26: #{gcn_forward.1} parent=0 // pred_check
    _
  $region27: #{gcn_forward.1} parent=0 // pred_check_branch
    %10114 = sbr.rel (0) target = $region29
  $region28: #{gcn_forward.1} parent=0 // pred_region
    _
  $region29: #{gcn_forward.1} parent=0 // pred_fallthru
    _
  // Predicated region
  $region30: #{gcn_forward.1} parent=0 // pred_check
    _
  $region31: #{gcn_forward.1} parent=0 // pred_check_branch
    %10116 = sbr.rel (0) target = $region33
  $region32: #{gcn_forward.1} parent=0 // pred_region
    _
  $region33: #{gcn_forward.1} parent=0 // pred_fallthru
    _

</llo_original>
